<compile_context>
chip_gen: v7x
topology: tpu7x:2x2x1
jax: 0.10.0
libtpu: 0.0.40
codegen_flags: <defaults>
</compile_context>

<pallas_src>
import numpy as np
import jax
import jax.numpy as jnp
from jax.experimental import pallas as pl
from jax.experimental.pallas import tpu as pltpu


def _shift_masks(H, W, K):
    """(K*K, H*W) float32 0/1 masks: tap t=(kh,kw) is valid at pixel p=(h,w) iff the
    source pixel (h+kh-pad, w+kw-pad) lies inside the image (i.e. not in the pad)."""
    pad = K // 2
    p = np.arange(H * W)
    h, w = p // W, p % W
    rows = []
    for kh in range(K):
        for kw in range(K):
            dh, dw = kh - pad, kw - pad
            ok = (h + dh >= 0) & (h + dh < H) & (w + dw >= 0) & (w + dw < W)
            rows.append(ok.astype(np.float32))
    return jnp.asarray(np.stack(rows, axis=0))


def _tap_shifts(W, K):
    pad = K // 2
    return [(kh - pad) * W + (kw - pad) for kh in range(K) for kw in range(K)]


def _make_fused_kernel(H, W, r):
    P = H * W
    s5 = _tap_shifts(W, 5)
    s3 = _tap_shifts(W, 3)

    def conv(a, w_ref, b_ref, masks, shifts, relu):
        # a: (Cin, P) activation.  One im2col matmul: (Cout, K*K*Cin) @ (K*K*Cin, P).
        pieces = []
        for t, s in enumerate(shifts):
            shifted = a if s == 0 else pltpu.roll(a, shift=(-s) % P, axis=1)
            pieces.append(shifted * masks[t:t + 1, :])      # zero the padded border
        pmat = jnp.concatenate(pieces, axis=0)              # (K*K*Cin, P)
        y = jnp.dot(w_ref[...], pmat, preferred_element_type=jnp.float32)
        y = y + b_ref[...]                                  # (Cout, 1) bcast over lanes
        if relu:
            y = jnp.maximum(y, 0.0)
        return y

    def kernel(x_ref, m5_ref, m3_ref,
               w1, b1, w2, b2, w3, b3, w31, b31,
               wra, bra, wrb, brb, w4, b4, o_ref):
        m5 = m5_ref[...]                                    # (25, P)
        m3 = m3_ref[...]                                    # (9, P)

        a = x_ref[0]                                        # (1, P): one grayscale image
        a = conv(a, w1, b1, m5, s5, True)                   # (64, P)   conv_1 5x5 + ReLU
        a = conv(a, w2, b2, m3, s3, True)                   # (128, P)  conv_2 3x3 + ReLU
        a = conv(a, w3, b3, m3, s3, True)                   # (64, P)   conv_3 3x3 + ReLU
        a = conv(a, w31, b31, m3, s3, True)                 # (64, P)   conv_3_1 3x3 + ReLU
        # TODO(synk): ResidualBlock source not provided; assumed the standard
        #             conv -> ReLU -> conv + identity skip (no BN, no post-add act).
        h = conv(a, wra, bra, m3, s3, True)
        h = conv(h, wrb, brb, m3, s3, False)
        a = a + h
        a = conv(a, w4, b4, m3, s3, False)                  # (r*r, P)  conv_4 3x3
        a = jnp.clip(a, 0.0, 1.0)                           # fused clip
        o_ref[...] = a.reshape(1, r * r, P).astype(o_ref.dtype)   # lane-dense store

    return kernel


def init_params(key, scale_factor=4, std=1e-3):
    """Weights ~ N(0, std) (PyTorch module uses std=0.001), zero biases.

    Weight layout: (Cout, K*K*Cin), column index = (kh*K + kw)*Cin + cin,
    i.e. torch_weight.permute(0, 2, 3, 1).reshape(Cout, -1)."""
    def conv(k, K, Cin, Cout):
        w = jax.random.normal(k, (Cout, K * K * Cin), jnp.float32) * std
        b = jnp.zeros((Cout, 1), jnp.float32)
        return w, b

    ks = jax.random.split(key, 7)
    rr = scale_factor * scale_factor
    return {
        "conv1":  conv(ks[0], 5, 1, 64),
        "conv2":  conv(ks[1], 3, 64, 128),
        "conv3":  conv(ks[2], 3, 128, 64),
        "conv31": conv(ks[3], 3, 64, 64),
        "res_a":  conv(ks[4], 3, 64, 64),
        "res_b":  conv(ks[5], 3, 64, 64),
        "conv4":  conv(ks[6], 3, 64, rr),
    }


def espcn_forward(params, x, scale_factor=4):
    """x: (B, C, H, W) float32.  B*C must be divisible by 3 (as in the torch module)."""
    B, C, H, W = x.shape
    r = scale_factor
    N = B * C
    P = H * W
    xf = x.reshape(N, 1, P)                 # one single-channel image per row, lane-dense

    m5 = _shift_masks(H, W, 5)
    m3 = _shift_masks(H, W, 3)

    layer_order = ["conv1", "conv2", "conv3", "conv31", "res_a", "res_b", "conv4"]
    wb = []
    for name in layer_order:
        wb.extend(params[name])

    def fullspec(arr):                      # whole (2-D) array resident every grid step
        return pl.BlockSpec(arr.shape, lambda n: (0, 0))

    in_specs = [pl.BlockSpec((1, 1, P), lambda n: (n, 0, 0)),
                fullspec(m5), fullspec(m3)] + [fullspec(a) for a in wb]

    out = pl.pallas_call(
        _make_fused_kernel(H, W, r),
        out_shape=jax.ShapeDtypeStruct((N, r * r, P), jnp.float32),
        grid=(N,),
        in_specs=in_specs,
        out_specs=pl.BlockSpec((1, r * r, P), lambda n: (n, 0, 0)),
        compiler_params=pltpu.CompilerParams(
            dimension_semantics=("parallel",)),
    )(xf, m5, m3, *wb)                      # (N, r*r, H*W), already clipped

    # PixelShuffle (NCHW semantics) + final reshape: cheap layout glue left to XLA.
    y = out.reshape(N, r, r, H, W)
    y = jnp.transpose(y, (0, 3, 1, 4, 2)).reshape(N, H * r, W * r)
    return y.reshape(-1, 3, H * r, W * r)


def _ref_forward(params, x, scale_factor=4):
    """Pure-JAX (lax.conv) reference with identical semantics, used for validation."""
    r = scale_factor
    B, C, H, W = x.shape
    N = B * C
    a = x.reshape(N, 1, H, W)

    def conv(a, wb, K, Cin, relu):
        w, b = wb
        Cout = w.shape[0]
        wk = jnp.transpose(w.reshape(Cout, K, K, Cin), (0, 3, 1, 2))   # OIHW
        y = jax.lax.conv_general_dilated(
            a, wk, (1, 1), "SAME",
            dimension_numbers=("NCHW", "OIHW", "NCHW"),
            precision=jax.lax.Precision.HIGHEST)
        y = y + b.reshape(1, Cout, 1, 1)
        return jnp.maximum(y, 0.0) if relu else y

    a = conv(a, params["conv1"], 5, 1, True)
    a = conv(a, params["conv2"], 3, 64, True)
    a = conv(a, params["conv3"], 3, 128, True)
    a = conv(a, params["conv31"], 3, 64, True)
    h = conv(a, params["res_a"], 3, 64, True)
    h = conv(h, params["res_b"], 3, 64, False)
    a = a + h
    a = conv(a, params["conv4"], 3, 64, False)              # (N, r*r, H, W)
    y = a.reshape(N, r, r, H, W)
    y = jnp.transpose(y, (0, 3, 1, 4, 2)).reshape(N, H * r, W * r)
    y = y.reshape(-1, 3, H * r, W * r)
    return jnp.clip(y, 0.0, 1.0)


if __name__ == "__main__":
    key = jax.random.PRNGKey(0)
    pkey, xkey = jax.random.split(key)
    scale = 4

    # B*C = 6 is divisible by 3, matching the module's final reshape(-1, 3, H', W').
    x = jax.random.uniform(xkey, (2, 3, 16, 16), jnp.float32)
    fwd = jax.jit(lambda p, xx: espcn_forward(p, xx, scale_factor=scale))

    # Faithful init (weights ~ N(0, 0.001), zero bias), as in the PyTorch module.
    params = init_params(pkey, scale_factor=scale)
    out = jax.block_until_ready(fwd(params, x))
    assert out.shape == (2, 3, 64, 64), out.shape
    assert out.dtype == jnp.float32
    assert bool(jnp.all(jnp.isfinite(out)))

    # Numerical check against a pure-JAX lax.conv reference; a larger weight std is
    # used so activations are O(1e-2) instead of ~1e-12 and the check is meaningful.
    tparams = init_params(pkey, scale_factor=scale, std=0.04)
    out_t = jax.block_until_ready(fwd(tparams, x))
    ref_t = _ref_forward(tparams, x, scale_factor=scale)
    err = float(jnp.max(jnp.abs(out_t - ref_t)))
    ref_mag = float(jnp.max(jnp.abs(ref_t)))
    assert err <= 0.05 * ref_mag + 1e-6, (err, ref_mag)

    print("KERNEL_OK")
</pallas_src>

<mosaic_0001>
module attributes {stable_mosaic.version = 11 : i64} {
  func.func @kernel(%arg0: i32, %arg1: memref<1x1x256xf32, #tpu.memory_space<vmem>>, %arg2: memref<25x256xf32, #tpu.memory_space<vmem>>, %arg3: memref<9x256xf32, #tpu.memory_space<vmem>>, %arg4: memref<64x25xf32, #tpu.memory_space<vmem>>, %arg5: memref<64x1xf32, #tpu.memory_space<vmem>>, %arg6: memref<128x576xf32, #tpu.memory_space<vmem>>, %arg7: memref<128x1xf32, #tpu.memory_space<vmem>>, %arg8: memref<64x1152xf32, #tpu.memory_space<vmem>>, %arg9: memref<64x1xf32, #tpu.memory_space<vmem>>, %arg10: memref<64x576xf32, #tpu.memory_space<vmem>>, %arg11: memref<64x1xf32, #tpu.memory_space<vmem>>, %arg12: memref<64x576xf32, #tpu.memory_space<vmem>>, %arg13: memref<64x1xf32, #tpu.memory_space<vmem>>, %arg14: memref<64x576xf32, #tpu.memory_space<vmem>>, %arg15: memref<64x1xf32, #tpu.memory_space<vmem>>, %arg16: memref<16x576xf32, #tpu.memory_space<vmem>>, %arg17: memref<16x1xf32, #tpu.memory_space<vmem>>, %arg18: memref<1x16x256xf32, #tpu.memory_space<vmem>>) attributes {dimension_semantics = [#tpu.dimension_semantics<parallel>], iteration_bounds = array<i64: 6>, scalar_prefetch = 0 : i64, scratch_operands = 0 : i64, tpu.core_type = #tpu.core_type<tc>, window_params = [{transform_indices = @transform_0, window_bounds = array<i64: 1, 1, 256>}, {pipeline_mode = #tpu.pipeline_mode<synchronous>, transform_indices = @transform_1, window_bounds = array<i64: 25, 256>}, {pipeline_mode = #tpu.pipeline_mode<synchronous>, transform_indices = @transform_2, window_bounds = array<i64: 9, 256>}, {pipeline_mode = #tpu.pipeline_mode<synchronous>, transform_indices = @transform_3, window_bounds = array<i64: 64, 25>}, {pipeline_mode = #tpu.pipeline_mode<synchronous>, transform_indices = @transform_4, window_bounds = array<i64: 64, 1>}, {pipeline_mode = #tpu.pipeline_mode<synchronous>, transform_indices = @transform_5, window_bounds = array<i64: 128, 576>}, {pipeline_mode = #tpu.pipeline_mode<synchronous>, transform_indices = @transform_6, window_bounds = array<i64: 128, 1>}, {pipeline_mode = #tpu.pipeline_mode<synchronous>, transform_indices = @transform_7, window_bounds = array<i64: 64, 1152>}, {pipeline_mode = #tpu.pipeline_mode<synchronous>, transform_indices = @transform_8, window_bounds = array<i64: 64, 1>}, {pipeline_mode = #tpu.pipeline_mode<synchronous>, transform_indices = @transform_9, window_bounds = array<i64: 64, 576>}, {pipeline_mode = #tpu.pipeline_mode<synchronous>, transform_indices = @transform_10, window_bounds = array<i64: 64, 1>}, {pipeline_mode = #tpu.pipeline_mode<synchronous>, transform_indices = @transform_11, window_bounds = array<i64: 64, 576>}, {pipeline_mode = #tpu.pipeline_mode<synchronous>, transform_indices = @transform_12, window_bounds = array<i64: 64, 1>}, {pipeline_mode = #tpu.pipeline_mode<synchronous>, transform_indices = @transform_13, window_bounds = array<i64: 64, 576>}, {pipeline_mode = #tpu.pipeline_mode<synchronous>, transform_indices = @transform_14, window_bounds = array<i64: 64, 1>}, {pipeline_mode = #tpu.pipeline_mode<synchronous>, transform_indices = @transform_15, window_bounds = array<i64: 16, 576>}, {pipeline_mode = #tpu.pipeline_mode<synchronous>, transform_indices = @transform_16, window_bounds = array<i64: 16, 1>}, {transform_indices = @transform_17, window_bounds = array<i64: 1, 16, 256>}]} {
    %c0 = arith.constant 0 : index
    %c0_0 = arith.constant 0 : index
    %0 = vector.load %arg2[%c0, %c0_0] : memref<25x256xf32, #tpu.memory_space<vmem>>, vector<25x256xf32>
    %c0_1 = arith.constant 0 : index
    %c0_2 = arith.constant 0 : index
    %1 = vector.load %arg3[%c0_1, %c0_2] : memref<9x256xf32, #tpu.memory_space<vmem>>, vector<9x256xf32>
    %c0_3 = arith.constant 0 : index
    %c0_4 = arith.constant 0 : index
    %c0_5 = arith.constant 0 : index
    %2 = vector.load %arg1[%c0_3, %c0_4, %c0_5] : memref<1x1x256xf32, #tpu.memory_space<vmem>>, vector<1x1x256xf32>
    %3 = vector.shape_cast %2 : vector<1x1x256xf32> to vector<1x256xf32>
    %c34_i32 = arith.constant 34 : i32
    %4 = tpu.dynamic_rotate %3 by %c34_i32 dim 1 : vector<1x256xf32>, i32 -> vector<1x256xf32>
    %5 = vector.extract_strided_slice %0 {offsets = [0, 0], sizes = [1, 256], strides = [1, 1]} : vector<25x256xf32> to vector<1x256xf32>
    %6 = arith.mulf %4, %5 : vector<1x256xf32>
    %c33_i32 = arith.constant 33 : i32
    %7 = tpu.dynamic_rotate %3 by %c33_i32 dim 1 : vector<1x256xf32>, i32 -> vector<1x256xf32>
    %8 = vector.extract_strided_slice %0 {offsets = [1, 0], sizes = [1, 256], strides = [1, 1]} : vector<25x256xf32> to vector<1x256xf32>
    %9 = arith.mulf %7, %8 : vector<1x256xf32>
    %c32_i32 = arith.constant 32 : i32
    %10 = tpu.dynamic_rotate %3 by %c32_i32 dim 1 : vector<1x256xf32>, i32 -> vector<1x256xf32>
    %11 = vector.extract_strided_slice %0 {offsets = [2, 0], sizes = [1, 256], strides = [1, 1]} : vector<25x256xf32> to vector<1x256xf32>
    %12 = arith.mulf %10, %11 : vector<1x256xf32>
    %c31_i32 = arith.constant 31 : i32
    %13 = tpu.dynamic_rotate %3 by %c31_i32 dim 1 : vector<1x256xf32>, i32 -> vector<1x256xf32>
    %14 = vector.extract_strided_slice %0 {offsets = [3, 0], sizes = [1, 256], strides = [1, 1]} : vector<25x256xf32> to vector<1x256xf32>
    %15 = arith.mulf %13, %14 : vector<1x256xf32>
    %c30_i32 = arith.constant 30 : i32
    %16 = tpu.dynamic_rotate %3 by %c30_i32 dim 1 : vector<1x256xf32>, i32 -> vector<1x256xf32>
    %17 = vector.extract_strided_slice %0 {offsets = [4, 0], sizes = [1, 256], strides = [1, 1]} : vector<25x256xf32> to vector<1x256xf32>
    %18 = arith.mulf %16, %17 : vector<1x256xf32>
    %c18_i32 = arith.constant 18 : i32
    %19 = tpu.dynamic_rotate %3 by %c18_i32 dim 1 : vector<1x256xf32>, i32 -> vector<1x256xf32>
    %20 = vector.extract_strided_slice %0 {offsets = [5, 0], sizes = [1, 256], strides = [1, 1]} : vector<25x256xf32> to vector<1x256xf32>
    %21 = arith.mulf %19, %20 : vector<1x256xf32>
    %c17_i32 = arith.constant 17 : i32
    %22 = tpu.dynamic_rotate %3 by %c17_i32 dim 1 : vector<1x256xf32>, i32 -> vector<1x256xf32>
    %23 = vector.extract_strided_slice %0 {offsets = [6, 0], sizes = [1, 256], strides = [1, 1]} : vector<25x256xf32> to vector<1x256xf32>
    %24 = arith.mulf %22, %23 : vector<1x256xf32>
    %c16_i32 = arith.constant 16 : i32
    %25 = tpu.dynamic_rotate %3 by %c16_i32 dim 1 : vector<1x256xf32>, i32 -> vector<1x256xf32>
    %26 = vector.extract_strided_slice %0 {offsets = [7, 0], sizes = [1, 256], strides = [1, 1]} : vector<25x256xf32> to vector<1x256xf32>
    %27 = arith.mulf %25, %26 : vector<1x256xf32>
    %c15_i32 = arith.constant 15 : i32
    %28 = tpu.dynamic_rotate %3 by %c15_i32 dim 1 : vector<1x256xf32>, i32 -> vector<1x256xf32>
    %29 = vector.extract_strided_slice %0 {offsets = [8, 0], sizes = [1, 256], strides = [1, 1]} : vector<25x256xf32> to vector<1x256xf32>
    %30 = arith.mulf %28, %29 : vector<1x256xf32>
    %c14_i32 = arith.constant 14 : i32
    %31 = tpu.dynamic_rotate %3 by %c14_i32 dim 1 : vector<1x256xf32>, i32 -> vector<1x256xf32>
    %32 = vector.extract_strided_slice %0 {offsets = [9, 0], sizes = [1, 256], strides = [1, 1]} : vector<25x256xf32> to vector<1x256xf32>
    %33 = arith.mulf %31, %32 : vector<1x256xf32>
    %c2_i32 = arith.constant 2 : i32
    %34 = tpu.dynamic_rotate %3 by %c2_i32 dim 1 : vector<1x256xf32>, i32 -> vector<1x256xf32>
    %35 = vector.extract_strided_slice %0 {offsets = [10, 0], sizes = [1, 256], strides = [1, 1]} : vector<25x256xf32> to vector<1x256xf32>
    %36 = arith.mulf %34, %35 : vector<1x256xf32>
    %c1_i32 = arith.constant 1 : i32
    %37 = tpu.dynamic_rotate %3 by %c1_i32 dim 1 : vector<1x256xf32>, i32 -> vector<1x256xf32>
    %38 = vector.extract_strided_slice %0 {offsets = [11, 0], sizes = [1, 256], strides = [1, 1]} : vector<25x256xf32> to vector<1x256xf32>
    %39 = arith.mulf %37, %38 : vector<1x256xf32>
    %40 = vector.extract_strided_slice %0 {offsets = [12, 0], sizes = [1, 256], strides = [1, 1]} : vector<25x256xf32> to vector<1x256xf32>
    %41 = arith.mulf %3, %40 : vector<1x256xf32>
    %c255_i32 = arith.constant 255 : i32
    %42 = tpu.dynamic_rotate %3 by %c255_i32 dim 1 : vector<1x256xf32>, i32 -> vector<1x256xf32>
    %43 = vector.extract_strided_slice %0 {offsets = [13, 0], sizes = [1, 256], strides = [1, 1]} : vector<25x256xf32> to vector<1x256xf32>
    %44 = arith.mulf %42, %43 : vector<1x256xf32>
    %c254_i32 = arith.constant 254 : i32
    %45 = tpu.dynamic_rotate %3 by %c254_i32 dim 1 : vector<1x256xf32>, i32 -> vector<1x256xf32>
    %46 = vector.extract_strided_slice %0 {offsets = [14, 0], sizes = [1, 256], strides = [1, 1]} : vector<25x256xf32> to vector<1x256xf32>
    %47 = arith.mulf %45, %46 : vector<1x256xf32>
    %c242_i32 = arith.constant 242 : i32
    %48 = tpu.dynamic_rotate %3 by %c242_i32 dim 1 : vector<1x256xf32>, i32 -> vector<1x256xf32>
    %49 = vector.extract_strided_slice %0 {offsets = [15, 0], sizes = [1, 256], strides = [1, 1]} : vector<25x256xf32> to vector<1x256xf32>
    %50 = arith.mulf %48, %49 : vector<1x256xf32>
    %c241_i32 = arith.constant 241 : i32
    %51 = tpu.dynamic_rotate %3 by %c241_i32 dim 1 : vector<1x256xf32>, i32 -> vector<1x256xf32>
    %52 = vector.extract_strided_slice %0 {offsets = [16, 0], sizes = [1, 256], strides = [1, 1]} : vector<25x256xf32> to vector<1x256xf32>
    %53 = arith.mulf %51, %52 : vector<1x256xf32>
    %c240_i32 = arith.constant 240 : i32
    %54 = tpu.dynamic_rotate %3 by %c240_i32 dim 1 : vector<1x256xf32>, i32 -> vector<1x256xf32>
    %55 = vector.extract_strided_slice %0 {offsets = [17, 0], sizes = [1, 256], strides = [1, 1]} : vector<25x256xf32> to vector<1x256xf32>
    %56 = arith.mulf %54, %55 : vector<1x256xf32>
    %c239_i32 = arith.constant 239 : i32
    %57 = tpu.dynamic_rotate %3 by %c239_i32 dim 1 : vector<1x256xf32>, i32 -> vector<1x256xf32>
    %58 = vector.extract_strided_slice %0 {offsets = [18, 0], sizes = [1, 256], strides = [1, 1]} : vector<25x256xf32> to vector<1x256xf32>
    %59 = arith.mulf %57, %58 : vector<1x256xf32>
    %c238_i32 = arith.constant 238 : i32
    %60 = tpu.dynamic_rotate %3 by %c238_i32 dim 1 : vector<1x256xf32>, i32 -> vector<1x256xf32>
    %61 = vector.extract_strided_slice %0 {offsets = [19, 0], sizes = [1, 256], strides = [1, 1]} : vector<25x256xf32> to vector<1x256xf32>
    %62 = arith.mulf %60, %61 : vector<1x256xf32>
    %c226_i32 = arith.constant 226 : i32
    %63 = tpu.dynamic_rotate %3 by %c226_i32 dim 1 : vector<1x256xf32>, i32 -> vector<1x256xf32>
    %64 = vector.extract_strided_slice %0 {offsets = [20, 0], sizes = [1, 256], strides = [1, 1]} : vector<25x256xf32> to vector<1x256xf32>
    %65 = arith.mulf %63, %64 : vector<1x256xf32>
    %c225_i32 = arith.constant 225 : i32
    %66 = tpu.dynamic_rotate %3 by %c225_i32 dim 1 : vector<1x256xf32>, i32 -> vector<1x256xf32>
    %67 = vector.extract_strided_slice %0 {offsets = [21, 0], sizes = [1, 256], strides = [1, 1]} : vector<25x256xf32> to vector<1x256xf32>
    %68 = arith.mulf %66, %67 : vector<1x256xf32>
    %c224_i32 = arith.constant 224 : i32
    %69 = tpu.dynamic_rotate %3 by %c224_i32 dim 1 : vector<1x256xf32>, i32 -> vector<1x256xf32>
    %70 = vector.extract_strided_slice %0 {offsets = [22, 0], sizes = [1, 256], strides = [1, 1]} : vector<25x256xf32> to vector<1x256xf32>
    %71 = arith.mulf %69, %70 : vector<1x256xf32>
    %c223_i32 = arith.constant 223 : i32
    %72 = tpu.dynamic_rotate %3 by %c223_i32 dim 1 : vector<1x256xf32>, i32 -> vector<1x256xf32>
    %73 = vector.extract_strided_slice %0 {offsets = [23, 0], sizes = [1, 256], strides = [1, 1]} : vector<25x256xf32> to vector<1x256xf32>
    %74 = arith.mulf %72, %73 : vector<1x256xf32>
    %c222_i32 = arith.constant 222 : i32
    %75 = tpu.dynamic_rotate %3 by %c222_i32 dim 1 : vector<1x256xf32>, i32 -> vector<1x256xf32>
    %76 = vector.extract_strided_slice %0 {offsets = [24, 0], sizes = [1, 256], strides = [1, 1]} : vector<25x256xf32> to vector<1x256xf32>
    %77 = arith.mulf %75, %76 : vector<1x256xf32>
    %78 = tpu.concatenate %6, %9, %12, %15, %18, %21, %24, %27, %30, %33, %36, %39, %41, %44, %47, %50 in 0 : vector<1x256xf32>, vector<1x256xf32>, vector<1x256xf32>, vector<1x256xf32>, vector<1x256xf32>, vector<1x256xf32>, vector<1x256xf32>, vector<1x256xf32>, vector<1x256xf32>, vector<1x256xf32>, vector<1x256xf32>, vector<1x256xf32>, vector<1x256xf32>, vector<1x256xf32>, vector<1x256xf32>, vector<1x256xf32> -> vector<16x256xf32>
    %79 = tpu.concatenate %53, %56, %59, %62, %65, %68, %71, %74, %77 in 0 : vector<1x256xf32>, vector<1x256xf32>, vector<1x256xf32>, vector<1x256xf32>, vector<1x256xf32>, vector<1x256xf32>, vector<1x256xf32>, vector<1x256xf32>, vector<1x256xf32> -> vector<9x256xf32>
    %80 = tpu.concatenate %78, %79 in 0 : vector<16x256xf32>, vector<9x256xf32> -> vector<25x256xf32>
    %c0_6 = arith.constant 0 : index
    %c0_7 = arith.constant 0 : index
    %81 = vector.load %arg4[%c0_6, %c0_7] : memref<64x25xf32, #tpu.memory_space<vmem>>, vector<64x25xf32>
    %cst = arith.constant dense<0.000000e+00> : vector<64x256xf32>
    %82 = tpu.matmul %81, %80, %cst {dimension_numbers = #tpu.dot_dimension_numbers<[1], [0], [0], [1], [0, 0, 1, 1], [], []>} : vector<64x25xf32>, vector<25x256xf32>, vector<64x256xf32> -> vector<64x256xf32>
    %c0_8 = arith.constant 0 : index
    %c0_9 = arith.constant 0 : index
    %83 = vector.load %arg5[%c0_8, %c0_9] : memref<64x1xf32, #tpu.memory_space<vmem>>, vector<64x1xf32>
    %84 = vector.broadcast %83 : vector<64x1xf32> to vector<64x256xf32>
    %85 = arith.addf %82, %84 : vector<64x256xf32>
    %cst_10 = arith.constant 0.000000e+00 : f32
    %86 = vector.broadcast %cst_10 : f32 to vector<64x256xf32>
    %87 = arith.maximumf %85, %86 : vector<64x256xf32>
    %c17_i32_11 = arith.constant 17 : i32
    %88 = tpu.dynamic_rotate %87 by %c17_i32_11 dim 1 : vector<64x256xf32>, i32 -> vector<64x256xf32>
    %89 = vector.extract_strided_slice %1 {offsets = [0, 0], sizes = [1, 256], strides = [1, 1]} : vector<9x256xf32> to vector<1x256xf32>
    %90 = vector.broadcast %89 : vector<1x256xf32> to vector<64x256xf32>
    %91 = arith.mulf %88, %90 : vector<64x256xf32>
    %c16_i32_12 = arith.constant 16 : i32
    %92 = tpu.dynamic_rotate %87 by %c16_i32_12 dim 1 : vector<64x256xf32>, i32 -> vector<64x256xf32>
    %93 = vector.extract_strided_slice %1 {offsets = [1, 0], sizes = [1, 256], strides = [1, 1]} : vector<9x256xf32> to vector<1x256xf32>
    %94 = vector.broadcast %93 : vector<1x256xf32> to vector<64x256xf32>
    %95 = arith.mulf %92, %94 : vector<64x256xf32>
    %c15_i32_13 = arith.constant 15 : i32
    %96 = tpu.dynamic_rotate %87 by %c15_i32_13 dim 1 : vector<64x256xf32>, i32 -> vector<64x256xf32>
    %97 = vector.extract_strided_slice %1 {offsets = [2, 0], sizes = [1, 256], strides = [1, 1]} : vector<9x256xf32> to vector<1x256xf32>
    %98 = vector.broadcast %97 : vector<1x256xf32> to vector<64x256xf32>
    %99 = arith.mulf %96, %98 : vector<64x256xf32>
    %c1_i32_14 = arith.constant 1 : i32
    %100 = tpu.dynamic_rotate %87 by %c1_i32_14 dim 1 : vector<64x256xf32>, i32 -> vector<64x256xf32>
    %101 = vector.extract_strided_slice %1 {offsets = [3, 0], sizes = [1, 256], strides = [1, 1]} : vector<9x256xf32> to vector<1x256xf32>
    %102 = vector.broadcast %101 : vector<1x256xf32> to vector<64x256xf32>
    %103 = arith.mulf %100, %102 : vector<64x256xf32>
    %104 = vector.extract_strided_slice %1 {offsets = [4, 0], sizes = [1, 256], strides = [1, 1]} : vector<9x256xf32> to vector<1x256xf32>
    %105 = vector.broadcast %104 : vector<1x256xf32> to vector<64x256xf32>
    %106 = arith.mulf %87, %105 : vector<64x256xf32>
    %c255_i32_15 = arith.constant 255 : i32
    %107 = tpu.dynamic_rotate %87 by %c255_i32_15 dim 1 : vector<64x256xf32>, i32 -> vector<64x256xf32>
    %108 = vector.extract_strided_slice %1 {offsets = [5, 0], sizes = [1, 256], strides = [1, 1]} : vector<9x256xf32> to vector<1x256xf32>
    %109 = vector.broadcast %108 : vector<1x256xf32> to vector<64x256xf32>
    %110 = arith.mulf %107, %109 : vector<64x256xf32>
    %c241_i32_16 = arith.constant 241 : i32
    %111 = tpu.dynamic_rotate %87 by %c241_i32_16 dim 1 : vector<64x256xf32>, i32 -> vector<64x256xf32>
    %112 = vector.extract_strided_slice %1 {offsets = [6, 0], sizes = [1, 256], strides = [1, 1]} : vector<9x256xf32> to vector<1x256xf32>
    %113 = vector.broadcast %112 : vector<1x256xf32> to vector<64x256xf32>
    %114 = arith.mulf %111, %113 : vector<64x256xf32>
    %c240_i32_17 = arith.constant 240 : i32
    %115 = tpu.dynamic_rotate %87 by %c240_i32_17 dim 1 : vector<64x256xf32>, i32 -> vector<64x256xf32>
    %116 = vector.extract_strided_slice %1 {offsets = [7, 0], sizes = [1, 256], strides = [1, 1]} : vector<9x256xf32> to vector<1x256xf32>
    %117 = vector.broadcast %116 : vector<1x256xf32> to vector<64x256xf32>
    %118 = arith.mulf %115, %117 : vector<64x256xf32>
    %c239_i32_18 = arith.constant 239 : i32
    %119 = tpu.dynamic_rotate %87 by %c239_i32_18 dim 1 : vector<64x256xf32>, i32 -> vector<64x256xf32>
    %120 = vector.extract_strided_slice %1 {offsets = [8, 0], sizes = [1, 256], strides = [1, 1]} : vector<9x256xf32> to vector<1x256xf32>
    %121 = vector.broadcast %120 : vector<1x256xf32> to vector<64x256xf32>
    %122 = arith.mulf %119, %121 : vector<64x256xf32>
    %123 = tpu.concatenate %91, %95, %99, %103, %106, %110, %114, %118, %122 in 0 : vector<64x256xf32>, vector<64x256xf32>, vector<64x256xf32>, vector<64x256xf32>, vector<64x256xf32>, vector<64x256xf32>, vector<64x256xf32>, vector<64x256xf32>, vector<64x256xf32> -> vector<576x256xf32>
    %c0_19 = arith.constant 0 : index
    %c0_20 = arith.constant 0 : index
    %124 = vector.load %arg6[%c0_19, %c0_20] : memref<128x576xf32, #tpu.memory_space<vmem>>, vector<128x576xf32>
    %cst_21 = arith.constant dense<0.000000e+00> : vector<128x256xf32>
    %125 = tpu.matmul %124, %123, %cst_21 {dimension_numbers = #tpu.dot_dimension_numbers<[1], [0], [0], [1], [0, 0, 1, 1], [], []>} : vector<128x576xf32>, vector<576x256xf32>, vector<128x256xf32> -> vector<128x256xf32>
    %c0_22 = arith.constant 0 : index
    %c0_23 = arith.constant 0 : index
    %126 = vector.load %arg7[%c0_22, %c0_23] : memref<128x1xf32, #tpu.memory_space<vmem>>, vector<128x1xf32>
    %127 = vector.broadcast %126 : vector<128x1xf32> to vector<128x256xf32>
    %128 = arith.addf %125, %127 : vector<128x256xf32>
    %cst_24 = arith.constant 0.000000e+00 : f32
    %129 = vector.broadcast %cst_24 : f32 to vector<128x256xf32>
    %130 = arith.maximumf %128, %129 : vector<128x256xf32>
    %c17_i32_25 = arith.constant 17 : i32
    %131 = tpu.dynamic_rotate %130 by %c17_i32_25 dim 1 : vector<128x256xf32>, i32 -> vector<128x256xf32>
    %132 = vector.extract_strided_slice %1 {offsets = [0, 0], sizes = [1, 256], strides = [1, 1]} : vector<9x256xf32> to vector<1x256xf32>
    %133 = vector.broadcast %132 : vector<1x256xf32> to vector<128x256xf32>
    %134 = arith.mulf %131, %133 : vector<128x256xf32>
    %c16_i32_26 = arith.constant 16 : i32
    %135 = tpu.dynamic_rotate %130 by %c16_i32_26 dim 1 : vector<128x256xf32>, i32 -> vector<128x256xf32>
    %136 = vector.extract_strided_slice %1 {offsets = [1, 0], sizes = [1, 256], strides = [1, 1]} : vector<9x256xf32> to vector<1x256xf32>
    %137 = vector.broadcast %136 : vector<1x256xf32> to vector<128x256xf32>
    %138 = arith.mulf %135, %137 : vector<128x256xf32>
    %c15_i32_27 = arith.constant 15 : i32
    %139 = tpu.dynamic_rotate %130 by %c15_i32_27 dim 1 : vector<128x256xf32>, i32 -> vector<128x256xf32>
    %140 = vector.extract_strided_slice %1 {offsets = [2, 0], sizes = [1, 256], strides = [1, 1]} : vector<9x256xf32> to vector<1x256xf32>
    %141 = vector.broadcast %140 : vector<1x256xf32> to vector<128x256xf32>
    %142 = arith.mulf %139, %141 : vector<128x256xf32>
    %c1_i32_28 = arith.constant 1 : i32
    %143 = tpu.dynamic_rotate %130 by %c1_i32_28 dim 1 : vector<128x256xf32>, i32 -> vector<128x256xf32>
    %144 = vector.extract_strided_slice %1 {offsets = [3, 0], sizes = [1, 256], strides = [1, 1]} : vector<9x256xf32> to vector<1x256xf32>
    %145 = vector.broadcast %144 : vector<1x256xf32> to vector<128x256xf32>
    %146 = arith.mulf %143, %145 : vector<128x256xf32>
    %147 = vector.extract_strided_slice %1 {offsets = [4, 0], sizes = [1, 256], strides = [1, 1]} : vector<9x256xf32> to vector<1x256xf32>
    %148 = vector.broadcast %147 : vector<1x256xf32> to vector<128x256xf32>
    %149 = arith.mulf %130, %148 : vector<128x256xf32>
    %c255_i32_29 = arith.constant 255 : i32
    %150 = tpu.dynamic_rotate %130 by %c255_i32_29 dim 1 : vector<128x256xf32>, i32 -> vector<128x256xf32>
    %151 = vector.extract_strided_slice %1 {offsets = [5, 0], sizes = [1, 256], strides = [1, 1]} : vector<9x256xf32> to vector<1x256xf32>
    %152 = vector.broadcast %151 : vector<1x256xf32> to vector<128x256xf32>
    %153 = arith.mulf %150, %152 : vector<128x256xf32>
    %c241_i32_30 = arith.constant 241 : i32
    %154 = tpu.dynamic_rotate %130 by %c241_i32_30 dim 1 : vector<128x256xf32>, i32 -> vector<128x256xf32>
    %155 = vector.extract_strided_slice %1 {offsets = [6, 0], sizes = [1, 256], strides = [1, 1]} : vector<9x256xf32> to vector<1x256xf32>
    %156 = vector.broadcast %155 : vector<1x256xf32> to vector<128x256xf32>
    %157 = arith.mulf %154, %156 : vector<128x256xf32>
    %c240_i32_31 = arith.constant 240 : i32
    %158 = tpu.dynamic_rotate %130 by %c240_i32_31 dim 1 : vector<128x256xf32>, i32 -> vector<128x256xf32>
    %159 = vector.extract_strided_slice %1 {offsets = [7, 0], sizes = [1, 256], strides = [1, 1]} : vector<9x256xf32> to vector<1x256xf32>
    %160 = vector.broadcast %159 : vector<1x256xf32> to vector<128x256xf32>
    %161 = arith.mulf %158, %160 : vector<128x256xf32>
    %c239_i32_32 = arith.constant 239 : i32
    %162 = tpu.dynamic_rotate %130 by %c239_i32_32 dim 1 : vector<128x256xf32>, i32 -> vector<128x256xf32>
    %163 = vector.extract_strided_slice %1 {offsets = [8, 0], sizes = [1, 256], strides = [1, 1]} : vector<9x256xf32> to vector<1x256xf32>
    %164 = vector.broadcast %163 : vector<1x256xf32> to vector<128x256xf32>
    %165 = arith.mulf %162, %164 : vector<128x256xf32>
    %166 = tpu.concatenate %134, %138, %142, %146, %149, %153, %157, %161, %165 in 0 : vector<128x256xf32>, vector<128x256xf32>, vector<128x256xf32>, vector<128x256xf32>, vector<128x256xf32>, vector<128x256xf32>, vector<128x256xf32>, vector<128x256xf32>, vector<128x256xf32> -> vector<1152x256xf32>
    %c0_33 = arith.constant 0 : index
    %c0_34 = arith.constant 0 : index
    %167 = vector.load %arg8[%c0_33, %c0_34] : memref<64x1152xf32, #tpu.memory_space<vmem>>, vector<64x1152xf32>
    %cst_35 = arith.constant dense<0.000000e+00> : vector<64x256xf32>
    %168 = tpu.matmul %167, %166, %cst_35 {dimension_numbers = #tpu.dot_dimension_numbers<[1], [0], [0], [1], [0, 0, 1, 1], [], []>} : vector<64x1152xf32>, vector<1152x256xf32>, vector<64x256xf32> -> vector<64x256xf32>
    %c0_36 = arith.constant 0 : index
    %c0_37 = arith.constant 0 : index
    %169 = vector.load %arg9[%c0_36, %c0_37] : memref<64x1xf32, #tpu.memory_space<vmem>>, vector<64x1xf32>
    %170 = vector.broadcast %169 : vector<64x1xf32> to vector<64x256xf32>
    %171 = arith.addf %168, %170 : vector<64x256xf32>
    %cst_38 = arith.constant 0.000000e+00 : f32
    %172 = vector.broadcast %cst_38 : f32 to vector<64x256xf32>
    %173 = arith.maximumf %171, %172 : vector<64x256xf32>
    %c17_i32_39 = arith.constant 17 : i32
    %174 = tpu.dynamic_rotate %173 by %c17_i32_39 dim 1 : vector<64x256xf32>, i32 -> vector<64x256xf32>
    %175 = vector.extract_strided_slice %1 {offsets = [0, 0], sizes = [1, 256], strides = [1, 1]} : vector<9x256xf32> to vector<1x256xf32>
    %176 = vector.broadcast %175 : vector<1x256xf32> to vector<64x256xf32>
    %177 = arith.mulf %174, %176 : vector<64x256xf32>
    %c16_i32_40 = arith.constant 16 : i32
    %178 = tpu.dynamic_rotate %173 by %c16_i32_40 dim 1 : vector<64x256xf32>, i32 -> vector<64x256xf32>
    %179 = vector.extract_strided_slice %1 {offsets = [1, 0], sizes = [1, 256], strides = [1, 1]} : vector<9x256xf32> to vector<1x256xf32>
    %180 = vector.broadcast %179 : vector<1x256xf32> to vector<64x256xf32>
    %181 = arith.mulf %178, %180 : vector<64x256xf32>
    %c15_i32_41 = arith.constant 15 : i32
    %182 = tpu.dynamic_rotate %173 by %c15_i32_41 dim 1 : vector<64x256xf32>, i32 -> vector<64x256xf32>
    %183 = vector.extract_strided_slice %1 {offsets = [2, 0], sizes = [1, 256], strides = [1, 1]} : vector<9x256xf32> to vector<1x256xf32>
    %184 = vector.broadcast %183 : vector<1x256xf32> to vector<64x256xf32>
    %185 = arith.mulf %182, %184 : vector<64x256xf32>
    %c1_i32_42 = arith.constant 1 : i32
    %186 = tpu.dynamic_rotate %173 by %c1_i32_42 dim 1 : vector<64x256xf32>, i32 -> vector<64x256xf32>
    %187 = vector.extract_strided_slice %1 {offsets = [3, 0], sizes = [1, 256], strides = [1, 1]} : vector<9x256xf32> to vector<1x256xf32>
    %188 = vector.broadcast %187 : vector<1x256xf32> to vector<64x256xf32>
    %189 = arith.mulf %186, %188 : vector<64x256xf32>
    %190 = vector.extract_strided_slice %1 {offsets = [4, 0], sizes = [1, 256], strides = [1, 1]} : vector<9x256xf32> to vector<1x256xf32>
    %191 = vector.broadcast %190 : vector<1x256xf32> to vector<64x256xf32>
    %192 = arith.mulf %173, %191 : vector<64x256xf32>
    %c255_i32_43 = arith.constant 255 : i32
    %193 = tpu.dynamic_rotate %173 by %c255_i32_43 dim 1 : vector<64x256xf32>, i32 -> vector<64x256xf32>
    %194 = vector.extract_strided_slice %1 {offsets = [5, 0], sizes = [1, 256], strides = [1, 1]} : vector<9x256xf32> to vector<1x256xf32>
    %195 = vector.broadcast %194 : vector<1x256xf32> to vector<64x256xf32>
    %196 = arith.mulf %193, %195 : vector<64x256xf32>
    %c241_i32_44 = arith.constant 241 : i32
    %197 = tpu.dynamic_rotate %173 by %c241_i32_44 dim 1 : vector<64x256xf32>, i32 -> vector<64x256xf32>
    %198 = vector.extract_strided_slice %1 {offsets = [6, 0], sizes = [1, 256], strides = [1, 1]} : vector<9x256xf32> to vector<1x256xf32>
    %199 = vector.broadcast %198 : vector<1x256xf32> to vector<64x256xf32>
    %200 = arith.mulf %197, %199 : vector<64x256xf32>
    %c240_i32_45 = arith.constant 240 : i32
    %201 = tpu.dynamic_rotate %173 by %c240_i32_45 dim 1 : vector<64x256xf32>, i32 -> vector<64x256xf32>
    %202 = vector.extract_strided_slice %1 {offsets = [7, 0], sizes = [1, 256], strides = [1, 1]} : vector<9x256xf32> to vector<1x256xf32>
    %203 = vector.broadcast %202 : vector<1x256xf32> to vector<64x256xf32>
    %204 = arith.mulf %201, %203 : vector<64x256xf32>
    %c239_i32_46 = arith.constant 239 : i32
    %205 = tpu.dynamic_rotate %173 by %c239_i32_46 dim 1 : vector<64x256xf32>, i32 -> vector<64x256xf32>
    %206 = vector.extract_strided_slice %1 {offsets = [8, 0], sizes = [1, 256], strides = [1, 1]} : vector<9x256xf32> to vector<1x256xf32>
    %207 = vector.broadcast %206 : vector<1x256xf32> to vector<64x256xf32>
    %208 = arith.mulf %205, %207 : vector<64x256xf32>
    %209 = tpu.concatenate %177, %181, %185, %189, %192, %196, %200, %204, %208 in 0 : vector<64x256xf32>, vector<64x256xf32>, vector<64x256xf32>, vector<64x256xf32>, vector<64x256xf32>, vector<64x256xf32>, vector<64x256xf32>, vector<64x256xf32>, vector<64x256xf32> -> vector<576x256xf32>
    %c0_47 = arith.constant 0 : index
    %c0_48 = arith.constant 0 : index
    %210 = vector.load %arg10[%c0_47, %c0_48] : memref<64x576xf32, #tpu.memory_space<vmem>>, vector<64x576xf32>
    %cst_49 = arith.constant dense<0.000000e+00> : vector<64x256xf32>
    %211 = tpu.matmul %210, %209, %cst_49 {dimension_numbers = #tpu.dot_dimension_numbers<[1], [0], [0], [1], [0, 0, 1, 1], [], []>} : vector<64x576xf32>, vector<576x256xf32>, vector<64x256xf32> -> vector<64x256xf32>
    %c0_50 = arith.constant 0 : index
    %c0_51 = arith.constant 0 : index
    %212 = vector.load %arg11[%c0_50, %c0_51] : memref<64x1xf32, #tpu.memory_space<vmem>>, vector<64x1xf32>
    %213 = vector.broadcast %212 : vector<64x1xf32> to vector<64x256xf32>
    %214 = arith.addf %211, %213 : vector<64x256xf32>
    %cst_52 = arith.constant 0.000000e+00 : f32
    %215 = vector.broadcast %cst_52 : f32 to vector<64x256xf32>
    %216 = arith.maximumf %214, %215 : vector<64x256xf32>
    %c17_i32_53 = arith.constant 17 : i32
    %217 = tpu.dynamic_rotate %216 by %c17_i32_53 dim 1 : vector<64x256xf32>, i32 -> vector<64x256xf32>
    %218 = vector.extract_strided_slice %1 {offsets = [0, 0], sizes = [1, 256], strides = [1, 1]} : vector<9x256xf32> to vector<1x256xf32>
    %219 = vector.broadcast %218 : vector<1x256xf32> to vector<64x256xf32>
    %220 = arith.mulf %217, %219 : vector<64x256xf32>
    %c16_i32_54 = arith.constant 16 : i32
    %221 = tpu.dynamic_rotate %216 by %c16_i32_54 dim 1 : vector<64x256xf32>, i32 -> vector<64x256xf32>
    %222 = vector.extract_strided_slice %1 {offsets = [1, 0], sizes = [1, 256], strides = [1, 1]} : vector<9x256xf32> to vector<1x256xf32>
    %223 = vector.broadcast %222 : vector<1x256xf32> to vector<64x256xf32>
    %224 = arith.mulf %221, %223 : vector<64x256xf32>
    %c15_i32_55 = arith.constant 15 : i32
    %225 = tpu.dynamic_rotate %216 by %c15_i32_55 dim 1 : vector<64x256xf32>, i32 -> vector<64x256xf32>
    %226 = vector.extract_strided_slice %1 {offsets = [2, 0], sizes = [1, 256], strides = [1, 1]} : vector<9x256xf32> to vector<1x256xf32>
    %227 = vector.broadcast %226 : vector<1x256xf32> to vector<64x256xf32>
    %228 = arith.mulf %225, %227 : vector<64x256xf32>
    %c1_i32_56 = arith.constant 1 : i32
    %229 = tpu.dynamic_rotate %216 by %c1_i32_56 dim 1 : vector<64x256xf32>, i32 -> vector<64x256xf32>
    %230 = vector.extract_strided_slice %1 {offsets = [3, 0], sizes = [1, 256], strides = [1, 1]} : vector<9x256xf32> to vector<1x256xf32>
    %231 = vector.broadcast %230 : vector<1x256xf32> to vector<64x256xf32>
    %232 = arith.mulf %229, %231 : vector<64x256xf32>
    %233 = vector.extract_strided_slice %1 {offsets = [4, 0], sizes = [1, 256], strides = [1, 1]} : vector<9x256xf32> to vector<1x256xf32>
    %234 = vector.broadcast %233 : vector<1x256xf32> to vector<64x256xf32>
    %235 = arith.mulf %216, %234 : vector<64x256xf32>
    %c255_i32_57 = arith.constant 255 : i32
    %236 = tpu.dynamic_rotate %216 by %c255_i32_57 dim 1 : vector<64x256xf32>, i32 -> vector<64x256xf32>
    %237 = vector.extract_strided_slice %1 {offsets = [5, 0], sizes = [1, 256], strides = [1, 1]} : vector<9x256xf32> to vector<1x256xf32>
    %238 = vector.broadcast %237 : vector<1x256xf32> to vector<64x256xf32>
    %239 = arith.mulf %236, %238 : vector<64x256xf32>
    %c241_i32_58 = arith.constant 241 : i32
    %240 = tpu.dynamic_rotate %216 by %c241_i32_58 dim 1 : vector<64x256xf32>, i32 -> vector<64x256xf32>
    %241 = vector.extract_strided_slice %1 {offsets = [6, 0], sizes = [1, 256], strides = [1, 1]} : vector<9x256xf32> to vector<1x256xf32>
    %242 = vector.broadcast %241 : vector<1x256xf32> to vector<64x256xf32>
    %243 = arith.mulf %240, %242 : vector<64x256xf32>
    %c240_i32_59 = arith.constant 240 : i32
    %244 = tpu.dynamic_rotate %216 by %c240_i32_59 dim 1 : vector<64x256xf32>, i32 -> vector<64x256xf32>
    %245 = vector.extract_strided_slice %1 {offsets = [7, 0], sizes = [1, 256], strides = [1, 1]} : vector<9x256xf32> to vector<1x256xf32>
    %246 = vector.broadcast %245 : vector<1x256xf32> to vector<64x256xf32>
    %247 = arith.mulf %244, %246 : vector<64x256xf32>
    %c239_i32_60 = arith.constant 239 : i32
    %248 = tpu.dynamic_rotate %216 by %c239_i32_60 dim 1 : vector<64x256xf32>, i32 -> vector<64x256xf32>
    %249 = vector.extract_strided_slice %1 {offsets = [8, 0], sizes = [1, 256], strides = [1, 1]} : vector<9x256xf32> to vector<1x256xf32>
    %250 = vector.broadcast %249 : vector<1x256xf32> to vector<64x256xf32>
    %251 = arith.mulf %248, %250 : vector<64x256xf32>
    %252 = tpu.concatenate %220, %224, %228, %232, %235, %239, %243, %247, %251 in 0 : vector<64x256xf32>, vector<64x256xf32>, vector<64x256xf32>, vector<64x256xf32>, vector<64x256xf32>, vector<64x256xf32>, vector<64x256xf32>, vector<64x256xf32>, vector<64x256xf32> -> vector<576x256xf32>
    %c0_61 = arith.constant 0 : index
    %c0_62 = arith.constant 0 : index
    %253 = vector.load %arg12[%c0_61, %c0_62] : memref<64x576xf32, #tpu.memory_space<vmem>>, vector<64x576xf32>
    %cst_63 = arith.constant dense<0.000000e+00> : vector<64x256xf32>
    %254 = tpu.matmul %253, %252, %cst_63 {dimension_numbers = #tpu.dot_dimension_numbers<[1], [0], [0], [1], [0, 0, 1, 1], [], []>} : vector<64x576xf32>, vector<576x256xf32>, vector<64x256xf32> -> vector<64x256xf32>
    %c0_64 = arith.constant 0 : index
    %c0_65 = arith.constant 0 : index
    %255 = vector.load %arg13[%c0_64, %c0_65] : memref<64x1xf32, #tpu.memory_space<vmem>>, vector<64x1xf32>
    %256 = vector.broadcast %255 : vector<64x1xf32> to vector<64x256xf32>
    %257 = arith.addf %254, %256 : vector<64x256xf32>
    %cst_66 = arith.constant 0.000000e+00 : f32
    %258 = vector.broadcast %cst_66 : f32 to vector<64x256xf32>
    %259 = arith.maximumf %257, %258 : vector<64x256xf32>
    %c17_i32_67 = arith.constant 17 : i32
    %260 = tpu.dynamic_rotate %259 by %c17_i32_67 dim 1 : vector<64x256xf32>, i32 -> vector<64x256xf32>
    %261 = vector.extract_strided_slice %1 {offsets = [0, 0], sizes = [1, 256], strides = [1, 1]} : vector<9x256xf32> to vector<1x256xf32>
    %262 = vector.broadcast %261 : vector<1x256xf32> to vector<64x256xf32>
    %263 = arith.mulf %260, %262 : vector<64x256xf32>
    %c16_i32_68 = arith.constant 16 : i32
    %264 = tpu.dynamic_rotate %259 by %c16_i32_68 dim 1 : vector<64x256xf32>, i32 -> vector<64x256xf32>
    %265 = vector.extract_strided_slice %1 {offsets = [1, 0], sizes = [1, 256], strides = [1, 1]} : vector<9x256xf32> to vector<1x256xf32>
    %266 = vector.broadcast %265 : vector<1x256xf32> to vector<64x256xf32>
    %267 = arith.mulf %264, %266 : vector<64x256xf32>
    %c15_i32_69 = arith.constant 15 : i32
    %268 = tpu.dynamic_rotate %259 by %c15_i32_69 dim 1 : vector<64x256xf32>, i32 -> vector<64x256xf32>
    %269 = vector.extract_strided_slice %1 {offsets = [2, 0], sizes = [1, 256], strides = [1, 1]} : vector<9x256xf32> to vector<1x256xf32>
    %270 = vector.broadcast %269 : vector<1x256xf32> to vector<64x256xf32>
    %271 = arith.mulf %268, %270 : vector<64x256xf32>
    %c1_i32_70 = arith.constant 1 : i32
    %272 = tpu.dynamic_rotate %259 by %c1_i32_70 dim 1 : vector<64x256xf32>, i32 -> vector<64x256xf32>
    %273 = vector.extract_strided_slice %1 {offsets = [3, 0], sizes = [1, 256], strides = [1, 1]} : vector<9x256xf32> to vector<1x256xf32>
    %274 = vector.broadcast %273 : vector<1x256xf32> to vector<64x256xf32>
    %275 = arith.mulf %272, %274 : vector<64x256xf32>
    %276 = vector.extract_strided_slice %1 {offsets = [4, 0], sizes = [1, 256], strides = [1, 1]} : vector<9x256xf32> to vector<1x256xf32>
    %277 = vector.broadcast %276 : vector<1x256xf32> to vector<64x256xf32>
    %278 = arith.mulf %259, %277 : vector<64x256xf32>
    %c255_i32_71 = arith.constant 255 : i32
    %279 = tpu.dynamic_rotate %259 by %c255_i32_71 dim 1 : vector<64x256xf32>, i32 -> vector<64x256xf32>
    %280 = vector.extract_strided_slice %1 {offsets = [5, 0], sizes = [1, 256], strides = [1, 1]} : vector<9x256xf32> to vector<1x256xf32>
    %281 = vector.broadcast %280 : vector<1x256xf32> to vector<64x256xf32>
    %282 = arith.mulf %279, %281 : vector<64x256xf32>
    %c241_i32_72 = arith.constant 241 : i32
    %283 = tpu.dynamic_rotate %259 by %c241_i32_72 dim 1 : vector<64x256xf32>, i32 -> vector<64x256xf32>
    %284 = vector.extract_strided_slice %1 {offsets = [6, 0], sizes = [1, 256], strides = [1, 1]} : vector<9x256xf32> to vector<1x256xf32>
    %285 = vector.broadcast %284 : vector<1x256xf32> to vector<64x256xf32>
    %286 = arith.mulf %283, %285 : vector<64x256xf32>
    %c240_i32_73 = arith.constant 240 : i32
    %287 = tpu.dynamic_rotate %259 by %c240_i32_73 dim 1 : vector<64x256xf32>, i32 -> vector<64x256xf32>
    %288 = vector.extract_strided_slice %1 {offsets = [7, 0], sizes = [1, 256], strides = [1, 1]} : vector<9x256xf32> to vector<1x256xf32>
    %289 = vector.broadcast %288 : vector<1x256xf32> to vector<64x256xf32>
    %290 = arith.mulf %287, %289 : vector<64x256xf32>
    %c239_i32_74 = arith.constant 239 : i32
    %291 = tpu.dynamic_rotate %259 by %c239_i32_74 dim 1 : vector<64x256xf32>, i32 -> vector<64x256xf32>
    %292 = vector.extract_strided_slice %1 {offsets = [8, 0], sizes = [1, 256], strides = [1, 1]} : vector<9x256xf32> to vector<1x256xf32>
    %293 = vector.broadcast %292 : vector<1x256xf32> to vector<64x256xf32>
    %294 = arith.mulf %291, %293 : vector<64x256xf32>
    %295 = tpu.concatenate %263, %267, %271, %275, %278, %282, %286, %290, %294 in 0 : vector<64x256xf32>, vector<64x256xf32>, vector<64x256xf32>, vector<64x256xf32>, vector<64x256xf32>, vector<64x256xf32>, vector<64x256xf32>, vector<64x256xf32>, vector<64x256xf32> -> vector<576x256xf32>
    %c0_75 = arith.constant 0 : index
    %c0_76 = arith.constant 0 : index
    %296 = vector.load %arg14[%c0_75, %c0_76] : memref<64x576xf32, #tpu.memory_space<vmem>>, vector<64x576xf32>
    %cst_77 = arith.constant dense<0.000000e+00> : vector<64x256xf32>
    %297 = tpu.matmul %296, %295, %cst_77 {dimension_numbers = #tpu.dot_dimension_numbers<[1], [0], [0], [1], [0, 0, 1, 1], [], []>} : vector<64x576xf32>, vector<576x256xf32>, vector<64x256xf32> -> vector<64x256xf32>
    %c0_78 = arith.constant 0 : index
    %c0_79 = arith.constant 0 : index
    %298 = vector.load %arg15[%c0_78, %c0_79] : memref<64x1xf32, #tpu.memory_space<vmem>>, vector<64x1xf32>
    %299 = vector.broadcast %298 : vector<64x1xf32> to vector<64x256xf32>
    %300 = arith.addf %297, %299 : vector<64x256xf32>
    %301 = arith.addf %216, %300 : vector<64x256xf32>
    %c17_i32_80 = arith.constant 17 : i32
    %302 = tpu.dynamic_rotate %301 by %c17_i32_80 dim 1 : vector<64x256xf32>, i32 -> vector<64x256xf32>
    %303 = vector.extract_strided_slice %1 {offsets = [0, 0], sizes = [1, 256], strides = [1, 1]} : vector<9x256xf32> to vector<1x256xf32>
    %304 = vector.broadcast %303 : vector<1x256xf32> to vector<64x256xf32>
    %305 = arith.mulf %302, %304 : vector<64x256xf32>
    %c16_i32_81 = arith.constant 16 : i32
    %306 = tpu.dynamic_rotate %301 by %c16_i32_81 dim 1 : vector<64x256xf32>, i32 -> vector<64x256xf32>
    %307 = vector.extract_strided_slice %1 {offsets = [1, 0], sizes = [1, 256], strides = [1, 1]} : vector<9x256xf32> to vector<1x256xf32>
    %308 = vector.broadcast %307 : vector<1x256xf32> to vector<64x256xf32>
    %309 = arith.mulf %306, %308 : vector<64x256xf32>
    %c15_i32_82 = arith.constant 15 : i32
    %310 = tpu.dynamic_rotate %301 by %c15_i32_82 dim 1 : vector<64x256xf32>, i32 -> vector<64x256xf32>
    %311 = vector.extract_strided_slice %1 {offsets = [2, 0], sizes = [1, 256], strides = [1, 1]} : vector<9x256xf32> to vector<1x256xf32>
    %312 = vector.broadcast %311 : vector<1x256xf32> to vector<64x256xf32>
    %313 = arith.mulf %310, %312 : vector<64x256xf32>
    %c1_i32_83 = arith.constant 1 : i32
    %314 = tpu.dynamic_rotate %301 by %c1_i32_83 dim 1 : vector<64x256xf32>, i32 -> vector<64x256xf32>
    %315 = vector.extract_strided_slice %1 {offsets = [3, 0], sizes = [1, 256], strides = [1, 1]} : vector<9x256xf32> to vector<1x256xf32>
    %316 = vector.broadcast %315 : vector<1x256xf32> to vector<64x256xf32>
    %317 = arith.mulf %314, %316 : vector<64x256xf32>
    %318 = vector.extract_strided_slice %1 {offsets = [4, 0], sizes = [1, 256], strides = [1, 1]} : vector<9x256xf32> to vector<1x256xf32>
    %319 = vector.broadcast %318 : vector<1x256xf32> to vector<64x256xf32>
    %320 = arith.mulf %301, %319 : vector<64x256xf32>
    %c255_i32_84 = arith.constant 255 : i32
    %321 = tpu.dynamic_rotate %301 by %c255_i32_84 dim 1 : vector<64x256xf32>, i32 -> vector<64x256xf32>
    %322 = vector.extract_strided_slice %1 {offsets = [5, 0], sizes = [1, 256], strides = [1, 1]} : vector<9x256xf32> to vector<1x256xf32>
    %323 = vector.broadcast %322 : vector<1x256xf32> to vector<64x256xf32>
    %324 = arith.mulf %321, %323 : vector<64x256xf32>
    %c241_i32_85 = arith.constant 241 : i32
    %325 = tpu.dynamic_rotate %301 by %c241_i32_85 dim 1 : vector<64x256xf32>, i32 -> vector<64x256xf32>
    %326 = vector.extract_strided_slice %1 {offsets = [6, 0], sizes = [1, 256], strides = [1, 1]} : vector<9x256xf32> to vector<1x256xf32>
    %327 = vector.broadcast %326 : vector<1x256xf32> to vector<64x256xf32>
    %328 = arith.mulf %325, %327 : vector<64x256xf32>
    %c240_i32_86 = arith.constant 240 : i32
    %329 = tpu.dynamic_rotate %301 by %c240_i32_86 dim 1 : vector<64x256xf32>, i32 -> vector<64x256xf32>
    %330 = vector.extract_strided_slice %1 {offsets = [7, 0], sizes = [1, 256], strides = [1, 1]} : vector<9x256xf32> to vector<1x256xf32>
    %331 = vector.broadcast %330 : vector<1x256xf32> to vector<64x256xf32>
    %332 = arith.mulf %329, %331 : vector<64x256xf32>
    %c239_i32_87 = arith.constant 239 : i32
    %333 = tpu.dynamic_rotate %301 by %c239_i32_87 dim 1 : vector<64x256xf32>, i32 -> vector<64x256xf32>
    %334 = vector.extract_strided_slice %1 {offsets = [8, 0], sizes = [1, 256], strides = [1, 1]} : vector<9x256xf32> to vector<1x256xf32>
    %335 = vector.broadcast %334 : vector<1x256xf32> to vector<64x256xf32>
    %336 = arith.mulf %333, %335 : vector<64x256xf32>
    %337 = tpu.concatenate %305, %309, %313, %317, %320, %324, %328, %332, %336 in 0 : vector<64x256xf32>, vector<64x256xf32>, vector<64x256xf32>, vector<64x256xf32>, vector<64x256xf32>, vector<64x256xf32>, vector<64x256xf32>, vector<64x256xf32>, vector<64x256xf32> -> vector<576x256xf32>
    %c0_88 = arith.constant 0 : index
    %c0_89 = arith.constant 0 : index
    %338 = vector.load %arg16[%c0_88, %c0_89] : memref<16x576xf32, #tpu.memory_space<vmem>>, vector<16x576xf32>
    %cst_90 = arith.constant dense<0.000000e+00> : vector<16x256xf32>
    %339 = tpu.matmul %338, %337, %cst_90 {dimension_numbers = #tpu.dot_dimension_numbers<[1], [0], [0], [1], [0, 0, 1, 1], [], []>} : vector<16x576xf32>, vector<576x256xf32>, vector<16x256xf32> -> vector<16x256xf32>
    %c0_91 = arith.constant 0 : index
    %c0_92 = arith.constant 0 : index
    %340 = vector.load %arg17[%c0_91, %c0_92] : memref<16x1xf32, #tpu.memory_space<vmem>>, vector<16x1xf32>
    %341 = vector.broadcast %340 : vector<16x1xf32> to vector<16x256xf32>
    %342 = arith.addf %339, %341 : vector<16x256xf32>
    %cst_93 = arith.constant 0.000000e+00 : f32
    %cst_94 = arith.constant 1.000000e+00 : f32
    %343 = vector.broadcast %cst_93 : f32 to vector<16x256xf32>
    %344 = arith.maximumf %343, %342 : vector<16x256xf32>
    %345 = vector.broadcast %cst_94 : f32 to vector<16x256xf32>
    %346 = arith.minimumf %345, %344 : vector<16x256xf32>
    %347 = vector.shape_cast %346 : vector<16x256xf32> to vector<1x16x256xf32>
    %c0_95 = arith.constant 0 : index
    %c0_96 = arith.constant 0 : index
    %c0_97 = arith.constant 0 : index
    %348 = vector.load %arg18[%c0_95, %c0_96, %c0_97] : memref<1x16x256xf32, #tpu.memory_space<vmem>>, vector<1x16x256xf32>
    tpu.vector_store %arg18[%c0_95, %c0_96, %c0_97], %347 {strides = array<i32>} : memref<1x16x256xf32, #tpu.memory_space<vmem>>, vector<1x16x256xf32>,
    return
  }
  func.func @transform_0(%arg0: i32) -> (i32, i32, i32) {
    %c0_i32 = arith.constant 0 : i32
    %c0_i32_0 = arith.constant 0 : i32
    %c0_i32_1 = arith.constant 0 : i32
    return %arg0, %c0_i32, %c0_i32_0 : i32, i32, i32
  }
  func.func @transform_1(%arg0: i32) -> (i32, i32) {
    %c0_i32 = arith.constant 0 : i32
    %c0_i32_0 = arith.constant 0 : i32
    %c0_i32_1 = arith.constant 0 : i32
    return %c0_i32, %c0_i32_0 : i32, i32
  }
  func.func @transform_2(%arg0: i32) -> (i32, i32) {
    %c0_i32 = arith.constant 0 : i32
    %c0_i32_0 = arith.constant 0 : i32
    %c0_i32_1 = arith.constant 0 : i32
    return %c0_i32, %c0_i32_0 : i32, i32
  }
  func.func @transform_3(%arg0: i32) -> (i32, i32) {
    %c0_i32 = arith.constant 0 : i32
    %c0_i32_0 = arith.constant 0 : i32
    %c0_i32_1 = arith.constant 0 : i32
    return %c0_i32, %c0_i32_0 : i32, i32
  }
  func.func @transform_4(%arg0: i32) -> (i32, i32) {
    %c0_i32 = arith.constant 0 : i32
    %c0_i32_0 = arith.constant 0 : i32
    %c0_i32_1 = arith.constant 0 : i32
    return %c0_i32, %c0_i32_0 : i32, i32
  }
  func.func @transform_5(%arg0: i32) -> (i32, i32) {
    %c0_i32 = arith.constant 0 : i32
    %c0_i32_0 = arith.constant 0 : i32
    %c0_i32_1 = arith.constant 0 : i32
    return %c0_i32, %c0_i32_0 : i32, i32
  }
  func.func @transform_6(%arg0: i32) -> (i32, i32) {
    %c0_i32 = arith.constant 0 : i32
    %c0_i32_0 = arith.constant 0 : i32
    %c0_i32_1 = arith.constant 0 : i32
    return %c0_i32, %c0_i32_0 : i32, i32
  }
  func.func @transform_7(%arg0: i32) -> (i32, i32) {
    %c0_i32 = arith.constant 0 : i32
    %c0_i32_0 = arith.constant 0 : i32
    %c0_i32_1 = arith.constant 0 : i32
    return %c0_i32, %c0_i32_0 : i32, i32
  }
  func.func @transform_8(%arg0: i32) -> (i32, i32) {
    %c0_i32 = arith.constant 0 : i32
    %c0_i32_0 = arith.constant 0 : i32
    %c0_i32_1 = arith.constant 0 : i32
    return %c0_i32, %c0_i32_0 : i32, i32
  }
  func.func @transform_9(%arg0: i32) -> (i32, i32) {
    %c0_i32 = arith.constant 0 : i32
    %c0_i32_0 = arith.constant 0 : i32
    %c0_i32_1 = arith.constant 0 : i32
    return %c0_i32, %c0_i32_0 : i32, i32
  }
  func.func @transform_10(%arg0: i32) -> (i32, i32) {
    %c0_i32 = arith.constant 0 : i32
    %c0_i32_0 = arith.constant 0 : i32
    %c0_i32_1 = arith.constant 0 : i32
    return %c0_i32, %c0_i32_0 : i32, i32
  }
  func.func @transform_11(%arg0: i32) -> (i32, i32) {
    %c0_i32 = arith.constant 0 : i32
    %c0_i32_0 = arith.constant 0 : i32
    %c0_i32_1 = arith.constant 0 : i32
    return %c0_i32, %c0_i32_0 : i32, i32
  }
  func.func @transform_12(%arg0: i32) -> (i32, i32) {
    %c0_i32 = arith.constant 0 : i32
    %c0_i32_0 = arith.constant 0 : i32
    %c0_i32_1 = arith.constant 0 : i32
    return %c0_i32, %c0_i32_0 : i32, i32
  }
  func.func @transform_13(%arg0: i32) -> (i32, i32) {
    %c0_i32 = arith.constant 0 : i32
    %c0_i32_0 = arith.constant 0 : i32
    %c0_i32_1 = arith.constant 0 : i32
    return %c0_i32, %c0_i32_0 : i32, i32
  }
  func.func @transform_14(%arg0: i32) -> (i32, i32) {
    %c0_i32 = arith.constant 0 : i32
    %c0_i32_0 = arith.constant 0 : i32
    %c0_i32_1 = arith.constant 0 : i32
    return %c0_i32, %c0_i32_0 : i32, i32
  }
  func.func @transform_15(%arg0: i32) -> (i32, i32) {
    %c0_i32 = arith.constant 0 : i32
    %c0_i32_0 = arith.constant 0 : i32
    %c0_i32_1 = arith.constant 0 : i32
    return %c0_i32, %c0_i32_0 : i32, i32
  }
  func.func @transform_16(%arg0: i32) -> (i32, i32) {
    %c0_i32 = arith.constant 0 : i32
    %c0_i32_0 = arith.constant 0 : i32
    %c0_i32_1 = arith.constant 0 : i32
    return %c0_i32, %c0_i32_0 : i32, i32
  }
  func.func @transform_17(%arg0: i32) -> (i32, i32, i32) {
    %c0_i32 = arith.constant 0 : i32
    %c0_i32_0 = arith.constant 0 : i32
    %c0_i32_1 = arith.constant 0 : i32
    return %arg0, %c0_i32, %c0_i32_0 : i32, i32, i32
  }
}

</mosaic_0001>

<llo_original>
// kernel: _lambda_.1
$region0: #{_lambda_.1}
  #allocation0 [shape = 'u32[]', space=smem, size = 0x4, offset = 0x4, fixed_abs, tag = 'smem constant byte address 0x4 - core index']
  #allocation1 [shape = 'u32[144,128]{1,0:T(1,128)}', space=vmem, size = 0x12000, scoped, tag = 'internal scratch']
  %s0 = inlined_call_operand.vmem [shape: f32[6,1,256], index: 0, kind: input, shape index: {}]
  %s1 = inlined_call_operand.hbm [shape: f32[25,256], index: 1, kind: input, shape index: {}]
  %s2 = inlined_call_operand.hbm [shape: f32[9,256], index: 2, kind: input, shape index: {}]
  %s3 = inlined_call_operand.vmem [shape: f32[64,25], index: 3, kind: input, shape index: {}]
  %s4 = inlined_call_operand.vmem [shape: f32[64,1], index: 4, kind: input, shape index: {}]
  %s5 = inlined_call_operand.vmem [shape: f32[128,576], index: 5, kind: input, shape index: {}]
  %s6 = inlined_call_operand.vmem [shape: f32[128,1], index: 6, kind: input, shape index: {}]
  %s7 = inlined_call_operand.hbm [shape: f32[64,1152], index: 7, kind: input, shape index: {}]
  %s8 = inlined_call_operand.vmem [shape: f32[64,1], index: 8, kind: input, shape index: {}]
  %s9 = inlined_call_operand.hbm [shape: f32[64,576], index: 9, kind: input, shape index: {}]
  %s10 = inlined_call_operand.vmem [shape: f32[64,1], index: 10, kind: input, shape index: {}]
  %s11 = inlined_call_operand.hbm [shape: f32[64,576], index: 11, kind: input, shape index: {}]
  %s12 = inlined_call_operand.vmem [shape: f32[64,1], index: 12, kind: input, shape index: {}]
  %s13 = inlined_call_operand.hbm [shape: f32[64,576], index: 13, kind: input, shape index: {}]
  %s14 = inlined_call_operand.vmem [shape: f32[64,1], index: 14, kind: input, shape index: {}]
  %s15 = inlined_call_operand.hbm [shape: f32[16,576], index: 15, kind: input, shape index: {}]
  %s16 = inlined_call_operand.vmem [shape: f32[16,1], index: 16, kind: input, shape index: {}]
  %s17 = inlined_call_operand.vmem [shape: f32[6,16,256], index: 17, kind: output, shape index: {}]
  %s18 = sld [smem:[#allocation0]]
  $region129: #{_lambda_.1} parent=0
    _
  %s20 = ssub.s32 1, %s18
  %s21 = scalar_select 0, %s20, %s18
  $region1: #{_lambda_.1} parent=0
    #allocation2 [shape = 'u8[32768]{0}', space=vmem, size = 0x8000, scoped, tag = 'input window, operand 1, single buffered']
    #allocation3 [shape = 's32[2]{0}', space=sflag, size = 0x8, scoped, tag = 'scoped memory for _lambda_.1']
    #allocation4 [shape = 'u8[16384]{0}', space=vmem, size = 0x4000, scoped, tag = 'input window, operand 2, single buffered']
    #allocation5 [shape = 's32[1]{0}', space=sflag, size = 0x4, scoped, tag = 'scoped memory for _lambda_.1']
    #allocation6 [shape = 'u8[294912]{0}', space=vmem, size = 0x48000, scoped, tag = 'input window, operand 7, single buffered']
    #allocation7 [shape = 'u8[163840]{0}', space=vmem, size = 0x28000, scoped, tag = 'input window, operand 9, single buffered']
    #allocation8 [shape = 's32[1]{0}', space=sflag, size = 0x4, scoped, tag = 'scoped memory for _lambda_.1']
    #allocation9 [shape = 'u8[163840]{0}', space=vmem, size = 0x28000, scoped, tag = 'input window, operand 11, single buffered']
    #allocation10 [shape = 'u8[163840]{0}', space=vmem, size = 0x28000, scoped, tag = 'input window, operand 13, single buffered']
    #allocation11 [shape = 's32[1]{0}', space=sflag, size = 0x4, scoped, tag = 'scoped memory for _lambda_.1']
    #allocation12 [shape = 'u8[40960]{0}', space=vmem, size = 0xa000, scoped, tag = 'input window, operand 15, single buffered']
    %22 = vsyncpa [#allocation3], 0
    %23 = vsyncpa [#allocation5], 0
    %24 = vsyncpa [#allocation8], 0
    %25 = vsyncpa [#allocation11], 0
    loop: start=0, step=1, limit=8
    $region2: #{_lambda_.1} parent=1 // loop_pre_header
      _
    $region3: #{_lambda_.1} parent=1 // loop_header
      %s27 = sphi 0, %s31
      %p28 = scmp.ge.s32.totalorder %s27, 8
      %s37 = sphi 0, %s39
      %s40 = sphi 0, %s37
      %s41 = sphi 0, %s40
      %s57 = sphi 0, %s41
      %s61 = sphi 0, %s61
      %s63 = sphi 0, %s61
      %s64 = sphi 0, %s63
      %s78 = sphi 0, %s64
      %s82 = sphi 0, %s82
      %s84 = sphi 0, %s82
      %s85 = sphi 0, %s84
      %s99 = sphi 0, %s85
      %s103 = sphi 0, %s103
      %s105 = sphi 0, %s103
      %s106 = sphi 0, %s105
      %s120 = sphi 0, %s106
      %s124 = sphi 0, %s124
      %s126 = sphi 0, %s124
      %s127 = sphi 0, %s126
      %s141 = sphi 0, %s127
      %s145 = sphi 0, %s145
      %s147 = sphi 0, %s145
      %s148 = sphi 0, %s147
      %s162 = sphi 0, %s148
      %s166 = sphi 0, %s166
      %s168 = sphi 0, %s166
      %s169 = sphi 0, %s168
      %s183 = sphi 0, %s169
      %s187 = sphi 0, %s187
      %s189 = sphi 0, %s187
      %s190 = sphi 0, %s189
      %s204 = sphi 0, %s190
      %s208 = sphi 0, %s208
      %s210 = sphi 0, %s208
      %s211 = sphi 0, %s210
      %s225 = sphi 0, %s211
      %s229 = sphi 0, %s229
      %s231 = sphi 0, %s229
      %s232 = sphi 0, %s231
      %s246 = sphi 0, %s232
      %s250 = sphi 0, %s250
      %s252 = sphi 0, %s250
      %s253 = sphi 0, %s252
      %s267 = sphi 0, %s253
      %s271 = sphi 0, %s271
      %s273 = sphi 0, %s271
      %s274 = sphi 0, %s273
      %s288 = sphi 0, %s274
      %s292 = sphi 0, %s292
      %s294 = sphi 0, %s292
      %s295 = sphi 0, %s294
      %s309 = sphi 0, %s295
      %s313 = sphi 0, %s313
      %s315 = sphi 0, %s313
      %s316 = sphi 0, %s315
      %s330 = sphi 0, %s316
      %s334 = sphi 0, %s334
      %s336 = sphi 0, %s334
      %s337 = sphi 0, %s336
      %s351 = sphi 0, %s337
      %s355 = sphi 0, %s355
      %s357 = sphi 0, %s355
      %s358 = sphi 0, %s357
      %s372 = sphi 0, %s358
      %s376 = sphi 0, %s376
      %s378 = sphi 0, %s376
      %s379 = sphi 0, %s378
      %s393 = sphi 0, %s379
      %s399 = sphi 0, %s401
      %s402 = sphi 0, %s399
      %s403 = sphi 0, %s402
      %s419 = sphi 0, %s403
    $region4: #{_lambda_.1} parent=1 // loop_header_branch
      %30 = sbr.rel (%p28) target = $region8
    $region5: #{_lambda_.1} parent=1 // loop_body
      %s32 = ssub.s32 %s27, 1
      %s33 = ssub.s32 %s27, 2
      %s34 = sadd.s32 %s27, 1
      %s35 = ssub.s32 %s27, %s34
      %p36 = scmp.eq.s32.totalorder %s35, 0
      %s38 = sadd.s32 %s37, 1
      %s39 = scalar_select %p36, %s37, %s38
      %p42 = pneg %p36
      %p43 = scmp.eq.s32.totalorder %s27, 5
      %p44 = por %p42, %p43
      %p45 = scmp.ne.s32.totalorder %s37, %s40
      %p46 = scmp.eq.s32.totalorder %s27, 0
      %p47 = por %p45, %p46
      %p48 = scmp.ne.s32.totalorder %s37, %s40
      %p49 = scmp.eq.s32.totalorder %s32, 5
      %p50 = por %p48, %p49
      %p51 = scmp.ne.s32.totalorder %s40, %s41
      %p52 = scmp.eq.s32.totalorder %s32, 0
      %p53 = por %p51, %p52
      %p54 = scmp.ne.s32.totalorder %s40, %s41
      %p55 = scmp.eq.s32.totalorder %s33, 5
      %p56 = por %p54, %p55
      %p58 = scmp.ne.s32.totalorder %s41, %s57
      %p59 = scmp.eq.s32.totalorder %s33, 0
      %p60 = por %p58, %p59
      %s62 = sadd.s32 %s61, 1
      %p65 = scmp.eq.s32.totalorder %s27, 5
      %p66 = scmp.ne.s32.totalorder %s61, %s63
      %p67 = scmp.eq.s32.totalorder %s27, 0
      %p68 = por %p66, %p67
      %p69 = scmp.ne.s32.totalorder %s61, %s63
      %p70 = scmp.eq.s32.totalorder %s32, 5
      %p71 = por %p69, %p70
      %p72 = scmp.ne.s32.totalorder %s63, %s64
      %p73 = scmp.eq.s32.totalorder %s32, 0
      %p74 = por %p72, %p73
      %p75 = scmp.ne.s32.totalorder %s63, %s64
      %p76 = scmp.eq.s32.totalorder %s33, 5
      %p77 = por %p75, %p76
      %p79 = scmp.ne.s32.totalorder %s64, %s78
      %p80 = scmp.eq.s32.totalorder %s33, 0
      %p81 = por %p79, %p80
      %s83 = sadd.s32 %s82, 1
      %p86 = scmp.eq.s32.totalorder %s27, 5
      %p87 = scmp.ne.s32.totalorder %s82, %s84
      %p88 = scmp.eq.s32.totalorder %s27, 0
      %p89 = por %p87, %p88
      %p90 = scmp.ne.s32.totalorder %s82, %s84
      %p91 = scmp.eq.s32.totalorder %s32, 5
      %p92 = por %p90, %p91
      %p93 = scmp.ne.s32.totalorder %s84, %s85
      %p94 = scmp.eq.s32.totalorder %s32, 0
      %p95 = por %p93, %p94
      %p96 = scmp.ne.s32.totalorder %s84, %s85
      %p97 = scmp.eq.s32.totalorder %s33, 5
      %p98 = por %p96, %p97
      %p100 = scmp.ne.s32.totalorder %s85, %s99
      %p101 = scmp.eq.s32.totalorder %s33, 0
      %p102 = por %p100, %p101
      %s104 = sadd.s32 %s103, 1
      %p107 = scmp.eq.s32.totalorder %s27, 5
      %p108 = scmp.ne.s32.totalorder %s103, %s105
      %p109 = scmp.eq.s32.totalorder %s27, 0
      %p110 = por %p108, %p109
      %p111 = scmp.ne.s32.totalorder %s103, %s105
      %p112 = scmp.eq.s32.totalorder %s32, 5
      %p113 = por %p111, %p112
      %p114 = scmp.ne.s32.totalorder %s105, %s106
      %p115 = scmp.eq.s32.totalorder %s32, 0
      %p116 = por %p114, %p115
      %p117 = scmp.ne.s32.totalorder %s105, %s106
      %p118 = scmp.eq.s32.totalorder %s33, 5
      %p119 = por %p117, %p118
      %p121 = scmp.ne.s32.totalorder %s106, %s120
      %p122 = scmp.eq.s32.totalorder %s33, 0
      %p123 = por %p121, %p122
      %s125 = sadd.s32 %s124, 1
      %p128 = scmp.eq.s32.totalorder %s27, 5
      %p129 = scmp.ne.s32.totalorder %s124, %s126
      %p130 = scmp.eq.s32.totalorder %s27, 0
      %p131 = por %p129, %p130
      %p132 = scmp.ne.s32.totalorder %s124, %s126
      %p133 = scmp.eq.s32.totalorder %s32, 5
      %p134 = por %p132, %p133
      %p135 = scmp.ne.s32.totalorder %s126, %s127
      %p136 = scmp.eq.s32.totalorder %s32, 0
      %p137 = por %p135, %p136
      %p138 = scmp.ne.s32.totalorder %s126, %s127
      %p139 = scmp.eq.s32.totalorder %s33, 5
      %p140 = por %p138, %p139
      %p142 = scmp.ne.s32.totalorder %s127, %s141
      %p143 = scmp.eq.s32.totalorder %s33, 0
      %p144 = por %p142, %p143
      %s146 = sadd.s32 %s145, 1
      %p149 = scmp.eq.s32.totalorder %s27, 5
      %p150 = scmp.ne.s32.totalorder %s145, %s147
      %p151 = scmp.eq.s32.totalorder %s27, 0
      %p152 = por %p150, %p151
      %p153 = scmp.ne.s32.totalorder %s145, %s147
      %p154 = scmp.eq.s32.totalorder %s32, 5
      %p155 = por %p153, %p154
      %p156 = scmp.ne.s32.totalorder %s147, %s148
      %p157 = scmp.eq.s32.totalorder %s32, 0
      %p158 = por %p156, %p157
      %p159 = scmp.ne.s32.totalorder %s147, %s148
      %p160 = scmp.eq.s32.totalorder %s33, 5
      %p161 = por %p159, %p160
      %p163 = scmp.ne.s32.totalorder %s148, %s162
      %p164 = scmp.eq.s32.totalorder %s33, 0
      %p165 = por %p163, %p164
      %s167 = sadd.s32 %s166, 1
      %p170 = scmp.eq.s32.totalorder %s27, 5
      %p171 = scmp.ne.s32.totalorder %s166, %s168
      %p172 = scmp.eq.s32.totalorder %s27, 0
      %p173 = por %p171, %p172
      %p174 = scmp.ne.s32.totalorder %s166, %s168
      %p175 = scmp.eq.s32.totalorder %s32, 5
      %p176 = por %p174, %p175
      %p177 = scmp.ne.s32.totalorder %s168, %s169
      %p178 = scmp.eq.s32.totalorder %s32, 0
      %p179 = por %p177, %p178
      %p180 = scmp.ne.s32.totalorder %s168, %s169
      %p181 = scmp.eq.s32.totalorder %s33, 5
      %p182 = por %p180, %p181
      %p184 = scmp.ne.s32.totalorder %s169, %s183
      %p185 = scmp.eq.s32.totalorder %s33, 0
      %p186 = por %p184, %p185
      %s188 = sadd.s32 %s187, 1
      %p191 = scmp.eq.s32.totalorder %s27, 5
      %p192 = scmp.ne.s32.totalorder %s187, %s189
      %p193 = scmp.eq.s32.totalorder %s27, 0
      %p194 = por %p192, %p193
      %p195 = scmp.ne.s32.totalorder %s187, %s189
      %p196 = scmp.eq.s32.totalorder %s32, 5
      %p197 = por %p195, %p196
      %p198 = scmp.ne.s32.totalorder %s189, %s190
      %p199 = scmp.eq.s32.totalorder %s32, 0
      %p200 = por %p198, %p199
      %p201 = scmp.ne.s32.totalorder %s189, %s190
      %p202 = scmp.eq.s32.totalorder %s33, 5
      %p203 = por %p201, %p202
      %p205 = scmp.ne.s32.totalorder %s190, %s204
      %p206 = scmp.eq.s32.totalorder %s33, 0
      %p207 = por %p205, %p206
      %s209 = sadd.s32 %s208, 1
      %p212 = scmp.eq.s32.totalorder %s27, 5
      %p213 = scmp.ne.s32.totalorder %s208, %s210
      %p214 = scmp.eq.s32.totalorder %s27, 0
      %p215 = por %p213, %p214
      %p216 = scmp.ne.s32.totalorder %s208, %s210
      %p217 = scmp.eq.s32.totalorder %s32, 5
      %p218 = por %p216, %p217
      %p219 = scmp.ne.s32.totalorder %s210, %s211
      %p220 = scmp.eq.s32.totalorder %s32, 0
      %p221 = por %p219, %p220
      %p222 = scmp.ne.s32.totalorder %s210, %s211
      %p223 = scmp.eq.s32.totalorder %s33, 5
      %p224 = por %p222, %p223
      %p226 = scmp.ne.s32.totalorder %s211, %s225
      %p227 = scmp.eq.s32.totalorder %s33, 0
      %p228 = por %p226, %p227
      %s230 = sadd.s32 %s229, 1
      %p233 = scmp.eq.s32.totalorder %s27, 5
      %p234 = scmp.ne.s32.totalorder %s229, %s231
      %p235 = scmp.eq.s32.totalorder %s27, 0
      %p236 = por %p234, %p235
      %p237 = scmp.ne.s32.totalorder %s229, %s231
      %p238 = scmp.eq.s32.totalorder %s32, 5
      %p239 = por %p237, %p238
      %p240 = scmp.ne.s32.totalorder %s231, %s232
      %p241 = scmp.eq.s32.totalorder %s32, 0
      %p242 = por %p240, %p241
      %p243 = scmp.ne.s32.totalorder %s231, %s232
      %p244 = scmp.eq.s32.totalorder %s33, 5
      %p245 = por %p243, %p244
      %p247 = scmp.ne.s32.totalorder %s232, %s246
      %p248 = scmp.eq.s32.totalorder %s33, 0
      %p249 = por %p247, %p248
      %s251 = sadd.s32 %s250, 1
      %p254 = scmp.eq.s32.totalorder %s27, 5
      %p255 = scmp.ne.s32.totalorder %s250, %s252
      %p256 = scmp.eq.s32.totalorder %s27, 0
      %p257 = por %p255, %p256
      %p258 = scmp.ne.s32.totalorder %s250, %s252
      %p259 = scmp.eq.s32.totalorder %s32, 5
      %p260 = por %p258, %p259
      %p261 = scmp.ne.s32.totalorder %s252, %s253
      %p262 = scmp.eq.s32.totalorder %s32, 0
      %p263 = por %p261, %p262
      %p264 = scmp.ne.s32.totalorder %s252, %s253
      %p265 = scmp.eq.s32.totalorder %s33, 5
      %p266 = por %p264, %p265
      %p268 = scmp.ne.s32.totalorder %s253, %s267
      %p269 = scmp.eq.s32.totalorder %s33, 0
      %p270 = por %p268, %p269
      %s272 = sadd.s32 %s271, 1
      %p275 = scmp.eq.s32.totalorder %s27, 5
      %p276 = scmp.ne.s32.totalorder %s271, %s273
      %p277 = scmp.eq.s32.totalorder %s27, 0
      %p278 = por %p276, %p277
      %p279 = scmp.ne.s32.totalorder %s271, %s273
      %p280 = scmp.eq.s32.totalorder %s32, 5
      %p281 = por %p279, %p280
      %p282 = scmp.ne.s32.totalorder %s273, %s274
      %p283 = scmp.eq.s32.totalorder %s32, 0
      %p284 = por %p282, %p283
      %p285 = scmp.ne.s32.totalorder %s273, %s274
      %p286 = scmp.eq.s32.totalorder %s33, 5
      %p287 = por %p285, %p286
      %p289 = scmp.ne.s32.totalorder %s274, %s288
      %p290 = scmp.eq.s32.totalorder %s33, 0
      %p291 = por %p289, %p290
      %s293 = sadd.s32 %s292, 1
      %p296 = scmp.eq.s32.totalorder %s27, 5
      %p297 = scmp.ne.s32.totalorder %s292, %s294
      %p298 = scmp.eq.s32.totalorder %s27, 0
      %p299 = por %p297, %p298
      %p300 = scmp.ne.s32.totalorder %s292, %s294
      %p301 = scmp.eq.s32.totalorder %s32, 5
      %p302 = por %p300, %p301
      %p303 = scmp.ne.s32.totalorder %s294, %s295
      %p304 = scmp.eq.s32.totalorder %s32, 0
      %p305 = por %p303, %p304
      %p306 = scmp.ne.s32.totalorder %s294, %s295
      %p307 = scmp.eq.s32.totalorder %s33, 5
      %p308 = por %p306, %p307
      %p310 = scmp.ne.s32.totalorder %s295, %s309
      %p311 = scmp.eq.s32.totalorder %s33, 0
      %p312 = por %p310, %p311
      %s314 = sadd.s32 %s313, 1
      %p317 = scmp.eq.s32.totalorder %s27, 5
      %p318 = scmp.ne.s32.totalorder %s313, %s315
      %p319 = scmp.eq.s32.totalorder %s27, 0
      %p320 = por %p318, %p319
      %p321 = scmp.ne.s32.totalorder %s313, %s315
      %p322 = scmp.eq.s32.totalorder %s32, 5
      %p323 = por %p321, %p322
      %p324 = scmp.ne.s32.totalorder %s315, %s316
      %p325 = scmp.eq.s32.totalorder %s32, 0
      %p326 = por %p324, %p325
      %p327 = scmp.ne.s32.totalorder %s315, %s316
      %p328 = scmp.eq.s32.totalorder %s33, 5
      %p329 = por %p327, %p328
      %p331 = scmp.ne.s32.totalorder %s316, %s330
      %p332 = scmp.eq.s32.totalorder %s33, 0
      %p333 = por %p331, %p332
      %s335 = sadd.s32 %s334, 1
      %p338 = scmp.eq.s32.totalorder %s27, 5
      %p339 = scmp.ne.s32.totalorder %s334, %s336
      %p340 = scmp.eq.s32.totalorder %s27, 0
      %p341 = por %p339, %p340
      %p342 = scmp.ne.s32.totalorder %s334, %s336
      %p343 = scmp.eq.s32.totalorder %s32, 5
      %p344 = por %p342, %p343
      %p345 = scmp.ne.s32.totalorder %s336, %s337
      %p346 = scmp.eq.s32.totalorder %s32, 0
      %p347 = por %p345, %p346
      %p348 = scmp.ne.s32.totalorder %s336, %s337
      %p349 = scmp.eq.s32.totalorder %s33, 5
      %p350 = por %p348, %p349
      %p352 = scmp.ne.s32.totalorder %s337, %s351
      %p353 = scmp.eq.s32.totalorder %s33, 0
      %p354 = por %p352, %p353
      %s356 = sadd.s32 %s355, 1
      %p359 = scmp.eq.s32.totalorder %s27, 5
      %p360 = scmp.ne.s32.totalorder %s355, %s357
      %p361 = scmp.eq.s32.totalorder %s27, 0
      %p362 = por %p360, %p361
      %p363 = scmp.ne.s32.totalorder %s355, %s357
      %p364 = scmp.eq.s32.totalorder %s32, 5
      %p365 = por %p363, %p364
      %p366 = scmp.ne.s32.totalorder %s357, %s358
      %p367 = scmp.eq.s32.totalorder %s32, 0
      %p368 = por %p366, %p367
      %p369 = scmp.ne.s32.totalorder %s357, %s358
      %p370 = scmp.eq.s32.totalorder %s33, 5
      %p371 = por %p369, %p370
      %p373 = scmp.ne.s32.totalorder %s358, %s372
      %p374 = scmp.eq.s32.totalorder %s33, 0
      %p375 = por %p373, %p374
      %s377 = sadd.s32 %s376, 1
      %p380 = scmp.eq.s32.totalorder %s27, 5
      %p381 = scmp.ne.s32.totalorder %s376, %s378
      %p382 = scmp.eq.s32.totalorder %s27, 0
      %p383 = por %p381, %p382
      %p384 = scmp.ne.s32.totalorder %s376, %s378
      %p385 = scmp.eq.s32.totalorder %s32, 5
      %p386 = por %p384, %p385
      %p387 = scmp.ne.s32.totalorder %s378, %s379
      %p388 = scmp.eq.s32.totalorder %s32, 0
      %p389 = por %p387, %p388
      %p390 = scmp.ne.s32.totalorder %s378, %s379
      %p391 = scmp.eq.s32.totalorder %s33, 5
      %p392 = por %p390, %p391
      %p394 = scmp.ne.s32.totalorder %s379, %s393
      %p395 = scmp.eq.s32.totalorder %s33, 0
      %p396 = por %p394, %p395
      %s397 = ssub.s32 %s27, %s34
      %p398 = scmp.eq.s32.totalorder %s397, 0
      %s400 = sadd.s32 %s399, 1
      %s401 = scalar_select %p398, %s399, %s400
      %p404 = pneg %p398
      %p405 = scmp.eq.s32.totalorder %s27, 5
      %p406 = por %p404, %p405
      %p407 = scmp.ne.s32.totalorder %s399, %s402
      %p408 = scmp.eq.s32.totalorder %s27, 0
      %p409 = por %p407, %p408
      %p410 = scmp.ne.s32.totalorder %s399, %s402
      %p411 = scmp.eq.s32.totalorder %s32, 5
      %p412 = por %p410, %p411
      %p413 = scmp.ne.s32.totalorder %s402, %s403
      %p414 = scmp.eq.s32.totalorder %s32, 0
      %p415 = por %p413, %p414
      %p416 = scmp.ne.s32.totalorder %s402, %s403
      %p417 = scmp.eq.s32.totalorder %s33, 5
      %p418 = por %p416, %p417
      %p420 = scmp.ne.s32.totalorder %s403, %s419
      %p421 = scmp.eq.s32.totalorder %s33, 0
      %p422 = por %p420, %p421
      %p423 = scmp.le.s32.totalorder 1, %s27
      %p424 = scmp.lt.s32.totalorder %s27, 7
      %p425 = pnand %p423, %p424
      %p426 = pneg %p425
      // Predicated region
      $region9: #{_lambda_.1} parent=5 // pred_check
        _
      $region10: #{_lambda_.1} parent=5 // pred_check_branch
        %428 = sbr.rel (%p425) target = $region12
      $region11: #{_lambda_.1} parent=5 // pred_region
        %s429 = ssub.s32 %s27, 1
        // Predicated region
        $region13: #{_lambda_.1} parent=11 // pred_check
          %p430 = pneg %p74
        $region14: #{_lambda_.1} parent=11 // pred_check_branch
          %432 = sbr.rel (%p430) target = $region16
        $region15: #{_lambda_.1} parent=11 // pred_region
          %s434 = ssub.s32 1024, 1024
          %435 = vsyncadd [#allocation3], %s434
          %s436 = sshll.u32 [#allocation2], 4
          %s437 = int_to_ptr.vmem [resolvable:$true] %s436
          %442 = dma.hbm_to_vmem [thread:$0]  %s1, 1024, %s437, [#allocation3], 256, 256, 16
        $region16: #{_lambda_.1} parent=11 // pred_fallthru
          _
        // Predicated region
        $region17: #{_lambda_.1} parent=11 // pred_check
          %p443 = pneg %p95
        $region18: #{_lambda_.1} parent=11 // pred_check_branch
          %445 = sbr.rel (%p443) target = $region20
        $region19: #{_lambda_.1} parent=11 // pred_region
          %s447 = ssub.s32 512, 512
          %448 = vsyncadd [#allocation5], %s447
          %s449 = sshll.u32 [#allocation4], 4
          %s450 = int_to_ptr.vmem [resolvable:$true] %s449
          %455 = dma.hbm_to_vmem [thread:$0]  %s2, 512, %s450, [#allocation5], 256, 256, 16
        $region20: #{_lambda_.1} parent=11 // pred_fallthru
          _
        // Predicated region
        $region21: #{_lambda_.1} parent=11 // pred_check
          %p456 = pneg %p116
        $region22: #{_lambda_.1} parent=11 // pred_check_branch
          %458 = sbr.rel (%p456) target = $region24
        $region23: #{_lambda_.1} parent=11 // pred_region
          _
        $region24: #{_lambda_.1} parent=11 // pred_fallthru
          _
        // Predicated region
        $region25: #{_lambda_.1} parent=11 // pred_check
          %p459 = pneg %p137
        $region26: #{_lambda_.1} parent=11 // pred_check_branch
          %461 = sbr.rel (%p459) target = $region28
        $region27: #{_lambda_.1} parent=11 // pred_region
          _
        $region28: #{_lambda_.1} parent=11 // pred_fallthru
          _
        // Predicated region
        $region29: #{_lambda_.1} parent=11 // pred_check
          %p462 = pneg %p158
        $region30: #{_lambda_.1} parent=11 // pred_check_branch
          %464 = sbr.rel (%p462) target = $region32
        $region31: #{_lambda_.1} parent=11 // pred_region
          _
        $region32: #{_lambda_.1} parent=11 // pred_fallthru
          _
        // Predicated region
        $region33: #{_lambda_.1} parent=11 // pred_check
          %p465 = pneg %p179
        $region34: #{_lambda_.1} parent=11 // pred_check_branch
          %467 = sbr.rel (%p465) target = $region36
        $region35: #{_lambda_.1} parent=11 // pred_region
          _
        $region36: #{_lambda_.1} parent=11 // pred_fallthru
          _
        // Predicated region
        $region37: #{_lambda_.1} parent=11 // pred_check
          %p468 = pneg %p200
        $region38: #{_lambda_.1} parent=11 // pred_check_branch
          %470 = sbr.rel (%p468) target = $region40
        $region39: #{_lambda_.1} parent=11 // pred_region
          %s472 = ssub.s32 9216, 9216
          %473 = vsyncadd [#allocation5], %s472
          %s474 = sshll.u32 [#allocation6], 4
          %s475 = int_to_ptr.vmem [resolvable:$true] %s474
          %480 = dma.hbm_to_vmem [thread:$0]  %s7, 9216, %s475, [#allocation5], 1152, 1152, 72
        $region40: #{_lambda_.1} parent=11 // pred_fallthru
          _
        // Predicated region
        $region41: #{_lambda_.1} parent=11 // pred_check
          %p481 = pneg %p221
        $region42: #{_lambda_.1} parent=11 // pred_check_branch
          %483 = sbr.rel (%p481) target = $region44
        $region43: #{_lambda_.1} parent=11 // pred_region
          _
        $region44: #{_lambda_.1} parent=11 // pred_fallthru
          _
        // Predicated region
        $region45: #{_lambda_.1} parent=11 // pred_check
          %p484 = pneg %p242
        $region46: #{_lambda_.1} parent=11 // pred_check_branch
          %486 = sbr.rel (%p484) target = $region48
        $region47: #{_lambda_.1} parent=11 // pred_region
          %s488 = ssub.s32 5120, 5120
          %489 = vsyncadd [#allocation8], %s488
          %s490 = sshll.u32 [#allocation7], 4
          %s491 = int_to_ptr.vmem [resolvable:$true] %s490
          %496 = dma.hbm_to_vmem [thread:$0]  %s9, 5120, %s491, [#allocation8], 640, 640, 40
        $region48: #{_lambda_.1} parent=11 // pred_fallthru
          _
        // Predicated region
        $region49: #{_lambda_.1} parent=11 // pred_check
          %p497 = pneg %p263
        $region50: #{_lambda_.1} parent=11 // pred_check_branch
          %499 = sbr.rel (%p497) target = $region52
        $region51: #{_lambda_.1} parent=11 // pred_region
          _
        $region52: #{_lambda_.1} parent=11 // pred_fallthru
          _
        // Predicated region
        $region53: #{_lambda_.1} parent=11 // pred_check
          %p500 = pneg %p284
        $region54: #{_lambda_.1} parent=11 // pred_check_branch
          %502 = sbr.rel (%p500) target = $region56
        $region55: #{_lambda_.1} parent=11 // pred_region
          %s504 = ssub.s32 5120, 5120
          %505 = vsyncadd [#allocation8], %s504
          %s506 = sshll.u32 [#allocation9], 4
          %s507 = int_to_ptr.vmem [resolvable:$true] %s506
          %512 = dma.hbm_to_vmem [thread:$0]  %s11, 5120, %s507, [#allocation8], 640, 640, 40
        $region56: #{_lambda_.1} parent=11 // pred_fallthru
          _
        // Predicated region
        $region57: #{_lambda_.1} parent=11 // pred_check
          %p513 = pneg %p305
        $region58: #{_lambda_.1} parent=11 // pred_check_branch
          %515 = sbr.rel (%p513) target = $region60
        $region59: #{_lambda_.1} parent=11 // pred_region
          _
        $region60: #{_lambda_.1} parent=11 // pred_fallthru
          _
        // Predicated region
        $region61: #{_lambda_.1} parent=11 // pred_check
          %p516 = pneg %p326
        $region62: #{_lambda_.1} parent=11 // pred_check_branch
          %518 = sbr.rel (%p516) target = $region64
        $region63: #{_lambda_.1} parent=11 // pred_region
          %s520 = ssub.s32 5120, 5120
          %521 = vsyncadd [#allocation11], %s520
          %s522 = sshll.u32 [#allocation10], 4
          %s523 = int_to_ptr.vmem [resolvable:$true] %s522
          %528 = dma.hbm_to_vmem [thread:$0]  %s13, 5120, %s523, [#allocation11], 640, 640, 40
        $region64: #{_lambda_.1} parent=11 // pred_fallthru
          _
        // Predicated region
        $region65: #{_lambda_.1} parent=11 // pred_check
          %p529 = pneg %p347
        $region66: #{_lambda_.1} parent=11 // pred_check_branch
          %531 = sbr.rel (%p529) target = $region68
        $region67: #{_lambda_.1} parent=11 // pred_region
          _
        $region68: #{_lambda_.1} parent=11 // pred_fallthru
          _
        // Predicated region
        $region69: #{_lambda_.1} parent=11 // pred_check
          %p532 = pneg %p368
        $region70: #{_lambda_.1} parent=11 // pred_check_branch
          %534 = sbr.rel (%p532) target = $region72
        $region71: #{_lambda_.1} parent=11 // pred_region
          %s536 = ssub.s32 1280, 1280
          %537 = vsyncadd [#allocation11], %s536
          %s538 = sshll.u32 [#allocation12], 4
          %s539 = int_to_ptr.vmem [resolvable:$true] %s538
          %544 = dma.hbm_to_vmem [thread:$0]  %s15, 1280, %s539, [#allocation11], 640, 640, 40
        $region72: #{_lambda_.1} parent=11 // pred_fallthru
          _
        // Predicated region
        $region73: #{_lambda_.1} parent=11 // pred_check
          %p545 = pneg %p389
        $region74: #{_lambda_.1} parent=11 // pred_check_branch
          %547 = sbr.rel (%p545) target = $region76
        $region75: #{_lambda_.1} parent=11 // pred_region
          _
        $region76: #{_lambda_.1} parent=11 // pred_fallthru
          _
      $region12: #{_lambda_.1} parent=5 // pred_fallthru
        _
      %p548 = scmp.lt.s32.totalorder %s27, 6
      // Predicated region
      $region77: #{_lambda_.1} parent=5 // pred_check
        %p549 = pneg %p548
      $region78: #{_lambda_.1} parent=5 // pred_check_branch
        %551 = sbr.rel (%p549) target = $region80
      $region79: #{_lambda_.1} parent=5 // pred_region
        // Predicated region
        $region81: #{_lambda_.1} parent=79 // pred_check
          %p552 = pneg %p47
        $region82: #{_lambda_.1} parent=79 // pred_check_branch
          %554 = sbr.rel (%p552) target = $region84
        $region83: #{_lambda_.1} parent=79 // pred_region
          %p555 = scmp.lt.s32.totalorder %s27, 5
          %s556 = scalar_select %p555, %s27, 5
          %s557 = smul.addr %s556, 2
          %s558 = scalar_lea.vmem %s0, %s557
        $region84: #{_lambda_.1} parent=79 // pred_fallthru
          _
      $region80: #{_lambda_.1} parent=5 // pred_fallthru
        _
      %p559 = scmp.le.s32.totalorder 1, %s27
      %p560 = scmp.lt.s32.totalorder %s27, 7
      %p561 = pnand %p559, %p560
      %p562 = pneg %p561
      // Predicated region
      $region85: #{_lambda_.1} parent=5 // pred_check
        _
      $region86: #{_lambda_.1} parent=5 // pred_check_branch
        %564 = sbr.rel (%p561) target = $region88
      $region87: #{_lambda_.1} parent=5 // pred_region
        %s565 = ssub.s32 %s27, 1
        // Predicated region
        $region89: #{_lambda_.1} parent=87 // pred_check
          %p566 = pneg %p74
        $region90: #{_lambda_.1} parent=87 // pred_check_branch
          %568 = sbr.rel (%p566) target = $region92
        $region91: #{_lambda_.1} parent=87 // pred_region
          %569 = dma.done [#allocation3], 1024
        $region92: #{_lambda_.1} parent=87 // pred_fallthru
          _
        // Predicated region
        $region93: #{_lambda_.1} parent=87 // pred_check
          %p570 = pneg %p95
        $region94: #{_lambda_.1} parent=87 // pred_check_branch
          %572 = sbr.rel (%p570) target = $region96
        $region95: #{_lambda_.1} parent=87 // pred_region
          %573 = dma.done [#allocation5], 512
        $region96: #{_lambda_.1} parent=87 // pred_fallthru
          _
        // Predicated region
        $region97: #{_lambda_.1} parent=87 // pred_check
          %p574 = pneg %p200
        $region98: #{_lambda_.1} parent=87 // pred_check_branch
          %576 = sbr.rel (%p574) target = $region100
        $region99: #{_lambda_.1} parent=87 // pred_region
          %577 = dma.done [#allocation5], 9216
        $region100: #{_lambda_.1} parent=87 // pred_fallthru
          _
        // Predicated region
        $region101: #{_lambda_.1} parent=87 // pred_check
          %p578 = pneg %p242
        $region102: #{_lambda_.1} parent=87 // pred_check_branch
          %580 = sbr.rel (%p578) target = $region104
        $region103: #{_lambda_.1} parent=87 // pred_region
          %581 = dma.done [#allocation8], 5120
        $region104: #{_lambda_.1} parent=87 // pred_fallthru
          _
        // Predicated region
        $region105: #{_lambda_.1} parent=87 // pred_check
          %p582 = pneg %p284
        $region106: #{_lambda_.1} parent=87 // pred_check_branch
          %584 = sbr.rel (%p582) target = $region108
        $region107: #{_lambda_.1} parent=87 // pred_region
          %585 = dma.done [#allocation8], 5120
        $region108: #{_lambda_.1} parent=87 // pred_fallthru
          _
        // Predicated region
        $region109: #{_lambda_.1} parent=87 // pred_check
          %p586 = pneg %p326
        $region110: #{_lambda_.1} parent=87 // pred_check_branch
          %588 = sbr.rel (%p586) target = $region112
        $region111: #{_lambda_.1} parent=87 // pred_region
          %589 = dma.done [#allocation11], 5120
        $region112: #{_lambda_.1} parent=87 // pred_fallthru
          _
        // Predicated region
        $region113: #{_lambda_.1} parent=87 // pred_check
          %p590 = pneg %p368
        $region114: #{_lambda_.1} parent=87 // pred_check_branch
          %592 = sbr.rel (%p590) target = $region116
        $region115: #{_lambda_.1} parent=87 // pred_region
          %593 = dma.done [#allocation11], 1280
        $region116: #{_lambda_.1} parent=87 // pred_fallthru
          _
        %p594 = scmp.lt.s32.totalorder %s32, 5
        %s595 = scalar_select %p594, %s32, 5
        %s596 = smul.addr %s595, 2
        %s597 = scalar_lea.vmem %s0, %s596
        %p598 = pneg %p53
        %p599 = pneg %p50
        %p600 = pneg %p74
        %p601 = pneg %p71
        %p602 = pneg %p95
        %p603 = pneg %p92
        %p604 = pneg %p116
        %p605 = pneg %p113
        %p606 = pneg %p137
        %p607 = pneg %p134
        %p608 = pneg %p158
        %p609 = pneg %p155
        %p610 = pneg %p179
        %p611 = pneg %p176
        %p612 = pneg %p200
        %p613 = pneg %p197
        %p614 = pneg %p221
        %p615 = pneg %p218
        %p616 = pneg %p242
        %p617 = pneg %p239
        %p618 = pneg %p263
        %p619 = pneg %p260
        %p620 = pneg %p284
        %p621 = pneg %p281
        %p622 = pneg %p305
        %p623 = pneg %p302
        %p624 = pneg %p326
        %p625 = pneg %p323
        %p626 = pneg %p347
        %p627 = pneg %p344
        %p628 = pneg %p368
        %p629 = pneg %p365
        %p630 = pneg %p389
        %p631 = pneg %p386
        %p632 = pneg %p415
        %p633 = pneg %p412
        %p634 = scmp.lt.s32.totalorder %s32, 5
        %s635 = scalar_select %p634, %s32, 5
        %s636 = smul.addr %s635, 4
        %s637 = smul.addr %s636, 8
        %s638 = scalar_lea.vmem %s17, %s637
        %p639 = scmp.lt.s32.totalorder %s32, 5
        %s640 = scalar_select %p639, %s32, 5
        %s641 = smul.addr %s640, 2
        %s642 = scalar_lea.vmem %s0, %s641
        %p643 = scmp.lt.s32.totalorder %s32, 5
        %s644 = scalar_select %p643, %s32, 5
        %s645 = smul.addr %s644, 4
        %s646 = smul.addr %s645, 8
        %s647 = scalar_lea.vmem %s17, %s646
        %v648 = vld [vmem:[#allocation2] sm:$0xff]
        %v649 = vld [vmem:[#allocation2 + $0x8] sm:$0xff]
        %v650 = vld [vmem:[#allocation2 + $0x10] sm:$0xff]
        %v651 = vld [vmem:[#allocation2 + $0x18] sm:$0xff]
        %v652 = vld [vmem:[#allocation2 + $0x20] sm:$0xff]
        %v653 = vld [vmem:[#allocation2 + $0x28] sm:$0xff]
        %v654 = vld [vmem:[#allocation2 + $0x30] sm:$0x1]
        %v655 = vld [vmem:[#allocation2 + $0x38] sm:$0x1]
        %v656 = vld [vmem:[#allocation4] sm:$0xff]
        %v657 = vld [vmem:[#allocation4 + $0x8] sm:$0xff]
        %v658 = vld [vmem:[#allocation4 + $0x10] sm:$0x1]
        %v659 = vld [vmem:[#allocation4 + $0x18] sm:$0x1]
        %v660 = vld [vmem:[%s642] sm:$0x3]
        %v662 = vlaneseq
        %v663 = vshrl.u32 %v662, 7
        %v664 = vsub.s32 0, %v663
        %v665 = vrot.slane %v660, %v664
        %v666 = vlaneseq
        %v667 = vshrl.u32 %v666, 7
        %v668 = vsub.s32 1, %v667
        %v669 = vrot.slane %v660, %v668
        %672 = vrot.lane.b32.xlu0 %v665, 34
        %v673 = vpop.permute.xlu0 %672
        %674 = vrot.lane.b32.xlu0 %v669, 34
        %v675 = vpop.permute.xlu0 %674
        %v676 = vlaneseq
        %v677 = vand.u32 %v676, 127
        %vm678 = vcmp.lt.s32.totalorder %v677, 34
        %v679 = vsel %vm678, %v673, %v675
        %v680 = vsel %vm678, %v675, %v673
        %v681 = vmul.f32 %v680, %v648
        %v682 = vmul.f32 %v679, %v649
        %683 = vrot.lane.b32.xlu0 %v665, 33
        %v684 = vpop.permute.xlu0 %683
        %685 = vrot.lane.b32.xlu0 %v669, 33
        %v686 = vpop.permute.xlu0 %685
        %vm687 = vcmp.lt.s32.totalorder %v677, 33
        %v688 = vsel %vm687, %v684, %v686
        %v689 = vsel %vm687, %v686, %v684
        %v692 = vrot.slane %v648, 1
        %v693 = vrot.slane %v649, 1
        %v696 = vmul.f32 %v689, %v692
        %v697 = vmul.f32 %v688, %v693
        %698 = vrot.lane.b32.xlu0 %v665, 32
        %v699 = vpop.permute.xlu0 %698
        %700 = vrot.lane.b32.xlu0 %v669, 32
        %v701 = vpop.permute.xlu0 %700
        %vm702 = vcmp.lt.s32.totalorder %v677, 32
        %v703 = vsel %vm702, %v699, %v701
        %v704 = vsel %vm702, %v701, %v699
        %v705 = vrot.slane %v648, 2
        %v706 = vrot.slane %v649, 2
        %v709 = vmul.f32 %v704, %v705
        %v710 = vmul.f32 %v703, %v706
        %711 = vrot.lane.b32.xlu0 %v665, 31
        %v712 = vpop.permute.xlu0 %711
        %713 = vrot.lane.b32.xlu0 %v669, 31
        %v714 = vpop.permute.xlu0 %713
        %vm715 = vcmp.lt.s32.totalorder %v677, 31
        %v716 = vsel %vm715, %v712, %v714
        %v717 = vsel %vm715, %v714, %v712
        %v718 = vrot.slane %v648, 3
        %v719 = vrot.slane %v649, 3
        %v722 = vmul.f32 %v717, %v718
        %v723 = vmul.f32 %v716, %v719
        %724 = vrot.lane.b32.xlu0 %v665, 30
        %v725 = vpop.permute.xlu0 %724
        %726 = vrot.lane.b32.xlu0 %v669, 30
        %v727 = vpop.permute.xlu0 %726
        %vm728 = vcmp.lt.s32.totalorder %v677, 30
        %v729 = vsel %vm728, %v725, %v727
        %v730 = vsel %vm728, %v727, %v725
        %v731 = vrot.slane %v648, 4
        %v732 = vrot.slane %v649, 4
        %v735 = vmul.f32 %v730, %v731
        %v736 = vmul.f32 %v729, %v732
        %737 = vrot.lane.b32.xlu0 %v665, 18
        %v738 = vpop.permute.xlu0 %737
        %739 = vrot.lane.b32.xlu0 %v669, 18
        %v740 = vpop.permute.xlu0 %739
        %vm741 = vcmp.lt.s32.totalorder %v677, 18
        %v742 = vsel %vm741, %v738, %v740
        %v743 = vsel %vm741, %v740, %v738
        %v744 = vrot.slane %v648, 5
        %v745 = vrot.slane %v649, 5
        %v748 = vmul.f32 %v743, %v744
        %v749 = vmul.f32 %v742, %v745
        %750 = vrot.lane.b32.xlu0 %v665, 17
        %v751 = vpop.permute.xlu0 %750
        %752 = vrot.lane.b32.xlu0 %v669, 17
        %v753 = vpop.permute.xlu0 %752
        %vm754 = vcmp.lt.s32.totalorder %v677, 17
        %v755 = vsel %vm754, %v751, %v753
        %v756 = vsel %vm754, %v753, %v751
        %v757 = vrot.slane %v648, 6
        %v758 = vrot.slane %v649, 6
        %v761 = vmul.f32 %v756, %v757
        %v762 = vmul.f32 %v755, %v758
        %763 = vrot.lane.b32.xlu0 %v665, 16
        %v764 = vpop.permute.xlu0 %763
        %765 = vrot.lane.b32.xlu0 %v669, 16
        %v766 = vpop.permute.xlu0 %765
        %vm767 = vcmp.lt.s32.totalorder %v677, 16
        %v768 = vsel %vm767, %v764, %v766
        %v769 = vsel %vm767, %v766, %v764
        %v770 = vrot.slane %v648, 7
        %v771 = vrot.slane %v649, 7
        %v774 = vmul.f32 %v769, %v770
        %v775 = vmul.f32 %v768, %v771
        %776 = vrot.lane.b32.xlu0 %v665, 15
        %v777 = vpop.permute.xlu0 %776
        %778 = vrot.lane.b32.xlu0 %v669, 15
        %v779 = vpop.permute.xlu0 %778
        %vm780 = vcmp.lt.s32.totalorder %v677, 15
        %v781 = vsel %vm780, %v777, %v779
        %v782 = vsel %vm780, %v779, %v777
        %v783 = vmul.f32 %v782, %v650
        %v784 = vmul.f32 %v781, %v651
        %785 = vrot.lane.b32.xlu0 %v665, 14
        %v786 = vpop.permute.xlu0 %785
        %787 = vrot.lane.b32.xlu0 %v669, 14
        %v788 = vpop.permute.xlu0 %787
        %vm789 = vcmp.lt.s32.totalorder %v677, 14
        %v790 = vsel %vm789, %v786, %v788
        %v791 = vsel %vm789, %v788, %v786
        %v794 = vrot.slane %v650, 1
        %v795 = vrot.slane %v651, 1
        %v798 = vmul.f32 %v791, %v794
        %v799 = vmul.f32 %v790, %v795
        %800 = vrot.lane.b32.xlu0 %v665, 2
        %v801 = vpop.permute.xlu0 %800
        %802 = vrot.lane.b32.xlu0 %v669, 2
        %v803 = vpop.permute.xlu0 %802
        %vm804 = vcmp.lt.s32.totalorder %v677, 2
        %v805 = vsel %vm804, %v801, %v803
        %v806 = vsel %vm804, %v803, %v801
        %v807 = vrot.slane %v650, 2
        %v808 = vrot.slane %v651, 2
        %v811 = vmul.f32 %v806, %v807
        %v812 = vmul.f32 %v805, %v808
        %813 = vrot.lane.b32.xlu0 %v665, 1
        %v814 = vpop.permute.xlu0 %813
        %815 = vrot.lane.b32.xlu0 %v669, 1
        %v816 = vpop.permute.xlu0 %815
        %vm817 = vcmp.lt.s32.totalorder %v677, 1
        %v818 = vsel %vm817, %v814, %v816
        %v819 = vsel %vm817, %v816, %v814
        %v820 = vrot.slane %v650, 3
        %v821 = vrot.slane %v651, 3
        %v824 = vmul.f32 %v819, %v820
        %v825 = vmul.f32 %v818, %v821
        %v826 = vcombine.high %v650, %v651
        %v828 = vunpack.c.l.s4 1966171168
        %v829 = vunpack.c.0.s8 %v828
        %v830 = vlaneseq
        %v831 = vshrl.u32 %v830, 7
        %v832 = vsub.s32 %v829, %v831
        %v833 = vrot.slane %v826, %v832
        %v835 = vunpack.c.l.s4 1966171168
        %v836 = vunpack.c.0.s8 %v835
        %v837 = vlaneseq
        %v838 = vshrl.u32 %v837, 7
        %v839 = vsub.s32 %v836, %v838
        %v840 = vrot.slane %v833, %v839
        %v842 = vmul.f32 %v660, %v840
        %843 = vrot.lane.b32.xlu0 %v665, 127
        %v844 = vpop.permute.xlu0 %843
        %845 = vrot.lane.b32.xlu0 %v669, 127
        %v846 = vpop.permute.xlu0 %845
        %vm847 = vcmp.lt.s32.totalorder %v677, 127
        %v848 = vsel %vm847, %v844, %v846
        %v849 = vsel %vm847, %v846, %v844
        %v850 = vrot.slane %v650, 5
        %v851 = vrot.slane %v651, 5
        %v854 = vmul.f32 %v848, %v850
        %v855 = vmul.f32 %v849, %v851
        %856 = vrot.lane.b32.xlu0 %v665, 126
        %v857 = vpop.permute.xlu0 %856
        %858 = vrot.lane.b32.xlu0 %v669, 126
        %v859 = vpop.permute.xlu0 %858
        %vm860 = vcmp.lt.s32.totalorder %v677, 126
        %v861 = vsel %vm860, %v857, %v859
        %v862 = vsel %vm860, %v859, %v857
        %v863 = vrot.slane %v650, 6
        %v864 = vrot.slane %v651, 6
        %v867 = vmul.f32 %v861, %v863
        %v868 = vmul.f32 %v862, %v864
        %869 = vrot.lane.b32.xlu0 %v665, 114
        %v870 = vpop.permute.xlu0 %869
        %871 = vrot.lane.b32.xlu0 %v669, 114
        %v872 = vpop.permute.xlu0 %871
        %vm873 = vcmp.lt.s32.totalorder %v677, 114
        %v874 = vsel %vm873, %v870, %v872
        %v875 = vsel %vm873, %v872, %v870
        %v876 = vrot.slane %v650, 7
        %v877 = vrot.slane %v651, 7
        %v880 = vmul.f32 %v874, %v876
        %v881 = vmul.f32 %v875, %v877
        %882 = vrot.lane.b32.xlu0 %v665, 113
        %v883 = vpop.permute.xlu0 %882
        %884 = vrot.lane.b32.xlu0 %v669, 113
        %v885 = vpop.permute.xlu0 %884
        %vm886 = vcmp.lt.s32.totalorder %v677, 113
        %v887 = vsel %vm886, %v883, %v885
        %v888 = vsel %vm886, %v885, %v883
        %v889 = vmul.f32 %v887, %v652
        %v890 = vmul.f32 %v888, %v653
        %891 = vrot.lane.b32.xlu0 %v665, 112
        %v892 = vpop.permute.xlu0 %891
        %893 = vrot.lane.b32.xlu0 %v669, 112
        %v894 = vpop.permute.xlu0 %893
        %vm895 = vcmp.lt.s32.totalorder %v677, 112
        %v896 = vsel %vm895, %v892, %v894
        %v897 = vsel %vm895, %v894, %v892
        %v900 = vrot.slane %v652, 1
        %v901 = vrot.slane %v653, 1
        %v904 = vmul.f32 %v896, %v900
        %v905 = vmul.f32 %v897, %v901
        %906 = vrot.lane.b32.xlu0 %v665, 111
        %v907 = vpop.permute.xlu0 %906
        %908 = vrot.lane.b32.xlu0 %v669, 111
        %v909 = vpop.permute.xlu0 %908
        %vm910 = vcmp.lt.s32.totalorder %v677, 111
        %v911 = vsel %vm910, %v907, %v909
        %v912 = vsel %vm910, %v909, %v907
        %v913 = vrot.slane %v652, 2
        %v914 = vrot.slane %v653, 2
        %v917 = vmul.f32 %v911, %v913
        %v918 = vmul.f32 %v912, %v914
        %919 = vrot.lane.b32.xlu0 %v665, 110
        %v920 = vpop.permute.xlu0 %919
        %921 = vrot.lane.b32.xlu0 %v669, 110
        %v922 = vpop.permute.xlu0 %921
        %vm923 = vcmp.lt.s32.totalorder %v677, 110
        %v924 = vsel %vm923, %v920, %v922
        %v925 = vsel %vm923, %v922, %v920
        %v926 = vrot.slane %v652, 3
        %v927 = vrot.slane %v653, 3
        %v930 = vmul.f32 %v924, %v926
        %v931 = vmul.f32 %v925, %v927
        %932 = vrot.lane.b32.xlu0 %v665, 98
        %v933 = vpop.permute.xlu0 %932
        %934 = vrot.lane.b32.xlu0 %v669, 98
        %v935 = vpop.permute.xlu0 %934
        %vm936 = vcmp.lt.s32.totalorder %v677, 98
        %v937 = vsel %vm936, %v933, %v935
        %v938 = vsel %vm936, %v935, %v933
        %v939 = vrot.slane %v652, 4
        %v940 = vrot.slane %v653, 4
        %v943 = vmul.f32 %v937, %v939
        %v944 = vmul.f32 %v938, %v940
        %945 = vrot.lane.b32.xlu0 %v665, 97
        %v946 = vpop.permute.xlu0 %945
        %947 = vrot.lane.b32.xlu0 %v669, 97
        %v948 = vpop.permute.xlu0 %947
        %vm949 = vcmp.lt.s32.totalorder %v677, 97
        %v950 = vsel %vm949, %v946, %v948
        %v951 = vsel %vm949, %v948, %v946
        %v952 = vrot.slane %v652, 5
        %v953 = vrot.slane %v653, 5
        %v956 = vmul.f32 %v950, %v952
        %v957 = vmul.f32 %v951, %v953
        %958 = vrot.lane.b32.xlu0 %v665, 96
        %v959 = vpop.permute.xlu0 %958
        %960 = vrot.lane.b32.xlu0 %v669, 96
        %v961 = vpop.permute.xlu0 %960
        %vm962 = vcmp.lt.s32.totalorder %v677, 96
        %v963 = vsel %vm962, %v959, %v961
        %v964 = vsel %vm962, %v961, %v959
        %v965 = vrot.slane %v652, 6
        %v966 = vrot.slane %v653, 6
        %v969 = vmul.f32 %v963, %v965
        %v970 = vmul.f32 %v964, %v966
        %971 = vrot.lane.b32.xlu0 %v665, 95
        %v972 = vpop.permute.xlu0 %971
        %973 = vrot.lane.b32.xlu0 %v669, 95
        %v974 = vpop.permute.xlu0 %973
        %vm975 = vcmp.lt.s32.totalorder %v677, 95
        %v976 = vsel %vm975, %v972, %v974
        %v977 = vsel %vm975, %v974, %v972
        %v978 = vrot.slane %v652, 7
        %v979 = vrot.slane %v653, 7
        %v982 = vmul.f32 %v976, %v978
        %v983 = vmul.f32 %v977, %v979
        %984 = vrot.lane.b32.xlu0 %v665, 94
        %v985 = vpop.permute.xlu0 %984
        %986 = vrot.lane.b32.xlu0 %v669, 94
        %v987 = vpop.permute.xlu0 %986
        %vm988 = vcmp.lt.s32.totalorder %v677, 94
        %v989 = vsel %vm988, %v985, %v987
        %v990 = vsel %vm988, %v987, %v985
        %v991 = vmul.f32 %v989, %v654
        %v992 = vmul.f32 %v990, %v655
        %v995 = vrot.slane %v696, 7
        %v996 = vrot.slane %v697, 7
        %v1001 = vrot.slane %v709, 6
        %v1002 = vrot.slane %v710, 6
        %v1007 = vrot.slane %v722, 5
        %v1008 = vrot.slane %v723, 5
        %v1013 = vrot.slane %v735, 4
        %v1014 = vrot.slane %v736, 4
        %v1019 = vrot.slane %v748, 3
        %v1020 = vrot.slane %v749, 3
        %v1025 = vrot.slane %v761, 2
        %v1026 = vrot.slane %v762, 2
        %v1031 = vrot.slane %v774, 1
        %v1032 = vrot.slane %v775, 1
        %v1037 = vrot.slane %v798, 7
        %v1038 = vrot.slane %v799, 7
        %v1043 = vrot.slane %v811, 6
        %v1044 = vrot.slane %v812, 6
        %v1049 = vrot.slane %v824, 5
        %v1050 = vrot.slane %v825, 5
        %v1054 = vlaneseq
        %v1055 = vshrl.u32 %v1054, 7
        %v1056 = vsub.s32 0, %v1055
        %v1057 = vrot.slane %v842, %v1056
        %v1058 = vlaneseq
        %v1059 = vshrl.u32 %v1058, 7
        %v1060 = vsub.s32 1, %v1059
        %v1061 = vrot.slane %v842, %v1060
        %v1066 = vrot.slane %v854, 3
        %v1067 = vrot.slane %v855, 3
        %v1072 = vrot.slane %v867, 2
        %v1073 = vrot.slane %v868, 2
        %v1078 = vrot.slane %v880, 1
        %v1079 = vrot.slane %v881, 1
        %vm1082 = vcmask 1040384
        %v1083 = vsel %vm1082, %v681, %v995
        %v1084 = vsel %vm1082, %v682, %v996
        %vm1085 = vcmask 1041408
        %v1086 = vsel %vm1085, %v1083, %v1001
        %v1087 = vsel %vm1085, %v1084, %v1002
        %vm1088 = vcmask 1042432
        %v1089 = vsel %vm1088, %v1086, %v1007
        %v1090 = vsel %vm1088, %v1087, %v1008
        %vm1091 = vcmask 1043456
        %v1092 = vsel %vm1091, %v1089, %v1013
        %v1093 = vsel %vm1091, %v1090, %v1014
        %vm1094 = vcmask 1044480
        %v1095 = vsel %vm1094, %v1092, %v1019
        %v1096 = vsel %vm1094, %v1093, %v1020
        %vm1097 = vcmask 1045504
        %v1098 = vsel %vm1097, %v1095, %v1025
        %v1099 = vsel %vm1097, %v1096, %v1026
        %vm1100 = vcmask 1046528
        %v1101 = vsel %vm1100, %v1098, %v1031
        %v1102 = vsel %vm1100, %v1099, %v1032
        %v1103 = vsel %vm1082, %v783, %v1037
        %v1104 = vsel %vm1082, %v784, %v1038
        %v1105 = vsel %vm1085, %v1103, %v1043
        %v1106 = vsel %vm1085, %v1104, %v1044
        %v1107 = vsel %vm1088, %v1105, %v1049
        %v1108 = vsel %vm1088, %v1106, %v1050
        %v1109 = vsel %vm1091, %v1107, %v1057
        %v1110 = vsel %vm1091, %v1108, %v1061
        %v1111 = vsel %vm1094, %v1109, %v1066
        %v1112 = vsel %vm1094, %v1110, %v1067
        %v1113 = vsel %vm1097, %v1111, %v1072
        %v1114 = vsel %vm1097, %v1112, %v1073
        %v1115 = vsel %vm1100, %v1113, %v1078
        %v1116 = vsel %vm1100, %v1114, %v1079
        %v1119 = vrot.slane %v904, 7
        %v1120 = vrot.slane %v905, 7
        %v1125 = vrot.slane %v917, 6
        %v1126 = vrot.slane %v918, 6
        %v1131 = vrot.slane %v930, 5
        %v1132 = vrot.slane %v931, 5
        %v1137 = vrot.slane %v943, 4
        %v1138 = vrot.slane %v944, 4
        %v1143 = vrot.slane %v956, 3
        %v1144 = vrot.slane %v957, 3
        %v1149 = vrot.slane %v969, 2
        %v1150 = vrot.slane %v970, 2
        %v1155 = vrot.slane %v982, 1
        %v1156 = vrot.slane %v983, 1
        %v1159 = vsel %vm1082, %v889, %v1119
        %v1160 = vsel %vm1082, %v890, %v1120
        %v1161 = vsel %vm1085, %v1159, %v1125
        %v1162 = vsel %vm1085, %v1160, %v1126
        %v1163 = vsel %vm1088, %v1161, %v1131
        %v1164 = vsel %vm1088, %v1162, %v1132
        %v1165 = vsel %vm1091, %v1163, %v1137
        %v1166 = vsel %vm1091, %v1164, %v1138
        %v1167 = vsel %vm1094, %v1165, %v1143
        %v1168 = vsel %vm1094, %v1166, %v1144
        %v1169 = vsel %vm1097, %v1167, %v1149
        %v1170 = vsel %vm1097, %v1168, %v1150
        %v1171 = vsel %vm1100, %v1169, %v1155
        %v1172 = vsel %vm1100, %v1170, %v1156
        %v1173 = vld [vmem:[%s3] sm:$0xff]
        %v1174 = vld [vmem:[%s3 + $0x8] sm:$0xff]
        %v1175 = vld [vmem:[%s3 + $0x10] sm:$0xff]
        %v1176 = vld [vmem:[%s3 + $0x18] sm:$0xff]
        %v1177 = vld [vmem:[%s3 + $0x20] sm:$0xff]
        %v1178 = vld [vmem:[%s3 + $0x28] sm:$0xff]
        %v1179 = vld [vmem:[%s3 + $0x30] sm:$0xff]
        %v1180 = vld [vmem:[%s3 + $0x38] sm:$0xff]
        %v1181 = vld [vmem:[%s4] sm:$0xff]
        %v1182 = vld [vmem:[%s4 + $0x8] sm:$0xff]
        %v1183 = vld [vmem:[%s4 + $0x10] sm:$0xff]
        %v1184 = vld [vmem:[%s4 + $0x18] sm:$0xff]
        %v1185 = vld [vmem:[%s4 + $0x20] sm:$0xff]
        %v1186 = vld [vmem:[%s4 + $0x28] sm:$0xff]
        %v1187 = vld [vmem:[%s4 + $0x30] sm:$0xff]
        %v1188 = vld [vmem:[%s4 + $0x38] sm:$0xff]
        %1190 = vset.pattern.permute.xlu0 0
        %1191 = vperm.xlu0 %1190, %v1181
        %v1192 = vpop.permute.xlu0 %1191
        %1195 = vset.pattern.permute.xlu0 0
        %1196 = vperm.xlu0 %1195, %v1182
        %v1197 = vpop.permute.xlu0 %1196
        %1200 = vset.pattern.permute.xlu0 0
        %1201 = vperm.xlu0 %1200, %v1183
        %v1202 = vpop.permute.xlu0 %1201
        %1205 = vset.pattern.permute.xlu0 0
        %1206 = vperm.xlu0 %1205, %v1184
        %v1207 = vpop.permute.xlu0 %1206
        %1210 = vset.pattern.permute.xlu0 0
        %1211 = vperm.xlu0 %1210, %v1185
        %v1212 = vpop.permute.xlu0 %1211
        %1215 = vset.pattern.permute.xlu0 0
        %1216 = vperm.xlu0 %1215, %v1186
        %v1217 = vpop.permute.xlu0 %1216
        %1220 = vset.pattern.permute.xlu0 0
        %1221 = vperm.xlu0 %1220, %v1187
        %v1222 = vpop.permute.xlu0 %1221
        %1225 = vset.pattern.permute.xlu0 0
        %1226 = vperm.xlu0 %1225, %v1188
        %v1227 = vpop.permute.xlu0 %1226
        %vm1229 = vcmask 203776
        %v1231 = vsel %vm1229, %v1173, 0
        %v1234 = vsel %vm1229, %v1174, 0
        %v1237 = vsel %vm1229, %v1175, 0
        %v1240 = vsel %vm1229, %v1176, 0
        %v1243 = vsel %vm1229, %v1177, 0
        %v1246 = vsel %vm1229, %v1178, 0
        %v1249 = vsel %vm1229, %v1179, 0
        %v1252 = vsel %vm1229, %v1180, 0
        %v1255 = vsel %vm1082, %v991, 0
        %v1258 = vsel %vm1082, %v992, 0
        %1260 = vmatprep.subr.mxu0 %v1102
        %1261 = vmatpush1.msra.mxu0 %v1101
        %1262 = vmatprep.subr.mxu0 %v1116
        %1263 = vmatpush1.msra.mxu0 %v1115
        %1264 = vmatprep.subr.mxu0 %v1172
        %1265 = vmatpush1.msra.mxu0 %v1171
        %1266 = vmatprep.subr.mxu0 %v1258
        %1267 = vmatpush1.msra.mxu0 %v1255
        %1268 = vmatprep.subr.mxu0 0.0
        %1269 = vmatpush1.msra.mxu0 0.0
        %1270 = vmatprep.subr.mxu0 0.0
        %1271 = vmatpush1.msra.mxu0 0.0
        %1272 = vmatprep.subr.mxu0 0.0
        %1273 = vmatpush1.msra.mxu0 0.0
        %1274 = vmatprep.subr.mxu0 0.0
        %1275 = vmatpush1.msra.mxu0 0.0
        %1276 = vmatprep.subr.mxu0 0.0
        %1277 = vmatpush1.msra.mxu0 0.0
        %1278 = vmatprep.subr.mxu0 0.0
        %1279 = vmatpush1.msra.mxu0 0.0
        %1280 = vmatprep.subr.mxu0 0.0
        %1281 = vmatpush1.msra.mxu0 0.0
        %1282 = vmatprep.subr.mxu0 0.0
        %1283 = vmatpush1.msra.mxu0 0.0
        %1284 = vmatprep.subr.mxu0 0.0
        %1285 = vmatpush1.msra.mxu0 0.0
        %1286 = vmatprep.subr.mxu0 0.0
        %1287 = vmatpush1.msra.mxu0 0.0
        %1288 = vmatprep.subr.mxu0 0.0
        %1289 = vmatpush1.msra.mxu0 0.0
        %1290 = vmatprep.subr.mxu0 0.0
        %1291 = vmatpush1.msra.mxu0 0.0
        %1292 = vmatprep.subr.mxu0 0.0
        %1293 = vmatpush1.msra.mxu0 0.0
        %1294 = vmatprep.subr.mxu0 0.0
        %1295 = vmatpush1.msra.mxu0 0.0
        %1296 = vmatprep.subr.mxu0 0.0
        %1297 = vmatpush1.msra.mxu0 0.0
        %1298 = vmatprep.subr.mxu0 0.0
        %1299 = vmatpush1.msra.mxu0 0.0
        %1300 = vmatprep.subr.mxu0 0.0
        %1301 = vmatpush1.msra.mxu0 0.0
        %1302 = vmatprep.subr.mxu0 0.0
        %1303 = vmatpush1.msra.mxu0 0.0
        %1304 = vmatprep.subr.mxu0 0.0
        %1305 = vmatpush1.msra.mxu0 0.0
        %1306 = vmatprep.subr.mxu0 0.0
        %1307 = vmatpush1.msra.mxu0 0.0
        %1308 = vmatprep.subr.mxu0 0.0
        %1309 = vmatpush1.msra.mxu0 0.0
        %1310 = vmatprep.subr.mxu0 0.0
        %1311 = vmatpush1.msra.mxu0 0.0
        %1312 = vmatprep.subr.mxu0 0.0
        %1313 = vmatpush1.msra.mxu0 0.0
        %1314 = vmatprep.subr.mxu0 0.0
        %1315 = vmatpush1.msra.mxu0 0.0
        %1316 = vmatprep.subr.mxu0 0.0
        %1317 = vmatpush1.msra.mxu0 0.0
        %1318 = vmatprep.subr.mxu0 0.0
        %1319 = vmatpush1.msra.mxu0 0.0
        %1320 = vmatprep.subr.mxu0 0.0
        %1321 = vmatpush1.msra.mxu0 0.0
        %1322 = vmatprep.subr.mxu0 0.0
        %1323 = vmatpush1.msra.mxu0 0.0
        %1324 = vmatprep.mubr.f32.mxu0 0.0
        %1325 = vmatmul.mubr.f32.gmra.mrb[0].mxu0 %v1231
        %v1326 = vpop.f32.mrb[0].mxu0
        %v1327 = vadd.f32 %v1192, %v1326
        %v1328 = vpop.f32.mrb[0].mxu0
        %v1329 = vadd.f32 %v1192, %v1328
        %1330 = vmatprep.mubr.f32.mxu0 0.0
        %1331 = vmatmul.mubr.f32.gmra.mrb[0].mxu0 %v1234
        %v1332 = vpop.f32.mrb[0].mxu0
        %v1333 = vadd.f32 %v1197, %v1332
        %v1334 = vpop.f32.mrb[0].mxu0
        %v1335 = vadd.f32 %v1197, %v1334
        %1336 = vmatprep.mubr.f32.mxu0 0.0
        %1337 = vmatmul.mubr.f32.gmra.mrb[0].mxu0 %v1237
        %v1338 = vpop.f32.mrb[0].mxu0
        %v1339 = vadd.f32 %v1202, %v1338
        %v1340 = vpop.f32.mrb[0].mxu0
        %v1341 = vadd.f32 %v1202, %v1340
        %1342 = vmatprep.mubr.f32.mxu0 0.0
        %1343 = vmatmul.mubr.f32.gmra.mrb[0].mxu0 %v1240
        %v1344 = vpop.f32.mrb[0].mxu0
        %v1345 = vadd.f32 %v1207, %v1344
        %v1346 = vpop.f32.mrb[0].mxu0
        %v1347 = vadd.f32 %v1207, %v1346
        %1348 = vmatprep.mubr.f32.mxu0 0.0
        %1349 = vmatmul.mubr.f32.gmra.mrb[0].mxu0 %v1243
        %v1350 = vpop.f32.mrb[0].mxu0
        %v1351 = vadd.f32 %v1212, %v1350
        %v1352 = vpop.f32.mrb[0].mxu0
        %v1353 = vadd.f32 %v1212, %v1352
        %1354 = vmatprep.mubr.f32.mxu0 0.0
        %1355 = vmatmul.mubr.f32.gmra.mrb[0].mxu0 %v1246
        %v1356 = vpop.f32.mrb[0].mxu0
        %v1357 = vadd.f32 %v1217, %v1356
        %v1358 = vpop.f32.mrb[0].mxu0
        %v1359 = vadd.f32 %v1217, %v1358
        %1360 = vmatprep.mubr.f32.mxu0 0.0
        %1361 = vmatmul.mubr.f32.gmra.mrb[0].mxu0 %v1249
        %v1362 = vpop.f32.mrb[0].mxu0
        %v1363 = vadd.f32 %v1222, %v1362
        %v1364 = vpop.f32.mrb[0].mxu0
        %v1365 = vadd.f32 %v1222, %v1364
        %1366 = vmatprep.mubr.f32.mxu0 0.0
        %1367 = vmatmul.mubr.f32.gmra.mrb[0].mxu0 %v1252
        %v1368 = vpop.f32.mrb[0].mxu0
        %v1369 = vadd.f32 %v1227, %v1368
        %v1370 = vpop.f32.mrb[0].mxu0
        %v1371 = vadd.f32 %v1227, %v1370
        %1372 = vdwg.mxu0
        %v1373 = vmax.f32 %v1327, 0.0
        %v1374 = vmax.f32 %v1329, 0.0
        %v1375 = vmax.f32 %v1333, 0.0
        %v1376 = vmax.f32 %v1335, 0.0
        %v1377 = vmax.f32 %v1339, 0.0
        %v1378 = vmax.f32 %v1341, 0.0
        %v1379 = vmax.f32 %v1345, 0.0
        %v1380 = vmax.f32 %v1347, 0.0
        %v1381 = vmax.f32 %v1351, 0.0
        %v1382 = vmax.f32 %v1353, 0.0
        %v1383 = vmax.f32 %v1357, 0.0
        %v1384 = vmax.f32 %v1359, 0.0
        %v1385 = vmax.f32 %v1363, 0.0
        %v1386 = vmax.f32 %v1365, 0.0
        %v1387 = vmax.f32 %v1369, 0.0
        %v1388 = vmax.f32 %v1371, 0.0
        %1389 = vrot.lane.b32.xlu0 %v1373, 17
        %v1390 = vpop.permute.xlu0 %1389
        %1391 = vrot.lane.b32.xlu0 %v1375, 17
        %v1392 = vpop.permute.xlu0 %1391
        %1393 = vrot.lane.b32.xlu0 %v1377, 17
        %v1394 = vpop.permute.xlu0 %1393
        %1395 = vrot.lane.b32.xlu0 %v1379, 17
        %v1396 = vpop.permute.xlu0 %1395
        %1397 = vrot.lane.b32.xlu0 %v1381, 17
        %v1398 = vpop.permute.xlu0 %1397
        %1399 = vrot.lane.b32.xlu0 %v1383, 17
        %v1400 = vpop.permute.xlu0 %1399
        %1401 = vrot.lane.b32.xlu0 %v1385, 17
        %v1402 = vpop.permute.xlu0 %1401
        %1403 = vrot.lane.b32.xlu0 %v1387, 17
        %v1404 = vpop.permute.xlu0 %1403
        %1405 = vrot.lane.b32.xlu0 %v1374, 17
        %v1406 = vpop.permute.xlu0 %1405
        %1407 = vrot.lane.b32.xlu0 %v1376, 17
        %v1408 = vpop.permute.xlu0 %1407
        %1409 = vrot.lane.b32.xlu0 %v1378, 17
        %v1410 = vpop.permute.xlu0 %1409
        %1411 = vrot.lane.b32.xlu0 %v1380, 17
        %v1412 = vpop.permute.xlu0 %1411
        %1413 = vrot.lane.b32.xlu0 %v1382, 17
        %v1414 = vpop.permute.xlu0 %1413
        %1415 = vrot.lane.b32.xlu0 %v1384, 17
        %v1416 = vpop.permute.xlu0 %1415
        %1417 = vrot.lane.b32.xlu0 %v1386, 17
        %v1418 = vpop.permute.xlu0 %1417
        %1419 = vrot.lane.b32.xlu0 %v1388, 17
        %v1420 = vpop.permute.xlu0 %1419
        %v1421 = vsel %vm754, %v1390, %v1406
        %v1422 = vsel %vm754, %v1392, %v1408
        %v1423 = vsel %vm754, %v1394, %v1410
        %v1424 = vsel %vm754, %v1396, %v1412
        %v1425 = vsel %vm754, %v1398, %v1414
        %v1426 = vsel %vm754, %v1400, %v1416
        %v1427 = vsel %vm754, %v1402, %v1418
        %v1428 = vsel %vm754, %v1404, %v1420
        %v1429 = vsel %vm754, %v1406, %v1390
        %v1430 = vsel %vm754, %v1408, %v1392
        %v1431 = vsel %vm754, %v1410, %v1394
        %v1432 = vsel %vm754, %v1412, %v1396
        %v1433 = vsel %vm754, %v1414, %v1398
        %v1434 = vsel %vm754, %v1416, %v1400
        %v1435 = vsel %vm754, %v1418, %v1402
        %v1436 = vsel %vm754, %v1420, %v1404
        %v1437 = vlaneseq
        %v1438 = vshrl.u32 %v1437, 7
        %v1439 = vsub.s32 0, %v1438
        %v1440 = vrot.slane %v656, %v1439
        %v1441 = vlaneseq
        %v1442 = vshrl.u32 %v1441, 7
        %v1443 = vsub.s32 0, %v1442
        %v1444 = vrot.slane %v657, %v1443
        %v1445 = vmul.f32 %v1429, %v1440
        %v1446 = vmul.f32 %v1421, %v1444
        %v1447 = vmul.f32 %v1430, %v1440
        %v1448 = vmul.f32 %v1422, %v1444
        %v1449 = vmul.f32 %v1431, %v1440
        %v1450 = vmul.f32 %v1423, %v1444
        %v1451 = vmul.f32 %v1432, %v1440
        %v1452 = vmul.f32 %v1424, %v1444
        %v1453 = vmul.f32 %v1433, %v1440
        %v1454 = vmul.f32 %v1425, %v1444
        %v1455 = vmul.f32 %v1434, %v1440
        %v1456 = vmul.f32 %v1426, %v1444
        %v1457 = vmul.f32 %v1435, %v1440
        %v1458 = vmul.f32 %v1427, %v1444
        %v1459 = vmul.f32 %v1436, %v1440
        %v1460 = vmul.f32 %v1428, %v1444
        %1461 = vrot.lane.b32.xlu0 %v1373, 16
        %v1462 = vpop.permute.xlu0 %1461
        %1463 = vrot.lane.b32.xlu0 %v1375, 16
        %v1464 = vpop.permute.xlu0 %1463
        %1465 = vrot.lane.b32.xlu0 %v1377, 16
        %v1466 = vpop.permute.xlu0 %1465
        %1467 = vrot.lane.b32.xlu0 %v1379, 16
        %v1468 = vpop.permute.xlu0 %1467
        %1469 = vrot.lane.b32.xlu0 %v1381, 16
        %v1470 = vpop.permute.xlu0 %1469
        %1471 = vrot.lane.b32.xlu0 %v1383, 16
        %v1472 = vpop.permute.xlu0 %1471
        %1473 = vrot.lane.b32.xlu0 %v1385, 16
        %v1474 = vpop.permute.xlu0 %1473
        %1475 = vrot.lane.b32.xlu0 %v1387, 16
        %v1476 = vpop.permute.xlu0 %1475
        %1477 = vrot.lane.b32.xlu0 %v1374, 16
        %v1478 = vpop.permute.xlu0 %1477
        %1479 = vrot.lane.b32.xlu0 %v1376, 16
        %v1480 = vpop.permute.xlu0 %1479
        %1481 = vrot.lane.b32.xlu0 %v1378, 16
        %v1482 = vpop.permute.xlu0 %1481
        %1483 = vrot.lane.b32.xlu0 %v1380, 16
        %v1484 = vpop.permute.xlu0 %1483
        %1485 = vrot.lane.b32.xlu0 %v1382, 16
        %v1486 = vpop.permute.xlu0 %1485
        %1487 = vrot.lane.b32.xlu0 %v1384, 16
        %v1488 = vpop.permute.xlu0 %1487
        %1489 = vrot.lane.b32.xlu0 %v1386, 16
        %v1490 = vpop.permute.xlu0 %1489
        %1491 = vrot.lane.b32.xlu0 %v1388, 16
        %v1492 = vpop.permute.xlu0 %1491
        %v1493 = vsel %vm767, %v1462, %v1478
        %v1494 = vsel %vm767, %v1464, %v1480
        %v1495 = vsel %vm767, %v1466, %v1482
        %v1496 = vsel %vm767, %v1468, %v1484
        %v1497 = vsel %vm767, %v1470, %v1486
        %v1498 = vsel %vm767, %v1472, %v1488
        %v1499 = vsel %vm767, %v1474, %v1490
        %v1500 = vsel %vm767, %v1476, %v1492
        %v1501 = vsel %vm767, %v1478, %v1462
        %v1502 = vsel %vm767, %v1480, %v1464
        %v1503 = vsel %vm767, %v1482, %v1466
        %v1504 = vsel %vm767, %v1484, %v1468
        %v1505 = vsel %vm767, %v1486, %v1470
        %v1506 = vsel %vm767, %v1488, %v1472
        %v1507 = vsel %vm767, %v1490, %v1474
        %v1508 = vsel %vm767, %v1492, %v1476
        %v1509 = vlaneseq
        %v1510 = vshrl.u32 %v1509, 7
        %v1511 = vsub.s32 1, %v1510
        %v1512 = vrot.slane %v656, %v1511
        %v1513 = vlaneseq
        %v1514 = vshrl.u32 %v1513, 7
        %v1515 = vsub.s32 1, %v1514
        %v1516 = vrot.slane %v657, %v1515
        %v1517 = vmul.f32 %v1501, %v1512
        %v1518 = vmul.f32 %v1493, %v1516
        %v1519 = vmul.f32 %v1502, %v1512
        %v1520 = vmul.f32 %v1494, %v1516
        %v1521 = vmul.f32 %v1503, %v1512
        %v1522 = vmul.f32 %v1495, %v1516
        %v1523 = vmul.f32 %v1504, %v1512
        %v1524 = vmul.f32 %v1496, %v1516
        %v1525 = vmul.f32 %v1505, %v1512
        %v1526 = vmul.f32 %v1497, %v1516
        %v1527 = vmul.f32 %v1506, %v1512
        %v1528 = vmul.f32 %v1498, %v1516
        %v1529 = vmul.f32 %v1507, %v1512
        %v1530 = vmul.f32 %v1499, %v1516
        %v1531 = vmul.f32 %v1508, %v1512
        %v1532 = vmul.f32 %v1500, %v1516
        %1533 = vrot.lane.b32.xlu0 %v1373, 15
        %v1534 = vpop.permute.xlu0 %1533
        %1535 = vrot.lane.b32.xlu0 %v1375, 15
        %v1536 = vpop.permute.xlu0 %1535
        %1537 = vrot.lane.b32.xlu0 %v1377, 15
        %v1538 = vpop.permute.xlu0 %1537
        %1539 = vrot.lane.b32.xlu0 %v1379, 15
        %v1540 = vpop.permute.xlu0 %1539
        %1541 = vrot.lane.b32.xlu0 %v1381, 15
        %v1542 = vpop.permute.xlu0 %1541
        %1543 = vrot.lane.b32.xlu0 %v1383, 15
        %v1544 = vpop.permute.xlu0 %1543
        %1545 = vrot.lane.b32.xlu0 %v1385, 15
        %v1546 = vpop.permute.xlu0 %1545
        %1547 = vrot.lane.b32.xlu0 %v1387, 15
        %v1548 = vpop.permute.xlu0 %1547
        %1549 = vrot.lane.b32.xlu0 %v1374, 15
        %v1550 = vpop.permute.xlu0 %1549
        %1551 = vrot.lane.b32.xlu0 %v1376, 15
        %v1552 = vpop.permute.xlu0 %1551
        %1553 = vrot.lane.b32.xlu0 %v1378, 15
        %v1554 = vpop.permute.xlu0 %1553
        %1555 = vrot.lane.b32.xlu0 %v1380, 15
        %v1556 = vpop.permute.xlu0 %1555
        %1557 = vrot.lane.b32.xlu0 %v1382, 15
        %v1558 = vpop.permute.xlu0 %1557
        %1559 = vrot.lane.b32.xlu0 %v1384, 15
        %v1560 = vpop.permute.xlu0 %1559
        %1561 = vrot.lane.b32.xlu0 %v1386, 15
        %v1562 = vpop.permute.xlu0 %1561
        %1563 = vrot.lane.b32.xlu0 %v1388, 15
        %v1564 = vpop.permute.xlu0 %1563
        %v1565 = vsel %vm780, %v1534, %v1550
        %v1566 = vsel %vm780, %v1536, %v1552
        %v1567 = vsel %vm780, %v1538, %v1554
        %v1568 = vsel %vm780, %v1540, %v1556
        %v1569 = vsel %vm780, %v1542, %v1558
        %v1570 = vsel %vm780, %v1544, %v1560
        %v1571 = vsel %vm780, %v1546, %v1562
        %v1572 = vsel %vm780, %v1548, %v1564
        %v1573 = vsel %vm780, %v1550, %v1534
        %v1574 = vsel %vm780, %v1552, %v1536
        %v1575 = vsel %vm780, %v1554, %v1538
        %v1576 = vsel %vm780, %v1556, %v1540
        %v1577 = vsel %vm780, %v1558, %v1542
        %v1578 = vsel %vm780, %v1560, %v1544
        %v1579 = vsel %vm780, %v1562, %v1546
        %v1580 = vsel %vm780, %v1564, %v1548
        %v1581 = vlaneseq
        %v1582 = vshrl.u32 %v1581, 7
        %v1583 = vsub.s32 2, %v1582
        %v1584 = vrot.slane %v656, %v1583
        %v1585 = vlaneseq
        %v1586 = vshrl.u32 %v1585, 7
        %v1587 = vsub.s32 2, %v1586
        %v1588 = vrot.slane %v657, %v1587
        %v1589 = vmul.f32 %v1573, %v1584
        %v1590 = vmul.f32 %v1565, %v1588
        %v1591 = vmul.f32 %v1574, %v1584
        %v1592 = vmul.f32 %v1566, %v1588
        %v1593 = vmul.f32 %v1575, %v1584
        %v1594 = vmul.f32 %v1567, %v1588
        %v1595 = vmul.f32 %v1576, %v1584
        %v1596 = vmul.f32 %v1568, %v1588
        %v1597 = vmul.f32 %v1577, %v1584
        %v1598 = vmul.f32 %v1569, %v1588
        %v1599 = vmul.f32 %v1578, %v1584
        %v1600 = vmul.f32 %v1570, %v1588
        %v1601 = vmul.f32 %v1579, %v1584
        %v1602 = vmul.f32 %v1571, %v1588
        %v1603 = vmul.f32 %v1580, %v1584
        %v1604 = vmul.f32 %v1572, %v1588
        %1605 = vrot.lane.b32.xlu0 %v1373, 1
        %v1606 = vpop.permute.xlu0 %1605
        %1607 = vrot.lane.b32.xlu0 %v1375, 1
        %v1608 = vpop.permute.xlu0 %1607
        %1609 = vrot.lane.b32.xlu0 %v1377, 1
        %v1610 = vpop.permute.xlu0 %1609
        %1611 = vrot.lane.b32.xlu0 %v1379, 1
        %v1612 = vpop.permute.xlu0 %1611
        %1613 = vrot.lane.b32.xlu0 %v1381, 1
        %v1614 = vpop.permute.xlu0 %1613
        %1615 = vrot.lane.b32.xlu0 %v1383, 1
        %v1616 = vpop.permute.xlu0 %1615
        %1617 = vrot.lane.b32.xlu0 %v1385, 1
        %v1618 = vpop.permute.xlu0 %1617
        %1619 = vrot.lane.b32.xlu0 %v1387, 1
        %v1620 = vpop.permute.xlu0 %1619
        %1621 = vrot.lane.b32.xlu0 %v1374, 1
        %v1622 = vpop.permute.xlu0 %1621
        %1623 = vrot.lane.b32.xlu0 %v1376, 1
        %v1624 = vpop.permute.xlu0 %1623
        %1625 = vrot.lane.b32.xlu0 %v1378, 1
        %v1626 = vpop.permute.xlu0 %1625
        %1627 = vrot.lane.b32.xlu0 %v1380, 1
        %v1628 = vpop.permute.xlu0 %1627
        %1629 = vrot.lane.b32.xlu0 %v1382, 1
        %v1630 = vpop.permute.xlu0 %1629
        %1631 = vrot.lane.b32.xlu0 %v1384, 1
        %v1632 = vpop.permute.xlu0 %1631
        %1633 = vrot.lane.b32.xlu0 %v1386, 1
        %v1634 = vpop.permute.xlu0 %1633
        %1635 = vrot.lane.b32.xlu0 %v1388, 1
        %v1636 = vpop.permute.xlu0 %1635
        %v1637 = vsel %vm817, %v1606, %v1622
        %v1638 = vsel %vm817, %v1608, %v1624
        %v1639 = vsel %vm817, %v1610, %v1626
        %v1640 = vsel %vm817, %v1612, %v1628
        %v1641 = vsel %vm817, %v1614, %v1630
        %v1642 = vsel %vm817, %v1616, %v1632
        %v1643 = vsel %vm817, %v1618, %v1634
        %v1644 = vsel %vm817, %v1620, %v1636
        %v1645 = vsel %vm817, %v1622, %v1606
        %v1646 = vsel %vm817, %v1624, %v1608
        %v1647 = vsel %vm817, %v1626, %v1610
        %v1648 = vsel %vm817, %v1628, %v1612
        %v1649 = vsel %vm817, %v1630, %v1614
        %v1650 = vsel %vm817, %v1632, %v1616
        %v1651 = vsel %vm817, %v1634, %v1618
        %v1652 = vsel %vm817, %v1636, %v1620
        %v1653 = vlaneseq
        %v1654 = vshrl.u32 %v1653, 7
        %v1655 = vsub.s32 3, %v1654
        %v1656 = vrot.slane %v656, %v1655
        %v1657 = vlaneseq
        %v1658 = vshrl.u32 %v1657, 7
        %v1659 = vsub.s32 3, %v1658
        %v1660 = vrot.slane %v657, %v1659
        %v1661 = vmul.f32 %v1645, %v1656
        %v1662 = vmul.f32 %v1637, %v1660
        %v1663 = vmul.f32 %v1646, %v1656
        %v1664 = vmul.f32 %v1638, %v1660
        %v1665 = vmul.f32 %v1647, %v1656
        %v1666 = vmul.f32 %v1639, %v1660
        %v1667 = vmul.f32 %v1648, %v1656
        %v1668 = vmul.f32 %v1640, %v1660
        %v1669 = vmul.f32 %v1649, %v1656
        %v1670 = vmul.f32 %v1641, %v1660
        %v1671 = vmul.f32 %v1650, %v1656
        %v1672 = vmul.f32 %v1642, %v1660
        %v1673 = vmul.f32 %v1651, %v1656
        %v1674 = vmul.f32 %v1643, %v1660
        %v1675 = vmul.f32 %v1652, %v1656
        %v1676 = vmul.f32 %v1644, %v1660
        %v1677 = vlaneseq
        %v1678 = vshrl.u32 %v1677, 7
        %v1679 = vsub.s32 4, %v1678
        %v1680 = vrot.slane %v656, %v1679
        %v1681 = vlaneseq
        %v1682 = vshrl.u32 %v1681, 7
        %v1683 = vsub.s32 4, %v1682
        %v1684 = vrot.slane %v657, %v1683
        %v1685 = vmul.f32 %v1373, %v1680
        %v1686 = vmul.f32 %v1374, %v1684
        %v1687 = vmul.f32 %v1375, %v1680
        %v1688 = vmul.f32 %v1376, %v1684
        %v1689 = vmul.f32 %v1377, %v1680
        %v1690 = vmul.f32 %v1378, %v1684
        %v1691 = vmul.f32 %v1379, %v1680
        %v1692 = vmul.f32 %v1380, %v1684
        %v1693 = vmul.f32 %v1381, %v1680
        %v1694 = vmul.f32 %v1382, %v1684
        %v1695 = vmul.f32 %v1383, %v1680
        %v1696 = vmul.f32 %v1384, %v1684
        %v1697 = vmul.f32 %v1385, %v1680
        %v1698 = vmul.f32 %v1386, %v1684
        %v1699 = vmul.f32 %v1387, %v1680
        %v1700 = vmul.f32 %v1388, %v1684
        %1701 = vrot.lane.b32.xlu0 %v1373, 127
        %v1702 = vpop.permute.xlu0 %1701
        %1703 = vrot.lane.b32.xlu0 %v1375, 127
        %v1704 = vpop.permute.xlu0 %1703
        %1705 = vrot.lane.b32.xlu0 %v1377, 127
        %v1706 = vpop.permute.xlu0 %1705
        %1707 = vrot.lane.b32.xlu0 %v1379, 127
        %v1708 = vpop.permute.xlu0 %1707
        %1709 = vrot.lane.b32.xlu0 %v1381, 127
        %v1710 = vpop.permute.xlu0 %1709
        %1711 = vrot.lane.b32.xlu0 %v1383, 127
        %v1712 = vpop.permute.xlu0 %1711
        %1713 = vrot.lane.b32.xlu0 %v1385, 127
        %v1714 = vpop.permute.xlu0 %1713
        %1715 = vrot.lane.b32.xlu0 %v1387, 127
        %v1716 = vpop.permute.xlu0 %1715
        %1717 = vrot.lane.b32.xlu0 %v1374, 127
        %v1718 = vpop.permute.xlu0 %1717
        %1719 = vrot.lane.b32.xlu0 %v1376, 127
        %v1720 = vpop.permute.xlu0 %1719
        %1721 = vrot.lane.b32.xlu0 %v1378, 127
        %v1722 = vpop.permute.xlu0 %1721
        %1723 = vrot.lane.b32.xlu0 %v1380, 127
        %v1724 = vpop.permute.xlu0 %1723
        %1725 = vrot.lane.b32.xlu0 %v1382, 127
        %v1726 = vpop.permute.xlu0 %1725
        %1727 = vrot.lane.b32.xlu0 %v1384, 127
        %v1728 = vpop.permute.xlu0 %1727
        %1729 = vrot.lane.b32.xlu0 %v1386, 127
        %v1730 = vpop.permute.xlu0 %1729
        %1731 = vrot.lane.b32.xlu0 %v1388, 127
        %v1732 = vpop.permute.xlu0 %1731
        %v1733 = vsel %vm847, %v1702, %v1718
        %v1734 = vsel %vm847, %v1704, %v1720
        %v1735 = vsel %vm847, %v1706, %v1722
        %v1736 = vsel %vm847, %v1708, %v1724
        %v1737 = vsel %vm847, %v1710, %v1726
        %v1738 = vsel %vm847, %v1712, %v1728
        %v1739 = vsel %vm847, %v1714, %v1730
        %v1740 = vsel %vm847, %v1716, %v1732
        %v1741 = vsel %vm847, %v1718, %v1702
        %v1742 = vsel %vm847, %v1720, %v1704
        %v1743 = vsel %vm847, %v1722, %v1706
        %v1744 = vsel %vm847, %v1724, %v1708
        %v1745 = vsel %vm847, %v1726, %v1710
        %v1746 = vsel %vm847, %v1728, %v1712
        %v1747 = vsel %vm847, %v1730, %v1714
        %v1748 = vsel %vm847, %v1732, %v1716
        %v1749 = vlaneseq
        %v1750 = vshrl.u32 %v1749, 7
        %v1751 = vsub.s32 5, %v1750
        %v1752 = vrot.slane %v656, %v1751
        %v1753 = vlaneseq
        %v1754 = vshrl.u32 %v1753, 7
        %v1755 = vsub.s32 5, %v1754
        %v1756 = vrot.slane %v657, %v1755
        %v1757 = vmul.f32 %v1733, %v1752
        %v1758 = vmul.f32 %v1741, %v1756
        %v1759 = vmul.f32 %v1734, %v1752
        %v1760 = vmul.f32 %v1742, %v1756
        %v1761 = vmul.f32 %v1735, %v1752
        %v1762 = vmul.f32 %v1743, %v1756
        %v1763 = vmul.f32 %v1736, %v1752
        %v1764 = vmul.f32 %v1744, %v1756
        %v1765 = vmul.f32 %v1737, %v1752
        %v1766 = vmul.f32 %v1745, %v1756
        %v1767 = vmul.f32 %v1738, %v1752
        %v1768 = vmul.f32 %v1746, %v1756
        %v1769 = vmul.f32 %v1739, %v1752
        %v1770 = vmul.f32 %v1747, %v1756
        %v1771 = vmul.f32 %v1740, %v1752
        %v1772 = vmul.f32 %v1748, %v1756
        %1773 = vrot.lane.b32.xlu0 %v1373, 113
        %v1774 = vpop.permute.xlu0 %1773
        %1775 = vrot.lane.b32.xlu0 %v1375, 113
        %v1776 = vpop.permute.xlu0 %1775
        %1777 = vrot.lane.b32.xlu0 %v1377, 113
        %v1778 = vpop.permute.xlu0 %1777
        %1779 = vrot.lane.b32.xlu0 %v1379, 113
        %v1780 = vpop.permute.xlu0 %1779
        %1781 = vrot.lane.b32.xlu0 %v1381, 113
        %v1782 = vpop.permute.xlu0 %1781
        %1783 = vrot.lane.b32.xlu0 %v1383, 113
        %v1784 = vpop.permute.xlu0 %1783
        %1785 = vrot.lane.b32.xlu0 %v1385, 113
        %v1786 = vpop.permute.xlu0 %1785
        %1787 = vrot.lane.b32.xlu0 %v1387, 113
        %v1788 = vpop.permute.xlu0 %1787
        %1789 = vrot.lane.b32.xlu0 %v1374, 113
        %v1790 = vpop.permute.xlu0 %1789
        %1791 = vrot.lane.b32.xlu0 %v1376, 113
        %v1792 = vpop.permute.xlu0 %1791
        %1793 = vrot.lane.b32.xlu0 %v1378, 113
        %v1794 = vpop.permute.xlu0 %1793
        %1795 = vrot.lane.b32.xlu0 %v1380, 113
        %v1796 = vpop.permute.xlu0 %1795
        %1797 = vrot.lane.b32.xlu0 %v1382, 113
        %v1798 = vpop.permute.xlu0 %1797
        %1799 = vrot.lane.b32.xlu0 %v1384, 113
        %v1800 = vpop.permute.xlu0 %1799
        %1801 = vrot.lane.b32.xlu0 %v1386, 113
        %v1802 = vpop.permute.xlu0 %1801
        %1803 = vrot.lane.b32.xlu0 %v1388, 113
        %v1804 = vpop.permute.xlu0 %1803
        %v1805 = vsel %vm886, %v1774, %v1790
        %v1806 = vsel %vm886, %v1776, %v1792
        %v1807 = vsel %vm886, %v1778, %v1794
        %v1808 = vsel %vm886, %v1780, %v1796
        %v1809 = vsel %vm886, %v1782, %v1798
        %v1810 = vsel %vm886, %v1784, %v1800
        %v1811 = vsel %vm886, %v1786, %v1802
        %v1812 = vsel %vm886, %v1788, %v1804
        %v1813 = vsel %vm886, %v1790, %v1774
        %v1814 = vsel %vm886, %v1792, %v1776
        %v1815 = vsel %vm886, %v1794, %v1778
        %v1816 = vsel %vm886, %v1796, %v1780
        %v1817 = vsel %vm886, %v1798, %v1782
        %v1818 = vsel %vm886, %v1800, %v1784
        %v1819 = vsel %vm886, %v1802, %v1786
        %v1820 = vsel %vm886, %v1804, %v1788
        %v1821 = vlaneseq
        %v1822 = vshrl.u32 %v1821, 7
        %v1823 = vsub.s32 6, %v1822
        %v1824 = vrot.slane %v656, %v1823
        %v1825 = vlaneseq
        %v1826 = vshrl.u32 %v1825, 7
        %v1827 = vsub.s32 6, %v1826
        %v1828 = vrot.slane %v657, %v1827
        %v1829 = vmul.f32 %v1805, %v1824
        %v1830 = vmul.f32 %v1813, %v1828
        %v1831 = vmul.f32 %v1806, %v1824
        %v1832 = vmul.f32 %v1814, %v1828
        %v1833 = vmul.f32 %v1807, %v1824
        %v1834 = vmul.f32 %v1815, %v1828
        %v1835 = vmul.f32 %v1808, %v1824
        %v1836 = vmul.f32 %v1816, %v1828
        %v1837 = vmul.f32 %v1809, %v1824
        %v1838 = vmul.f32 %v1817, %v1828
        %v1839 = vmul.f32 %v1810, %v1824
        %v1840 = vmul.f32 %v1818, %v1828
        %v1841 = vmul.f32 %v1811, %v1824
        %v1842 = vmul.f32 %v1819, %v1828
        %v1843 = vmul.f32 %v1812, %v1824
        %v1844 = vmul.f32 %v1820, %v1828
        %1845 = vrot.lane.b32.xlu0 %v1373, 112
        %v1846 = vpop.permute.xlu0 %1845
        %1847 = vrot.lane.b32.xlu0 %v1375, 112
        %v1848 = vpop.permute.xlu0 %1847
        %1849 = vrot.lane.b32.xlu0 %v1377, 112
        %v1850 = vpop.permute.xlu0 %1849
        %1851 = vrot.lane.b32.xlu0 %v1379, 112
        %v1852 = vpop.permute.xlu0 %1851
        %1853 = vrot.lane.b32.xlu0 %v1381, 112
        %v1854 = vpop.permute.xlu0 %1853
        %1855 = vrot.lane.b32.xlu0 %v1383, 112
        %v1856 = vpop.permute.xlu0 %1855
        %1857 = vrot.lane.b32.xlu0 %v1385, 112
        %v1858 = vpop.permute.xlu0 %1857
        %1859 = vrot.lane.b32.xlu0 %v1387, 112
        %v1860 = vpop.permute.xlu0 %1859
        %1861 = vrot.lane.b32.xlu0 %v1374, 112
        %v1862 = vpop.permute.xlu0 %1861
        %1863 = vrot.lane.b32.xlu0 %v1376, 112
        %v1864 = vpop.permute.xlu0 %1863
        %1865 = vrot.lane.b32.xlu0 %v1378, 112
        %v1866 = vpop.permute.xlu0 %1865
        %1867 = vrot.lane.b32.xlu0 %v1380, 112
        %v1868 = vpop.permute.xlu0 %1867
        %1869 = vrot.lane.b32.xlu0 %v1382, 112
        %v1870 = vpop.permute.xlu0 %1869
        %1871 = vrot.lane.b32.xlu0 %v1384, 112
        %v1872 = vpop.permute.xlu0 %1871
        %1873 = vrot.lane.b32.xlu0 %v1386, 112
        %v1874 = vpop.permute.xlu0 %1873
        %1875 = vrot.lane.b32.xlu0 %v1388, 112
        %v1876 = vpop.permute.xlu0 %1875
        %v1877 = vsel %vm895, %v1846, %v1862
        %v1878 = vsel %vm895, %v1848, %v1864
        %v1879 = vsel %vm895, %v1850, %v1866
        %v1880 = vsel %vm895, %v1852, %v1868
        %v1881 = vsel %vm895, %v1854, %v1870
        %v1882 = vsel %vm895, %v1856, %v1872
        %v1883 = vsel %vm895, %v1858, %v1874
        %v1884 = vsel %vm895, %v1860, %v1876
        %v1885 = vsel %vm895, %v1862, %v1846
        %v1886 = vsel %vm895, %v1864, %v1848
        %v1887 = vsel %vm895, %v1866, %v1850
        %v1888 = vsel %vm895, %v1868, %v1852
        %v1889 = vsel %vm895, %v1870, %v1854
        %v1890 = vsel %vm895, %v1872, %v1856
        %v1891 = vsel %vm895, %v1874, %v1858
        %v1892 = vsel %vm895, %v1876, %v1860
        %v1893 = vlaneseq
        %v1894 = vshrl.u32 %v1893, 7
        %v1895 = vsub.s32 7, %v1894
        %v1896 = vrot.slane %v656, %v1895
        %v1897 = vlaneseq
        %v1898 = vshrl.u32 %v1897, 7
        %v1899 = vsub.s32 7, %v1898
        %v1900 = vrot.slane %v657, %v1899
        %v1901 = vmul.f32 %v1877, %v1896
        %v1902 = vmul.f32 %v1885, %v1900
        %v1903 = vmul.f32 %v1878, %v1896
        %v1904 = vmul.f32 %v1886, %v1900
        %v1905 = vmul.f32 %v1879, %v1896
        %v1906 = vmul.f32 %v1887, %v1900
        %v1907 = vmul.f32 %v1880, %v1896
        %v1908 = vmul.f32 %v1888, %v1900
        %v1909 = vmul.f32 %v1881, %v1896
        %v1910 = vmul.f32 %v1889, %v1900
        %v1911 = vmul.f32 %v1882, %v1896
        %v1912 = vmul.f32 %v1890, %v1900
        %v1913 = vmul.f32 %v1883, %v1896
        %v1914 = vmul.f32 %v1891, %v1900
        %v1915 = vmul.f32 %v1884, %v1896
        %v1916 = vmul.f32 %v1892, %v1900
        %1917 = vrot.lane.b32.xlu0 %v1373, 111
        %v1918 = vpop.permute.xlu0 %1917
        %1919 = vrot.lane.b32.xlu0 %v1375, 111
        %v1920 = vpop.permute.xlu0 %1919
        %1921 = vrot.lane.b32.xlu0 %v1377, 111
        %v1922 = vpop.permute.xlu0 %1921
        %1923 = vrot.lane.b32.xlu0 %v1379, 111
        %v1924 = vpop.permute.xlu0 %1923
        %1925 = vrot.lane.b32.xlu0 %v1381, 111
        %v1926 = vpop.permute.xlu0 %1925
        %1927 = vrot.lane.b32.xlu0 %v1383, 111
        %v1928 = vpop.permute.xlu0 %1927
        %1929 = vrot.lane.b32.xlu0 %v1385, 111
        %v1930 = vpop.permute.xlu0 %1929
        %1931 = vrot.lane.b32.xlu0 %v1387, 111
        %v1932 = vpop.permute.xlu0 %1931
        %1933 = vrot.lane.b32.xlu0 %v1374, 111
        %v1934 = vpop.permute.xlu0 %1933
        %1935 = vrot.lane.b32.xlu0 %v1376, 111
        %v1936 = vpop.permute.xlu0 %1935
        %1937 = vrot.lane.b32.xlu0 %v1378, 111
        %v1938 = vpop.permute.xlu0 %1937
        %1939 = vrot.lane.b32.xlu0 %v1380, 111
        %v1940 = vpop.permute.xlu0 %1939
        %1941 = vrot.lane.b32.xlu0 %v1382, 111
        %v1942 = vpop.permute.xlu0 %1941
        %1943 = vrot.lane.b32.xlu0 %v1384, 111
        %v1944 = vpop.permute.xlu0 %1943
        %1945 = vrot.lane.b32.xlu0 %v1386, 111
        %v1946 = vpop.permute.xlu0 %1945
        %1947 = vrot.lane.b32.xlu0 %v1388, 111
        %v1948 = vpop.permute.xlu0 %1947
        %v1949 = vsel %vm910, %v1918, %v1934
        %v1950 = vsel %vm910, %v1920, %v1936
        %v1951 = vsel %vm910, %v1922, %v1938
        %v1952 = vsel %vm910, %v1924, %v1940
        %v1953 = vsel %vm910, %v1926, %v1942
        %v1954 = vsel %vm910, %v1928, %v1944
        %v1955 = vsel %vm910, %v1930, %v1946
        %v1956 = vsel %vm910, %v1932, %v1948
        %v1957 = vsel %vm910, %v1934, %v1918
        %v1958 = vsel %vm910, %v1936, %v1920
        %v1959 = vsel %vm910, %v1938, %v1922
        %v1960 = vsel %vm910, %v1940, %v1924
        %v1961 = vsel %vm910, %v1942, %v1926
        %v1962 = vsel %vm910, %v1944, %v1928
        %v1963 = vsel %vm910, %v1946, %v1930
        %v1964 = vsel %vm910, %v1948, %v1932
        %v1965 = vlaneseq
        %v1966 = vshrl.u32 %v1965, 7
        %v1967 = vsub.s32 0, %v1966
        %v1968 = vrot.slane %v658, %v1967
        %v1969 = vlaneseq
        %v1970 = vshrl.u32 %v1969, 7
        %v1971 = vsub.s32 0, %v1970
        %v1972 = vrot.slane %v659, %v1971
        %v1973 = vmul.f32 %v1949, %v1968
        %v1974 = vmul.f32 %v1957, %v1972
        %v1975 = vmul.f32 %v1950, %v1968
        %v1976 = vmul.f32 %v1958, %v1972
        %v1977 = vmul.f32 %v1951, %v1968
        %v1978 = vmul.f32 %v1959, %v1972
        %v1979 = vmul.f32 %v1952, %v1968
        %v1980 = vmul.f32 %v1960, %v1972
        %v1981 = vmul.f32 %v1953, %v1968
        %v1982 = vmul.f32 %v1961, %v1972
        %v1983 = vmul.f32 %v1954, %v1968
        %v1984 = vmul.f32 %v1962, %v1972
        %v1985 = vmul.f32 %v1955, %v1968
        %v1986 = vmul.f32 %v1963, %v1972
        %v1987 = vmul.f32 %v1956, %v1968
        %v1988 = vmul.f32 %v1964, %v1972
        %v1989 = vld [vmem:[%s5] sm:$0xff]
        %v1990 = vld [vmem:[%s5 + $0x8] sm:$0xff]
        %v1991 = vld [vmem:[%s5 + $0x10] sm:$0xff]
        %v1992 = vld [vmem:[%s5 + $0x18] sm:$0xff]
        %v1993 = vld [vmem:[%s5 + $0x20] sm:$0xff]
        %v1994 = vld [vmem:[%s5 + $0x28] sm:$0xff]
        %v1995 = vld [vmem:[%s5 + $0x30] sm:$0xff]
        %v1996 = vld [vmem:[%s5 + $0x38] sm:$0xff]
        %v1997 = vld [vmem:[%s5 + $0x40] sm:$0xff]
        %v1998 = vld [vmem:[%s5 + $0x48] sm:$0xff]
        %v1999 = vld [vmem:[%s5 + $0x50] sm:$0xff]
        %v2000 = vld [vmem:[%s5 + $0x58] sm:$0xff]
        %v2001 = vld [vmem:[%s5 + $0x60] sm:$0xff]
        %v2002 = vld [vmem:[%s5 + $0x68] sm:$0xff]
        %v2003 = vld [vmem:[%s5 + $0x70] sm:$0xff]
        %v2004 = vld [vmem:[%s5 + $0x78] sm:$0xff]
        %v2005 = vld [vmem:[%s5 + $0x80] sm:$0xff]
        %v2006 = vld [vmem:[%s5 + $0x88] sm:$0xff]
        %v2007 = vld [vmem:[%s5 + $0x90] sm:$0xff]
        %v2008 = vld [vmem:[%s5 + $0x98] sm:$0xff]
        %v2009 = vld [vmem:[%s5 + $0xa0] sm:$0xff]
        %v2010 = vld [vmem:[%s5 + $0xa8] sm:$0xff]
        %v2011 = vld [vmem:[%s5 + $0xb0] sm:$0xff]
        %v2012 = vld [vmem:[%s5 + $0xb8] sm:$0xff]
        %v2013 = vld [vmem:[%s5 + $0xc0] sm:$0xff]
        %v2014 = vld [vmem:[%s5 + $0xc8] sm:$0xff]
        %v2015 = vld [vmem:[%s5 + $0xd0] sm:$0xff]
        %v2016 = vld [vmem:[%s5 + $0xd8] sm:$0xff]
        %v2017 = vld [vmem:[%s5 + $0xe0] sm:$0xff]
        %v2018 = vld [vmem:[%s5 + $0xe8] sm:$0xff]
        %v2019 = vld [vmem:[%s5 + $0xf0] sm:$0xff]
        %v2020 = vld [vmem:[%s5 + $0xf8] sm:$0xff]
        %v2021 = vld [vmem:[%s5 + $0x100] sm:$0xff]
        %v2022 = vld [vmem:[%s5 + $0x108] sm:$0xff]
        %v2023 = vld [vmem:[%s5 + $0x110] sm:$0xff]
        %v2024 = vld [vmem:[%s5 + $0x118] sm:$0xff]
        %v2025 = vld [vmem:[%s5 + $0x120] sm:$0xff]
        %v2026 = vld [vmem:[%s5 + $0x128] sm:$0xff]
        %v2027 = vld [vmem:[%s5 + $0x130] sm:$0xff]
        %v2028 = vld [vmem:[%s5 + $0x138] sm:$0xff]
        %v2029 = vld [vmem:[%s5 + $0x140] sm:$0xff]
        %v2030 = vld [vmem:[%s5 + $0x148] sm:$0xff]
        %v2031 = vld [vmem:[%s5 + $0x150] sm:$0xff]
        %v2032 = vld [vmem:[%s5 + $0x158] sm:$0xff]
        %v2033 = vld [vmem:[%s5 + $0x160] sm:$0xff]
        %v2034 = vld [vmem:[%s5 + $0x168] sm:$0xff]
        %v2035 = vld [vmem:[%s5 + $0x170] sm:$0xff]
        %v2036 = vld [vmem:[%s5 + $0x178] sm:$0xff]
        %v2037 = vld [vmem:[%s5 + $0x180] sm:$0xff]
        %v2038 = vld [vmem:[%s5 + $0x188] sm:$0xff]
        %v2039 = vld [vmem:[%s5 + $0x190] sm:$0xff]
        %v2040 = vld [vmem:[%s5 + $0x198] sm:$0xff]
        %v2041 = vld [vmem:[%s5 + $0x1a0] sm:$0xff]
        %v2042 = vld [vmem:[%s5 + $0x1a8] sm:$0xff]
        %v2043 = vld [vmem:[%s5 + $0x1b0] sm:$0xff]
        %v2044 = vld [vmem:[%s5 + $0x1b8] sm:$0xff]
        %v2045 = vld [vmem:[%s5 + $0x1c0] sm:$0xff]
        %v2046 = vld [vmem:[%s5 + $0x1c8] sm:$0xff]
        %v2047 = vld [vmem:[%s5 + $0x1d0] sm:$0xff]
        %v2048 = vld [vmem:[%s5 + $0x1d8] sm:$0xff]
        %v2049 = vld [vmem:[%s5 + $0x1e0] sm:$0xff]
        %v2050 = vld [vmem:[%s5 + $0x1e8] sm:$0xff]
        %v2051 = vld [vmem:[%s5 + $0x1f0] sm:$0xff]
        %v2052 = vld [vmem:[%s5 + $0x1f8] sm:$0xff]
        %v2053 = vld [vmem:[%s5 + $0x200] sm:$0xff]
        %v2054 = vld [vmem:[%s5 + $0x208] sm:$0xff]
        %v2055 = vld [vmem:[%s5 + $0x210] sm:$0xff]
        %v2056 = vld [vmem:[%s5 + $0x218] sm:$0xff]
        %v2057 = vld [vmem:[%s5 + $0x220] sm:$0xff]
        %v2058 = vld [vmem:[%s5 + $0x228] sm:$0xff]
        %v2059 = vld [vmem:[%s5 + $0x230] sm:$0xff]
        %v2060 = vld [vmem:[%s5 + $0x238] sm:$0xff]
        %v2061 = vld [vmem:[%s5 + $0x240] sm:$0xff]
        %v2062 = vld [vmem:[%s5 + $0x248] sm:$0xff]
        %v2063 = vld [vmem:[%s5 + $0x250] sm:$0xff]
        %v2064 = vld [vmem:[%s5 + $0x258] sm:$0xff]
        %v2065 = vld [vmem:[%s5 + $0x260] sm:$0xff]
        %v2066 = vld [vmem:[%s5 + $0x268] sm:$0xff]
        %v2067 = vld [vmem:[%s5 + $0x270] sm:$0xff]
        %v2068 = vld [vmem:[%s5 + $0x278] sm:$0xff]
        %v2069 = vld [vmem:[%s6] sm:$0xff]
        %v2070 = vld [vmem:[%s6 + $0x8] sm:$0xff]
        %v2071 = vld [vmem:[%s6 + $0x10] sm:$0xff]
        %v2072 = vld [vmem:[%s6 + $0x18] sm:$0xff]
        %v2073 = vld [vmem:[%s6 + $0x20] sm:$0xff]
        %v2074 = vld [vmem:[%s6 + $0x28] sm:$0xff]
        %v2075 = vld [vmem:[%s6 + $0x30] sm:$0xff]
        %v2076 = vld [vmem:[%s6 + $0x38] sm:$0xff]
        %v2077 = vld [vmem:[%s6 + $0x40] sm:$0xff]
        %v2078 = vld [vmem:[%s6 + $0x48] sm:$0xff]
        %v2079 = vld [vmem:[%s6 + $0x50] sm:$0xff]
        %v2080 = vld [vmem:[%s6 + $0x58] sm:$0xff]
        %v2081 = vld [vmem:[%s6 + $0x60] sm:$0xff]
        %v2082 = vld [vmem:[%s6 + $0x68] sm:$0xff]
        %v2083 = vld [vmem:[%s6 + $0x70] sm:$0xff]
        %v2084 = vld [vmem:[%s6 + $0x78] sm:$0xff]
        %2086 = vset.pattern.permute.xlu0 0
        %2087 = vperm.xlu0 %2086, %v2069
        %v2088 = vpop.permute.xlu0 %2087
        %2091 = vset.pattern.permute.xlu0 0
        %2092 = vperm.xlu0 %2091, %v2070
        %v2093 = vpop.permute.xlu0 %2092
        %2096 = vset.pattern.permute.xlu0 0
        %2097 = vperm.xlu0 %2096, %v2071
        %v2098 = vpop.permute.xlu0 %2097
        %2101 = vset.pattern.permute.xlu0 0
        %2102 = vperm.xlu0 %2101, %v2072
        %v2103 = vpop.permute.xlu0 %2102
        %2106 = vset.pattern.permute.xlu0 0
        %2107 = vperm.xlu0 %2106, %v2073
        %v2108 = vpop.permute.xlu0 %2107
        %2111 = vset.pattern.permute.xlu0 0
        %2112 = vperm.xlu0 %2111, %v2074
        %v2113 = vpop.permute.xlu0 %2112
        %2116 = vset.pattern.permute.xlu0 0
        %2117 = vperm.xlu0 %2116, %v2075
        %v2118 = vpop.permute.xlu0 %2117
        %2121 = vset.pattern.permute.xlu0 0
        %2122 = vperm.xlu0 %2121, %v2076
        %v2123 = vpop.permute.xlu0 %2122
        %2126 = vset.pattern.permute.xlu0 0
        %2127 = vperm.xlu0 %2126, %v2077
        %v2128 = vpop.permute.xlu0 %2127
        %2131 = vset.pattern.permute.xlu0 0
        %2132 = vperm.xlu0 %2131, %v2078
        %v2133 = vpop.permute.xlu0 %2132
        %2136 = vset.pattern.permute.xlu0 0
        %2137 = vperm.xlu0 %2136, %v2079
        %v2138 = vpop.permute.xlu0 %2137
        %2141 = vset.pattern.permute.xlu0 0
        %2142 = vperm.xlu0 %2141, %v2080
        %v2143 = vpop.permute.xlu0 %2142
        %2146 = vset.pattern.permute.xlu0 0
        %2147 = vperm.xlu0 %2146, %v2081
        %v2148 = vpop.permute.xlu0 %2147
        %2151 = vset.pattern.permute.xlu0 0
        %2152 = vperm.xlu0 %2151, %v2082
        %v2153 = vpop.permute.xlu0 %2152
        %2156 = vset.pattern.permute.xlu0 0
        %2157 = vperm.xlu0 %2156, %v2083
        %v2158 = vpop.permute.xlu0 %2157
        %2161 = vset.pattern.permute.xlu0 0
        %2162 = vperm.xlu0 %2161, %v2084
        %v2163 = vpop.permute.xlu0 %2162
        %vm2165 = vcmask 523264
        %v2167 = vsel %vm2165, %v1993, 0
        %v2170 = vsel %vm2165, %v1998, 0
        %v2173 = vsel %vm2165, %v2003, 0
        %v2176 = vsel %vm2165, %v2008, 0
        %v2179 = vsel %vm2165, %v2013, 0
        %v2182 = vsel %vm2165, %v2018, 0
        %v2185 = vsel %vm2165, %v2023, 0
        %v2188 = vsel %vm2165, %v2028, 0
        %v2191 = vsel %vm2165, %v2033, 0
        %v2194 = vsel %vm2165, %v2038, 0
        %v2197 = vsel %vm2165, %v2043, 0
        %v2200 = vsel %vm2165, %v2048, 0
        %v2203 = vsel %vm2165, %v2053, 0
        %v2206 = vsel %vm2165, %v2058, 0
        %v2209 = vsel %vm2165, %v2063, 0
        %v2212 = vsel %vm2165, %v2068, 0
        %2214 = vmatprep.subr.mxu0 %v1446
        %2215 = vmatpush1.msra.mxu0 %v1445
        %2216 = vmatprep.subr.mxu0 %v1448
        %2217 = vmatpush1.msra.mxu0 %v1447
        %2218 = vmatprep.subr.mxu0 %v1450
        %2219 = vmatpush1.msra.mxu0 %v1449
        %2220 = vmatprep.subr.mxu0 %v1452
        %2221 = vmatpush1.msra.mxu0 %v1451
        %2222 = vmatprep.subr.mxu0 %v1454
        %2223 = vmatpush1.msra.mxu0 %v1453
        %2224 = vmatprep.subr.mxu0 %v1456
        %2225 = vmatpush1.msra.mxu0 %v1455
        %2226 = vmatprep.subr.mxu0 %v1458
        %2227 = vmatpush1.msra.mxu0 %v1457
        %2228 = vmatprep.subr.mxu0 %v1460
        %2229 = vmatpush1.msra.mxu0 %v1459
        %2230 = vmatprep.subr.mxu0 %v1518
        %2231 = vmatpush1.msra.mxu0 %v1517
        %2232 = vmatprep.subr.mxu0 %v1520
        %2233 = vmatpush1.msra.mxu0 %v1519
        %2234 = vmatprep.subr.mxu0 %v1522
        %2235 = vmatpush1.msra.mxu0 %v1521
        %2236 = vmatprep.subr.mxu0 %v1524
        %2237 = vmatpush1.msra.mxu0 %v1523
        %2238 = vmatprep.subr.mxu0 %v1526
        %2239 = vmatpush1.msra.mxu0 %v1525
        %2240 = vmatprep.subr.mxu0 %v1528
        %2241 = vmatpush1.msra.mxu0 %v1527
        %2242 = vmatprep.subr.mxu0 %v1530
        %2243 = vmatpush1.msra.mxu0 %v1529
        %2244 = vmatprep.subr.mxu0 %v1532
        %2245 = vmatpush1.msra.mxu0 %v1531
        %2246 = vmatprep.subr.mxu0 %v1590
        %2247 = vmatpush1.msra.mxu0 %v1589
        %2248 = vmatprep.subr.mxu0 %v1592
        %2249 = vmatpush1.msra.mxu0 %v1591
        %2250 = vmatprep.subr.mxu0 %v1594
        %2251 = vmatpush1.msra.mxu0 %v1593
        %2252 = vmatprep.subr.mxu0 %v1596
        %2253 = vmatpush1.msra.mxu0 %v1595
        %2254 = vmatprep.subr.mxu0 %v1598
        %2255 = vmatpush1.msra.mxu0 %v1597
        %2256 = vmatprep.subr.mxu0 %v1600
        %2257 = vmatpush1.msra.mxu0 %v1599
        %2258 = vmatprep.subr.mxu0 %v1602
        %2259 = vmatpush1.msra.mxu0 %v1601
        %2260 = vmatprep.subr.mxu0 %v1604
        %2261 = vmatpush1.msra.mxu0 %v1603
        %2262 = vmatprep.subr.mxu0 %v1662
        %2263 = vmatpush1.msra.mxu0 %v1661
        %2264 = vmatprep.subr.mxu0 %v1664
        %2265 = vmatpush1.msra.mxu0 %v1663
        %2266 = vmatprep.subr.mxu0 %v1666
        %2267 = vmatpush1.msra.mxu0 %v1665
        %2268 = vmatprep.subr.mxu0 %v1668
        %2269 = vmatpush1.msra.mxu0 %v1667
        %2270 = vmatprep.subr.mxu0 %v1670
        %2271 = vmatpush1.msra.mxu0 %v1669
        %2272 = vmatprep.subr.mxu0 %v1672
        %2273 = vmatpush1.msra.mxu0 %v1671
        %2274 = vmatprep.subr.mxu0 %v1674
        %2275 = vmatpush1.msra.mxu0 %v1673
        %2276 = vmatprep.subr.mxu0 %v1676
        %2277 = vmatpush1.msra.mxu0 %v1675
        %2278 = vmatprep.mubr.f32.mxu0 %v1990
        %2279 = vmatmul.mubr.f32.gmra.mrb[0].mxu0 %v1989
        %v2280 = vpop.f32.mrb[0].mxu0
        %v2281 = vadd.f32 %v2088, %v2280
        %v2282 = vpop.f32.mrb[0].mxu0
        %v2283 = vadd.f32 %v2088, %v2282
        %2284 = vmatprep.mubr.f32.mxu0 %v1995
        %2285 = vmatmul.mubr.f32.gmra.mrb[0].mxu0 %v1994
        %v2286 = vpop.f32.mrb[0].mxu0
        %v2287 = vadd.f32 %v2093, %v2286
        %v2288 = vpop.f32.mrb[0].mxu0
        %v2289 = vadd.f32 %v2093, %v2288
        %2290 = vmatprep.mubr.f32.mxu0 %v2000
        %2291 = vmatmul.mubr.f32.gmra.mrb[0].mxu0 %v1999
        %v2292 = vpop.f32.mrb[0].mxu0
        %v2293 = vadd.f32 %v2098, %v2292
        %v2294 = vpop.f32.mrb[0].mxu0
        %v2295 = vadd.f32 %v2098, %v2294
        %2296 = vmatprep.mubr.f32.mxu0 %v2005
        %2297 = vmatmul.mubr.f32.gmra.mrb[0].mxu0 %v2004
        %v2298 = vpop.f32.mrb[0].mxu0
        %v2299 = vadd.f32 %v2103, %v2298
        %v2300 = vpop.f32.mrb[0].mxu0
        %v2301 = vadd.f32 %v2103, %v2300
        %2302 = vmatprep.mubr.f32.mxu0 %v2010
        %2303 = vmatmul.mubr.f32.gmra.mrb[0].mxu0 %v2009
        %v2304 = vpop.f32.mrb[0].mxu0
        %v2305 = vadd.f32 %v2108, %v2304
        %v2306 = vpop.f32.mrb[0].mxu0
        %v2307 = vadd.f32 %v2108, %v2306
        %2308 = vmatprep.mubr.f32.mxu0 %v2015
        %2309 = vmatmul.mubr.f32.gmra.mrb[0].mxu0 %v2014
        %v2310 = vpop.f32.mrb[0].mxu0
        %v2311 = vadd.f32 %v2113, %v2310
        %v2312 = vpop.f32.mrb[0].mxu0
        %v2313 = vadd.f32 %v2113, %v2312
        %2314 = vmatprep.mubr.f32.mxu0 %v2020
        %2315 = vmatmul.mubr.f32.gmra.mrb[0].mxu0 %v2019
        %v2316 = vpop.f32.mrb[0].mxu0
        %v2317 = vadd.f32 %v2118, %v2316
        %v2318 = vpop.f32.mrb[0].mxu0
        %v2319 = vadd.f32 %v2118, %v2318
        %2320 = vmatprep.mubr.f32.mxu0 %v2025
        %2321 = vmatmul.mubr.f32.gmra.mrb[0].mxu0 %v2024
        %v2322 = vpop.f32.mrb[0].mxu0
        %v2323 = vadd.f32 %v2123, %v2322
        %v2324 = vpop.f32.mrb[0].mxu0
        %v2325 = vadd.f32 %v2123, %v2324
        %2326 = vmatprep.mubr.f32.mxu0 %v2030
        %2327 = vmatmul.mubr.f32.gmra.mrb[0].mxu0 %v2029
        %v2328 = vpop.f32.mrb[0].mxu0
        %v2329 = vadd.f32 %v2128, %v2328
        %v2330 = vpop.f32.mrb[0].mxu0
        %v2331 = vadd.f32 %v2128, %v2330
        %2332 = vmatprep.mubr.f32.mxu0 %v2035
        %2333 = vmatmul.mubr.f32.gmra.mrb[0].mxu0 %v2034
        %v2334 = vpop.f32.mrb[0].mxu0
        %v2335 = vadd.f32 %v2133, %v2334
        %v2336 = vpop.f32.mrb[0].mxu0
        %v2337 = vadd.f32 %v2133, %v2336
        %2338 = vmatprep.mubr.f32.mxu0 %v2040
        %2339 = vmatmul.mubr.f32.gmra.mrb[0].mxu0 %v2039
        %v2340 = vpop.f32.mrb[0].mxu0
        %v2341 = vadd.f32 %v2138, %v2340
        %v2342 = vpop.f32.mrb[0].mxu0
        %v2343 = vadd.f32 %v2138, %v2342
        %2344 = vmatprep.mubr.f32.mxu0 %v2045
        %2345 = vmatmul.mubr.f32.gmra.mrb[0].mxu0 %v2044
        %v2346 = vpop.f32.mrb[0].mxu0
        %v2347 = vadd.f32 %v2143, %v2346
        %v2348 = vpop.f32.mrb[0].mxu0
        %v2349 = vadd.f32 %v2143, %v2348
        %2350 = vmatprep.mubr.f32.mxu0 %v2050
        %2351 = vmatmul.mubr.f32.gmra.mrb[0].mxu0 %v2049
        %v2352 = vpop.f32.mrb[0].mxu0
        %v2353 = vadd.f32 %v2148, %v2352
        %v2354 = vpop.f32.mrb[0].mxu0
        %v2355 = vadd.f32 %v2148, %v2354
        %2356 = vmatprep.mubr.f32.mxu0 %v2055
        %2357 = vmatmul.mubr.f32.gmra.mrb[0].mxu0 %v2054
        %v2358 = vpop.f32.mrb[0].mxu0
        %v2359 = vadd.f32 %v2153, %v2358
        %v2360 = vpop.f32.mrb[0].mxu0
        %v2361 = vadd.f32 %v2153, %v2360
        %2362 = vmatprep.mubr.f32.mxu0 %v2060
        %2363 = vmatmul.mubr.f32.gmra.mrb[0].mxu0 %v2059
        %v2364 = vpop.f32.mrb[0].mxu0
        %v2365 = vadd.f32 %v2158, %v2364
        %v2366 = vpop.f32.mrb[0].mxu0
        %v2367 = vadd.f32 %v2158, %v2366
        %2368 = vmatprep.mubr.f32.mxu0 %v2065
        %2369 = vmatmul.mubr.f32.gmra.mrb[0].mxu0 %v2064
        %v2370 = vpop.f32.mrb[0].mxu0
        %v2371 = vadd.f32 %v2163, %v2370
        %v2372 = vpop.f32.mrb[0].mxu0
        %v2373 = vadd.f32 %v2163, %v2372
        %2374 = vdwg.mxu0
        %2375 = vmatprep.subr.mxu0 %v1686
        %2376 = vmatpush1.msra.mxu0 %v1685
        %2377 = vmatprep.subr.mxu0 %v1688
        %2378 = vmatpush1.msra.mxu0 %v1687
        %2379 = vmatprep.subr.mxu0 %v1690
        %2380 = vmatpush1.msra.mxu0 %v1689
        %2381 = vmatprep.subr.mxu0 %v1692
        %2382 = vmatpush1.msra.mxu0 %v1691
        %2383 = vmatprep.subr.mxu0 %v1694
        %2384 = vmatpush1.msra.mxu0 %v1693
        %2385 = vmatprep.subr.mxu0 %v1696
        %2386 = vmatpush1.msra.mxu0 %v1695
        %2387 = vmatprep.subr.mxu0 %v1698
        %2388 = vmatpush1.msra.mxu0 %v1697
        %2389 = vmatprep.subr.mxu0 %v1700
        %2390 = vmatpush1.msra.mxu0 %v1699
        %2391 = vmatprep.subr.mxu0 %v1758
        %2392 = vmatpush1.msra.mxu0 %v1757
        %2393 = vmatprep.subr.mxu0 %v1760
        %2394 = vmatpush1.msra.mxu0 %v1759
        %2395 = vmatprep.subr.mxu0 %v1762
        %2396 = vmatpush1.msra.mxu0 %v1761
        %2397 = vmatprep.subr.mxu0 %v1764
        %2398 = vmatpush1.msra.mxu0 %v1763
        %2399 = vmatprep.subr.mxu0 %v1766
        %2400 = vmatpush1.msra.mxu0 %v1765
        %2401 = vmatprep.subr.mxu0 %v1768
        %2402 = vmatpush1.msra.mxu0 %v1767
        %2403 = vmatprep.subr.mxu0 %v1770
        %2404 = vmatpush1.msra.mxu0 %v1769
        %2405 = vmatprep.subr.mxu0 %v1772
        %2406 = vmatpush1.msra.mxu0 %v1771
        %2407 = vmatprep.subr.mxu0 %v1830
        %2408 = vmatpush1.msra.mxu0 %v1829
        %2409 = vmatprep.subr.mxu0 %v1832
        %2410 = vmatpush1.msra.mxu0 %v1831
        %2411 = vmatprep.subr.mxu0 %v1834
        %2412 = vmatpush1.msra.mxu0 %v1833
        %2413 = vmatprep.subr.mxu0 %v1836
        %2414 = vmatpush1.msra.mxu0 %v1835
        %2415 = vmatprep.subr.mxu0 %v1838
        %2416 = vmatpush1.msra.mxu0 %v1837
        %2417 = vmatprep.subr.mxu0 %v1840
        %2418 = vmatpush1.msra.mxu0 %v1839
        %2419 = vmatprep.subr.mxu0 %v1842
        %2420 = vmatpush1.msra.mxu0 %v1841
        %2421 = vmatprep.subr.mxu0 %v1844
        %2422 = vmatpush1.msra.mxu0 %v1843
        %2423 = vmatprep.subr.mxu0 %v1902
        %2424 = vmatpush1.msra.mxu0 %v1901
        %2425 = vmatprep.subr.mxu0 %v1904
        %2426 = vmatpush1.msra.mxu0 %v1903
        %2427 = vmatprep.subr.mxu0 %v1906
        %2428 = vmatpush1.msra.mxu0 %v1905
        %2429 = vmatprep.subr.mxu0 %v1908
        %2430 = vmatpush1.msra.mxu0 %v1907
        %2431 = vmatprep.subr.mxu0 %v1910
        %2432 = vmatpush1.msra.mxu0 %v1909
        %2433 = vmatprep.subr.mxu0 %v1912
        %2434 = vmatpush1.msra.mxu0 %v1911
        %2435 = vmatprep.subr.mxu0 %v1914
        %2436 = vmatpush1.msra.mxu0 %v1913
        %2437 = vmatprep.subr.mxu0 %v1916
        %2438 = vmatpush1.msra.mxu0 %v1915
        %2439 = vmatprep.mubr.f32.mxu0 %v1992
        %2440 = vmatmul.mubr.f32.gmra.mrb[0].mxu0 %v1991
        %v2441 = vpop.f32.mrb[0].mxu0
        %v2442 = vadd.f32 %v2281, %v2441
        %v2443 = vpop.f32.mrb[0].mxu0
        %v2444 = vadd.f32 %v2283, %v2443
        %2445 = vmatprep.mubr.f32.mxu0 %v1997
        %2446 = vmatmul.mubr.f32.gmra.mrb[0].mxu0 %v1996
        %v2447 = vpop.f32.mrb[0].mxu0
        %v2448 = vadd.f32 %v2287, %v2447
        %v2449 = vpop.f32.mrb[0].mxu0
        %v2450 = vadd.f32 %v2289, %v2449
        %2451 = vmatprep.mubr.f32.mxu0 %v2002
        %2452 = vmatmul.mubr.f32.gmra.mrb[0].mxu0 %v2001
        %v2453 = vpop.f32.mrb[0].mxu0
        %v2454 = vadd.f32 %v2293, %v2453
        %v2455 = vpop.f32.mrb[0].mxu0
        %v2456 = vadd.f32 %v2295, %v2455
        %2457 = vmatprep.mubr.f32.mxu0 %v2007
        %2458 = vmatmul.mubr.f32.gmra.mrb[0].mxu0 %v2006
        %v2459 = vpop.f32.mrb[0].mxu0
        %v2460 = vadd.f32 %v2299, %v2459
        %v2461 = vpop.f32.mrb[0].mxu0
        %v2462 = vadd.f32 %v2301, %v2461
        %2463 = vmatprep.mubr.f32.mxu0 %v2012
        %2464 = vmatmul.mubr.f32.gmra.mrb[0].mxu0 %v2011
        %v2465 = vpop.f32.mrb[0].mxu0
        %v2466 = vadd.f32 %v2305, %v2465
        %v2467 = vpop.f32.mrb[0].mxu0
        %v2468 = vadd.f32 %v2307, %v2467
        %2469 = vmatprep.mubr.f32.mxu0 %v2017
        %2470 = vmatmul.mubr.f32.gmra.mrb[0].mxu0 %v2016
        %v2471 = vpop.f32.mrb[0].mxu0
        %v2472 = vadd.f32 %v2311, %v2471
        %v2473 = vpop.f32.mrb[0].mxu0
        %v2474 = vadd.f32 %v2313, %v2473
        %2475 = vmatprep.mubr.f32.mxu0 %v2022
        %2476 = vmatmul.mubr.f32.gmra.mrb[0].mxu0 %v2021
        %v2477 = vpop.f32.mrb[0].mxu0
        %v2478 = vadd.f32 %v2317, %v2477
        %v2479 = vpop.f32.mrb[0].mxu0
        %v2480 = vadd.f32 %v2319, %v2479
        %2481 = vmatprep.mubr.f32.mxu0 %v2027
        %2482 = vmatmul.mubr.f32.gmra.mrb[0].mxu0 %v2026
        %v2483 = vpop.f32.mrb[0].mxu0
        %v2484 = vadd.f32 %v2323, %v2483
        %v2485 = vpop.f32.mrb[0].mxu0
        %v2486 = vadd.f32 %v2325, %v2485
        %2487 = vmatprep.mubr.f32.mxu0 %v2032
        %2488 = vmatmul.mubr.f32.gmra.mrb[0].mxu0 %v2031
        %v2489 = vpop.f32.mrb[0].mxu0
        %v2490 = vadd.f32 %v2329, %v2489
        %v2491 = vpop.f32.mrb[0].mxu0
        %v2492 = vadd.f32 %v2331, %v2491
        %2493 = vmatprep.mubr.f32.mxu0 %v2037
        %2494 = vmatmul.mubr.f32.gmra.mrb[0].mxu0 %v2036
        %v2495 = vpop.f32.mrb[0].mxu0
        %v2496 = vadd.f32 %v2335, %v2495
        %v2497 = vpop.f32.mrb[0].mxu0
        %v2498 = vadd.f32 %v2337, %v2497
        %2499 = vmatprep.mubr.f32.mxu0 %v2042
        %2500 = vmatmul.mubr.f32.gmra.mrb[0].mxu0 %v2041
        %v2501 = vpop.f32.mrb[0].mxu0
        %v2502 = vadd.f32 %v2341, %v2501
        %v2503 = vpop.f32.mrb[0].mxu0
        %v2504 = vadd.f32 %v2343, %v2503
        %2505 = vmatprep.mubr.f32.mxu0 %v2047
        %2506 = vmatmul.mubr.f32.gmra.mrb[0].mxu0 %v2046
        %v2507 = vpop.f32.mrb[0].mxu0
        %v2508 = vadd.f32 %v2347, %v2507
        %v2509 = vpop.f32.mrb[0].mxu0
        %v2510 = vadd.f32 %v2349, %v2509
        %2511 = vmatprep.mubr.f32.mxu0 %v2052
        %2512 = vmatmul.mubr.f32.gmra.mrb[0].mxu0 %v2051
        %v2513 = vpop.f32.mrb[0].mxu0
        %v2514 = vadd.f32 %v2353, %v2513
        %v2515 = vpop.f32.mrb[0].mxu0
        %v2516 = vadd.f32 %v2355, %v2515
        %2517 = vmatprep.mubr.f32.mxu0 %v2057
        %2518 = vmatmul.mubr.f32.gmra.mrb[0].mxu0 %v2056
        %v2519 = vpop.f32.mrb[0].mxu0
        %v2520 = vadd.f32 %v2359, %v2519
        %v2521 = vpop.f32.mrb[0].mxu0
        %v2522 = vadd.f32 %v2361, %v2521
        %2523 = vmatprep.mubr.f32.mxu0 %v2062
        %2524 = vmatmul.mubr.f32.gmra.mrb[0].mxu0 %v2061
        %v2525 = vpop.f32.mrb[0].mxu0
        %v2526 = vadd.f32 %v2365, %v2525
        %v2527 = vpop.f32.mrb[0].mxu0
        %v2528 = vadd.f32 %v2367, %v2527
        %2529 = vmatprep.mubr.f32.mxu0 %v2067
        %2530 = vmatmul.mubr.f32.gmra.mrb[0].mxu0 %v2066
        %v2531 = vpop.f32.mrb[0].mxu0
        %v2532 = vadd.f32 %v2371, %v2531
        %v2533 = vpop.f32.mrb[0].mxu0
        %v2534 = vadd.f32 %v2373, %v2533
        %2535 = vdwg.mxu0
        %2536 = vmatprep.subr.mxu0 %v1974
        %2537 = vmatpush1.msra.mxu0 %v1973
        %2538 = vmatprep.subr.mxu0 %v1976
        %2539 = vmatpush1.msra.mxu0 %v1975
        %2540 = vmatprep.subr.mxu0 %v1978
        %2541 = vmatpush1.msra.mxu0 %v1977
        %2542 = vmatprep.subr.mxu0 %v1980
        %2543 = vmatpush1.msra.mxu0 %v1979
        %2544 = vmatprep.subr.mxu0 %v1982
        %2545 = vmatpush1.msra.mxu0 %v1981
        %2546 = vmatprep.subr.mxu0 %v1984
        %2547 = vmatpush1.msra.mxu0 %v1983
        %2548 = vmatprep.subr.mxu0 %v1986
        %2549 = vmatpush1.msra.mxu0 %v1985
        %2550 = vmatprep.subr.mxu0 %v1988
        %2551 = vmatpush1.msra.mxu0 %v1987
        %2552 = vmatprep.subr.mxu0 0.0
        %2553 = vmatpush1.msra.mxu0 0.0
        %2554 = vmatprep.subr.mxu0 0.0
        %2555 = vmatpush1.msra.mxu0 0.0
        %2556 = vmatprep.subr.mxu0 0.0
        %2557 = vmatpush1.msra.mxu0 0.0
        %2558 = vmatprep.subr.mxu0 0.0
        %2559 = vmatpush1.msra.mxu0 0.0
        %2560 = vmatprep.subr.mxu0 0.0
        %2561 = vmatpush1.msra.mxu0 0.0
        %2562 = vmatprep.subr.mxu0 0.0
        %2563 = vmatpush1.msra.mxu0 0.0
        %2564 = vmatprep.subr.mxu0 0.0
        %2565 = vmatpush1.msra.mxu0 0.0
        %2566 = vmatprep.subr.mxu0 0.0
        %2567 = vmatpush1.msra.mxu0 0.0
        %2568 = vmatprep.subr.mxu0 0.0
        %2569 = vmatpush1.msra.mxu0 0.0
        %2570 = vmatprep.subr.mxu0 0.0
        %2571 = vmatpush1.msra.mxu0 0.0
        %2572 = vmatprep.subr.mxu0 0.0
        %2573 = vmatpush1.msra.mxu0 0.0
        %2574 = vmatprep.subr.mxu0 0.0
        %2575 = vmatpush1.msra.mxu0 0.0
        %2576 = vmatprep.subr.mxu0 0.0
        %2577 = vmatpush1.msra.mxu0 0.0
        %2578 = vmatprep.subr.mxu0 0.0
        %2579 = vmatpush1.msra.mxu0 0.0
        %2580 = vmatprep.subr.mxu0 0.0
        %2581 = vmatpush1.msra.mxu0 0.0
        %2582 = vmatprep.subr.mxu0 0.0
        %2583 = vmatpush1.msra.mxu0 0.0
        %2584 = vmatprep.subr.mxu0 0.0
        %2585 = vmatpush1.msra.mxu0 0.0
        %2586 = vmatprep.subr.mxu0 0.0
        %2587 = vmatpush1.msra.mxu0 0.0
        %2588 = vmatprep.subr.mxu0 0.0
        %2589 = vmatpush1.msra.mxu0 0.0
        %2590 = vmatprep.subr.mxu0 0.0
        %2591 = vmatpush1.msra.mxu0 0.0
        %2592 = vmatprep.subr.mxu0 0.0
        %2593 = vmatpush1.msra.mxu0 0.0
        %2594 = vmatprep.subr.mxu0 0.0
        %2595 = vmatpush1.msra.mxu0 0.0
        %2596 = vmatprep.subr.mxu0 0.0
        %2597 = vmatpush1.msra.mxu0 0.0
        %2598 = vmatprep.subr.mxu0 0.0
        %2599 = vmatpush1.msra.mxu0 0.0
        %2600 = vmatprep.mubr.f32.mxu0 0.0
        %2601 = vmatmul.mubr.f32.gmra.mrb[0].mxu0 %v2167
        %v2602 = vpop.f32.mrb[0].mxu0
        %v2603 = vadd.f32 %v2442, %v2602
        %v2604 = vpop.f32.mrb[0].mxu0
        %v2605 = vadd.f32 %v2444, %v2604
        %2606 = vmatprep.mubr.f32.mxu0 0.0
        %2607 = vmatmul.mubr.f32.gmra.mrb[0].mxu0 %v2170
        %v2608 = vpop.f32.mrb[0].mxu0
        %v2609 = vadd.f32 %v2448, %v2608
        %v2610 = vpop.f32.mrb[0].mxu0
        %v2611 = vadd.f32 %v2450, %v2610
        %2612 = vmatprep.mubr.f32.mxu0 0.0
        %2613 = vmatmul.mubr.f32.gmra.mrb[0].mxu0 %v2173
        %v2614 = vpop.f32.mrb[0].mxu0
        %v2615 = vadd.f32 %v2454, %v2614
        %v2616 = vpop.f32.mrb[0].mxu0
        %v2617 = vadd.f32 %v2456, %v2616
        %2618 = vmatprep.mubr.f32.mxu0 0.0
        %2619 = vmatmul.mubr.f32.gmra.mrb[0].mxu0 %v2176
        %v2620 = vpop.f32.mrb[0].mxu0
        %v2621 = vadd.f32 %v2460, %v2620
        %v2622 = vpop.f32.mrb[0].mxu0
        %v2623 = vadd.f32 %v2462, %v2622
        %2624 = vmatprep.mubr.f32.mxu0 0.0
        %2625 = vmatmul.mubr.f32.gmra.mrb[0].mxu0 %v2179
        %v2626 = vpop.f32.mrb[0].mxu0
        %v2627 = vadd.f32 %v2466, %v2626
        %v2628 = vpop.f32.mrb[0].mxu0
        %v2629 = vadd.f32 %v2468, %v2628
        %2630 = vmatprep.mubr.f32.mxu0 0.0
        %2631 = vmatmul.mubr.f32.gmra.mrb[0].mxu0 %v2182
        %v2632 = vpop.f32.mrb[0].mxu0
        %v2633 = vadd.f32 %v2472, %v2632
        %v2634 = vpop.f32.mrb[0].mxu0
        %v2635 = vadd.f32 %v2474, %v2634
        %2636 = vmatprep.mubr.f32.mxu0 0.0
        %2637 = vmatmul.mubr.f32.gmra.mrb[0].mxu0 %v2185
        %v2638 = vpop.f32.mrb[0].mxu0
        %v2639 = vadd.f32 %v2478, %v2638
        %v2640 = vpop.f32.mrb[0].mxu0
        %v2641 = vadd.f32 %v2480, %v2640
        %2642 = vmatprep.mubr.f32.mxu0 0.0
        %2643 = vmatmul.mubr.f32.gmra.mrb[0].mxu0 %v2188
        %v2644 = vpop.f32.mrb[0].mxu0
        %v2645 = vadd.f32 %v2484, %v2644
        %v2646 = vpop.f32.mrb[0].mxu0
        %v2647 = vadd.f32 %v2486, %v2646
        %2648 = vmatprep.mubr.f32.mxu0 0.0
        %2649 = vmatmul.mubr.f32.gmra.mrb[0].mxu0 %v2191
        %v2650 = vpop.f32.mrb[0].mxu0
        %v2651 = vadd.f32 %v2490, %v2650
        %v2652 = vpop.f32.mrb[0].mxu0
        %v2653 = vadd.f32 %v2492, %v2652
        %2654 = vmatprep.mubr.f32.mxu0 0.0
        %2655 = vmatmul.mubr.f32.gmra.mrb[0].mxu0 %v2194
        %v2656 = vpop.f32.mrb[0].mxu0
        %v2657 = vadd.f32 %v2496, %v2656
        %v2658 = vpop.f32.mrb[0].mxu0
        %v2659 = vadd.f32 %v2498, %v2658
        %2660 = vmatprep.mubr.f32.mxu0 0.0
        %2661 = vmatmul.mubr.f32.gmra.mrb[0].mxu0 %v2197
        %v2662 = vpop.f32.mrb[0].mxu0
        %v2663 = vadd.f32 %v2502, %v2662
        %v2664 = vpop.f32.mrb[0].mxu0
        %v2665 = vadd.f32 %v2504, %v2664
        %2666 = vmatprep.mubr.f32.mxu0 0.0
        %2667 = vmatmul.mubr.f32.gmra.mrb[0].mxu0 %v2200
        %v2668 = vpop.f32.mrb[0].mxu0
        %v2669 = vadd.f32 %v2508, %v2668
        %v2670 = vpop.f32.mrb[0].mxu0
        %v2671 = vadd.f32 %v2510, %v2670
        %2672 = vmatprep.mubr.f32.mxu0 0.0
        %2673 = vmatmul.mubr.f32.gmra.mrb[0].mxu0 %v2203
        %v2674 = vpop.f32.mrb[0].mxu0
        %v2675 = vadd.f32 %v2514, %v2674
        %v2676 = vpop.f32.mrb[0].mxu0
        %v2677 = vadd.f32 %v2516, %v2676
        %2678 = vmatprep.mubr.f32.mxu0 0.0
        %2679 = vmatmul.mubr.f32.gmra.mrb[0].mxu0 %v2206
        %v2680 = vpop.f32.mrb[0].mxu0
        %v2681 = vadd.f32 %v2520, %v2680
        %v2682 = vpop.f32.mrb[0].mxu0
        %v2683 = vadd.f32 %v2522, %v2682
        %2684 = vmatprep.mubr.f32.mxu0 0.0
        %2685 = vmatmul.mubr.f32.gmra.mrb[0].mxu0 %v2209
        %v2686 = vpop.f32.mrb[0].mxu0
        %v2687 = vadd.f32 %v2526, %v2686
        %v2688 = vpop.f32.mrb[0].mxu0
        %v2689 = vadd.f32 %v2528, %v2688
        %2690 = vmatprep.mubr.f32.mxu0 0.0
        %2691 = vmatmul.mubr.f32.gmra.mrb[0].mxu0 %v2212
        %v2692 = vpop.f32.mrb[0].mxu0
        %v2693 = vadd.f32 %v2532, %v2692
        %v2694 = vpop.f32.mrb[0].mxu0
        %v2695 = vadd.f32 %v2534, %v2694
        %2696 = vdwg.mxu0
        %v2697 = vmax.f32 %v2603, 0.0
        %v2698 = vmax.f32 %v2605, 0.0
        %v2699 = vmax.f32 %v2609, 0.0
        %v2700 = vmax.f32 %v2611, 0.0
        %v2701 = vmax.f32 %v2615, 0.0
        %v2702 = vmax.f32 %v2617, 0.0
        %v2703 = vmax.f32 %v2621, 0.0
        %v2704 = vmax.f32 %v2623, 0.0
        %v2705 = vmax.f32 %v2627, 0.0
        %v2706 = vmax.f32 %v2629, 0.0
        %v2707 = vmax.f32 %v2633, 0.0
        %v2708 = vmax.f32 %v2635, 0.0
        %v2709 = vmax.f32 %v2639, 0.0
        %v2710 = vmax.f32 %v2641, 0.0
        %v2711 = vmax.f32 %v2645, 0.0
        %v2712 = vmax.f32 %v2647, 0.0
        %v2713 = vmax.f32 %v2651, 0.0
        %v2714 = vmax.f32 %v2653, 0.0
        %v2715 = vmax.f32 %v2657, 0.0
        %v2716 = vmax.f32 %v2659, 0.0
        %v2717 = vmax.f32 %v2663, 0.0
        %v2718 = vmax.f32 %v2665, 0.0
        %v2719 = vmax.f32 %v2669, 0.0
        %v2720 = vmax.f32 %v2671, 0.0
        %v2721 = vmax.f32 %v2675, 0.0
        %v2722 = vmax.f32 %v2677, 0.0
        %v2723 = vmax.f32 %v2681, 0.0
        %v2724 = vmax.f32 %v2683, 0.0
        %v2725 = vmax.f32 %v2687, 0.0
        %v2726 = vmax.f32 %v2689, 0.0
        %v2727 = vmax.f32 %v2693, 0.0
        %v2728 = vmax.f32 %v2695, 0.0
        %2729 = vrot.lane.b32.xlu0 %v2697, 17
        %v2730 = vpop.permute.xlu0 %2729
        %2731 = vrot.lane.b32.xlu0 %v2699, 17
        %v2732 = vpop.permute.xlu0 %2731
        %2733 = vrot.lane.b32.xlu0 %v2701, 17
        %v2734 = vpop.permute.xlu0 %2733
        %2735 = vrot.lane.b32.xlu0 %v2703, 17
        %v2736 = vpop.permute.xlu0 %2735
        %2737 = vrot.lane.b32.xlu0 %v2705, 17
        %v2738 = vpop.permute.xlu0 %2737
        %2739 = vrot.lane.b32.xlu0 %v2707, 17
        %v2740 = vpop.permute.xlu0 %2739
        %2741 = vrot.lane.b32.xlu0 %v2709, 17
        %v2742 = vpop.permute.xlu0 %2741
        %2743 = vrot.lane.b32.xlu0 %v2711, 17
        %v2744 = vpop.permute.xlu0 %2743
        %2745 = vrot.lane.b32.xlu0 %v2713, 17
        %v2746 = vpop.permute.xlu0 %2745
        %2747 = vrot.lane.b32.xlu0 %v2715, 17
        %v2748 = vpop.permute.xlu0 %2747
        %2749 = vrot.lane.b32.xlu0 %v2717, 17
        %v2750 = vpop.permute.xlu0 %2749
        %2751 = vrot.lane.b32.xlu0 %v2719, 17
        %v2752 = vpop.permute.xlu0 %2751
        %2753 = vrot.lane.b32.xlu0 %v2721, 17
        %v2754 = vpop.permute.xlu0 %2753
        %2755 = vrot.lane.b32.xlu0 %v2723, 17
        %v2756 = vpop.permute.xlu0 %2755
        %2757 = vrot.lane.b32.xlu0 %v2725, 17
        %v2758 = vpop.permute.xlu0 %2757
        %2759 = vrot.lane.b32.xlu0 %v2727, 17
        %v2760 = vpop.permute.xlu0 %2759
        %2761 = vrot.lane.b32.xlu0 %v2698, 17
        %v2762 = vpop.permute.xlu0 %2761
        %2763 = vrot.lane.b32.xlu0 %v2700, 17
        %v2764 = vpop.permute.xlu0 %2763
        %2765 = vrot.lane.b32.xlu0 %v2702, 17
        %v2766 = vpop.permute.xlu0 %2765
        %2767 = vrot.lane.b32.xlu0 %v2704, 17
        %v2768 = vpop.permute.xlu0 %2767
        %2769 = vrot.lane.b32.xlu0 %v2706, 17
        %v2770 = vpop.permute.xlu0 %2769
        %2771 = vrot.lane.b32.xlu0 %v2708, 17
        %v2772 = vpop.permute.xlu0 %2771
        %2773 = vrot.lane.b32.xlu0 %v2710, 17
        %v2774 = vpop.permute.xlu0 %2773
        %2775 = vrot.lane.b32.xlu0 %v2712, 17
        %v2776 = vpop.permute.xlu0 %2775
        %2777 = vrot.lane.b32.xlu0 %v2714, 17
        %v2778 = vpop.permute.xlu0 %2777
        %2779 = vrot.lane.b32.xlu0 %v2716, 17
        %v2780 = vpop.permute.xlu0 %2779
        %2781 = vrot.lane.b32.xlu0 %v2718, 17
        %v2782 = vpop.permute.xlu0 %2781
        %2783 = vrot.lane.b32.xlu0 %v2720, 17
        %v2784 = vpop.permute.xlu0 %2783
        %2785 = vrot.lane.b32.xlu0 %v2722, 17
        %v2786 = vpop.permute.xlu0 %2785
        %2787 = vrot.lane.b32.xlu0 %v2724, 17
        %v2788 = vpop.permute.xlu0 %2787
        %2789 = vrot.lane.b32.xlu0 %v2726, 17
        %v2790 = vpop.permute.xlu0 %2789
        %2791 = vrot.lane.b32.xlu0 %v2728, 17
        %v2792 = vpop.permute.xlu0 %2791
        %v2793 = vsel %vm754, %v2730, %v2762
        %v2794 = vsel %vm754, %v2732, %v2764
        %v2795 = vsel %vm754, %v2734, %v2766
        %v2796 = vsel %vm754, %v2736, %v2768
        %v2797 = vsel %vm754, %v2738, %v2770
        %v2798 = vsel %vm754, %v2740, %v2772
        %v2799 = vsel %vm754, %v2742, %v2774
        %v2800 = vsel %vm754, %v2744, %v2776
        %v2801 = vsel %vm754, %v2746, %v2778
        %v2802 = vsel %vm754, %v2748, %v2780
        %v2803 = vsel %vm754, %v2750, %v2782
        %v2804 = vsel %vm754, %v2752, %v2784
        %v2805 = vsel %vm754, %v2754, %v2786
        %v2806 = vsel %vm754, %v2756, %v2788
        %v2807 = vsel %vm754, %v2758, %v2790
        %v2808 = vsel %vm754, %v2760, %v2792
        %v2809 = vsel %vm754, %v2762, %v2730
        %v2810 = vsel %vm754, %v2764, %v2732
        %v2811 = vsel %vm754, %v2766, %v2734
        %v2812 = vsel %vm754, %v2768, %v2736
        %v2813 = vsel %vm754, %v2770, %v2738
        %v2814 = vsel %vm754, %v2772, %v2740
        %v2815 = vsel %vm754, %v2774, %v2742
        %v2816 = vsel %vm754, %v2776, %v2744
        %v2817 = vsel %vm754, %v2778, %v2746
        %v2818 = vsel %vm754, %v2780, %v2748
        %v2819 = vsel %vm754, %v2782, %v2750
        %v2820 = vsel %vm754, %v2784, %v2752
        %v2821 = vsel %vm754, %v2786, %v2754
        %v2822 = vsel %vm754, %v2788, %v2756
        %v2823 = vsel %vm754, %v2790, %v2758
        %v2824 = vsel %vm754, %v2792, %v2760
        %v2825 = vmul.f32 %v2809, %v1440
        %v2826 = vmul.f32 %v2793, %v1444
        %v2827 = vmul.f32 %v2810, %v1440
        %v2828 = vmul.f32 %v2794, %v1444
        %v2829 = vmul.f32 %v2811, %v1440
        %v2830 = vmul.f32 %v2795, %v1444
        %v2831 = vmul.f32 %v2812, %v1440
        %v2832 = vmul.f32 %v2796, %v1444
        %v2833 = vmul.f32 %v2813, %v1440
        %v2834 = vmul.f32 %v2797, %v1444
        %v2835 = vmul.f32 %v2814, %v1440
        %v2836 = vmul.f32 %v2798, %v1444
        %v2837 = vmul.f32 %v2815, %v1440
        %v2838 = vmul.f32 %v2799, %v1444
        %v2839 = vmul.f32 %v2816, %v1440
        %v2840 = vmul.f32 %v2800, %v1444
        %v2841 = vmul.f32 %v2817, %v1440
        %v2842 = vmul.f32 %v2801, %v1444
        %v2843 = vmul.f32 %v2818, %v1440
        %v2844 = vmul.f32 %v2802, %v1444
        %v2845 = vmul.f32 %v2819, %v1440
        %v2846 = vmul.f32 %v2803, %v1444
        %v2847 = vmul.f32 %v2820, %v1440
        %v2848 = vmul.f32 %v2804, %v1444
        %v2849 = vmul.f32 %v2821, %v1440
        %v2850 = vmul.f32 %v2805, %v1444
        %v2851 = vmul.f32 %v2822, %v1440
        %v2852 = vmul.f32 %v2806, %v1444
        %v2853 = vmul.f32 %v2823, %v1440
        %v2854 = vmul.f32 %v2807, %v1444
        %v2855 = vmul.f32 %v2824, %v1440
        %v2856 = vmul.f32 %v2808, %v1444
        %2857 = vrot.lane.b32.xlu0 %v2697, 16
        %v2858 = vpop.permute.xlu0 %2857
        %2859 = vrot.lane.b32.xlu0 %v2699, 16
        %v2860 = vpop.permute.xlu0 %2859
        %2861 = vrot.lane.b32.xlu0 %v2701, 16
        %v2862 = vpop.permute.xlu0 %2861
        %2863 = vrot.lane.b32.xlu0 %v2703, 16
        %v2864 = vpop.permute.xlu0 %2863
        %2865 = vrot.lane.b32.xlu0 %v2705, 16
        %v2866 = vpop.permute.xlu0 %2865
        %2867 = vrot.lane.b32.xlu0 %v2707, 16
        %v2868 = vpop.permute.xlu0 %2867
        %2869 = vrot.lane.b32.xlu0 %v2709, 16
        %v2870 = vpop.permute.xlu0 %2869
        %2871 = vrot.lane.b32.xlu0 %v2711, 16
        %v2872 = vpop.permute.xlu0 %2871
        %2873 = vrot.lane.b32.xlu0 %v2713, 16
        %v2874 = vpop.permute.xlu0 %2873
        %2875 = vrot.lane.b32.xlu0 %v2715, 16
        %v2876 = vpop.permute.xlu0 %2875
        %2877 = vrot.lane.b32.xlu0 %v2717, 16
        %v2878 = vpop.permute.xlu0 %2877
        %2879 = vrot.lane.b32.xlu0 %v2719, 16
        %v2880 = vpop.permute.xlu0 %2879
        %2881 = vrot.lane.b32.xlu0 %v2721, 16
        %v2882 = vpop.permute.xlu0 %2881
        %2883 = vrot.lane.b32.xlu0 %v2723, 16
        %v2884 = vpop.permute.xlu0 %2883
        %2885 = vrot.lane.b32.xlu0 %v2725, 16
        %v2886 = vpop.permute.xlu0 %2885
        %2887 = vrot.lane.b32.xlu0 %v2727, 16
        %v2888 = vpop.permute.xlu0 %2887
        %2889 = vrot.lane.b32.xlu0 %v2698, 16
        %v2890 = vpop.permute.xlu0 %2889
        %2891 = vrot.lane.b32.xlu0 %v2700, 16
        %v2892 = vpop.permute.xlu0 %2891
        %2893 = vrot.lane.b32.xlu0 %v2702, 16
        %v2894 = vpop.permute.xlu0 %2893
        %2895 = vrot.lane.b32.xlu0 %v2704, 16
        %v2896 = vpop.permute.xlu0 %2895
        %2897 = vrot.lane.b32.xlu0 %v2706, 16
        %v2898 = vpop.permute.xlu0 %2897
        %2899 = vrot.lane.b32.xlu0 %v2708, 16
        %v2900 = vpop.permute.xlu0 %2899
        %2901 = vrot.lane.b32.xlu0 %v2710, 16
        %v2902 = vpop.permute.xlu0 %2901
        %2903 = vrot.lane.b32.xlu0 %v2712, 16
        %v2904 = vpop.permute.xlu0 %2903
        %2905 = vrot.lane.b32.xlu0 %v2714, 16
        %v2906 = vpop.permute.xlu0 %2905
        %2907 = vrot.lane.b32.xlu0 %v2716, 16
        %v2908 = vpop.permute.xlu0 %2907
        %2909 = vrot.lane.b32.xlu0 %v2718, 16
        %v2910 = vpop.permute.xlu0 %2909
        %2911 = vrot.lane.b32.xlu0 %v2720, 16
        %v2912 = vpop.permute.xlu0 %2911
        %2913 = vrot.lane.b32.xlu0 %v2722, 16
        %v2914 = vpop.permute.xlu0 %2913
        %2915 = vrot.lane.b32.xlu0 %v2724, 16
        %v2916 = vpop.permute.xlu0 %2915
        %2917 = vrot.lane.b32.xlu0 %v2726, 16
        %v2918 = vpop.permute.xlu0 %2917
        %2919 = vrot.lane.b32.xlu0 %v2728, 16
        %v2920 = vpop.permute.xlu0 %2919
        %v2921 = vsel %vm767, %v2858, %v2890
        %v2922 = vsel %vm767, %v2860, %v2892
        %v2923 = vsel %vm767, %v2862, %v2894
        %v2924 = vsel %vm767, %v2864, %v2896
        %v2925 = vsel %vm767, %v2866, %v2898
        %v2926 = vsel %vm767, %v2868, %v2900
        %v2927 = vsel %vm767, %v2870, %v2902
        %v2928 = vsel %vm767, %v2872, %v2904
        %v2929 = vsel %vm767, %v2874, %v2906
        %v2930 = vsel %vm767, %v2876, %v2908
        %v2931 = vsel %vm767, %v2878, %v2910
        %v2932 = vsel %vm767, %v2880, %v2912
        %v2933 = vsel %vm767, %v2882, %v2914
        %v2934 = vsel %vm767, %v2884, %v2916
        %v2935 = vsel %vm767, %v2886, %v2918
        %v2936 = vsel %vm767, %v2888, %v2920
        %v2937 = vsel %vm767, %v2890, %v2858
        %v2938 = vsel %vm767, %v2892, %v2860
        %v2939 = vsel %vm767, %v2894, %v2862
        %v2940 = vsel %vm767, %v2896, %v2864
        %v2941 = vsel %vm767, %v2898, %v2866
        %v2942 = vsel %vm767, %v2900, %v2868
        %v2943 = vsel %vm767, %v2902, %v2870
        %v2944 = vsel %vm767, %v2904, %v2872
        %v2945 = vsel %vm767, %v2906, %v2874
        %v2946 = vsel %vm767, %v2908, %v2876
        %v2947 = vsel %vm767, %v2910, %v2878
        %v2948 = vsel %vm767, %v2912, %v2880
        %v2949 = vsel %vm767, %v2914, %v2882
        %v2950 = vsel %vm767, %v2916, %v2884
        %v2951 = vsel %vm767, %v2918, %v2886
        %v2952 = vsel %vm767, %v2920, %v2888
        %v2953 = vmul.f32 %v2937, %v1512
        %v2954 = vmul.f32 %v2921, %v1516
        %v2955 = vmul.f32 %v2938, %v1512
        %v2956 = vmul.f32 %v2922, %v1516
        %v2957 = vmul.f32 %v2939, %v1512
        %v2958 = vmul.f32 %v2923, %v1516
        %v2959 = vmul.f32 %v2940, %v1512
        %v2960 = vmul.f32 %v2924, %v1516
        %v2961 = vmul.f32 %v2941, %v1512
        %v2962 = vmul.f32 %v2925, %v1516
        %v2963 = vmul.f32 %v2942, %v1512
        %v2964 = vmul.f32 %v2926, %v1516
        %v2965 = vmul.f32 %v2943, %v1512
        %v2966 = vmul.f32 %v2927, %v1516
        %v2967 = vmul.f32 %v2944, %v1512
        %v2968 = vmul.f32 %v2928, %v1516
        %v2969 = vmul.f32 %v2945, %v1512
        %v2970 = vmul.f32 %v2929, %v1516
        %v2971 = vmul.f32 %v2946, %v1512
        %v2972 = vmul.f32 %v2930, %v1516
        %v2973 = vmul.f32 %v2947, %v1512
        %v2974 = vmul.f32 %v2931, %v1516
        %v2975 = vmul.f32 %v2948, %v1512
        %v2976 = vmul.f32 %v2932, %v1516
        %v2977 = vmul.f32 %v2949, %v1512
        %v2978 = vmul.f32 %v2933, %v1516
        %v2979 = vmul.f32 %v2950, %v1512
        %v2980 = vmul.f32 %v2934, %v1516
        %v2981 = vmul.f32 %v2951, %v1512
        %v2982 = vmul.f32 %v2935, %v1516
        %v2983 = vmul.f32 %v2952, %v1512
        %v2984 = vmul.f32 %v2936, %v1516
        %2985 = vrot.lane.b32.xlu0 %v2697, 15
        %v2986 = vpop.permute.xlu0 %2985
        %2987 = vrot.lane.b32.xlu0 %v2699, 15
        %v2988 = vpop.permute.xlu0 %2987
        %2989 = vrot.lane.b32.xlu0 %v2701, 15
        %v2990 = vpop.permute.xlu0 %2989
        %2991 = vrot.lane.b32.xlu0 %v2703, 15
        %v2992 = vpop.permute.xlu0 %2991
        %2993 = vrot.lane.b32.xlu0 %v2705, 15
        %v2994 = vpop.permute.xlu0 %2993
        %2995 = vrot.lane.b32.xlu0 %v2707, 15
        %v2996 = vpop.permute.xlu0 %2995
        %2997 = vrot.lane.b32.xlu0 %v2709, 15
        %v2998 = vpop.permute.xlu0 %2997
        %2999 = vrot.lane.b32.xlu0 %v2711, 15
        %v3000 = vpop.permute.xlu0 %2999
        %3001 = vrot.lane.b32.xlu0 %v2713, 15
        %v3002 = vpop.permute.xlu0 %3001
        %3003 = vrot.lane.b32.xlu0 %v2715, 15
        %v3004 = vpop.permute.xlu0 %3003
        %3005 = vrot.lane.b32.xlu0 %v2717, 15
        %v3006 = vpop.permute.xlu0 %3005
        %3007 = vrot.lane.b32.xlu0 %v2719, 15
        %v3008 = vpop.permute.xlu0 %3007
        %3009 = vrot.lane.b32.xlu0 %v2721, 15
        %v3010 = vpop.permute.xlu0 %3009
        %3011 = vrot.lane.b32.xlu0 %v2723, 15
        %v3012 = vpop.permute.xlu0 %3011
        %3013 = vrot.lane.b32.xlu0 %v2725, 15
        %v3014 = vpop.permute.xlu0 %3013
        %3015 = vrot.lane.b32.xlu0 %v2727, 15
        %v3016 = vpop.permute.xlu0 %3015
        %3017 = vrot.lane.b32.xlu0 %v2698, 15
        %v3018 = vpop.permute.xlu0 %3017
        %3019 = vrot.lane.b32.xlu0 %v2700, 15
        %v3020 = vpop.permute.xlu0 %3019
        %3021 = vrot.lane.b32.xlu0 %v2702, 15
        %v3022 = vpop.permute.xlu0 %3021
        %3023 = vrot.lane.b32.xlu0 %v2704, 15
        %v3024 = vpop.permute.xlu0 %3023
        %3025 = vrot.lane.b32.xlu0 %v2706, 15
        %v3026 = vpop.permute.xlu0 %3025
        %3027 = vrot.lane.b32.xlu0 %v2708, 15
        %v3028 = vpop.permute.xlu0 %3027
        %3029 = vrot.lane.b32.xlu0 %v2710, 15
        %v3030 = vpop.permute.xlu0 %3029
        %3031 = vrot.lane.b32.xlu0 %v2712, 15
        %v3032 = vpop.permute.xlu0 %3031
        %3033 = vrot.lane.b32.xlu0 %v2714, 15
        %v3034 = vpop.permute.xlu0 %3033
        %3035 = vrot.lane.b32.xlu0 %v2716, 15
        %v3036 = vpop.permute.xlu0 %3035
        %3037 = vrot.lane.b32.xlu0 %v2718, 15
        %v3038 = vpop.permute.xlu0 %3037
        %3039 = vrot.lane.b32.xlu0 %v2720, 15
        %v3040 = vpop.permute.xlu0 %3039
        %3041 = vrot.lane.b32.xlu0 %v2722, 15
        %v3042 = vpop.permute.xlu0 %3041
        %3043 = vrot.lane.b32.xlu0 %v2724, 15
        %v3044 = vpop.permute.xlu0 %3043
        %3045 = vrot.lane.b32.xlu0 %v2726, 15
        %v3046 = vpop.permute.xlu0 %3045
        %3047 = vrot.lane.b32.xlu0 %v2728, 15
        %v3048 = vpop.permute.xlu0 %3047
        %v3049 = vsel %vm780, %v2986, %v3018
        %v3050 = vsel %vm780, %v2988, %v3020
        %v3051 = vsel %vm780, %v2990, %v3022
        %v3052 = vsel %vm780, %v2992, %v3024
        %v3053 = vsel %vm780, %v2994, %v3026
        %v3054 = vsel %vm780, %v2996, %v3028
        %v3055 = vsel %vm780, %v2998, %v3030
        %v3056 = vsel %vm780, %v3000, %v3032
        %v3057 = vsel %vm780, %v3002, %v3034
        %v3058 = vsel %vm780, %v3004, %v3036
        %v3059 = vsel %vm780, %v3006, %v3038
        %v3060 = vsel %vm780, %v3008, %v3040
        %v3061 = vsel %vm780, %v3010, %v3042
        %v3062 = vsel %vm780, %v3012, %v3044
        %v3063 = vsel %vm780, %v3014, %v3046
        %v3064 = vsel %vm780, %v3016, %v3048
        %v3065 = vsel %vm780, %v3018, %v2986
        %v3066 = vsel %vm780, %v3020, %v2988
        %v3067 = vsel %vm780, %v3022, %v2990
        %v3068 = vsel %vm780, %v3024, %v2992
        %v3069 = vsel %vm780, %v3026, %v2994
        %v3070 = vsel %vm780, %v3028, %v2996
        %v3071 = vsel %vm780, %v3030, %v2998
        %v3072 = vsel %vm780, %v3032, %v3000
        %v3073 = vsel %vm780, %v3034, %v3002
        %v3074 = vsel %vm780, %v3036, %v3004
        %v3075 = vsel %vm780, %v3038, %v3006
        %v3076 = vsel %vm780, %v3040, %v3008
        %v3077 = vsel %vm780, %v3042, %v3010
        %v3078 = vsel %vm780, %v3044, %v3012
        %v3079 = vsel %vm780, %v3046, %v3014
        %v3080 = vsel %vm780, %v3048, %v3016
        %v3081 = vmul.f32 %v3065, %v1584
        %v3082 = vmul.f32 %v3049, %v1588
        %v3083 = vmul.f32 %v3066, %v1584
        %v3084 = vmul.f32 %v3050, %v1588
        %v3085 = vmul.f32 %v3067, %v1584
        %v3086 = vmul.f32 %v3051, %v1588
        %v3087 = vmul.f32 %v3068, %v1584
        %v3088 = vmul.f32 %v3052, %v1588
        %v3089 = vmul.f32 %v3069, %v1584
        %v3090 = vmul.f32 %v3053, %v1588
        %v3091 = vmul.f32 %v3070, %v1584
        %v3092 = vmul.f32 %v3054, %v1588
        %v3093 = vmul.f32 %v3071, %v1584
        %v3094 = vmul.f32 %v3055, %v1588
        %v3095 = vmul.f32 %v3072, %v1584
        %v3096 = vmul.f32 %v3056, %v1588
        %v3097 = vmul.f32 %v3073, %v1584
        %v3098 = vmul.f32 %v3057, %v1588
        %v3099 = vmul.f32 %v3074, %v1584
        %v3100 = vmul.f32 %v3058, %v1588
        %v3101 = vmul.f32 %v3075, %v1584
        %v3102 = vmul.f32 %v3059, %v1588
        %v3103 = vmul.f32 %v3076, %v1584
        %v3104 = vmul.f32 %v3060, %v1588
        %v3105 = vmul.f32 %v3077, %v1584
        %v3106 = vmul.f32 %v3061, %v1588
        %v3107 = vmul.f32 %v3078, %v1584
        %v3108 = vmul.f32 %v3062, %v1588
        %v3109 = vmul.f32 %v3079, %v1584
        %v3110 = vmul.f32 %v3063, %v1588
        %v3111 = vmul.f32 %v3080, %v1584
        %v3112 = vmul.f32 %v3064, %v1588
        %3113 = vrot.lane.b32.xlu0 %v2697, 1
        %v3114 = vpop.permute.xlu0 %3113
        %3115 = vrot.lane.b32.xlu0 %v2699, 1
        %v3116 = vpop.permute.xlu0 %3115
        %3117 = vrot.lane.b32.xlu0 %v2701, 1
        %v3118 = vpop.permute.xlu0 %3117
        %3119 = vrot.lane.b32.xlu0 %v2703, 1
        %v3120 = vpop.permute.xlu0 %3119
        %3121 = vrot.lane.b32.xlu0 %v2705, 1
        %v3122 = vpop.permute.xlu0 %3121
        %3123 = vrot.lane.b32.xlu0 %v2707, 1
        %v3124 = vpop.permute.xlu0 %3123
        %3125 = vrot.lane.b32.xlu0 %v2709, 1
        %v3126 = vpop.permute.xlu0 %3125
        %3127 = vrot.lane.b32.xlu0 %v2711, 1
        %v3128 = vpop.permute.xlu0 %3127
        %3129 = vrot.lane.b32.xlu0 %v2713, 1
        %v3130 = vpop.permute.xlu0 %3129
        %3131 = vrot.lane.b32.xlu0 %v2715, 1
        %v3132 = vpop.permute.xlu0 %3131
        %3133 = vrot.lane.b32.xlu0 %v2717, 1
        %v3134 = vpop.permute.xlu0 %3133
        %3135 = vrot.lane.b32.xlu0 %v2719, 1
        %v3136 = vpop.permute.xlu0 %3135
        %3137 = vrot.lane.b32.xlu0 %v2721, 1
        %v3138 = vpop.permute.xlu0 %3137
        %3139 = vrot.lane.b32.xlu0 %v2723, 1
        %v3140 = vpop.permute.xlu0 %3139
        %3141 = vrot.lane.b32.xlu0 %v2725, 1
        %v3142 = vpop.permute.xlu0 %3141
        %3143 = vrot.lane.b32.xlu0 %v2727, 1
        %v3144 = vpop.permute.xlu0 %3143
        %3145 = vrot.lane.b32.xlu0 %v2698, 1
        %v3146 = vpop.permute.xlu0 %3145
        %3147 = vrot.lane.b32.xlu0 %v2700, 1
        %v3148 = vpop.permute.xlu0 %3147
        %3149 = vrot.lane.b32.xlu0 %v2702, 1
        %v3150 = vpop.permute.xlu0 %3149
        %3151 = vrot.lane.b32.xlu0 %v2704, 1
        %v3152 = vpop.permute.xlu0 %3151
        %3153 = vrot.lane.b32.xlu0 %v2706, 1
        %v3154 = vpop.permute.xlu0 %3153
        %3155 = vrot.lane.b32.xlu0 %v2708, 1
        %v3156 = vpop.permute.xlu0 %3155
        %3157 = vrot.lane.b32.xlu0 %v2710, 1
        %v3158 = vpop.permute.xlu0 %3157
        %3159 = vrot.lane.b32.xlu0 %v2712, 1
        %v3160 = vpop.permute.xlu0 %3159
        %3161 = vrot.lane.b32.xlu0 %v2714, 1
        %v3162 = vpop.permute.xlu0 %3161
        %3163 = vrot.lane.b32.xlu0 %v2716, 1
        %v3164 = vpop.permute.xlu0 %3163
        %3165 = vrot.lane.b32.xlu0 %v2718, 1
        %v3166 = vpop.permute.xlu0 %3165
        %3167 = vrot.lane.b32.xlu0 %v2720, 1
        %v3168 = vpop.permute.xlu0 %3167
        %3169 = vrot.lane.b32.xlu0 %v2722, 1
        %v3170 = vpop.permute.xlu0 %3169
        %3171 = vrot.lane.b32.xlu0 %v2724, 1
        %v3172 = vpop.permute.xlu0 %3171
        %3173 = vrot.lane.b32.xlu0 %v2726, 1
        %v3174 = vpop.permute.xlu0 %3173
        %3175 = vrot.lane.b32.xlu0 %v2728, 1
        %v3176 = vpop.permute.xlu0 %3175
        %v3177 = vsel %vm817, %v3114, %v3146
        %v3178 = vsel %vm817, %v3116, %v3148
        %v3179 = vsel %vm817, %v3118, %v3150
        %v3180 = vsel %vm817, %v3120, %v3152
        %v3181 = vsel %vm817, %v3122, %v3154
        %v3182 = vsel %vm817, %v3124, %v3156
        %v3183 = vsel %vm817, %v3126, %v3158
        %v3184 = vsel %vm817, %v3128, %v3160
        %v3185 = vsel %vm817, %v3130, %v3162
        %v3186 = vsel %vm817, %v3132, %v3164
        %v3187 = vsel %vm817, %v3134, %v3166
        %v3188 = vsel %vm817, %v3136, %v3168
        %v3189 = vsel %vm817, %v3138, %v3170
        %v3190 = vsel %vm817, %v3140, %v3172
        %v3191 = vsel %vm817, %v3142, %v3174
        %v3192 = vsel %vm817, %v3144, %v3176
        %v3193 = vsel %vm817, %v3146, %v3114
        %v3194 = vsel %vm817, %v3148, %v3116
        %v3195 = vsel %vm817, %v3150, %v3118
        %v3196 = vsel %vm817, %v3152, %v3120
        %v3197 = vsel %vm817, %v3154, %v3122
        %v3198 = vsel %vm817, %v3156, %v3124
        %v3199 = vsel %vm817, %v3158, %v3126
        %v3200 = vsel %vm817, %v3160, %v3128
        %v3201 = vsel %vm817, %v3162, %v3130
        %v3202 = vsel %vm817, %v3164, %v3132
        %v3203 = vsel %vm817, %v3166, %v3134
        %v3204 = vsel %vm817, %v3168, %v3136
        %v3205 = vsel %vm817, %v3170, %v3138
        %v3206 = vsel %vm817, %v3172, %v3140
        %v3207 = vsel %vm817, %v3174, %v3142
        %v3208 = vsel %vm817, %v3176, %v3144
        %v3209 = vmul.f32 %v3193, %v1656
        %v3210 = vmul.f32 %v3177, %v1660
        %v3211 = vmul.f32 %v3194, %v1656
        %v3212 = vmul.f32 %v3178, %v1660
        %v3213 = vmul.f32 %v3195, %v1656
        %v3214 = vmul.f32 %v3179, %v1660
        %v3215 = vmul.f32 %v3196, %v1656
        %v3216 = vmul.f32 %v3180, %v1660
        %v3217 = vmul.f32 %v3197, %v1656
        %v3218 = vmul.f32 %v3181, %v1660
        %v3219 = vmul.f32 %v3198, %v1656
        %v3220 = vmul.f32 %v3182, %v1660
        %v3221 = vmul.f32 %v3199, %v1656
        %v3222 = vmul.f32 %v3183, %v1660
        %v3223 = vmul.f32 %v3200, %v1656
        %v3224 = vmul.f32 %v3184, %v1660
        %v3225 = vmul.f32 %v3201, %v1656
        %v3226 = vmul.f32 %v3185, %v1660
        %v3227 = vmul.f32 %v3202, %v1656
        %v3228 = vmul.f32 %v3186, %v1660
        %v3229 = vmul.f32 %v3203, %v1656
        %v3230 = vmul.f32 %v3187, %v1660
        %v3231 = vmul.f32 %v3204, %v1656
        %v3232 = vmul.f32 %v3188, %v1660
        %v3233 = vmul.f32 %v3205, %v1656
        %v3234 = vmul.f32 %v3189, %v1660
        %v3235 = vmul.f32 %v3206, %v1656
        %v3236 = vmul.f32 %v3190, %v1660
        %v3237 = vmul.f32 %v3207, %v1656
        %v3238 = vmul.f32 %v3191, %v1660
        %v3239 = vmul.f32 %v3208, %v1656
        %v3240 = vmul.f32 %v3192, %v1660
        %v3241 = vmul.f32 %v2697, %v1680
        %v3242 = vmul.f32 %v2698, %v1684
        %v3243 = vmul.f32 %v2699, %v1680
        %v3244 = vmul.f32 %v2700, %v1684
        %v3245 = vmul.f32 %v2701, %v1680
        %v3246 = vmul.f32 %v2702, %v1684
        %v3247 = vmul.f32 %v2703, %v1680
        %v3248 = vmul.f32 %v2704, %v1684
        %v3249 = vmul.f32 %v2705, %v1680
        %v3250 = vmul.f32 %v2706, %v1684
        %v3251 = vmul.f32 %v2707, %v1680
        %v3252 = vmul.f32 %v2708, %v1684
        %v3253 = vmul.f32 %v2709, %v1680
        %v3254 = vmul.f32 %v2710, %v1684
        %v3255 = vmul.f32 %v2711, %v1680
        %v3256 = vmul.f32 %v2712, %v1684
        %v3257 = vmul.f32 %v2713, %v1680
        %v3258 = vmul.f32 %v2714, %v1684
        %v3259 = vmul.f32 %v2715, %v1680
        %v3260 = vmul.f32 %v2716, %v1684
        %v3261 = vmul.f32 %v2717, %v1680
        %v3262 = vmul.f32 %v2718, %v1684
        %v3263 = vmul.f32 %v2719, %v1680
        %v3264 = vmul.f32 %v2720, %v1684
        %v3265 = vmul.f32 %v2721, %v1680
        %v3266 = vmul.f32 %v2722, %v1684
        %v3267 = vmul.f32 %v2723, %v1680
        %v3268 = vmul.f32 %v2724, %v1684
        %v3269 = vmul.f32 %v2725, %v1680
        %v3270 = vmul.f32 %v2726, %v1684
        %v3271 = vmul.f32 %v2727, %v1680
        %v3272 = vmul.f32 %v2728, %v1684
        %3273 = vrot.lane.b32.xlu0 %v2697, 127
        %v3274 = vpop.permute.xlu0 %3273
        %3275 = vrot.lane.b32.xlu0 %v2699, 127
        %v3276 = vpop.permute.xlu0 %3275
        %3277 = vrot.lane.b32.xlu0 %v2701, 127
        %v3278 = vpop.permute.xlu0 %3277
        %3279 = vrot.lane.b32.xlu0 %v2703, 127
        %v3280 = vpop.permute.xlu0 %3279
        %3281 = vrot.lane.b32.xlu0 %v2705, 127
        %v3282 = vpop.permute.xlu0 %3281
        %3283 = vrot.lane.b32.xlu0 %v2707, 127
        %v3284 = vpop.permute.xlu0 %3283
        %3285 = vrot.lane.b32.xlu0 %v2709, 127
        %v3286 = vpop.permute.xlu0 %3285
        %3287 = vrot.lane.b32.xlu0 %v2711, 127
        %v3288 = vpop.permute.xlu0 %3287
        %3289 = vrot.lane.b32.xlu0 %v2713, 127
        %v3290 = vpop.permute.xlu0 %3289
        %3291 = vrot.lane.b32.xlu0 %v2715, 127
        %v3292 = vpop.permute.xlu0 %3291
        %3293 = vrot.lane.b32.xlu0 %v2717, 127
        %v3294 = vpop.permute.xlu0 %3293
        %3295 = vrot.lane.b32.xlu0 %v2719, 127
        %v3296 = vpop.permute.xlu0 %3295
        %3297 = vrot.lane.b32.xlu0 %v2721, 127
        %v3298 = vpop.permute.xlu0 %3297
        %3299 = vrot.lane.b32.xlu0 %v2723, 127
        %v3300 = vpop.permute.xlu0 %3299
        %3301 = vrot.lane.b32.xlu0 %v2725, 127
        %v3302 = vpop.permute.xlu0 %3301
        %3303 = vrot.lane.b32.xlu0 %v2727, 127
        %v3304 = vpop.permute.xlu0 %3303
        %3305 = vrot.lane.b32.xlu0 %v2698, 127
        %v3306 = vpop.permute.xlu0 %3305
        %3307 = vrot.lane.b32.xlu0 %v2700, 127
        %v3308 = vpop.permute.xlu0 %3307
        %3309 = vrot.lane.b32.xlu0 %v2702, 127
        %v3310 = vpop.permute.xlu0 %3309
        %3311 = vrot.lane.b32.xlu0 %v2704, 127
        %v3312 = vpop.permute.xlu0 %3311
        %3313 = vrot.lane.b32.xlu0 %v2706, 127
        %v3314 = vpop.permute.xlu0 %3313
        %3315 = vrot.lane.b32.xlu0 %v2708, 127
        %v3316 = vpop.permute.xlu0 %3315
        %3317 = vrot.lane.b32.xlu0 %v2710, 127
        %v3318 = vpop.permute.xlu0 %3317
        %3319 = vrot.lane.b32.xlu0 %v2712, 127
        %v3320 = vpop.permute.xlu0 %3319
        %3321 = vrot.lane.b32.xlu0 %v2714, 127
        %v3322 = vpop.permute.xlu0 %3321
        %3323 = vrot.lane.b32.xlu0 %v2716, 127
        %v3324 = vpop.permute.xlu0 %3323
        %3325 = vrot.lane.b32.xlu0 %v2718, 127
        %v3326 = vpop.permute.xlu0 %3325
        %3327 = vrot.lane.b32.xlu0 %v2720, 127
        %v3328 = vpop.permute.xlu0 %3327
        %3329 = vrot.lane.b32.xlu0 %v2722, 127
        %v3330 = vpop.permute.xlu0 %3329
        %3331 = vrot.lane.b32.xlu0 %v2724, 127
        %v3332 = vpop.permute.xlu0 %3331
        %3333 = vrot.lane.b32.xlu0 %v2726, 127
        %v3334 = vpop.permute.xlu0 %3333
        %3335 = vrot.lane.b32.xlu0 %v2728, 127
        %v3336 = vpop.permute.xlu0 %3335
        %v3337 = vsel %vm847, %v3274, %v3306
        %v3338 = vsel %vm847, %v3276, %v3308
        %v3339 = vsel %vm847, %v3278, %v3310
        %v3340 = vsel %vm847, %v3280, %v3312
        %v3341 = vsel %vm847, %v3282, %v3314
        %v3342 = vsel %vm847, %v3284, %v3316
        %v3343 = vsel %vm847, %v3286, %v3318
        %v3344 = vsel %vm847, %v3288, %v3320
        %v3345 = vsel %vm847, %v3290, %v3322
        %v3346 = vsel %vm847, %v3292, %v3324
        %v3347 = vsel %vm847, %v3294, %v3326
        %v3348 = vsel %vm847, %v3296, %v3328
        %v3349 = vsel %vm847, %v3298, %v3330
        %v3350 = vsel %vm847, %v3300, %v3332
        %v3351 = vsel %vm847, %v3302, %v3334
        %v3352 = vsel %vm847, %v3304, %v3336
        %v3353 = vsel %vm847, %v3306, %v3274
        %v3354 = vsel %vm847, %v3308, %v3276
        %v3355 = vsel %vm847, %v3310, %v3278
        %v3356 = vsel %vm847, %v3312, %v3280
        %v3357 = vsel %vm847, %v3314, %v3282
        %v3358 = vsel %vm847, %v3316, %v3284
        %v3359 = vsel %vm847, %v3318, %v3286
        %v3360 = vsel %vm847, %v3320, %v3288
        %v3361 = vsel %vm847, %v3322, %v3290
        %v3362 = vsel %vm847, %v3324, %v3292
        %v3363 = vsel %vm847, %v3326, %v3294
        %v3364 = vsel %vm847, %v3328, %v3296
        %v3365 = vsel %vm847, %v3330, %v3298
        %v3366 = vsel %vm847, %v3332, %v3300
        %v3367 = vsel %vm847, %v3334, %v3302
        %v3368 = vsel %vm847, %v3336, %v3304
        %v3369 = vmul.f32 %v3337, %v1752
        %v3370 = vmul.f32 %v3353, %v1756
        %v3371 = vmul.f32 %v3338, %v1752
        %v3372 = vmul.f32 %v3354, %v1756
        %v3373 = vmul.f32 %v3339, %v1752
        %v3374 = vmul.f32 %v3355, %v1756
        %v3375 = vmul.f32 %v3340, %v1752
        %v3376 = vmul.f32 %v3356, %v1756
        %v3377 = vmul.f32 %v3341, %v1752
        %v3378 = vmul.f32 %v3357, %v1756
        %v3379 = vmul.f32 %v3342, %v1752
        %v3380 = vmul.f32 %v3358, %v1756
        %v3381 = vmul.f32 %v3343, %v1752
        %v3382 = vmul.f32 %v3359, %v1756
        %v3383 = vmul.f32 %v3344, %v1752
        %v3384 = vmul.f32 %v3360, %v1756
        %v3385 = vmul.f32 %v3345, %v1752
        %v3386 = vmul.f32 %v3361, %v1756
        %v3387 = vmul.f32 %v3346, %v1752
        %v3388 = vmul.f32 %v3362, %v1756
        %v3389 = vmul.f32 %v3347, %v1752
        %v3390 = vmul.f32 %v3363, %v1756
        %v3391 = vmul.f32 %v3348, %v1752
        %v3392 = vmul.f32 %v3364, %v1756
        %v3393 = vmul.f32 %v3349, %v1752
        %v3394 = vmul.f32 %v3365, %v1756
        %v3395 = vmul.f32 %v3350, %v1752
        %v3396 = vmul.f32 %v3366, %v1756
        %v3397 = vmul.f32 %v3351, %v1752
        %v3398 = vmul.f32 %v3367, %v1756
        %v3399 = vmul.f32 %v3352, %v1752
        %v3400 = vmul.f32 %v3368, %v1756
        %3401 = vrot.lane.b32.xlu0 %v2697, 113
        %v3402 = vpop.permute.xlu0 %3401
        %3403 = vrot.lane.b32.xlu0 %v2699, 113
        %v3404 = vpop.permute.xlu0 %3403
        %3405 = vrot.lane.b32.xlu0 %v2701, 113
        %v3406 = vpop.permute.xlu0 %3405
        %3407 = vrot.lane.b32.xlu0 %v2703, 113
        %v3408 = vpop.permute.xlu0 %3407
        %3409 = vrot.lane.b32.xlu0 %v2705, 113
        %v3410 = vpop.permute.xlu0 %3409
        %3411 = vrot.lane.b32.xlu0 %v2707, 113
        %v3412 = vpop.permute.xlu0 %3411
        %3413 = vrot.lane.b32.xlu0 %v2709, 113
        %v3414 = vpop.permute.xlu0 %3413
        %3415 = vrot.lane.b32.xlu0 %v2711, 113
        %v3416 = vpop.permute.xlu0 %3415
        %3417 = vrot.lane.b32.xlu0 %v2713, 113
        %v3418 = vpop.permute.xlu0 %3417
        %3419 = vrot.lane.b32.xlu0 %v2715, 113
        %v3420 = vpop.permute.xlu0 %3419
        %3421 = vrot.lane.b32.xlu0 %v2717, 113
        %v3422 = vpop.permute.xlu0 %3421
        %3423 = vrot.lane.b32.xlu0 %v2719, 113
        %v3424 = vpop.permute.xlu0 %3423
        %3425 = vrot.lane.b32.xlu0 %v2721, 113
        %v3426 = vpop.permute.xlu0 %3425
        %3427 = vrot.lane.b32.xlu0 %v2723, 113
        %v3428 = vpop.permute.xlu0 %3427
        %3429 = vrot.lane.b32.xlu0 %v2725, 113
        %v3430 = vpop.permute.xlu0 %3429
        %3431 = vrot.lane.b32.xlu0 %v2727, 113
        %v3432 = vpop.permute.xlu0 %3431
        %3433 = vrot.lane.b32.xlu0 %v2698, 113
        %v3434 = vpop.permute.xlu0 %3433
        %3435 = vrot.lane.b32.xlu0 %v2700, 113
        %v3436 = vpop.permute.xlu0 %3435
        %3437 = vrot.lane.b32.xlu0 %v2702, 113
        %v3438 = vpop.permute.xlu0 %3437
        %3439 = vrot.lane.b32.xlu0 %v2704, 113
        %v3440 = vpop.permute.xlu0 %3439
        %3441 = vrot.lane.b32.xlu0 %v2706, 113
        %v3442 = vpop.permute.xlu0 %3441
        %3443 = vrot.lane.b32.xlu0 %v2708, 113
        %v3444 = vpop.permute.xlu0 %3443
        %3445 = vrot.lane.b32.xlu0 %v2710, 113
        %v3446 = vpop.permute.xlu0 %3445
        %3447 = vrot.lane.b32.xlu0 %v2712, 113
        %v3448 = vpop.permute.xlu0 %3447
        %3449 = vrot.lane.b32.xlu0 %v2714, 113
        %v3450 = vpop.permute.xlu0 %3449
        %3451 = vrot.lane.b32.xlu0 %v2716, 113
        %v3452 = vpop.permute.xlu0 %3451
        %3453 = vrot.lane.b32.xlu0 %v2718, 113
        %v3454 = vpop.permute.xlu0 %3453
        %3455 = vrot.lane.b32.xlu0 %v2720, 113
        %v3456 = vpop.permute.xlu0 %3455
        %3457 = vrot.lane.b32.xlu0 %v2722, 113
        %v3458 = vpop.permute.xlu0 %3457
        %3459 = vrot.lane.b32.xlu0 %v2724, 113
        %v3460 = vpop.permute.xlu0 %3459
        %3461 = vrot.lane.b32.xlu0 %v2726, 113
        %v3462 = vpop.permute.xlu0 %3461
        %3463 = vrot.lane.b32.xlu0 %v2728, 113
        %v3464 = vpop.permute.xlu0 %3463
        %v3465 = vsel %vm886, %v3402, %v3434
        %v3466 = vsel %vm886, %v3404, %v3436
        %v3467 = vsel %vm886, %v3406, %v3438
        %v3468 = vsel %vm886, %v3408, %v3440
        %v3469 = vsel %vm886, %v3410, %v3442
        %v3470 = vsel %vm886, %v3412, %v3444
        %v3471 = vsel %vm886, %v3414, %v3446
        %v3472 = vsel %vm886, %v3416, %v3448
        %v3473 = vsel %vm886, %v3418, %v3450
        %v3474 = vsel %vm886, %v3420, %v3452
        %v3475 = vsel %vm886, %v3422, %v3454
        %v3476 = vsel %vm886, %v3424, %v3456
        %v3477 = vsel %vm886, %v3426, %v3458
        %v3478 = vsel %vm886, %v3428, %v3460
        %v3479 = vsel %vm886, %v3430, %v3462
        %v3480 = vsel %vm886, %v3432, %v3464
        %v3481 = vsel %vm886, %v3434, %v3402
        %v3482 = vsel %vm886, %v3436, %v3404
        %v3483 = vsel %vm886, %v3438, %v3406
        %v3484 = vsel %vm886, %v3440, %v3408
        %v3485 = vsel %vm886, %v3442, %v3410
        %v3486 = vsel %vm886, %v3444, %v3412
        %v3487 = vsel %vm886, %v3446, %v3414
        %v3488 = vsel %vm886, %v3448, %v3416
        %v3489 = vsel %vm886, %v3450, %v3418
        %v3490 = vsel %vm886, %v3452, %v3420
        %v3491 = vsel %vm886, %v3454, %v3422
        %v3492 = vsel %vm886, %v3456, %v3424
        %v3493 = vsel %vm886, %v3458, %v3426
        %v3494 = vsel %vm886, %v3460, %v3428
        %v3495 = vsel %vm886, %v3462, %v3430
        %v3496 = vsel %vm886, %v3464, %v3432
        %v3497 = vmul.f32 %v3465, %v1824
        %v3498 = vmul.f32 %v3481, %v1828
        %v3499 = vmul.f32 %v3466, %v1824
        %v3500 = vmul.f32 %v3482, %v1828
        %v3501 = vmul.f32 %v3467, %v1824
        %v3502 = vmul.f32 %v3483, %v1828
        %v3503 = vmul.f32 %v3468, %v1824
        %v3504 = vmul.f32 %v3484, %v1828
        %v3505 = vmul.f32 %v3469, %v1824
        %v3506 = vmul.f32 %v3485, %v1828
        %v3507 = vmul.f32 %v3470, %v1824
        %v3508 = vmul.f32 %v3486, %v1828
        %v3509 = vmul.f32 %v3471, %v1824
        %v3510 = vmul.f32 %v3487, %v1828
        %v3511 = vmul.f32 %v3472, %v1824
        %v3512 = vmul.f32 %v3488, %v1828
        %v3513 = vmul.f32 %v3473, %v1824
        %v3514 = vmul.f32 %v3489, %v1828
        %v3515 = vmul.f32 %v3474, %v1824
        %v3516 = vmul.f32 %v3490, %v1828
        %v3517 = vmul.f32 %v3475, %v1824
        %v3518 = vmul.f32 %v3491, %v1828
        %v3519 = vmul.f32 %v3476, %v1824
        %v3520 = vmul.f32 %v3492, %v1828
        %v3521 = vmul.f32 %v3477, %v1824
        %v3522 = vmul.f32 %v3493, %v1828
        %v3523 = vmul.f32 %v3478, %v1824
        %v3524 = vmul.f32 %v3494, %v1828
        %v3525 = vmul.f32 %v3479, %v1824
        %v3526 = vmul.f32 %v3495, %v1828
        %v3527 = vmul.f32 %v3480, %v1824
        %v3528 = vmul.f32 %v3496, %v1828
        %3529 = vrot.lane.b32.xlu0 %v2697, 112
        %v3530 = vpop.permute.xlu0 %3529
        %3531 = vrot.lane.b32.xlu0 %v2699, 112
        %v3532 = vpop.permute.xlu0 %3531
        %3533 = vrot.lane.b32.xlu0 %v2701, 112
        %v3534 = vpop.permute.xlu0 %3533
        %3535 = vrot.lane.b32.xlu0 %v2703, 112
        %v3536 = vpop.permute.xlu0 %3535
        %3537 = vrot.lane.b32.xlu0 %v2705, 112
        %v3538 = vpop.permute.xlu0 %3537
        %3539 = vrot.lane.b32.xlu0 %v2707, 112
        %v3540 = vpop.permute.xlu0 %3539
        %3541 = vrot.lane.b32.xlu0 %v2709, 112
        %v3542 = vpop.permute.xlu0 %3541
        %3543 = vrot.lane.b32.xlu0 %v2711, 112
        %v3544 = vpop.permute.xlu0 %3543
        %3545 = vrot.lane.b32.xlu0 %v2713, 112
        %v3546 = vpop.permute.xlu0 %3545
        %3547 = vrot.lane.b32.xlu0 %v2715, 112
        %v3548 = vpop.permute.xlu0 %3547
        %3549 = vrot.lane.b32.xlu0 %v2717, 112
        %v3550 = vpop.permute.xlu0 %3549
        %3551 = vrot.lane.b32.xlu0 %v2719, 112
        %v3552 = vpop.permute.xlu0 %3551
        %3553 = vrot.lane.b32.xlu0 %v2721, 112
        %v3554 = vpop.permute.xlu0 %3553
        %3555 = vrot.lane.b32.xlu0 %v2723, 112
        %v3556 = vpop.permute.xlu0 %3555
        %3557 = vrot.lane.b32.xlu0 %v2725, 112
        %v3558 = vpop.permute.xlu0 %3557
        %3559 = vrot.lane.b32.xlu0 %v2727, 112
        %v3560 = vpop.permute.xlu0 %3559
        %3561 = vrot.lane.b32.xlu0 %v2698, 112
        %v3562 = vpop.permute.xlu0 %3561
        %3563 = vrot.lane.b32.xlu0 %v2700, 112
        %v3564 = vpop.permute.xlu0 %3563
        %3565 = vrot.lane.b32.xlu0 %v2702, 112
        %v3566 = vpop.permute.xlu0 %3565
        %3567 = vrot.lane.b32.xlu0 %v2704, 112
        %v3568 = vpop.permute.xlu0 %3567
        %3569 = vrot.lane.b32.xlu0 %v2706, 112
        %v3570 = vpop.permute.xlu0 %3569
        %3571 = vrot.lane.b32.xlu0 %v2708, 112
        %v3572 = vpop.permute.xlu0 %3571
        %3573 = vrot.lane.b32.xlu0 %v2710, 112
        %v3574 = vpop.permute.xlu0 %3573
        %3575 = vrot.lane.b32.xlu0 %v2712, 112
        %v3576 = vpop.permute.xlu0 %3575
        %3577 = vrot.lane.b32.xlu0 %v2714, 112
        %v3578 = vpop.permute.xlu0 %3577
        %3579 = vrot.lane.b32.xlu0 %v2716, 112
        %v3580 = vpop.permute.xlu0 %3579
        %3581 = vrot.lane.b32.xlu0 %v2718, 112
        %v3582 = vpop.permute.xlu0 %3581
        %3583 = vrot.lane.b32.xlu0 %v2720, 112
        %v3584 = vpop.permute.xlu0 %3583
        %3585 = vrot.lane.b32.xlu0 %v2722, 112
        %v3586 = vpop.permute.xlu0 %3585
        %3587 = vrot.lane.b32.xlu0 %v2724, 112
        %v3588 = vpop.permute.xlu0 %3587
        %3589 = vrot.lane.b32.xlu0 %v2726, 112
        %v3590 = vpop.permute.xlu0 %3589
        %3591 = vrot.lane.b32.xlu0 %v2728, 112
        %v3592 = vpop.permute.xlu0 %3591
        %v3593 = vsel %vm895, %v3530, %v3562
        %v3594 = vsel %vm895, %v3532, %v3564
        %v3595 = vsel %vm895, %v3534, %v3566
        %v3596 = vsel %vm895, %v3536, %v3568
        %v3597 = vsel %vm895, %v3538, %v3570
        %v3598 = vsel %vm895, %v3540, %v3572
        %v3599 = vsel %vm895, %v3542, %v3574
        %v3600 = vsel %vm895, %v3544, %v3576
        %v3601 = vsel %vm895, %v3546, %v3578
        %v3602 = vsel %vm895, %v3548, %v3580
        %v3603 = vsel %vm895, %v3550, %v3582
        %v3604 = vsel %vm895, %v3552, %v3584
        %v3605 = vsel %vm895, %v3554, %v3586
        %v3606 = vsel %vm895, %v3556, %v3588
        %v3607 = vsel %vm895, %v3558, %v3590
        %v3608 = vsel %vm895, %v3560, %v3592
        %v3609 = vsel %vm895, %v3562, %v3530
        %v3610 = vsel %vm895, %v3564, %v3532
        %v3611 = vsel %vm895, %v3566, %v3534
        %v3612 = vsel %vm895, %v3568, %v3536
        %v3613 = vsel %vm895, %v3570, %v3538
        %v3614 = vsel %vm895, %v3572, %v3540
        %v3615 = vsel %vm895, %v3574, %v3542
        %v3616 = vsel %vm895, %v3576, %v3544
        %v3617 = vsel %vm895, %v3578, %v3546
        %v3618 = vsel %vm895, %v3580, %v3548
        %v3619 = vsel %vm895, %v3582, %v3550
        %v3620 = vsel %vm895, %v3584, %v3552
        %v3621 = vsel %vm895, %v3586, %v3554
        %v3622 = vsel %vm895, %v3588, %v3556
        %v3623 = vsel %vm895, %v3590, %v3558
        %v3624 = vsel %vm895, %v3592, %v3560
        %v3625 = vmul.f32 %v3593, %v1896
        %v3626 = vmul.f32 %v3609, %v1900
        %v3627 = vmul.f32 %v3594, %v1896
        %v3628 = vmul.f32 %v3610, %v1900
        %v3629 = vmul.f32 %v3595, %v1896
        %v3630 = vmul.f32 %v3611, %v1900
        %v3631 = vmul.f32 %v3596, %v1896
        %v3632 = vmul.f32 %v3612, %v1900
        %v3633 = vmul.f32 %v3597, %v1896
        %v3634 = vmul.f32 %v3613, %v1900
        %v3635 = vmul.f32 %v3598, %v1896
        %v3636 = vmul.f32 %v3614, %v1900
        %v3637 = vmul.f32 %v3599, %v1896
        %v3638 = vmul.f32 %v3615, %v1900
        %v3639 = vmul.f32 %v3600, %v1896
        %v3640 = vmul.f32 %v3616, %v1900
        %v3641 = vmul.f32 %v3601, %v1896
        %v3642 = vmul.f32 %v3617, %v1900
        %v3643 = vmul.f32 %v3602, %v1896
        %v3644 = vmul.f32 %v3618, %v1900
        %v3645 = vmul.f32 %v3603, %v1896
        %v3646 = vmul.f32 %v3619, %v1900
        %v3647 = vmul.f32 %v3604, %v1896
        %v3648 = vmul.f32 %v3620, %v1900
        %v3649 = vmul.f32 %v3605, %v1896
        %v3650 = vmul.f32 %v3621, %v1900
        %v3651 = vmul.f32 %v3606, %v1896
        %v3652 = vmul.f32 %v3622, %v1900
        %v3653 = vmul.f32 %v3607, %v1896
        %v3654 = vmul.f32 %v3623, %v1900
        %v3655 = vmul.f32 %v3608, %v1896
        %v3656 = vmul.f32 %v3624, %v1900
        %3657 = vrot.lane.b32.xlu0 %v2697, 111
        %v3658 = vpop.permute.xlu0 %3657
        %3659 = vrot.lane.b32.xlu0 %v2699, 111
        %v3660 = vpop.permute.xlu0 %3659
        %3661 = vrot.lane.b32.xlu0 %v2701, 111
        %v3662 = vpop.permute.xlu0 %3661
        %3663 = vrot.lane.b32.xlu0 %v2703, 111
        %v3664 = vpop.permute.xlu0 %3663
        %3665 = vrot.lane.b32.xlu0 %v2705, 111
        %v3666 = vpop.permute.xlu0 %3665
        %3667 = vrot.lane.b32.xlu0 %v2707, 111
        %v3668 = vpop.permute.xlu0 %3667
        %3669 = vrot.lane.b32.xlu0 %v2709, 111
        %v3670 = vpop.permute.xlu0 %3669
        %3671 = vrot.lane.b32.xlu0 %v2711, 111
        %v3672 = vpop.permute.xlu0 %3671
        %3673 = vrot.lane.b32.xlu0 %v2713, 111
        %v3674 = vpop.permute.xlu0 %3673
        %3675 = vrot.lane.b32.xlu0 %v2715, 111
        %v3676 = vpop.permute.xlu0 %3675
        %3677 = vrot.lane.b32.xlu0 %v2717, 111
        %v3678 = vpop.permute.xlu0 %3677
        %3679 = vrot.lane.b32.xlu0 %v2719, 111
        %v3680 = vpop.permute.xlu0 %3679
        %3681 = vrot.lane.b32.xlu0 %v2721, 111
        %v3682 = vpop.permute.xlu0 %3681
        %3683 = vrot.lane.b32.xlu0 %v2723, 111
        %v3684 = vpop.permute.xlu0 %3683
        %3685 = vrot.lane.b32.xlu0 %v2725, 111
        %v3686 = vpop.permute.xlu0 %3685
        %3687 = vrot.lane.b32.xlu0 %v2727, 111
        %v3688 = vpop.permute.xlu0 %3687
        %3689 = vrot.lane.b32.xlu0 %v2698, 111
        %v3690 = vpop.permute.xlu0 %3689
        %3691 = vrot.lane.b32.xlu0 %v2700, 111
        %v3692 = vpop.permute.xlu0 %3691
        %3693 = vrot.lane.b32.xlu0 %v2702, 111
        %v3694 = vpop.permute.xlu0 %3693
        %3695 = vrot.lane.b32.xlu0 %v2704, 111
        %v3696 = vpop.permute.xlu0 %3695
        %3697 = vrot.lane.b32.xlu0 %v2706, 111
        %v3698 = vpop.permute.xlu0 %3697
        %3699 = vrot.lane.b32.xlu0 %v2708, 111
        %v3700 = vpop.permute.xlu0 %3699
        %3701 = vrot.lane.b32.xlu0 %v2710, 111
        %v3702 = vpop.permute.xlu0 %3701
        %3703 = vrot.lane.b32.xlu0 %v2712, 111
        %v3704 = vpop.permute.xlu0 %3703
        %3705 = vrot.lane.b32.xlu0 %v2714, 111
        %v3706 = vpop.permute.xlu0 %3705
        %3707 = vrot.lane.b32.xlu0 %v2716, 111
        %v3708 = vpop.permute.xlu0 %3707
        %3709 = vrot.lane.b32.xlu0 %v2718, 111
        %v3710 = vpop.permute.xlu0 %3709
        %3711 = vrot.lane.b32.xlu0 %v2720, 111
        %v3712 = vpop.permute.xlu0 %3711
        %3713 = vrot.lane.b32.xlu0 %v2722, 111
        %v3714 = vpop.permute.xlu0 %3713
        %3715 = vrot.lane.b32.xlu0 %v2724, 111
        %v3716 = vpop.permute.xlu0 %3715
        %3717 = vrot.lane.b32.xlu0 %v2726, 111
        %v3718 = vpop.permute.xlu0 %3717
        %3719 = vrot.lane.b32.xlu0 %v2728, 111
        %v3720 = vpop.permute.xlu0 %3719
        %v3721 = vsel %vm910, %v3658, %v3690
        %v3722 = vsel %vm910, %v3660, %v3692
        %v3723 = vsel %vm910, %v3662, %v3694
        %v3724 = vsel %vm910, %v3664, %v3696
        %v3725 = vsel %vm910, %v3666, %v3698
        %v3726 = vsel %vm910, %v3668, %v3700
        %v3727 = vsel %vm910, %v3670, %v3702
        %v3728 = vsel %vm910, %v3672, %v3704
        %v3729 = vsel %vm910, %v3674, %v3706
        %v3730 = vsel %vm910, %v3676, %v3708
        %v3731 = vsel %vm910, %v3678, %v3710
        %v3732 = vsel %vm910, %v3680, %v3712
        %v3733 = vsel %vm910, %v3682, %v3714
        %v3734 = vsel %vm910, %v3684, %v3716
        %v3735 = vsel %vm910, %v3686, %v3718
        %v3736 = vsel %vm910, %v3688, %v3720
        %v3737 = vsel %vm910, %v3690, %v3658
        %v3738 = vsel %vm910, %v3692, %v3660
        %v3739 = vsel %vm910, %v3694, %v3662
        %v3740 = vsel %vm910, %v3696, %v3664
        %v3741 = vsel %vm910, %v3698, %v3666
        %v3742 = vsel %vm910, %v3700, %v3668
        %v3743 = vsel %vm910, %v3702, %v3670
        %v3744 = vsel %vm910, %v3704, %v3672
        %v3745 = vsel %vm910, %v3706, %v3674
        %v3746 = vsel %vm910, %v3708, %v3676
        %v3747 = vsel %vm910, %v3710, %v3678
        %v3748 = vsel %vm910, %v3712, %v3680
        %v3749 = vsel %vm910, %v3714, %v3682
        %v3750 = vsel %vm910, %v3716, %v3684
        %v3751 = vsel %vm910, %v3718, %v3686
        %v3752 = vsel %vm910, %v3720, %v3688
        %v3753 = vmul.f32 %v3721, %v1968
        %v3754 = vmul.f32 %v3737, %v1972
        %v3755 = vmul.f32 %v3722, %v1968
        %v3756 = vmul.f32 %v3738, %v1972
        %v3757 = vmul.f32 %v3723, %v1968
        %v3758 = vmul.f32 %v3739, %v1972
        %v3759 = vmul.f32 %v3724, %v1968
        %v3760 = vmul.f32 %v3740, %v1972
        %v3761 = vmul.f32 %v3725, %v1968
        %v3762 = vmul.f32 %v3741, %v1972
        %v3763 = vmul.f32 %v3726, %v1968
        %v3764 = vmul.f32 %v3742, %v1972
        %v3765 = vmul.f32 %v3727, %v1968
        %v3766 = vmul.f32 %v3743, %v1972
        %v3767 = vmul.f32 %v3728, %v1968
        %v3768 = vmul.f32 %v3744, %v1972
        %v3769 = vmul.f32 %v3729, %v1968
        %v3770 = vmul.f32 %v3745, %v1972
        %v3771 = vmul.f32 %v3730, %v1968
        %v3772 = vmul.f32 %v3746, %v1972
        %v3773 = vmul.f32 %v3731, %v1968
        %v3774 = vmul.f32 %v3747, %v1972
        %v3775 = vmul.f32 %v3732, %v1968
        %v3776 = vmul.f32 %v3748, %v1972
        %v3777 = vmul.f32 %v3733, %v1968
        %v3778 = vmul.f32 %v3749, %v1972
        %v3779 = vmul.f32 %v3734, %v1968
        %v3780 = vmul.f32 %v3750, %v1972
        %v3781 = vmul.f32 %v3735, %v1968
        %v3782 = vmul.f32 %v3751, %v1972
        %v3783 = vmul.f32 %v3736, %v1968
        %v3784 = vmul.f32 %v3752, %v1972
        %v3785 = vld [vmem:[#allocation6] sm:$0xff]
        %v3786 = vld [vmem:[#allocation6 + $0x8] sm:$0xff]
        %v3787 = vld [vmem:[#allocation6 + $0x10] sm:$0xff]
        %v3788 = vld [vmem:[#allocation6 + $0x18] sm:$0xff]
        %v3789 = vld [vmem:[#allocation6 + $0x20] sm:$0xff]
        %v3790 = vld [vmem:[#allocation6 + $0x28] sm:$0xff]
        %v3791 = vld [vmem:[#allocation6 + $0x30] sm:$0xff]
        %v3792 = vld [vmem:[#allocation6 + $0x38] sm:$0xff]
        %v3793 = vld [vmem:[#allocation6 + $0x40] sm:$0xff]
        %v3794 = vld [vmem:[#allocation6 + $0x48] sm:$0xff]
        %v3795 = vld [vmem:[#allocation6 + $0x50] sm:$0xff]
        %v3796 = vld [vmem:[#allocation6 + $0x58] sm:$0xff]
        %v3797 = vld [vmem:[#allocation6 + $0x60] sm:$0xff]
        %v3798 = vld [vmem:[#allocation6 + $0x68] sm:$0xff]
        %v3799 = vld [vmem:[#allocation6 + $0x70] sm:$0xff]
        %v3800 = vld [vmem:[#allocation6 + $0x78] sm:$0xff]
        %v3801 = vld [vmem:[#allocation6 + $0x80] sm:$0xff]
        %v3802 = vld [vmem:[#allocation6 + $0x88] sm:$0xff]
        %v3803 = vld [vmem:[#allocation6 + $0x90] sm:$0xff]
        %v3804 = vld [vmem:[#allocation6 + $0x98] sm:$0xff]
        %v3805 = vld [vmem:[#allocation6 + $0xa0] sm:$0xff]
        %v3806 = vld [vmem:[#allocation6 + $0xa8] sm:$0xff]
        %v3807 = vld [vmem:[#allocation6 + $0xb0] sm:$0xff]
        %v3808 = vld [vmem:[#allocation6 + $0xb8] sm:$0xff]
        %v3809 = vld [vmem:[#allocation6 + $0xc0] sm:$0xff]
        %v3810 = vld [vmem:[#allocation6 + $0xc8] sm:$0xff]
        %v3811 = vld [vmem:[#allocation6 + $0xd0] sm:$0xff]
        %v3812 = vld [vmem:[#allocation6 + $0xd8] sm:$0xff]
        %v3813 = vld [vmem:[#allocation6 + $0xe0] sm:$0xff]
        %v3814 = vld [vmem:[#allocation6 + $0xe8] sm:$0xff]
        %v3815 = vld [vmem:[#allocation6 + $0xf0] sm:$0xff]
        %v3816 = vld [vmem:[#allocation6 + $0xf8] sm:$0xff]
        %v3817 = vld [vmem:[#allocation6 + $0x100] sm:$0xff]
        %v3818 = vld [vmem:[#allocation6 + $0x108] sm:$0xff]
        %v3819 = vld [vmem:[#allocation6 + $0x110] sm:$0xff]
        %v3820 = vld [vmem:[#allocation6 + $0x118] sm:$0xff]
        %v3821 = vld [vmem:[#allocation6 + $0x120] sm:$0xff]
        %v3822 = vld [vmem:[#allocation6 + $0x128] sm:$0xff]
        %v3823 = vld [vmem:[#allocation6 + $0x130] sm:$0xff]
        %v3824 = vld [vmem:[#allocation6 + $0x138] sm:$0xff]
        %v3825 = vld [vmem:[#allocation6 + $0x140] sm:$0xff]
        %v3826 = vld [vmem:[#allocation6 + $0x148] sm:$0xff]
        %v3827 = vld [vmem:[#allocation6 + $0x150] sm:$0xff]
        %v3828 = vld [vmem:[#allocation6 + $0x158] sm:$0xff]
        %v3829 = vld [vmem:[#allocation6 + $0x160] sm:$0xff]
        %v3830 = vld [vmem:[#allocation6 + $0x168] sm:$0xff]
        %v3831 = vld [vmem:[#allocation6 + $0x170] sm:$0xff]
        %v3832 = vld [vmem:[#allocation6 + $0x178] sm:$0xff]
        %v3833 = vld [vmem:[#allocation6 + $0x180] sm:$0xff]
        %v3834 = vld [vmem:[#allocation6 + $0x188] sm:$0xff]
        %v3835 = vld [vmem:[#allocation6 + $0x190] sm:$0xff]
        %v3836 = vld [vmem:[#allocation6 + $0x198] sm:$0xff]
        %v3837 = vld [vmem:[#allocation6 + $0x1a0] sm:$0xff]
        %v3838 = vld [vmem:[#allocation6 + $0x1a8] sm:$0xff]
        %v3839 = vld [vmem:[#allocation6 + $0x1b0] sm:$0xff]
        %v3840 = vld [vmem:[#allocation6 + $0x1b8] sm:$0xff]
        %v3841 = vld [vmem:[#allocation6 + $0x1c0] sm:$0xff]
        %v3842 = vld [vmem:[#allocation6 + $0x1c8] sm:$0xff]
        %v3843 = vld [vmem:[#allocation6 + $0x1d0] sm:$0xff]
        %v3844 = vld [vmem:[#allocation6 + $0x1d8] sm:$0xff]
        %v3845 = vld [vmem:[#allocation6 + $0x1e0] sm:$0xff]
        %v3846 = vld [vmem:[#allocation6 + $0x1e8] sm:$0xff]
        %v3847 = vld [vmem:[#allocation6 + $0x1f0] sm:$0xff]
        %v3848 = vld [vmem:[#allocation6 + $0x1f8] sm:$0xff]
        %v3849 = vld [vmem:[#allocation6 + $0x200] sm:$0xff]
        %v3850 = vld [vmem:[#allocation6 + $0x208] sm:$0xff]
        %v3851 = vld [vmem:[#allocation6 + $0x210] sm:$0xff]
        %v3852 = vld [vmem:[#allocation6 + $0x218] sm:$0xff]
        %v3853 = vld [vmem:[#allocation6 + $0x220] sm:$0xff]
        %v3854 = vld [vmem:[#allocation6 + $0x228] sm:$0xff]
        %v3855 = vld [vmem:[#allocation6 + $0x230] sm:$0xff]
        %v3856 = vld [vmem:[#allocation6 + $0x238] sm:$0xff]
        %v3857 = vld [vmem:[%s8] sm:$0xff]
        %v3858 = vld [vmem:[%s8 + $0x8] sm:$0xff]
        %v3859 = vld [vmem:[%s8 + $0x10] sm:$0xff]
        %v3860 = vld [vmem:[%s8 + $0x18] sm:$0xff]
        %v3861 = vld [vmem:[%s8 + $0x20] sm:$0xff]
        %v3862 = vld [vmem:[%s8 + $0x28] sm:$0xff]
        %v3863 = vld [vmem:[%s8 + $0x30] sm:$0xff]
        %v3864 = vld [vmem:[%s8 + $0x38] sm:$0xff]
        %3866 = vset.pattern.permute.xlu0 0
        %3867 = vperm.xlu0 %3866, %v3857
        %v3868 = vpop.permute.xlu0 %3867
        %3871 = vset.pattern.permute.xlu0 0
        %3872 = vperm.xlu0 %3871, %v3858
        %v3873 = vpop.permute.xlu0 %3872
        %3876 = vset.pattern.permute.xlu0 0
        %3877 = vperm.xlu0 %3876, %v3859
        %v3878 = vpop.permute.xlu0 %3877
        %3881 = vset.pattern.permute.xlu0 0
        %3882 = vperm.xlu0 %3881, %v3860
        %v3883 = vpop.permute.xlu0 %3882
        %3886 = vset.pattern.permute.xlu0 0
        %3887 = vperm.xlu0 %3886, %v3861
        %v3888 = vpop.permute.xlu0 %3887
        %3891 = vset.pattern.permute.xlu0 0
        %3892 = vperm.xlu0 %3891, %v3862
        %v3893 = vpop.permute.xlu0 %3892
        %3896 = vset.pattern.permute.xlu0 0
        %3897 = vperm.xlu0 %3896, %v3863
        %v3898 = vpop.permute.xlu0 %3897
        %3901 = vset.pattern.permute.xlu0 0
        %3902 = vperm.xlu0 %3901, %v3864
        %v3903 = vpop.permute.xlu0 %3902
        %3905 = vmatprep.subr.mxu0 %v2826
        %3906 = vmatpush1.msra.mxu0 %v2825
        %3907 = vmatprep.subr.mxu0 %v2828
        %3908 = vmatpush1.msra.mxu0 %v2827
        %3909 = vmatprep.subr.mxu0 %v2830
        %3910 = vmatpush1.msra.mxu0 %v2829
        %3911 = vmatprep.subr.mxu0 %v2832
        %3912 = vmatpush1.msra.mxu0 %v2831
        %3913 = vmatprep.subr.mxu0 %v2834
        %3914 = vmatpush1.msra.mxu0 %v2833
        %3915 = vmatprep.subr.mxu0 %v2836
        %3916 = vmatpush1.msra.mxu0 %v2835
        %3917 = vmatprep.subr.mxu0 %v2838
        %3918 = vmatpush1.msra.mxu0 %v2837
        %3919 = vmatprep.subr.mxu0 %v2840
        %3920 = vmatpush1.msra.mxu0 %v2839
        %3921 = vmatprep.subr.mxu0 %v2842
        %3922 = vmatpush1.msra.mxu0 %v2841
        %3923 = vmatprep.subr.mxu0 %v2844
        %3924 = vmatpush1.msra.mxu0 %v2843
        %3925 = vmatprep.subr.mxu0 %v2846
        %3926 = vmatpush1.msra.mxu0 %v2845
        %3927 = vmatprep.subr.mxu0 %v2848
        %3928 = vmatpush1.msra.mxu0 %v2847
        %3929 = vmatprep.subr.mxu0 %v2850
        %3930 = vmatpush1.msra.mxu0 %v2849
        %3931 = vmatprep.subr.mxu0 %v2852
        %3932 = vmatpush1.msra.mxu0 %v2851
        %3933 = vmatprep.subr.mxu0 %v2854
        %3934 = vmatpush1.msra.mxu0 %v2853
        %3935 = vmatprep.subr.mxu0 %v2856
        %3936 = vmatpush1.msra.mxu0 %v2855
        %3937 = vmatprep.subr.mxu0 %v2954
        %3938 = vmatpush1.msra.mxu0 %v2953
        %3939 = vmatprep.subr.mxu0 %v2956
        %3940 = vmatpush1.msra.mxu0 %v2955
        %3941 = vmatprep.subr.mxu0 %v2958
        %3942 = vmatpush1.msra.mxu0 %v2957
        %3943 = vmatprep.subr.mxu0 %v2960
        %3944 = vmatpush1.msra.mxu0 %v2959
        %3945 = vmatprep.subr.mxu0 %v2962
        %3946 = vmatpush1.msra.mxu0 %v2961
        %3947 = vmatprep.subr.mxu0 %v2964
        %3948 = vmatpush1.msra.mxu0 %v2963
        %3949 = vmatprep.subr.mxu0 %v2966
        %3950 = vmatpush1.msra.mxu0 %v2965
        %3951 = vmatprep.subr.mxu0 %v2968
        %3952 = vmatpush1.msra.mxu0 %v2967
        %3953 = vmatprep.subr.mxu0 %v2970
        %3954 = vmatpush1.msra.mxu0 %v2969
        %3955 = vmatprep.subr.mxu0 %v2972
        %3956 = vmatpush1.msra.mxu0 %v2971
        %3957 = vmatprep.subr.mxu0 %v2974
        %3958 = vmatpush1.msra.mxu0 %v2973
        %3959 = vmatprep.subr.mxu0 %v2976
        %3960 = vmatpush1.msra.mxu0 %v2975
        %3961 = vmatprep.subr.mxu0 %v2978
        %3962 = vmatpush1.msra.mxu0 %v2977
        %3963 = vmatprep.subr.mxu0 %v2980
        %3964 = vmatpush1.msra.mxu0 %v2979
        %3965 = vmatprep.subr.mxu0 %v2982
        %3966 = vmatpush1.msra.mxu0 %v2981
        %3967 = vmatprep.subr.mxu0 %v2984
        %3968 = vmatpush1.msra.mxu0 %v2983
        %3969 = vmatprep.mubr.f32.mxu0 %v3786
        %3970 = vmatmul.mubr.f32.gmra.mrb[0].mxu0 %v3785
        %v3971 = vpop.f32.mrb[0].mxu0
        %v3972 = vadd.f32 %v3868, %v3971
        %v3973 = vpop.f32.mrb[0].mxu0
        %v3974 = vadd.f32 %v3868, %v3973
        %3975 = vmatprep.mubr.f32.mxu0 %v3795
        %3976 = vmatmul.mubr.f32.gmra.mrb[0].mxu0 %v3794
        %v3977 = vpop.f32.mrb[0].mxu0
        %v3978 = vadd.f32 %v3873, %v3977
        %v3979 = vpop.f32.mrb[0].mxu0
        %v3980 = vadd.f32 %v3873, %v3979
        %3981 = vmatprep.mubr.f32.mxu0 %v3804
        %3982 = vmatmul.mubr.f32.gmra.mrb[0].mxu0 %v3803
        %v3983 = vpop.f32.mrb[0].mxu0
        %v3984 = vadd.f32 %v3878, %v3983
        %v3985 = vpop.f32.mrb[0].mxu0
        %v3986 = vadd.f32 %v3878, %v3985
        %3987 = vmatprep.mubr.f32.mxu0 %v3813
        %3988 = vmatmul.mubr.f32.gmra.mrb[0].mxu0 %v3812
        %v3989 = vpop.f32.mrb[0].mxu0
        %v3990 = vadd.f32 %v3883, %v3989
        %v3991 = vpop.f32.mrb[0].mxu0
        %v3992 = vadd.f32 %v3883, %v3991
        %3993 = vmatprep.mubr.f32.mxu0 %v3822
        %3994 = vmatmul.mubr.f32.gmra.mrb[0].mxu0 %v3821
        %v3995 = vpop.f32.mrb[0].mxu0
        %v3996 = vadd.f32 %v3888, %v3995
        %v3997 = vpop.f32.mrb[0].mxu0
        %v3998 = vadd.f32 %v3888, %v3997
        %3999 = vmatprep.mubr.f32.mxu0 %v3831
        %4000 = vmatmul.mubr.f32.gmra.mrb[0].mxu0 %v3830
        %v4001 = vpop.f32.mrb[0].mxu0
        %v4002 = vadd.f32 %v3893, %v4001
        %v4003 = vpop.f32.mrb[0].mxu0
        %v4004 = vadd.f32 %v3893, %v4003
        %4005 = vmatprep.mubr.f32.mxu0 %v3840
        %4006 = vmatmul.mubr.f32.gmra.mrb[0].mxu0 %v3839
        %v4007 = vpop.f32.mrb[0].mxu0
        %v4008 = vadd.f32 %v3898, %v4007
        %v4009 = vpop.f32.mrb[0].mxu0
        %v4010 = vadd.f32 %v3898, %v4009
        %4011 = vmatprep.mubr.f32.mxu0 %v3849
        %4012 = vmatmul.mubr.f32.gmra.mrb[0].mxu0 %v3848
        %v4013 = vpop.f32.mrb[0].mxu0
        %v4014 = vadd.f32 %v3903, %v4013
        %v4015 = vpop.f32.mrb[0].mxu0
        %v4016 = vadd.f32 %v3903, %v4015
        %4017 = vdwg.mxu0
        %4018 = vmatprep.subr.mxu0 %v3082
        %4019 = vmatpush1.msra.mxu0 %v3081
        %4020 = vmatprep.subr.mxu0 %v3084
        %4021 = vmatpush1.msra.mxu0 %v3083
        %4022 = vmatprep.subr.mxu0 %v3086
        %4023 = vmatpush1.msra.mxu0 %v3085
        %4024 = vmatprep.subr.mxu0 %v3088
        %4025 = vmatpush1.msra.mxu0 %v3087
        %4026 = vmatprep.subr.mxu0 %v3090
        %4027 = vmatpush1.msra.mxu0 %v3089
        %4028 = vmatprep.subr.mxu0 %v3092
        %4029 = vmatpush1.msra.mxu0 %v3091
        %4030 = vmatprep.subr.mxu0 %v3094
        %4031 = vmatpush1.msra.mxu0 %v3093
        %4032 = vmatprep.subr.mxu0 %v3096
        %4033 = vmatpush1.msra.mxu0 %v3095
        %4034 = vmatprep.subr.mxu0 %v3098
        %4035 = vmatpush1.msra.mxu0 %v3097
        %4036 = vmatprep.subr.mxu0 %v3100
        %4037 = vmatpush1.msra.mxu0 %v3099
        %4038 = vmatprep.subr.mxu0 %v3102
        %4039 = vmatpush1.msra.mxu0 %v3101
        %4040 = vmatprep.subr.mxu0 %v3104
        %4041 = vmatpush1.msra.mxu0 %v3103
        %4042 = vmatprep.subr.mxu0 %v3106
        %4043 = vmatpush1.msra.mxu0 %v3105
        %4044 = vmatprep.subr.mxu0 %v3108
        %4045 = vmatpush1.msra.mxu0 %v3107
        %4046 = vmatprep.subr.mxu0 %v3110
        %4047 = vmatpush1.msra.mxu0 %v3109
        %4048 = vmatprep.subr.mxu0 %v3112
        %4049 = vmatpush1.msra.mxu0 %v3111
        %4050 = vmatprep.subr.mxu0 %v3210
        %4051 = vmatpush1.msra.mxu0 %v3209
        %4052 = vmatprep.subr.mxu0 %v3212
        %4053 = vmatpush1.msra.mxu0 %v3211
        %4054 = vmatprep.subr.mxu0 %v3214
        %4055 = vmatpush1.msra.mxu0 %v3213
        %4056 = vmatprep.subr.mxu0 %v3216
        %4057 = vmatpush1.msra.mxu0 %v3215
        %4058 = vmatprep.subr.mxu0 %v3218
        %4059 = vmatpush1.msra.mxu0 %v3217
        %4060 = vmatprep.subr.mxu0 %v3220
        %4061 = vmatpush1.msra.mxu0 %v3219
        %4062 = vmatprep.subr.mxu0 %v3222
        %4063 = vmatpush1.msra.mxu0 %v3221
        %4064 = vmatprep.subr.mxu0 %v3224
        %4065 = vmatpush1.msra.mxu0 %v3223
        %4066 = vmatprep.subr.mxu0 %v3226
        %4067 = vmatpush1.msra.mxu0 %v3225
        %4068 = vmatprep.subr.mxu0 %v3228
        %4069 = vmatpush1.msra.mxu0 %v3227
        %4070 = vmatprep.subr.mxu0 %v3230
        %4071 = vmatpush1.msra.mxu0 %v3229
        %4072 = vmatprep.subr.mxu0 %v3232
        %4073 = vmatpush1.msra.mxu0 %v3231
        %4074 = vmatprep.subr.mxu0 %v3234
        %4075 = vmatpush1.msra.mxu0 %v3233
        %4076 = vmatprep.subr.mxu0 %v3236
        %4077 = vmatpush1.msra.mxu0 %v3235
        %4078 = vmatprep.subr.mxu0 %v3238
        %4079 = vmatpush1.msra.mxu0 %v3237
        %4080 = vmatprep.subr.mxu0 %v3240
        %4081 = vmatpush1.msra.mxu0 %v3239
        %4082 = vmatprep.mubr.f32.mxu0 %v3788
        %4083 = vmatmul.mubr.f32.gmra.mrb[0].mxu0 %v3787
        %v4084 = vpop.f32.mrb[0].mxu0
        %v4085 = vadd.f32 %v3972, %v4084
        %v4086 = vpop.f32.mrb[0].mxu0
        %v4087 = vadd.f32 %v3974, %v4086
        %4088 = vmatprep.mubr.f32.mxu0 %v3797
        %4089 = vmatmul.mubr.f32.gmra.mrb[0].mxu0 %v3796
        %v4090 = vpop.f32.mrb[0].mxu0
        %v4091 = vadd.f32 %v3978, %v4090
        %v4092 = vpop.f32.mrb[0].mxu0
        %v4093 = vadd.f32 %v3980, %v4092
        %4094 = vmatprep.mubr.f32.mxu0 %v3806
        %4095 = vmatmul.mubr.f32.gmra.mrb[0].mxu0 %v3805
        %v4096 = vpop.f32.mrb[0].mxu0
        %v4097 = vadd.f32 %v3984, %v4096
        %v4098 = vpop.f32.mrb[0].mxu0
        %v4099 = vadd.f32 %v3986, %v4098
        %4100 = vmatprep.mubr.f32.mxu0 %v3815
        %4101 = vmatmul.mubr.f32.gmra.mrb[0].mxu0 %v3814
        %v4102 = vpop.f32.mrb[0].mxu0
        %v4103 = vadd.f32 %v3990, %v4102
        %v4104 = vpop.f32.mrb[0].mxu0
        %v4105 = vadd.f32 %v3992, %v4104
        %4106 = vmatprep.mubr.f32.mxu0 %v3824
        %4107 = vmatmul.mubr.f32.gmra.mrb[0].mxu0 %v3823
        %v4108 = vpop.f32.mrb[0].mxu0
        %v4109 = vadd.f32 %v3996, %v4108
        %v4110 = vpop.f32.mrb[0].mxu0
        %v4111 = vadd.f32 %v3998, %v4110
        %4112 = vmatprep.mubr.f32.mxu0 %v3833
        %4113 = vmatmul.mubr.f32.gmra.mrb[0].mxu0 %v3832
        %v4114 = vpop.f32.mrb[0].mxu0
        %v4115 = vadd.f32 %v4002, %v4114
        %v4116 = vpop.f32.mrb[0].mxu0
        %v4117 = vadd.f32 %v4004, %v4116
        %4118 = vmatprep.mubr.f32.mxu0 %v3842
        %4119 = vmatmul.mubr.f32.gmra.mrb[0].mxu0 %v3841
        %v4120 = vpop.f32.mrb[0].mxu0
        %v4121 = vadd.f32 %v4008, %v4120
        %v4122 = vpop.f32.mrb[0].mxu0
        %v4123 = vadd.f32 %v4010, %v4122
        %4124 = vmatprep.mubr.f32.mxu0 %v3851
        %4125 = vmatmul.mubr.f32.gmra.mrb[0].mxu0 %v3850
        %v4126 = vpop.f32.mrb[0].mxu0
        %v4127 = vadd.f32 %v4014, %v4126
        %v4128 = vpop.f32.mrb[0].mxu0
        %v4129 = vadd.f32 %v4016, %v4128
        %4130 = vdwg.mxu0
        %4131 = vmatprep.subr.mxu0 %v3242
        %4132 = vmatpush1.msra.mxu0 %v3241
        %4133 = vmatprep.subr.mxu0 %v3244
        %4134 = vmatpush1.msra.mxu0 %v3243
        %4135 = vmatprep.subr.mxu0 %v3246
        %4136 = vmatpush1.msra.mxu0 %v3245
        %4137 = vmatprep.subr.mxu0 %v3248
        %4138 = vmatpush1.msra.mxu0 %v3247
        %4139 = vmatprep.subr.mxu0 %v3250
        %4140 = vmatpush1.msra.mxu0 %v3249
        %4141 = vmatprep.subr.mxu0 %v3252
        %4142 = vmatpush1.msra.mxu0 %v3251
        %4143 = vmatprep.subr.mxu0 %v3254
        %4144 = vmatpush1.msra.mxu0 %v3253
        %4145 = vmatprep.subr.mxu0 %v3256
        %4146 = vmatpush1.msra.mxu0 %v3255
        %4147 = vmatprep.subr.mxu0 %v3258
        %4148 = vmatpush1.msra.mxu0 %v3257
        %4149 = vmatprep.subr.mxu0 %v3260
        %4150 = vmatpush1.msra.mxu0 %v3259
        %4151 = vmatprep.subr.mxu0 %v3262
        %4152 = vmatpush1.msra.mxu0 %v3261
        %4153 = vmatprep.subr.mxu0 %v3264
        %4154 = vmatpush1.msra.mxu0 %v3263
        %4155 = vmatprep.subr.mxu0 %v3266
        %4156 = vmatpush1.msra.mxu0 %v3265
        %4157 = vmatprep.subr.mxu0 %v3268
        %4158 = vmatpush1.msra.mxu0 %v3267
        %4159 = vmatprep.subr.mxu0 %v3270
        %4160 = vmatpush1.msra.mxu0 %v3269
        %4161 = vmatprep.subr.mxu0 %v3272
        %4162 = vmatpush1.msra.mxu0 %v3271
        %4163 = vmatprep.subr.mxu0 %v3370
        %4164 = vmatpush1.msra.mxu0 %v3369
        %4165 = vmatprep.subr.mxu0 %v3372
        %4166 = vmatpush1.msra.mxu0 %v3371
        %4167 = vmatprep.subr.mxu0 %v3374
        %4168 = vmatpush1.msra.mxu0 %v3373
        %4169 = vmatprep.subr.mxu0 %v3376
        %4170 = vmatpush1.msra.mxu0 %v3375
        %4171 = vmatprep.subr.mxu0 %v3378
        %4172 = vmatpush1.msra.mxu0 %v3377
        %4173 = vmatprep.subr.mxu0 %v3380
        %4174 = vmatpush1.msra.mxu0 %v3379
        %4175 = vmatprep.subr.mxu0 %v3382
        %4176 = vmatpush1.msra.mxu0 %v3381
        %4177 = vmatprep.subr.mxu0 %v3384
        %4178 = vmatpush1.msra.mxu0 %v3383
        %4179 = vmatprep.subr.mxu0 %v3386
        %4180 = vmatpush1.msra.mxu0 %v3385
        %4181 = vmatprep.subr.mxu0 %v3388
        %4182 = vmatpush1.msra.mxu0 %v3387
        %4183 = vmatprep.subr.mxu0 %v3390
        %4184 = vmatpush1.msra.mxu0 %v3389
        %4185 = vmatprep.subr.mxu0 %v3392
        %4186 = vmatpush1.msra.mxu0 %v3391
        %4187 = vmatprep.subr.mxu0 %v3394
        %4188 = vmatpush1.msra.mxu0 %v3393
        %4189 = vmatprep.subr.mxu0 %v3396
        %4190 = vmatpush1.msra.mxu0 %v3395
        %4191 = vmatprep.subr.mxu0 %v3398
        %4192 = vmatpush1.msra.mxu0 %v3397
        %4193 = vmatprep.subr.mxu0 %v3400
        %4194 = vmatpush1.msra.mxu0 %v3399
        %4195 = vmatprep.mubr.f32.mxu0 %v3790
        %4196 = vmatmul.mubr.f32.gmra.mrb[0].mxu0 %v3789
        %v4197 = vpop.f32.mrb[0].mxu0
        %v4198 = vadd.f32 %v4085, %v4197
        %v4199 = vpop.f32.mrb[0].mxu0
        %v4200 = vadd.f32 %v4087, %v4199
        %4201 = vmatprep.mubr.f32.mxu0 %v3799
        %4202 = vmatmul.mubr.f32.gmra.mrb[0].mxu0 %v3798
        %v4203 = vpop.f32.mrb[0].mxu0
        %v4204 = vadd.f32 %v4091, %v4203
        %v4205 = vpop.f32.mrb[0].mxu0
        %v4206 = vadd.f32 %v4093, %v4205
        %4207 = vmatprep.mubr.f32.mxu0 %v3808
        %4208 = vmatmul.mubr.f32.gmra.mrb[0].mxu0 %v3807
        %v4209 = vpop.f32.mrb[0].mxu0
        %v4210 = vadd.f32 %v4097, %v4209
        %v4211 = vpop.f32.mrb[0].mxu0
        %v4212 = vadd.f32 %v4099, %v4211
        %4213 = vmatprep.mubr.f32.mxu0 %v3817
        %4214 = vmatmul.mubr.f32.gmra.mrb[0].mxu0 %v3816
        %v4215 = vpop.f32.mrb[0].mxu0
        %v4216 = vadd.f32 %v4103, %v4215
        %v4217 = vpop.f32.mrb[0].mxu0
        %v4218 = vadd.f32 %v4105, %v4217
        %4219 = vmatprep.mubr.f32.mxu0 %v3826
        %4220 = vmatmul.mubr.f32.gmra.mrb[0].mxu0 %v3825
        %v4221 = vpop.f32.mrb[0].mxu0
        %v4222 = vadd.f32 %v4109, %v4221
        %v4223 = vpop.f32.mrb[0].mxu0
        %v4224 = vadd.f32 %v4111, %v4223
        %4225 = vmatprep.mubr.f32.mxu0 %v3835
        %4226 = vmatmul.mubr.f32.gmra.mrb[0].mxu0 %v3834
        %v4227 = vpop.f32.mrb[0].mxu0
        %v4228 = vadd.f32 %v4115, %v4227
        %v4229 = vpop.f32.mrb[0].mxu0
        %v4230 = vadd.f32 %v4117, %v4229
        %4231 = vmatprep.mubr.f32.mxu0 %v3844
        %4232 = vmatmul.mubr.f32.gmra.mrb[0].mxu0 %v3843
        %v4233 = vpop.f32.mrb[0].mxu0
        %v4234 = vadd.f32 %v4121, %v4233
        %v4235 = vpop.f32.mrb[0].mxu0
        %v4236 = vadd.f32 %v4123, %v4235
        %4237 = vmatprep.mubr.f32.mxu0 %v3853
        %4238 = vmatmul.mubr.f32.gmra.mrb[0].mxu0 %v3852
        %v4239 = vpop.f32.mrb[0].mxu0
        %v4240 = vadd.f32 %v4127, %v4239
        %v4241 = vpop.f32.mrb[0].mxu0
        %v4242 = vadd.f32 %v4129, %v4241
        %4243 = vdwg.mxu0
        %4244 = vmatprep.subr.mxu0 %v3498
        %4245 = vmatpush1.msra.mxu0 %v3497
        %4246 = vmatprep.subr.mxu0 %v3500
        %4247 = vmatpush1.msra.mxu0 %v3499
        %4248 = vmatprep.subr.mxu0 %v3502
        %4249 = vmatpush1.msra.mxu0 %v3501
        %4250 = vmatprep.subr.mxu0 %v3504
        %4251 = vmatpush1.msra.mxu0 %v3503
        %4252 = vmatprep.subr.mxu0 %v3506
        %4253 = vmatpush1.msra.mxu0 %v3505
        %4254 = vmatprep.subr.mxu0 %v3508
        %4255 = vmatpush1.msra.mxu0 %v3507
        %4256 = vmatprep.subr.mxu0 %v3510
        %4257 = vmatpush1.msra.mxu0 %v3509
        %4258 = vmatprep.subr.mxu0 %v3512
        %4259 = vmatpush1.msra.mxu0 %v3511
        %4260 = vmatprep.subr.mxu0 %v3514
        %4261 = vmatpush1.msra.mxu0 %v3513
        %4262 = vmatprep.subr.mxu0 %v3516
        %4263 = vmatpush1.msra.mxu0 %v3515
        %4264 = vmatprep.subr.mxu0 %v3518
        %4265 = vmatpush1.msra.mxu0 %v3517
        %4266 = vmatprep.subr.mxu0 %v3520
        %4267 = vmatpush1.msra.mxu0 %v3519
        %4268 = vmatprep.subr.mxu0 %v3522
        %4269 = vmatpush1.msra.mxu0 %v3521
        %4270 = vmatprep.subr.mxu0 %v3524
        %4271 = vmatpush1.msra.mxu0 %v3523
        %4272 = vmatprep.subr.mxu0 %v3526
        %4273 = vmatpush1.msra.mxu0 %v3525
        %4274 = vmatprep.subr.mxu0 %v3528
        %4275 = vmatpush1.msra.mxu0 %v3527
        %4276 = vmatprep.subr.mxu0 %v3626
        %4277 = vmatpush1.msra.mxu0 %v3625
        %4278 = vmatprep.subr.mxu0 %v3628
        %4279 = vmatpush1.msra.mxu0 %v3627
        %4280 = vmatprep.subr.mxu0 %v3630
        %4281 = vmatpush1.msra.mxu0 %v3629
        %4282 = vmatprep.subr.mxu0 %v3632
        %4283 = vmatpush1.msra.mxu0 %v3631
        %4284 = vmatprep.subr.mxu0 %v3634
        %4285 = vmatpush1.msra.mxu0 %v3633
        %4286 = vmatprep.subr.mxu0 %v3636
        %4287 = vmatpush1.msra.mxu0 %v3635
        %4288 = vmatprep.subr.mxu0 %v3638
        %4289 = vmatpush1.msra.mxu0 %v3637
        %4290 = vmatprep.subr.mxu0 %v3640
        %4291 = vmatpush1.msra.mxu0 %v3639
        %4292 = vmatprep.subr.mxu0 %v3642
        %4293 = vmatpush1.msra.mxu0 %v3641
        %4294 = vmatprep.subr.mxu0 %v3644
        %4295 = vmatpush1.msra.mxu0 %v3643
        %4296 = vmatprep.subr.mxu0 %v3646
        %4297 = vmatpush1.msra.mxu0 %v3645
        %4298 = vmatprep.subr.mxu0 %v3648
        %4299 = vmatpush1.msra.mxu0 %v3647
        %4300 = vmatprep.subr.mxu0 %v3650
        %4301 = vmatpush1.msra.mxu0 %v3649
        %4302 = vmatprep.subr.mxu0 %v3652
        %4303 = vmatpush1.msra.mxu0 %v3651
        %4304 = vmatprep.subr.mxu0 %v3654
        %4305 = vmatpush1.msra.mxu0 %v3653
        %4306 = vmatprep.subr.mxu0 %v3656
        %4307 = vmatpush1.msra.mxu0 %v3655
        %4308 = vmatprep.mubr.f32.mxu0 %v3792
        %4309 = vmatmul.mubr.f32.gmra.mrb[0].mxu0 %v3791
        %v4310 = vpop.f32.mrb[0].mxu0
        %v4311 = vadd.f32 %v4198, %v4310
        %v4312 = vpop.f32.mrb[0].mxu0
        %v4313 = vadd.f32 %v4200, %v4312
        %4314 = vmatprep.mubr.f32.mxu0 %v3801
        %4315 = vmatmul.mubr.f32.gmra.mrb[0].mxu0 %v3800
        %v4316 = vpop.f32.mrb[0].mxu0
        %v4317 = vadd.f32 %v4204, %v4316
        %v4318 = vpop.f32.mrb[0].mxu0
        %v4319 = vadd.f32 %v4206, %v4318
        %4320 = vmatprep.mubr.f32.mxu0 %v3810
        %4321 = vmatmul.mubr.f32.gmra.mrb[0].mxu0 %v3809
        %v4322 = vpop.f32.mrb[0].mxu0
        %v4323 = vadd.f32 %v4210, %v4322
        %v4324 = vpop.f32.mrb[0].mxu0
        %v4325 = vadd.f32 %v4212, %v4324
        %4326 = vmatprep.mubr.f32.mxu0 %v3819
        %4327 = vmatmul.mubr.f32.gmra.mrb[0].mxu0 %v3818
        %v4328 = vpop.f32.mrb[0].mxu0
        %v4329 = vadd.f32 %v4216, %v4328
        %v4330 = vpop.f32.mrb[0].mxu0
        %v4331 = vadd.f32 %v4218, %v4330
        %4332 = vmatprep.mubr.f32.mxu0 %v3828
        %4333 = vmatmul.mubr.f32.gmra.mrb[0].mxu0 %v3827
        %v4334 = vpop.f32.mrb[0].mxu0
        %v4335 = vadd.f32 %v4222, %v4334
        %v4336 = vpop.f32.mrb[0].mxu0
        %v4337 = vadd.f32 %v4224, %v4336
        %4338 = vmatprep.mubr.f32.mxu0 %v3837
        %4339 = vmatmul.mubr.f32.gmra.mrb[0].mxu0 %v3836
        %v4340 = vpop.f32.mrb[0].mxu0
        %v4341 = vadd.f32 %v4228, %v4340
        %v4342 = vpop.f32.mrb[0].mxu0
        %v4343 = vadd.f32 %v4230, %v4342
        %4344 = vmatprep.mubr.f32.mxu0 %v3846
        %4345 = vmatmul.mubr.f32.gmra.mrb[0].mxu0 %v3845
        %v4346 = vpop.f32.mrb[0].mxu0
        %v4347 = vadd.f32 %v4234, %v4346
        %v4348 = vpop.f32.mrb[0].mxu0
        %v4349 = vadd.f32 %v4236, %v4348
        %4350 = vmatprep.mubr.f32.mxu0 %v3855
        %4351 = vmatmul.mubr.f32.gmra.mrb[0].mxu0 %v3854
        %v4352 = vpop.f32.mrb[0].mxu0
        %v4353 = vadd.f32 %v4240, %v4352
        %v4354 = vpop.f32.mrb[0].mxu0
        %v4355 = vadd.f32 %v4242, %v4354
        %4356 = vdwg.mxu0
        %4357 = vmatprep.subr.mxu0 %v3754
        %4358 = vmatpush1.msra.mxu0 %v3753
        %4359 = vmatprep.subr.mxu0 %v3756
        %4360 = vmatpush1.msra.mxu0 %v3755
        %4361 = vmatprep.subr.mxu0 %v3758
        %4362 = vmatpush1.msra.mxu0 %v3757
        %4363 = vmatprep.subr.mxu0 %v3760
        %4364 = vmatpush1.msra.mxu0 %v3759
        %4365 = vmatprep.subr.mxu0 %v3762
        %4366 = vmatpush1.msra.mxu0 %v3761
        %4367 = vmatprep.subr.mxu0 %v3764
        %4368 = vmatpush1.msra.mxu0 %v3763
        %4369 = vmatprep.subr.mxu0 %v3766
        %4370 = vmatpush1.msra.mxu0 %v3765
        %4371 = vmatprep.subr.mxu0 %v3768
        %4372 = vmatpush1.msra.mxu0 %v3767
        %4373 = vmatprep.subr.mxu0 %v3770
        %4374 = vmatpush1.msra.mxu0 %v3769
        %4375 = vmatprep.subr.mxu0 %v3772
        %4376 = vmatpush1.msra.mxu0 %v3771
        %4377 = vmatprep.subr.mxu0 %v3774
        %4378 = vmatpush1.msra.mxu0 %v3773
        %4379 = vmatprep.subr.mxu0 %v3776
        %4380 = vmatpush1.msra.mxu0 %v3775
        %4381 = vmatprep.subr.mxu0 %v3778
        %4382 = vmatpush1.msra.mxu0 %v3777
        %4383 = vmatprep.subr.mxu0 %v3780
        %4384 = vmatpush1.msra.mxu0 %v3779
        %4385 = vmatprep.subr.mxu0 %v3782
        %4386 = vmatpush1.msra.mxu0 %v3781
        %4387 = vmatprep.subr.mxu0 %v3784
        %4388 = vmatpush1.msra.mxu0 %v3783
        %4389 = vmatprep.subr.mxu0 0.0
        %4390 = vmatpush1.msra.mxu0 0.0
        %4391 = vmatprep.subr.mxu0 0.0
        %4392 = vmatpush1.msra.mxu0 0.0
        %4393 = vmatprep.subr.mxu0 0.0
        %4394 = vmatpush1.msra.mxu0 0.0
        %4395 = vmatprep.subr.mxu0 0.0
        %4396 = vmatpush1.msra.mxu0 0.0
        %4397 = vmatprep.subr.mxu0 0.0
        %4398 = vmatpush1.msra.mxu0 0.0
        %4399 = vmatprep.subr.mxu0 0.0
        %4400 = vmatpush1.msra.mxu0 0.0
        %4401 = vmatprep.subr.mxu0 0.0
        %4402 = vmatpush1.msra.mxu0 0.0
        %4403 = vmatprep.subr.mxu0 0.0
        %4404 = vmatpush1.msra.mxu0 0.0
        %4405 = vmatprep.subr.mxu0 0.0
        %4406 = vmatpush1.msra.mxu0 0.0
        %4407 = vmatprep.subr.mxu0 0.0
        %4408 = vmatpush1.msra.mxu0 0.0
        %4409 = vmatprep.subr.mxu0 0.0
        %4410 = vmatpush1.msra.mxu0 0.0
        %4411 = vmatprep.subr.mxu0 0.0
        %4412 = vmatpush1.msra.mxu0 0.0
        %4413 = vmatprep.subr.mxu0 0.0
        %4414 = vmatpush1.msra.mxu0 0.0
        %4415 = vmatprep.subr.mxu0 0.0
        %4416 = vmatpush1.msra.mxu0 0.0
        %4417 = vmatprep.subr.mxu0 0.0
        %4418 = vmatpush1.msra.mxu0 0.0
        %4419 = vmatprep.subr.mxu0 0.0
        %4420 = vmatpush1.msra.mxu0 0.0
        %4421 = vmatprep.mubr.f32.mxu0 0.0
        %4422 = vmatmul.mubr.f32.gmra.mrb[0].mxu0 %v3793
        %v4423 = vpop.f32.mrb[0].mxu0
        %v4424 = vadd.f32 %v4311, %v4423
        %v4425 = vpop.f32.mrb[0].mxu0
        %v4426 = vadd.f32 %v4313, %v4425
        %4427 = vmatprep.mubr.f32.mxu0 0.0
        %4428 = vmatmul.mubr.f32.gmra.mrb[0].mxu0 %v3802
        %v4429 = vpop.f32.mrb[0].mxu0
        %v4430 = vadd.f32 %v4317, %v4429
        %v4431 = vpop.f32.mrb[0].mxu0
        %v4432 = vadd.f32 %v4319, %v4431
        %4433 = vmatprep.mubr.f32.mxu0 0.0
        %4434 = vmatmul.mubr.f32.gmra.mrb[0].mxu0 %v3811
        %v4435 = vpop.f32.mrb[0].mxu0
        %v4436 = vadd.f32 %v4323, %v4435
        %v4437 = vpop.f32.mrb[0].mxu0
        %v4438 = vadd.f32 %v4325, %v4437
        %4439 = vmatprep.mubr.f32.mxu0 0.0
        %4440 = vmatmul.mubr.f32.gmra.mrb[0].mxu0 %v3820
        %v4441 = vpop.f32.mrb[0].mxu0
        %v4442 = vadd.f32 %v4329, %v4441
        %v4443 = vpop.f32.mrb[0].mxu0
        %v4444 = vadd.f32 %v4331, %v4443
        %4445 = vmatprep.mubr.f32.mxu0 0.0
        %4446 = vmatmul.mubr.f32.gmra.mrb[0].mxu0 %v3829
        %v4447 = vpop.f32.mrb[0].mxu0
        %v4448 = vadd.f32 %v4335, %v4447
        %v4449 = vpop.f32.mrb[0].mxu0
        %v4450 = vadd.f32 %v4337, %v4449
        %4451 = vmatprep.mubr.f32.mxu0 0.0
        %4452 = vmatmul.mubr.f32.gmra.mrb[0].mxu0 %v3838
        %v4453 = vpop.f32.mrb[0].mxu0
        %v4454 = vadd.f32 %v4341, %v4453
        %v4455 = vpop.f32.mrb[0].mxu0
        %v4456 = vadd.f32 %v4343, %v4455
        %4457 = vmatprep.mubr.f32.mxu0 0.0
        %4458 = vmatmul.mubr.f32.gmra.mrb[0].mxu0 %v3847
        %v4459 = vpop.f32.mrb[0].mxu0
        %v4460 = vadd.f32 %v4347, %v4459
        %v4461 = vpop.f32.mrb[0].mxu0
        %v4462 = vadd.f32 %v4349, %v4461
        %4463 = vmatprep.mubr.f32.mxu0 0.0
        %4464 = vmatmul.mubr.f32.gmra.mrb[0].mxu0 %v3856
        %v4465 = vpop.f32.mrb[0].mxu0
        %v4466 = vadd.f32 %v4353, %v4465
        %v4467 = vpop.f32.mrb[0].mxu0
        %v4468 = vadd.f32 %v4355, %v4467
        %4469 = vdwg.mxu0
        %v4470 = vmax.f32 %v4424, 0.0
        %v4471 = vmax.f32 %v4426, 0.0
        %v4472 = vmax.f32 %v4430, 0.0
        %v4473 = vmax.f32 %v4432, 0.0
        %v4474 = vmax.f32 %v4436, 0.0
        %v4475 = vmax.f32 %v4438, 0.0
        %v4476 = vmax.f32 %v4442, 0.0
        %v4477 = vmax.f32 %v4444, 0.0
        %v4478 = vmax.f32 %v4448, 0.0
        %v4479 = vmax.f32 %v4450, 0.0
        %v4480 = vmax.f32 %v4454, 0.0
        %v4481 = vmax.f32 %v4456, 0.0
        %v4482 = vmax.f32 %v4460, 0.0
        %v4483 = vmax.f32 %v4462, 0.0
        %v4484 = vmax.f32 %v4466, 0.0
        %v4485 = vmax.f32 %v4468, 0.0
        %4486 = vrot.lane.b32.xlu0 %v4470, 17
        %v4487 = vpop.permute.xlu0 %4486
        %4488 = vrot.lane.b32.xlu0 %v4472, 17
        %v4489 = vpop.permute.xlu0 %4488
        %4490 = vrot.lane.b32.xlu0 %v4474, 17
        %v4491 = vpop.permute.xlu0 %4490
        %4492 = vrot.lane.b32.xlu0 %v4476, 17
        %v4493 = vpop.permute.xlu0 %4492
        %4494 = vrot.lane.b32.xlu0 %v4478, 17
        %v4495 = vpop.permute.xlu0 %4494
        %4496 = vrot.lane.b32.xlu0 %v4480, 17
        %v4497 = vpop.permute.xlu0 %4496
        %4498 = vrot.lane.b32.xlu0 %v4482, 17
        %v4499 = vpop.permute.xlu0 %4498
        %4500 = vrot.lane.b32.xlu0 %v4484, 17
        %v4501 = vpop.permute.xlu0 %4500
        %4502 = vrot.lane.b32.xlu0 %v4471, 17
        %v4503 = vpop.permute.xlu0 %4502
        %4504 = vrot.lane.b32.xlu0 %v4473, 17
        %v4505 = vpop.permute.xlu0 %4504
        %4506 = vrot.lane.b32.xlu0 %v4475, 17
        %v4507 = vpop.permute.xlu0 %4506
        %4508 = vrot.lane.b32.xlu0 %v4477, 17
        %v4509 = vpop.permute.xlu0 %4508
        %4510 = vrot.lane.b32.xlu0 %v4479, 17
        %v4511 = vpop.permute.xlu0 %4510
        %4512 = vrot.lane.b32.xlu0 %v4481, 17
        %v4513 = vpop.permute.xlu0 %4512
        %4514 = vrot.lane.b32.xlu0 %v4483, 17
        %v4515 = vpop.permute.xlu0 %4514
        %4516 = vrot.lane.b32.xlu0 %v4485, 17
        %v4517 = vpop.permute.xlu0 %4516
        %v4518 = vsel %vm754, %v4487, %v4503
        %v4519 = vsel %vm754, %v4489, %v4505
        %v4520 = vsel %vm754, %v4491, %v4507
        %v4521 = vsel %vm754, %v4493, %v4509
        %v4522 = vsel %vm754, %v4495, %v4511
        %v4523 = vsel %vm754, %v4497, %v4513
        %v4524 = vsel %vm754, %v4499, %v4515
        %v4525 = vsel %vm754, %v4501, %v4517
        %v4526 = vsel %vm754, %v4503, %v4487
        %v4527 = vsel %vm754, %v4505, %v4489
        %v4528 = vsel %vm754, %v4507, %v4491
        %v4529 = vsel %vm754, %v4509, %v4493
        %v4530 = vsel %vm754, %v4511, %v4495
        %v4531 = vsel %vm754, %v4513, %v4497
        %v4532 = vsel %vm754, %v4515, %v4499
        %v4533 = vsel %vm754, %v4517, %v4501
        %v4534 = vmul.f32 %v4526, %v1440
        %v4535 = vmul.f32 %v4518, %v1444
        %v4536 = vmul.f32 %v4527, %v1440
        %v4537 = vmul.f32 %v4519, %v1444
        %v4538 = vmul.f32 %v4528, %v1440
        %v4539 = vmul.f32 %v4520, %v1444
        %v4540 = vmul.f32 %v4529, %v1440
        %v4541 = vmul.f32 %v4521, %v1444
        %v4542 = vmul.f32 %v4530, %v1440
        %v4543 = vmul.f32 %v4522, %v1444
        %v4544 = vmul.f32 %v4531, %v1440
        %v4545 = vmul.f32 %v4523, %v1444
        %v4546 = vmul.f32 %v4532, %v1440
        %v4547 = vmul.f32 %v4524, %v1444
        %v4548 = vmul.f32 %v4533, %v1440
        %v4549 = vmul.f32 %v4525, %v1444
        %4550 = vrot.lane.b32.xlu0 %v4470, 16
        %v4551 = vpop.permute.xlu0 %4550
        %4552 = vrot.lane.b32.xlu0 %v4472, 16
        %v4553 = vpop.permute.xlu0 %4552
        %4554 = vrot.lane.b32.xlu0 %v4474, 16
        %v4555 = vpop.permute.xlu0 %4554
        %4556 = vrot.lane.b32.xlu0 %v4476, 16
        %v4557 = vpop.permute.xlu0 %4556
        %4558 = vrot.lane.b32.xlu0 %v4478, 16
        %v4559 = vpop.permute.xlu0 %4558
        %4560 = vrot.lane.b32.xlu0 %v4480, 16
        %v4561 = vpop.permute.xlu0 %4560
        %4562 = vrot.lane.b32.xlu0 %v4482, 16
        %v4563 = vpop.permute.xlu0 %4562
        %4564 = vrot.lane.b32.xlu0 %v4484, 16
        %v4565 = vpop.permute.xlu0 %4564
        %4566 = vrot.lane.b32.xlu0 %v4471, 16
        %v4567 = vpop.permute.xlu0 %4566
        %4568 = vrot.lane.b32.xlu0 %v4473, 16
        %v4569 = vpop.permute.xlu0 %4568
        %4570 = vrot.lane.b32.xlu0 %v4475, 16
        %v4571 = vpop.permute.xlu0 %4570
        %4572 = vrot.lane.b32.xlu0 %v4477, 16
        %v4573 = vpop.permute.xlu0 %4572
        %4574 = vrot.lane.b32.xlu0 %v4479, 16
        %v4575 = vpop.permute.xlu0 %4574
        %4576 = vrot.lane.b32.xlu0 %v4481, 16
        %v4577 = vpop.permute.xlu0 %4576
        %4578 = vrot.lane.b32.xlu0 %v4483, 16
        %v4579 = vpop.permute.xlu0 %4578
        %4580 = vrot.lane.b32.xlu0 %v4485, 16
        %v4581 = vpop.permute.xlu0 %4580
        %v4582 = vsel %vm767, %v4551, %v4567
        %v4583 = vsel %vm767, %v4553, %v4569
        %v4584 = vsel %vm767, %v4555, %v4571
        %v4585 = vsel %vm767, %v4557, %v4573
        %v4586 = vsel %vm767, %v4559, %v4575
        %v4587 = vsel %vm767, %v4561, %v4577
        %v4588 = vsel %vm767, %v4563, %v4579
        %v4589 = vsel %vm767, %v4565, %v4581
        %v4590 = vsel %vm767, %v4567, %v4551
        %v4591 = vsel %vm767, %v4569, %v4553
        %v4592 = vsel %vm767, %v4571, %v4555
        %v4593 = vsel %vm767, %v4573, %v4557
        %v4594 = vsel %vm767, %v4575, %v4559
        %v4595 = vsel %vm767, %v4577, %v4561
        %v4596 = vsel %vm767, %v4579, %v4563
        %v4597 = vsel %vm767, %v4581, %v4565
        %v4598 = vmul.f32 %v4590, %v1512
        %v4599 = vmul.f32 %v4582, %v1516
        %v4600 = vmul.f32 %v4591, %v1512
        %v4601 = vmul.f32 %v4583, %v1516
        %v4602 = vmul.f32 %v4592, %v1512
        %v4603 = vmul.f32 %v4584, %v1516
        %v4604 = vmul.f32 %v4593, %v1512
        %v4605 = vmul.f32 %v4585, %v1516
        %v4606 = vmul.f32 %v4594, %v1512
        %v4607 = vmul.f32 %v4586, %v1516
        %v4608 = vmul.f32 %v4595, %v1512
        %v4609 = vmul.f32 %v4587, %v1516
        %v4610 = vmul.f32 %v4596, %v1512
        %v4611 = vmul.f32 %v4588, %v1516
        %v4612 = vmul.f32 %v4597, %v1512
        %v4613 = vmul.f32 %v4589, %v1516
        %4614 = vrot.lane.b32.xlu0 %v4470, 15
        %v4615 = vpop.permute.xlu0 %4614
        %4616 = vrot.lane.b32.xlu0 %v4472, 15
        %v4617 = vpop.permute.xlu0 %4616
        %4618 = vrot.lane.b32.xlu0 %v4474, 15
        %v4619 = vpop.permute.xlu0 %4618
        %4620 = vrot.lane.b32.xlu0 %v4476, 15
        %v4621 = vpop.permute.xlu0 %4620
        %4622 = vrot.lane.b32.xlu0 %v4478, 15
        %v4623 = vpop.permute.xlu0 %4622
        %4624 = vrot.lane.b32.xlu0 %v4480, 15
        %v4625 = vpop.permute.xlu0 %4624
        %4626 = vrot.lane.b32.xlu0 %v4482, 15
        %v4627 = vpop.permute.xlu0 %4626
        %4628 = vrot.lane.b32.xlu0 %v4484, 15
        %v4629 = vpop.permute.xlu0 %4628
        %4630 = vrot.lane.b32.xlu0 %v4471, 15
        %v4631 = vpop.permute.xlu0 %4630
        %4632 = vrot.lane.b32.xlu0 %v4473, 15
        %v4633 = vpop.permute.xlu0 %4632
        %4634 = vrot.lane.b32.xlu0 %v4475, 15
        %v4635 = vpop.permute.xlu0 %4634
        %4636 = vrot.lane.b32.xlu0 %v4477, 15
        %v4637 = vpop.permute.xlu0 %4636
        %4638 = vrot.lane.b32.xlu0 %v4479, 15
        %v4639 = vpop.permute.xlu0 %4638
        %4640 = vrot.lane.b32.xlu0 %v4481, 15
        %v4641 = vpop.permute.xlu0 %4640
        %4642 = vrot.lane.b32.xlu0 %v4483, 15
        %v4643 = vpop.permute.xlu0 %4642
        %4644 = vrot.lane.b32.xlu0 %v4485, 15
        %v4645 = vpop.permute.xlu0 %4644
        %v4646 = vsel %vm780, %v4615, %v4631
        %v4647 = vsel %vm780, %v4617, %v4633
        %v4648 = vsel %vm780, %v4619, %v4635
        %v4649 = vsel %vm780, %v4621, %v4637
        %v4650 = vsel %vm780, %v4623, %v4639
        %v4651 = vsel %vm780, %v4625, %v4641
        %v4652 = vsel %vm780, %v4627, %v4643
        %v4653 = vsel %vm780, %v4629, %v4645
        %v4654 = vsel %vm780, %v4631, %v4615
        %v4655 = vsel %vm780, %v4633, %v4617
        %v4656 = vsel %vm780, %v4635, %v4619
        %v4657 = vsel %vm780, %v4637, %v4621
        %v4658 = vsel %vm780, %v4639, %v4623
        %v4659 = vsel %vm780, %v4641, %v4625
        %v4660 = vsel %vm780, %v4643, %v4627
        %v4661 = vsel %vm780, %v4645, %v4629
        %v4662 = vmul.f32 %v4654, %v1584
        %v4663 = vmul.f32 %v4646, %v1588
        %v4664 = vmul.f32 %v4655, %v1584
        %v4665 = vmul.f32 %v4647, %v1588
        %v4666 = vmul.f32 %v4656, %v1584
        %v4667 = vmul.f32 %v4648, %v1588
        %v4668 = vmul.f32 %v4657, %v1584
        %v4669 = vmul.f32 %v4649, %v1588
        %v4670 = vmul.f32 %v4658, %v1584
        %v4671 = vmul.f32 %v4650, %v1588
        %v4672 = vmul.f32 %v4659, %v1584
        %v4673 = vmul.f32 %v4651, %v1588
        %v4674 = vmul.f32 %v4660, %v1584
        %v4675 = vmul.f32 %v4652, %v1588
        %v4676 = vmul.f32 %v4661, %v1584
        %v4677 = vmul.f32 %v4653, %v1588
        %4678 = vrot.lane.b32.xlu0 %v4470, 1
        %v4679 = vpop.permute.xlu0 %4678
        %4680 = vrot.lane.b32.xlu0 %v4472, 1
        %v4681 = vpop.permute.xlu0 %4680
        %4682 = vrot.lane.b32.xlu0 %v4474, 1
        %v4683 = vpop.permute.xlu0 %4682
        %4684 = vrot.lane.b32.xlu0 %v4476, 1
        %v4685 = vpop.permute.xlu0 %4684
        %4686 = vrot.lane.b32.xlu0 %v4478, 1
        %v4687 = vpop.permute.xlu0 %4686
        %4688 = vrot.lane.b32.xlu0 %v4480, 1
        %v4689 = vpop.permute.xlu0 %4688
        %4690 = vrot.lane.b32.xlu0 %v4482, 1
        %v4691 = vpop.permute.xlu0 %4690
        %4692 = vrot.lane.b32.xlu0 %v4484, 1
        %v4693 = vpop.permute.xlu0 %4692
        %4694 = vrot.lane.b32.xlu0 %v4471, 1
        %v4695 = vpop.permute.xlu0 %4694
        %4696 = vrot.lane.b32.xlu0 %v4473, 1
        %v4697 = vpop.permute.xlu0 %4696
        %4698 = vrot.lane.b32.xlu0 %v4475, 1
        %v4699 = vpop.permute.xlu0 %4698
        %4700 = vrot.lane.b32.xlu0 %v4477, 1
        %v4701 = vpop.permute.xlu0 %4700
        %4702 = vrot.lane.b32.xlu0 %v4479, 1
        %v4703 = vpop.permute.xlu0 %4702
        %4704 = vrot.lane.b32.xlu0 %v4481, 1
        %v4705 = vpop.permute.xlu0 %4704
        %4706 = vrot.lane.b32.xlu0 %v4483, 1
        %v4707 = vpop.permute.xlu0 %4706
        %4708 = vrot.lane.b32.xlu0 %v4485, 1
        %v4709 = vpop.permute.xlu0 %4708
        %v4710 = vsel %vm817, %v4679, %v4695
        %v4711 = vsel %vm817, %v4681, %v4697
        %v4712 = vsel %vm817, %v4683, %v4699
        %v4713 = vsel %vm817, %v4685, %v4701
        %v4714 = vsel %vm817, %v4687, %v4703
        %v4715 = vsel %vm817, %v4689, %v4705
        %v4716 = vsel %vm817, %v4691, %v4707
        %v4717 = vsel %vm817, %v4693, %v4709
        %v4718 = vsel %vm817, %v4695, %v4679
        %v4719 = vsel %vm817, %v4697, %v4681
        %v4720 = vsel %vm817, %v4699, %v4683
        %v4721 = vsel %vm817, %v4701, %v4685
        %v4722 = vsel %vm817, %v4703, %v4687
        %v4723 = vsel %vm817, %v4705, %v4689
        %v4724 = vsel %vm817, %v4707, %v4691
        %v4725 = vsel %vm817, %v4709, %v4693
        %v4726 = vmul.f32 %v4718, %v1656
        %v4727 = vmul.f32 %v4710, %v1660
        %v4728 = vmul.f32 %v4719, %v1656
        %v4729 = vmul.f32 %v4711, %v1660
        %v4730 = vmul.f32 %v4720, %v1656
        %v4731 = vmul.f32 %v4712, %v1660
        %v4732 = vmul.f32 %v4721, %v1656
        %v4733 = vmul.f32 %v4713, %v1660
        %v4734 = vmul.f32 %v4722, %v1656
        %v4735 = vmul.f32 %v4714, %v1660
        %v4736 = vmul.f32 %v4723, %v1656
        %v4737 = vmul.f32 %v4715, %v1660
        %v4738 = vmul.f32 %v4724, %v1656
        %v4739 = vmul.f32 %v4716, %v1660
        %v4740 = vmul.f32 %v4725, %v1656
        %v4741 = vmul.f32 %v4717, %v1660
        %v4742 = vmul.f32 %v4470, %v1680
        %v4743 = vmul.f32 %v4471, %v1684
        %v4744 = vmul.f32 %v4472, %v1680
        %v4745 = vmul.f32 %v4473, %v1684
        %v4746 = vmul.f32 %v4474, %v1680
        %v4747 = vmul.f32 %v4475, %v1684
        %v4748 = vmul.f32 %v4476, %v1680
        %v4749 = vmul.f32 %v4477, %v1684
        %v4750 = vmul.f32 %v4478, %v1680
        %v4751 = vmul.f32 %v4479, %v1684
        %v4752 = vmul.f32 %v4480, %v1680
        %v4753 = vmul.f32 %v4481, %v1684
        %v4754 = vmul.f32 %v4482, %v1680
        %v4755 = vmul.f32 %v4483, %v1684
        %v4756 = vmul.f32 %v4484, %v1680
        %v4757 = vmul.f32 %v4485, %v1684
        %4758 = vrot.lane.b32.xlu0 %v4470, 127
        %v4759 = vpop.permute.xlu0 %4758
        %4760 = vrot.lane.b32.xlu0 %v4472, 127
        %v4761 = vpop.permute.xlu0 %4760
        %4762 = vrot.lane.b32.xlu0 %v4474, 127
        %v4763 = vpop.permute.xlu0 %4762
        %4764 = vrot.lane.b32.xlu0 %v4476, 127
        %v4765 = vpop.permute.xlu0 %4764
        %4766 = vrot.lane.b32.xlu0 %v4478, 127
        %v4767 = vpop.permute.xlu0 %4766
        %4768 = vrot.lane.b32.xlu0 %v4480, 127
        %v4769 = vpop.permute.xlu0 %4768
        %4770 = vrot.lane.b32.xlu0 %v4482, 127
        %v4771 = vpop.permute.xlu0 %4770
        %4772 = vrot.lane.b32.xlu0 %v4484, 127
        %v4773 = vpop.permute.xlu0 %4772
        %4774 = vrot.lane.b32.xlu0 %v4471, 127
        %v4775 = vpop.permute.xlu0 %4774
        %4776 = vrot.lane.b32.xlu0 %v4473, 127
        %v4777 = vpop.permute.xlu0 %4776
        %4778 = vrot.lane.b32.xlu0 %v4475, 127
        %v4779 = vpop.permute.xlu0 %4778
        %4780 = vrot.lane.b32.xlu0 %v4477, 127
        %v4781 = vpop.permute.xlu0 %4780
        %4782 = vrot.lane.b32.xlu0 %v4479, 127
        %v4783 = vpop.permute.xlu0 %4782
        %4784 = vrot.lane.b32.xlu0 %v4481, 127
        %v4785 = vpop.permute.xlu0 %4784
        %4786 = vrot.lane.b32.xlu0 %v4483, 127
        %v4787 = vpop.permute.xlu0 %4786
        %4788 = vrot.lane.b32.xlu0 %v4485, 127
        %v4789 = vpop.permute.xlu0 %4788
        %v4790 = vsel %vm847, %v4759, %v4775
        %v4791 = vsel %vm847, %v4761, %v4777
        %v4792 = vsel %vm847, %v4763, %v4779
        %v4793 = vsel %vm847, %v4765, %v4781
        %v4794 = vsel %vm847, %v4767, %v4783
        %v4795 = vsel %vm847, %v4769, %v4785
        %v4796 = vsel %vm847, %v4771, %v4787
        %v4797 = vsel %vm847, %v4773, %v4789
        %v4798 = vsel %vm847, %v4775, %v4759
        %v4799 = vsel %vm847, %v4777, %v4761
        %v4800 = vsel %vm847, %v4779, %v4763
        %v4801 = vsel %vm847, %v4781, %v4765
        %v4802 = vsel %vm847, %v4783, %v4767
        %v4803 = vsel %vm847, %v4785, %v4769
        %v4804 = vsel %vm847, %v4787, %v4771
        %v4805 = vsel %vm847, %v4789, %v4773
        %v4806 = vmul.f32 %v4790, %v1752
        %v4807 = vmul.f32 %v4798, %v1756
        %v4808 = vmul.f32 %v4791, %v1752
        %v4809 = vmul.f32 %v4799, %v1756
        %v4810 = vmul.f32 %v4792, %v1752
        %v4811 = vmul.f32 %v4800, %v1756
        %v4812 = vmul.f32 %v4793, %v1752
        %v4813 = vmul.f32 %v4801, %v1756
        %v4814 = vmul.f32 %v4794, %v1752
        %v4815 = vmul.f32 %v4802, %v1756
        %v4816 = vmul.f32 %v4795, %v1752
        %v4817 = vmul.f32 %v4803, %v1756
        %v4818 = vmul.f32 %v4796, %v1752
        %v4819 = vmul.f32 %v4804, %v1756
        %v4820 = vmul.f32 %v4797, %v1752
        %v4821 = vmul.f32 %v4805, %v1756
        %4822 = vrot.lane.b32.xlu0 %v4470, 113
        %v4823 = vpop.permute.xlu0 %4822
        %4824 = vrot.lane.b32.xlu0 %v4472, 113
        %v4825 = vpop.permute.xlu0 %4824
        %4826 = vrot.lane.b32.xlu0 %v4474, 113
        %v4827 = vpop.permute.xlu0 %4826
        %4828 = vrot.lane.b32.xlu0 %v4476, 113
        %v4829 = vpop.permute.xlu0 %4828
        %4830 = vrot.lane.b32.xlu0 %v4478, 113
        %v4831 = vpop.permute.xlu0 %4830
        %4832 = vrot.lane.b32.xlu0 %v4480, 113
        %v4833 = vpop.permute.xlu0 %4832
        %4834 = vrot.lane.b32.xlu0 %v4482, 113
        %v4835 = vpop.permute.xlu0 %4834
        %4836 = vrot.lane.b32.xlu0 %v4484, 113
        %v4837 = vpop.permute.xlu0 %4836
        %4838 = vrot.lane.b32.xlu0 %v4471, 113
        %v4839 = vpop.permute.xlu0 %4838
        %4840 = vrot.lane.b32.xlu0 %v4473, 113
        %v4841 = vpop.permute.xlu0 %4840
        %4842 = vrot.lane.b32.xlu0 %v4475, 113
        %v4843 = vpop.permute.xlu0 %4842
        %4844 = vrot.lane.b32.xlu0 %v4477, 113
        %v4845 = vpop.permute.xlu0 %4844
        %4846 = vrot.lane.b32.xlu0 %v4479, 113
        %v4847 = vpop.permute.xlu0 %4846
        %4848 = vrot.lane.b32.xlu0 %v4481, 113
        %v4849 = vpop.permute.xlu0 %4848
        %4850 = vrot.lane.b32.xlu0 %v4483, 113
        %v4851 = vpop.permute.xlu0 %4850
        %4852 = vrot.lane.b32.xlu0 %v4485, 113
        %v4853 = vpop.permute.xlu0 %4852
        %v4854 = vsel %vm886, %v4823, %v4839
        %v4855 = vsel %vm886, %v4825, %v4841
        %v4856 = vsel %vm886, %v4827, %v4843
        %v4857 = vsel %vm886, %v4829, %v4845
        %v4858 = vsel %vm886, %v4831, %v4847
        %v4859 = vsel %vm886, %v4833, %v4849
        %v4860 = vsel %vm886, %v4835, %v4851
        %v4861 = vsel %vm886, %v4837, %v4853
        %v4862 = vsel %vm886, %v4839, %v4823
        %v4863 = vsel %vm886, %v4841, %v4825
        %v4864 = vsel %vm886, %v4843, %v4827
        %v4865 = vsel %vm886, %v4845, %v4829
        %v4866 = vsel %vm886, %v4847, %v4831
        %v4867 = vsel %vm886, %v4849, %v4833
        %v4868 = vsel %vm886, %v4851, %v4835
        %v4869 = vsel %vm886, %v4853, %v4837
        %v4870 = vmul.f32 %v4854, %v1824
        %v4871 = vmul.f32 %v4862, %v1828
        %v4872 = vmul.f32 %v4855, %v1824
        %v4873 = vmul.f32 %v4863, %v1828
        %v4874 = vmul.f32 %v4856, %v1824
        %v4875 = vmul.f32 %v4864, %v1828
        %v4876 = vmul.f32 %v4857, %v1824
        %v4877 = vmul.f32 %v4865, %v1828
        %v4878 = vmul.f32 %v4858, %v1824
        %v4879 = vmul.f32 %v4866, %v1828
        %v4880 = vmul.f32 %v4859, %v1824
        %v4881 = vmul.f32 %v4867, %v1828
        %v4882 = vmul.f32 %v4860, %v1824
        %v4883 = vmul.f32 %v4868, %v1828
        %v4884 = vmul.f32 %v4861, %v1824
        %v4885 = vmul.f32 %v4869, %v1828
        %4886 = vrot.lane.b32.xlu0 %v4470, 112
        %v4887 = vpop.permute.xlu0 %4886
        %4888 = vrot.lane.b32.xlu0 %v4472, 112
        %v4889 = vpop.permute.xlu0 %4888
        %4890 = vrot.lane.b32.xlu0 %v4474, 112
        %v4891 = vpop.permute.xlu0 %4890
        %4892 = vrot.lane.b32.xlu0 %v4476, 112
        %v4893 = vpop.permute.xlu0 %4892
        %4894 = vrot.lane.b32.xlu0 %v4478, 112
        %v4895 = vpop.permute.xlu0 %4894
        %4896 = vrot.lane.b32.xlu0 %v4480, 112
        %v4897 = vpop.permute.xlu0 %4896
        %4898 = vrot.lane.b32.xlu0 %v4482, 112
        %v4899 = vpop.permute.xlu0 %4898
        %4900 = vrot.lane.b32.xlu0 %v4484, 112
        %v4901 = vpop.permute.xlu0 %4900
        %4902 = vrot.lane.b32.xlu0 %v4471, 112
        %v4903 = vpop.permute.xlu0 %4902
        %4904 = vrot.lane.b32.xlu0 %v4473, 112
        %v4905 = vpop.permute.xlu0 %4904
        %4906 = vrot.lane.b32.xlu0 %v4475, 112
        %v4907 = vpop.permute.xlu0 %4906
        %4908 = vrot.lane.b32.xlu0 %v4477, 112
        %v4909 = vpop.permute.xlu0 %4908
        %4910 = vrot.lane.b32.xlu0 %v4479, 112
        %v4911 = vpop.permute.xlu0 %4910
        %4912 = vrot.lane.b32.xlu0 %v4481, 112
        %v4913 = vpop.permute.xlu0 %4912
        %4914 = vrot.lane.b32.xlu0 %v4483, 112
        %v4915 = vpop.permute.xlu0 %4914
        %4916 = vrot.lane.b32.xlu0 %v4485, 112
        %v4917 = vpop.permute.xlu0 %4916
        %v4918 = vsel %vm895, %v4887, %v4903
        %v4919 = vsel %vm895, %v4889, %v4905
        %v4920 = vsel %vm895, %v4891, %v4907
        %v4921 = vsel %vm895, %v4893, %v4909
        %v4922 = vsel %vm895, %v4895, %v4911
        %v4923 = vsel %vm895, %v4897, %v4913
        %v4924 = vsel %vm895, %v4899, %v4915
        %v4925 = vsel %vm895, %v4901, %v4917
        %v4926 = vsel %vm895, %v4903, %v4887
        %v4927 = vsel %vm895, %v4905, %v4889
        %v4928 = vsel %vm895, %v4907, %v4891
        %v4929 = vsel %vm895, %v4909, %v4893
        %v4930 = vsel %vm895, %v4911, %v4895
        %v4931 = vsel %vm895, %v4913, %v4897
        %v4932 = vsel %vm895, %v4915, %v4899
        %v4933 = vsel %vm895, %v4917, %v4901
        %v4934 = vmul.f32 %v4918, %v1896
        %v4935 = vmul.f32 %v4926, %v1900
        %v4936 = vmul.f32 %v4919, %v1896
        %v4937 = vmul.f32 %v4927, %v1900
        %v4938 = vmul.f32 %v4920, %v1896
        %v4939 = vmul.f32 %v4928, %v1900
        %v4940 = vmul.f32 %v4921, %v1896
        %v4941 = vmul.f32 %v4929, %v1900
        %v4942 = vmul.f32 %v4922, %v1896
        %v4943 = vmul.f32 %v4930, %v1900
        %v4944 = vmul.f32 %v4923, %v1896
        %v4945 = vmul.f32 %v4931, %v1900
        %v4946 = vmul.f32 %v4924, %v1896
        %v4947 = vmul.f32 %v4932, %v1900
        %v4948 = vmul.f32 %v4925, %v1896
        %v4949 = vmul.f32 %v4933, %v1900
        %4950 = vrot.lane.b32.xlu0 %v4470, 111
        %v4951 = vpop.permute.xlu0 %4950
        %4952 = vrot.lane.b32.xlu0 %v4472, 111
        %v4953 = vpop.permute.xlu0 %4952
        %4954 = vrot.lane.b32.xlu0 %v4474, 111
        %v4955 = vpop.permute.xlu0 %4954
        %4956 = vrot.lane.b32.xlu0 %v4476, 111
        %v4957 = vpop.permute.xlu0 %4956
        %4958 = vrot.lane.b32.xlu0 %v4478, 111
        %v4959 = vpop.permute.xlu0 %4958
        %4960 = vrot.lane.b32.xlu0 %v4480, 111
        %v4961 = vpop.permute.xlu0 %4960
        %4962 = vrot.lane.b32.xlu0 %v4482, 111
        %v4963 = vpop.permute.xlu0 %4962
        %4964 = vrot.lane.b32.xlu0 %v4484, 111
        %v4965 = vpop.permute.xlu0 %4964
        %4966 = vrot.lane.b32.xlu0 %v4471, 111
        %v4967 = vpop.permute.xlu0 %4966
        %4968 = vrot.lane.b32.xlu0 %v4473, 111
        %v4969 = vpop.permute.xlu0 %4968
        %4970 = vrot.lane.b32.xlu0 %v4475, 111
        %v4971 = vpop.permute.xlu0 %4970
        %4972 = vrot.lane.b32.xlu0 %v4477, 111
        %v4973 = vpop.permute.xlu0 %4972
        %4974 = vrot.lane.b32.xlu0 %v4479, 111
        %v4975 = vpop.permute.xlu0 %4974
        %4976 = vrot.lane.b32.xlu0 %v4481, 111
        %v4977 = vpop.permute.xlu0 %4976
        %4978 = vrot.lane.b32.xlu0 %v4483, 111
        %v4979 = vpop.permute.xlu0 %4978
        %4980 = vrot.lane.b32.xlu0 %v4485, 111
        %v4981 = vpop.permute.xlu0 %4980
        %v4982 = vsel %vm910, %v4951, %v4967
        %v4983 = vsel %vm910, %v4953, %v4969
        %v4984 = vsel %vm910, %v4955, %v4971
        %v4985 = vsel %vm910, %v4957, %v4973
        %v4986 = vsel %vm910, %v4959, %v4975
        %v4987 = vsel %vm910, %v4961, %v4977
        %v4988 = vsel %vm910, %v4963, %v4979
        %v4989 = vsel %vm910, %v4965, %v4981
        %v4990 = vsel %vm910, %v4967, %v4951
        %v4991 = vsel %vm910, %v4969, %v4953
        %v4992 = vsel %vm910, %v4971, %v4955
        %v4993 = vsel %vm910, %v4973, %v4957
        %v4994 = vsel %vm910, %v4975, %v4959
        %v4995 = vsel %vm910, %v4977, %v4961
        %v4996 = vsel %vm910, %v4979, %v4963
        %v4997 = vsel %vm910, %v4981, %v4965
        %v4998 = vmul.f32 %v4982, %v1968
        %v4999 = vmul.f32 %v4990, %v1972
        %v5000 = vmul.f32 %v4983, %v1968
        %v5001 = vmul.f32 %v4991, %v1972
        %v5002 = vmul.f32 %v4984, %v1968
        %v5003 = vmul.f32 %v4992, %v1972
        %v5004 = vmul.f32 %v4985, %v1968
        %v5005 = vmul.f32 %v4993, %v1972
        %v5006 = vmul.f32 %v4986, %v1968
        %v5007 = vmul.f32 %v4994, %v1972
        %v5008 = vmul.f32 %v4987, %v1968
        %v5009 = vmul.f32 %v4995, %v1972
        %v5010 = vmul.f32 %v4988, %v1968
        %v5011 = vmul.f32 %v4996, %v1972
        %v5012 = vmul.f32 %v4989, %v1968
        %v5013 = vmul.f32 %v4997, %v1972
        %v5014 = vld [vmem:[#allocation7] sm:$0xff]
        %v5015 = vld [vmem:[#allocation7 + $0x8] sm:$0xff]
        %v5016 = vld [vmem:[#allocation7 + $0x10] sm:$0xff]
        %v5017 = vld [vmem:[#allocation7 + $0x18] sm:$0xff]
        %v5018 = vld [vmem:[#allocation7 + $0x20] sm:$0xff]
        %v5019 = vld [vmem:[#allocation7 + $0x28] sm:$0xff]
        %v5020 = vld [vmem:[#allocation7 + $0x30] sm:$0xff]
        %v5021 = vld [vmem:[#allocation7 + $0x38] sm:$0xff]
        %v5022 = vld [vmem:[#allocation7 + $0x40] sm:$0xff]
        %v5023 = vld [vmem:[#allocation7 + $0x48] sm:$0xff]
        %v5024 = vld [vmem:[#allocation7 + $0x50] sm:$0xff]
        %v5025 = vld [vmem:[#allocation7 + $0x58] sm:$0xff]
        %v5026 = vld [vmem:[#allocation7 + $0x60] sm:$0xff]
        %v5027 = vld [vmem:[#allocation7 + $0x68] sm:$0xff]
        %v5028 = vld [vmem:[#allocation7 + $0x70] sm:$0xff]
        %v5029 = vld [vmem:[#allocation7 + $0x78] sm:$0xff]
        %v5030 = vld [vmem:[#allocation7 + $0x80] sm:$0xff]
        %v5031 = vld [vmem:[#allocation7 + $0x88] sm:$0xff]
        %v5032 = vld [vmem:[#allocation7 + $0x90] sm:$0xff]
        %v5033 = vld [vmem:[#allocation7 + $0x98] sm:$0xff]
        %v5034 = vld [vmem:[#allocation7 + $0xa0] sm:$0xff]
        %v5035 = vld [vmem:[#allocation7 + $0xa8] sm:$0xff]
        %v5036 = vld [vmem:[#allocation7 + $0xb0] sm:$0xff]
        %v5037 = vld [vmem:[#allocation7 + $0xb8] sm:$0xff]
        %v5038 = vld [vmem:[#allocation7 + $0xc0] sm:$0xff]
        %v5039 = vld [vmem:[#allocation7 + $0xc8] sm:$0xff]
        %v5040 = vld [vmem:[#allocation7 + $0xd0] sm:$0xff]
        %v5041 = vld [vmem:[#allocation7 + $0xd8] sm:$0xff]
        %v5042 = vld [vmem:[#allocation7 + $0xe0] sm:$0xff]
        %v5043 = vld [vmem:[#allocation7 + $0xe8] sm:$0xff]
        %v5044 = vld [vmem:[#allocation7 + $0xf0] sm:$0xff]
        %v5045 = vld [vmem:[#allocation7 + $0xf8] sm:$0xff]
        %v5046 = vld [vmem:[#allocation7 + $0x100] sm:$0xff]
        %v5047 = vld [vmem:[#allocation7 + $0x108] sm:$0xff]
        %v5048 = vld [vmem:[#allocation7 + $0x110] sm:$0xff]
        %v5049 = vld [vmem:[#allocation7 + $0x118] sm:$0xff]
        %v5050 = vld [vmem:[#allocation7 + $0x120] sm:$0xff]
        %v5051 = vld [vmem:[#allocation7 + $0x128] sm:$0xff]
        %v5052 = vld [vmem:[#allocation7 + $0x130] sm:$0xff]
        %v5053 = vld [vmem:[#allocation7 + $0x138] sm:$0xff]
        %v5054 = vld [vmem:[%s10] sm:$0xff]
        %v5055 = vld [vmem:[%s10 + $0x8] sm:$0xff]
        %v5056 = vld [vmem:[%s10 + $0x10] sm:$0xff]
        %v5057 = vld [vmem:[%s10 + $0x18] sm:$0xff]
        %v5058 = vld [vmem:[%s10 + $0x20] sm:$0xff]
        %v5059 = vld [vmem:[%s10 + $0x28] sm:$0xff]
        %v5060 = vld [vmem:[%s10 + $0x30] sm:$0xff]
        %v5061 = vld [vmem:[%s10 + $0x38] sm:$0xff]
        %5063 = vset.pattern.permute.xlu0 0
        %5064 = vperm.xlu0 %5063, %v5054
        %v5065 = vpop.permute.xlu0 %5064
        %5068 = vset.pattern.permute.xlu0 0
        %5069 = vperm.xlu0 %5068, %v5055
        %v5070 = vpop.permute.xlu0 %5069
        %5073 = vset.pattern.permute.xlu0 0
        %5074 = vperm.xlu0 %5073, %v5056
        %v5075 = vpop.permute.xlu0 %5074
        %5078 = vset.pattern.permute.xlu0 0
        %5079 = vperm.xlu0 %5078, %v5057
        %v5080 = vpop.permute.xlu0 %5079
        %5083 = vset.pattern.permute.xlu0 0
        %5084 = vperm.xlu0 %5083, %v5058
        %v5085 = vpop.permute.xlu0 %5084
        %5088 = vset.pattern.permute.xlu0 0
        %5089 = vperm.xlu0 %5088, %v5059
        %v5090 = vpop.permute.xlu0 %5089
        %5093 = vset.pattern.permute.xlu0 0
        %5094 = vperm.xlu0 %5093, %v5060
        %v5095 = vpop.permute.xlu0 %5094
        %5098 = vset.pattern.permute.xlu0 0
        %5099 = vperm.xlu0 %5098, %v5061
        %v5100 = vpop.permute.xlu0 %5099
        %v5103 = vsel %vm2165, %v5018, 0
        %v5106 = vsel %vm2165, %v5023, 0
        %v5109 = vsel %vm2165, %v5028, 0
        %v5112 = vsel %vm2165, %v5033, 0
        %v5115 = vsel %vm2165, %v5038, 0
        %v5118 = vsel %vm2165, %v5043, 0
        %v5121 = vsel %vm2165, %v5048, 0
        %v5124 = vsel %vm2165, %v5053, 0
        %5126 = vmatprep.subr.mxu0 %v4535
        %5127 = vmatpush1.msra.mxu0 %v4534
        %5128 = vmatprep.subr.mxu0 %v4537
        %5129 = vmatpush1.msra.mxu0 %v4536
        %5130 = vmatprep.subr.mxu0 %v4539
        %5131 = vmatpush1.msra.mxu0 %v4538
        %5132 = vmatprep.subr.mxu0 %v4541
        %5133 = vmatpush1.msra.mxu0 %v4540
        %5134 = vmatprep.subr.mxu0 %v4543
        %5135 = vmatpush1.msra.mxu0 %v4542
        %5136 = vmatprep.subr.mxu0 %v4545
        %5137 = vmatpush1.msra.mxu0 %v4544
        %5138 = vmatprep.subr.mxu0 %v4547
        %5139 = vmatpush1.msra.mxu0 %v4546
        %5140 = vmatprep.subr.mxu0 %v4549
        %5141 = vmatpush1.msra.mxu0 %v4548
        %5142 = vmatprep.subr.mxu0 %v4599
        %5143 = vmatpush1.msra.mxu0 %v4598
        %5144 = vmatprep.subr.mxu0 %v4601
        %5145 = vmatpush1.msra.mxu0 %v4600
        %5146 = vmatprep.subr.mxu0 %v4603
        %5147 = vmatpush1.msra.mxu0 %v4602
        %5148 = vmatprep.subr.mxu0 %v4605
        %5149 = vmatpush1.msra.mxu0 %v4604
        %5150 = vmatprep.subr.mxu0 %v4607
        %5151 = vmatpush1.msra.mxu0 %v4606
        %5152 = vmatprep.subr.mxu0 %v4609
        %5153 = vmatpush1.msra.mxu0 %v4608
        %5154 = vmatprep.subr.mxu0 %v4611
        %5155 = vmatpush1.msra.mxu0 %v4610
        %5156 = vmatprep.subr.mxu0 %v4613
        %5157 = vmatpush1.msra.mxu0 %v4612
        %5158 = vmatprep.subr.mxu0 %v4663
        %5159 = vmatpush1.msra.mxu0 %v4662
        %5160 = vmatprep.subr.mxu0 %v4665
        %5161 = vmatpush1.msra.mxu0 %v4664
        %5162 = vmatprep.subr.mxu0 %v4667
        %5163 = vmatpush1.msra.mxu0 %v4666
        %5164 = vmatprep.subr.mxu0 %v4669
        %5165 = vmatpush1.msra.mxu0 %v4668
        %5166 = vmatprep.subr.mxu0 %v4671
        %5167 = vmatpush1.msra.mxu0 %v4670
        %5168 = vmatprep.subr.mxu0 %v4673
        %5169 = vmatpush1.msra.mxu0 %v4672
        %5170 = vmatprep.subr.mxu0 %v4675
        %5171 = vmatpush1.msra.mxu0 %v4674
        %5172 = vmatprep.subr.mxu0 %v4677
        %5173 = vmatpush1.msra.mxu0 %v4676
        %5174 = vmatprep.subr.mxu0 %v4727
        %5175 = vmatpush1.msra.mxu0 %v4726
        %5176 = vmatprep.subr.mxu0 %v4729
        %5177 = vmatpush1.msra.mxu0 %v4728
        %5178 = vmatprep.subr.mxu0 %v4731
        %5179 = vmatpush1.msra.mxu0 %v4730
        %5180 = vmatprep.subr.mxu0 %v4733
        %5181 = vmatpush1.msra.mxu0 %v4732
        %5182 = vmatprep.subr.mxu0 %v4735
        %5183 = vmatpush1.msra.mxu0 %v4734
        %5184 = vmatprep.subr.mxu0 %v4737
        %5185 = vmatpush1.msra.mxu0 %v4736
        %5186 = vmatprep.subr.mxu0 %v4739
        %5187 = vmatpush1.msra.mxu0 %v4738
        %5188 = vmatprep.subr.mxu0 %v4741
        %5189 = vmatpush1.msra.mxu0 %v4740
        %5190 = vmatprep.mubr.f32.mxu0 %v5015
        %5191 = vmatmul.mubr.f32.gmra.mrb[0].mxu0 %v5014
        %v5192 = vpop.f32.mrb[0].mxu0
        %v5193 = vadd.f32 %v5065, %v5192
        %v5194 = vpop.f32.mrb[0].mxu0
        %v5195 = vadd.f32 %v5065, %v5194
        %5196 = vmatprep.mubr.f32.mxu0 %v5020
        %5197 = vmatmul.mubr.f32.gmra.mrb[0].mxu0 %v5019
        %v5198 = vpop.f32.mrb[0].mxu0
        %v5199 = vadd.f32 %v5070, %v5198
        %v5200 = vpop.f32.mrb[0].mxu0
        %v5201 = vadd.f32 %v5070, %v5200
        %5202 = vmatprep.mubr.f32.mxu0 %v5025
        %5203 = vmatmul.mubr.f32.gmra.mrb[0].mxu0 %v5024
        %v5204 = vpop.f32.mrb[0].mxu0
        %v5205 = vadd.f32 %v5075, %v5204
        %v5206 = vpop.f32.mrb[0].mxu0
        %v5207 = vadd.f32 %v5075, %v5206
        %5208 = vmatprep.mubr.f32.mxu0 %v5030
        %5209 = vmatmul.mubr.f32.gmra.mrb[0].mxu0 %v5029
        %v5210 = vpop.f32.mrb[0].mxu0
        %v5211 = vadd.f32 %v5080, %v5210
        %v5212 = vpop.f32.mrb[0].mxu0
        %v5213 = vadd.f32 %v5080, %v5212
        %5214 = vmatprep.mubr.f32.mxu0 %v5035
        %5215 = vmatmul.mubr.f32.gmra.mrb[0].mxu0 %v5034
        %v5216 = vpop.f32.mrb[0].mxu0
        %v5217 = vadd.f32 %v5085, %v5216
        %v5218 = vpop.f32.mrb[0].mxu0
        %v5219 = vadd.f32 %v5085, %v5218
        %5220 = vmatprep.mubr.f32.mxu0 %v5040
        %5221 = vmatmul.mubr.f32.gmra.mrb[0].mxu0 %v5039
        %v5222 = vpop.f32.mrb[0].mxu0
        %v5223 = vadd.f32 %v5090, %v5222
        %v5224 = vpop.f32.mrb[0].mxu0
        %v5225 = vadd.f32 %v5090, %v5224
        %5226 = vmatprep.mubr.f32.mxu0 %v5045
        %5227 = vmatmul.mubr.f32.gmra.mrb[0].mxu0 %v5044
        %v5228 = vpop.f32.mrb[0].mxu0
        %v5229 = vadd.f32 %v5095, %v5228
        %v5230 = vpop.f32.mrb[0].mxu0
        %v5231 = vadd.f32 %v5095, %v5230
        %5232 = vmatprep.mubr.f32.mxu0 %v5050
        %5233 = vmatmul.mubr.f32.gmra.mrb[0].mxu0 %v5049
        %v5234 = vpop.f32.mrb[0].mxu0
        %v5235 = vadd.f32 %v5100, %v5234
        %v5236 = vpop.f32.mrb[0].mxu0
        %v5237 = vadd.f32 %v5100, %v5236
        %5238 = vdwg.mxu0
        %5239 = vmatprep.subr.mxu0 %v4743
        %5240 = vmatpush1.msra.mxu0 %v4742
        %5241 = vmatprep.subr.mxu0 %v4745
        %5242 = vmatpush1.msra.mxu0 %v4744
        %5243 = vmatprep.subr.mxu0 %v4747
        %5244 = vmatpush1.msra.mxu0 %v4746
        %5245 = vmatprep.subr.mxu0 %v4749
        %5246 = vmatpush1.msra.mxu0 %v4748
        %5247 = vmatprep.subr.mxu0 %v4751
        %5248 = vmatpush1.msra.mxu0 %v4750
        %5249 = vmatprep.subr.mxu0 %v4753
        %5250 = vmatpush1.msra.mxu0 %v4752
        %5251 = vmatprep.subr.mxu0 %v4755
        %5252 = vmatpush1.msra.mxu0 %v4754
        %5253 = vmatprep.subr.mxu0 %v4757
        %5254 = vmatpush1.msra.mxu0 %v4756
        %5255 = vmatprep.subr.mxu0 %v4807
        %5256 = vmatpush1.msra.mxu0 %v4806
        %5257 = vmatprep.subr.mxu0 %v4809
        %5258 = vmatpush1.msra.mxu0 %v4808
        %5259 = vmatprep.subr.mxu0 %v4811
        %5260 = vmatpush1.msra.mxu0 %v4810
        %5261 = vmatprep.subr.mxu0 %v4813
        %5262 = vmatpush1.msra.mxu0 %v4812
        %5263 = vmatprep.subr.mxu0 %v4815
        %5264 = vmatpush1.msra.mxu0 %v4814
        %5265 = vmatprep.subr.mxu0 %v4817
        %5266 = vmatpush1.msra.mxu0 %v4816
        %5267 = vmatprep.subr.mxu0 %v4819
        %5268 = vmatpush1.msra.mxu0 %v4818
        %5269 = vmatprep.subr.mxu0 %v4821
        %5270 = vmatpush1.msra.mxu0 %v4820
        %5271 = vmatprep.subr.mxu0 %v4871
        %5272 = vmatpush1.msra.mxu0 %v4870
        %5273 = vmatprep.subr.mxu0 %v4873
        %5274 = vmatpush1.msra.mxu0 %v4872
        %5275 = vmatprep.subr.mxu0 %v4875
        %5276 = vmatpush1.msra.mxu0 %v4874
        %5277 = vmatprep.subr.mxu0 %v4877
        %5278 = vmatpush1.msra.mxu0 %v4876
        %5279 = vmatprep.subr.mxu0 %v4879
        %5280 = vmatpush1.msra.mxu0 %v4878
        %5281 = vmatprep.subr.mxu0 %v4881
        %5282 = vmatpush1.msra.mxu0 %v4880
        %5283 = vmatprep.subr.mxu0 %v4883
        %5284 = vmatpush1.msra.mxu0 %v4882
        %5285 = vmatprep.subr.mxu0 %v4885
        %5286 = vmatpush1.msra.mxu0 %v4884
        %5287 = vmatprep.subr.mxu0 %v4935
        %5288 = vmatpush1.msra.mxu0 %v4934
        %5289 = vmatprep.subr.mxu0 %v4937
        %5290 = vmatpush1.msra.mxu0 %v4936
        %5291 = vmatprep.subr.mxu0 %v4939
        %5292 = vmatpush1.msra.mxu0 %v4938
        %5293 = vmatprep.subr.mxu0 %v4941
        %5294 = vmatpush1.msra.mxu0 %v4940
        %5295 = vmatprep.subr.mxu0 %v4943
        %5296 = vmatpush1.msra.mxu0 %v4942
        %5297 = vmatprep.subr.mxu0 %v4945
        %5298 = vmatpush1.msra.mxu0 %v4944
        %5299 = vmatprep.subr.mxu0 %v4947
        %5300 = vmatpush1.msra.mxu0 %v4946
        %5301 = vmatprep.subr.mxu0 %v4949
        %5302 = vmatpush1.msra.mxu0 %v4948
        %5303 = vmatprep.mubr.f32.mxu0 %v5017
        %5304 = vmatmul.mubr.f32.gmra.mrb[0].mxu0 %v5016
        %v5305 = vpop.f32.mrb[0].mxu0
        %v5306 = vadd.f32 %v5193, %v5305
        %v5307 = vpop.f32.mrb[0].mxu0
        %v5308 = vadd.f32 %v5195, %v5307
        %5309 = vmatprep.mubr.f32.mxu0 %v5022
        %5310 = vmatmul.mubr.f32.gmra.mrb[0].mxu0 %v5021
        %v5311 = vpop.f32.mrb[0].mxu0
        %v5312 = vadd.f32 %v5199, %v5311
        %v5313 = vpop.f32.mrb[0].mxu0
        %v5314 = vadd.f32 %v5201, %v5313
        %5315 = vmatprep.mubr.f32.mxu0 %v5027
        %5316 = vmatmul.mubr.f32.gmra.mrb[0].mxu0 %v5026
        %v5317 = vpop.f32.mrb[0].mxu0
        %v5318 = vadd.f32 %v5205, %v5317
        %v5319 = vpop.f32.mrb[0].mxu0
        %v5320 = vadd.f32 %v5207, %v5319
        %5321 = vmatprep.mubr.f32.mxu0 %v5032
        %5322 = vmatmul.mubr.f32.gmra.mrb[0].mxu0 %v5031
        %v5323 = vpop.f32.mrb[0].mxu0
        %v5324 = vadd.f32 %v5211, %v5323
        %v5325 = vpop.f32.mrb[0].mxu0
        %v5326 = vadd.f32 %v5213, %v5325
        %5327 = vmatprep.mubr.f32.mxu0 %v5037
        %5328 = vmatmul.mubr.f32.gmra.mrb[0].mxu0 %v5036
        %v5329 = vpop.f32.mrb[0].mxu0
        %v5330 = vadd.f32 %v5217, %v5329
        %v5331 = vpop.f32.mrb[0].mxu0
        %v5332 = vadd.f32 %v5219, %v5331
        %5333 = vmatprep.mubr.f32.mxu0 %v5042
        %5334 = vmatmul.mubr.f32.gmra.mrb[0].mxu0 %v5041
        %v5335 = vpop.f32.mrb[0].mxu0
        %v5336 = vadd.f32 %v5223, %v5335
        %v5337 = vpop.f32.mrb[0].mxu0
        %v5338 = vadd.f32 %v5225, %v5337
        %5339 = vmatprep.mubr.f32.mxu0 %v5047
        %5340 = vmatmul.mubr.f32.gmra.mrb[0].mxu0 %v5046
        %v5341 = vpop.f32.mrb[0].mxu0
        %v5342 = vadd.f32 %v5229, %v5341
        %v5343 = vpop.f32.mrb[0].mxu0
        %v5344 = vadd.f32 %v5231, %v5343
        %5345 = vmatprep.mubr.f32.mxu0 %v5052
        %5346 = vmatmul.mubr.f32.gmra.mrb[0].mxu0 %v5051
        %v5347 = vpop.f32.mrb[0].mxu0
        %v5348 = vadd.f32 %v5235, %v5347
        %v5349 = vpop.f32.mrb[0].mxu0
        %v5350 = vadd.f32 %v5237, %v5349
        %5351 = vdwg.mxu0
        %5352 = vmatprep.subr.mxu0 %v4999
        %5353 = vmatpush1.msra.mxu0 %v4998
        %5354 = vmatprep.subr.mxu0 %v5001
        %5355 = vmatpush1.msra.mxu0 %v5000
        %5356 = vmatprep.subr.mxu0 %v5003
        %5357 = vmatpush1.msra.mxu0 %v5002
        %5358 = vmatprep.subr.mxu0 %v5005
        %5359 = vmatpush1.msra.mxu0 %v5004
        %5360 = vmatprep.subr.mxu0 %v5007
        %5361 = vmatpush1.msra.mxu0 %v5006
        %5362 = vmatprep.subr.mxu0 %v5009
        %5363 = vmatpush1.msra.mxu0 %v5008
        %5364 = vmatprep.subr.mxu0 %v5011
        %5365 = vmatpush1.msra.mxu0 %v5010
        %5366 = vmatprep.subr.mxu0 %v5013
        %5367 = vmatpush1.msra.mxu0 %v5012
        %5368 = vmatprep.subr.mxu0 0.0
        %5369 = vmatpush1.msra.mxu0 0.0
        %5370 = vmatprep.subr.mxu0 0.0
        %5371 = vmatpush1.msra.mxu0 0.0
        %5372 = vmatprep.subr.mxu0 0.0
        %5373 = vmatpush1.msra.mxu0 0.0
        %5374 = vmatprep.subr.mxu0 0.0
        %5375 = vmatpush1.msra.mxu0 0.0
        %5376 = vmatprep.subr.mxu0 0.0
        %5377 = vmatpush1.msra.mxu0 0.0
        %5378 = vmatprep.subr.mxu0 0.0
        %5379 = vmatpush1.msra.mxu0 0.0
        %5380 = vmatprep.subr.mxu0 0.0
        %5381 = vmatpush1.msra.mxu0 0.0
        %5382 = vmatprep.subr.mxu0 0.0
        %5383 = vmatpush1.msra.mxu0 0.0
        %5384 = vmatprep.subr.mxu0 0.0
        %5385 = vmatpush1.msra.mxu0 0.0
        %5386 = vmatprep.subr.mxu0 0.0
        %5387 = vmatpush1.msra.mxu0 0.0
        %5388 = vmatprep.subr.mxu0 0.0
        %5389 = vmatpush1.msra.mxu0 0.0
        %5390 = vmatprep.subr.mxu0 0.0
        %5391 = vmatpush1.msra.mxu0 0.0
        %5392 = vmatprep.subr.mxu0 0.0
        %5393 = vmatpush1.msra.mxu0 0.0
        %5394 = vmatprep.subr.mxu0 0.0
        %5395 = vmatpush1.msra.mxu0 0.0
        %5396 = vmatprep.subr.mxu0 0.0
        %5397 = vmatpush1.msra.mxu0 0.0
        %5398 = vmatprep.subr.mxu0 0.0
        %5399 = vmatpush1.msra.mxu0 0.0
        %5400 = vmatprep.subr.mxu0 0.0
        %5401 = vmatpush1.msra.mxu0 0.0
        %5402 = vmatprep.subr.mxu0 0.0
        %5403 = vmatpush1.msra.mxu0 0.0
        %5404 = vmatprep.subr.mxu0 0.0
        %5405 = vmatpush1.msra.mxu0 0.0
        %5406 = vmatprep.subr.mxu0 0.0
        %5407 = vmatpush1.msra.mxu0 0.0
        %5408 = vmatprep.subr.mxu0 0.0
        %5409 = vmatpush1.msra.mxu0 0.0
        %5410 = vmatprep.subr.mxu0 0.0
        %5411 = vmatpush1.msra.mxu0 0.0
        %5412 = vmatprep.subr.mxu0 0.0
        %5413 = vmatpush1.msra.mxu0 0.0
        %5414 = vmatprep.subr.mxu0 0.0
        %5415 = vmatpush1.msra.mxu0 0.0
        %5416 = vmatprep.mubr.f32.mxu0 0.0
        %5417 = vmatmul.mubr.f32.gmra.mrb[0].mxu0 %v5103
        %v5418 = vpop.f32.mrb[0].mxu0
        %v5419 = vadd.f32 %v5306, %v5418
        %v5420 = vpop.f32.mrb[0].mxu0
        %v5421 = vadd.f32 %v5308, %v5420
        %5422 = vmatprep.mubr.f32.mxu0 0.0
        %5423 = vmatmul.mubr.f32.gmra.mrb[0].mxu0 %v5106
        %v5424 = vpop.f32.mrb[0].mxu0
        %v5425 = vadd.f32 %v5312, %v5424
        %v5426 = vpop.f32.mrb[0].mxu0
        %v5427 = vadd.f32 %v5314, %v5426
        %5428 = vmatprep.mubr.f32.mxu0 0.0
        %5429 = vmatmul.mubr.f32.gmra.mrb[0].mxu0 %v5109
        %v5430 = vpop.f32.mrb[0].mxu0
        %v5431 = vadd.f32 %v5318, %v5430
        %v5432 = vpop.f32.mrb[0].mxu0
        %v5433 = vadd.f32 %v5320, %v5432
        %5434 = vmatprep.mubr.f32.mxu0 0.0
        %5435 = vmatmul.mubr.f32.gmra.mrb[0].mxu0 %v5112
        %v5436 = vpop.f32.mrb[0].mxu0
        %v5437 = vadd.f32 %v5324, %v5436
        %v5438 = vpop.f32.mrb[0].mxu0
        %v5439 = vadd.f32 %v5326, %v5438
        %5440 = vmatprep.mubr.f32.mxu0 0.0
        %5441 = vmatmul.mubr.f32.gmra.mrb[0].mxu0 %v5115
        %v5442 = vpop.f32.mrb[0].mxu0
        %v5443 = vadd.f32 %v5330, %v5442
        %v5444 = vpop.f32.mrb[0].mxu0
        %v5445 = vadd.f32 %v5332, %v5444
        %5446 = vmatprep.mubr.f32.mxu0 0.0
        %5447 = vmatmul.mubr.f32.gmra.mrb[0].mxu0 %v5118
        %v5448 = vpop.f32.mrb[0].mxu0
        %v5449 = vadd.f32 %v5336, %v5448
        %v5450 = vpop.f32.mrb[0].mxu0
        %v5451 = vadd.f32 %v5338, %v5450
        %5452 = vmatprep.mubr.f32.mxu0 0.0
        %5453 = vmatmul.mubr.f32.gmra.mrb[0].mxu0 %v5121
        %v5454 = vpop.f32.mrb[0].mxu0
        %v5455 = vadd.f32 %v5342, %v5454
        %v5456 = vpop.f32.mrb[0].mxu0
        %v5457 = vadd.f32 %v5344, %v5456
        %5458 = vmatprep.mubr.f32.mxu0 0.0
        %5459 = vmatmul.mubr.f32.gmra.mrb[0].mxu0 %v5124
        %v5460 = vpop.f32.mrb[0].mxu0
        %v5461 = vadd.f32 %v5348, %v5460
        %v5462 = vpop.f32.mrb[0].mxu0
        %v5463 = vadd.f32 %v5350, %v5462
        %5464 = vdwg.mxu0
        %v5465 = vmax.f32 %v5419, 0.0
        %v5466 = vmax.f32 %v5421, 0.0
        %v5467 = vmax.f32 %v5425, 0.0
        %v5468 = vmax.f32 %v5427, 0.0
        %v5469 = vmax.f32 %v5431, 0.0
        %v5470 = vmax.f32 %v5433, 0.0
        %v5471 = vmax.f32 %v5437, 0.0
        %v5472 = vmax.f32 %v5439, 0.0
        %v5473 = vmax.f32 %v5443, 0.0
        %v5474 = vmax.f32 %v5445, 0.0
        %v5475 = vmax.f32 %v5449, 0.0
        %v5476 = vmax.f32 %v5451, 0.0
        %v5477 = vmax.f32 %v5455, 0.0
        %v5478 = vmax.f32 %v5457, 0.0
        %v5479 = vmax.f32 %v5461, 0.0
        %v5480 = vmax.f32 %v5463, 0.0
        %5481 = vrot.lane.b32.xlu0 %v5465, 17
        %v5482 = vpop.permute.xlu0 %5481
        %5483 = vrot.lane.b32.xlu0 %v5467, 17
        %v5484 = vpop.permute.xlu0 %5483
        %5485 = vrot.lane.b32.xlu0 %v5469, 17
        %v5486 = vpop.permute.xlu0 %5485
        %5487 = vrot.lane.b32.xlu0 %v5471, 17
        %v5488 = vpop.permute.xlu0 %5487
        %5489 = vrot.lane.b32.xlu0 %v5473, 17
        %v5490 = vpop.permute.xlu0 %5489
        %5491 = vrot.lane.b32.xlu0 %v5475, 17
        %v5492 = vpop.permute.xlu0 %5491
        %5493 = vrot.lane.b32.xlu0 %v5477, 17
        %v5494 = vpop.permute.xlu0 %5493
        %5495 = vrot.lane.b32.xlu0 %v5479, 17
        %v5496 = vpop.permute.xlu0 %5495
        %5497 = vrot.lane.b32.xlu0 %v5466, 17
        %v5498 = vpop.permute.xlu0 %5497
        %5499 = vrot.lane.b32.xlu0 %v5468, 17
        %v5500 = vpop.permute.xlu0 %5499
        %5501 = vrot.lane.b32.xlu0 %v5470, 17
        %v5502 = vpop.permute.xlu0 %5501
        %5503 = vrot.lane.b32.xlu0 %v5472, 17
        %v5504 = vpop.permute.xlu0 %5503
        %5505 = vrot.lane.b32.xlu0 %v5474, 17
        %v5506 = vpop.permute.xlu0 %5505
        %5507 = vrot.lane.b32.xlu0 %v5476, 17
        %v5508 = vpop.permute.xlu0 %5507
        %5509 = vrot.lane.b32.xlu0 %v5478, 17
        %v5510 = vpop.permute.xlu0 %5509
        %5511 = vrot.lane.b32.xlu0 %v5480, 17
        %v5512 = vpop.permute.xlu0 %5511
        %v5513 = vsel %vm754, %v5482, %v5498
        %v5514 = vsel %vm754, %v5484, %v5500
        %v5515 = vsel %vm754, %v5486, %v5502
        %v5516 = vsel %vm754, %v5488, %v5504
        %v5517 = vsel %vm754, %v5490, %v5506
        %v5518 = vsel %vm754, %v5492, %v5508
        %v5519 = vsel %vm754, %v5494, %v5510
        %v5520 = vsel %vm754, %v5496, %v5512
        %v5521 = vsel %vm754, %v5498, %v5482
        %v5522 = vsel %vm754, %v5500, %v5484
        %v5523 = vsel %vm754, %v5502, %v5486
        %v5524 = vsel %vm754, %v5504, %v5488
        %v5525 = vsel %vm754, %v5506, %v5490
        %v5526 = vsel %vm754, %v5508, %v5492
        %v5527 = vsel %vm754, %v5510, %v5494
        %v5528 = vsel %vm754, %v5512, %v5496
        %v5529 = vmul.f32 %v5521, %v1440
        %v5530 = vmul.f32 %v5513, %v1444
        %v5531 = vmul.f32 %v5522, %v1440
        %v5532 = vmul.f32 %v5514, %v1444
        %v5533 = vmul.f32 %v5523, %v1440
        %v5534 = vmul.f32 %v5515, %v1444
        %v5535 = vmul.f32 %v5524, %v1440
        %v5536 = vmul.f32 %v5516, %v1444
        %v5537 = vmul.f32 %v5525, %v1440
        %v5538 = vmul.f32 %v5517, %v1444
        %v5539 = vmul.f32 %v5526, %v1440
        %v5540 = vmul.f32 %v5518, %v1444
        %v5541 = vmul.f32 %v5527, %v1440
        %v5542 = vmul.f32 %v5519, %v1444
        %v5543 = vmul.f32 %v5528, %v1440
        %v5544 = vmul.f32 %v5520, %v1444
        %5545 = vrot.lane.b32.xlu0 %v5465, 16
        %v5546 = vpop.permute.xlu0 %5545
        %5547 = vrot.lane.b32.xlu0 %v5467, 16
        %v5548 = vpop.permute.xlu0 %5547
        %5549 = vrot.lane.b32.xlu0 %v5469, 16
        %v5550 = vpop.permute.xlu0 %5549
        %5551 = vrot.lane.b32.xlu0 %v5471, 16
        %v5552 = vpop.permute.xlu0 %5551
        %5553 = vrot.lane.b32.xlu0 %v5473, 16
        %v5554 = vpop.permute.xlu0 %5553
        %5555 = vrot.lane.b32.xlu0 %v5475, 16
        %v5556 = vpop.permute.xlu0 %5555
        %5557 = vrot.lane.b32.xlu0 %v5477, 16
        %v5558 = vpop.permute.xlu0 %5557
        %5559 = vrot.lane.b32.xlu0 %v5479, 16
        %v5560 = vpop.permute.xlu0 %5559
        %5561 = vrot.lane.b32.xlu0 %v5466, 16
        %v5562 = vpop.permute.xlu0 %5561
        %5563 = vrot.lane.b32.xlu0 %v5468, 16
        %v5564 = vpop.permute.xlu0 %5563
        %5565 = vrot.lane.b32.xlu0 %v5470, 16
        %v5566 = vpop.permute.xlu0 %5565
        %5567 = vrot.lane.b32.xlu0 %v5472, 16
        %v5568 = vpop.permute.xlu0 %5567
        %5569 = vrot.lane.b32.xlu0 %v5474, 16
        %v5570 = vpop.permute.xlu0 %5569
        %5571 = vrot.lane.b32.xlu0 %v5476, 16
        %v5572 = vpop.permute.xlu0 %5571
        %5573 = vrot.lane.b32.xlu0 %v5478, 16
        %v5574 = vpop.permute.xlu0 %5573
        %5575 = vrot.lane.b32.xlu0 %v5480, 16
        %v5576 = vpop.permute.xlu0 %5575
        %v5577 = vsel %vm767, %v5546, %v5562
        %v5578 = vsel %vm767, %v5548, %v5564
        %v5579 = vsel %vm767, %v5550, %v5566
        %v5580 = vsel %vm767, %v5552, %v5568
        %v5581 = vsel %vm767, %v5554, %v5570
        %v5582 = vsel %vm767, %v5556, %v5572
        %v5583 = vsel %vm767, %v5558, %v5574
        %v5584 = vsel %vm767, %v5560, %v5576
        %v5585 = vsel %vm767, %v5562, %v5546
        %v5586 = vsel %vm767, %v5564, %v5548
        %v5587 = vsel %vm767, %v5566, %v5550
        %v5588 = vsel %vm767, %v5568, %v5552
        %v5589 = vsel %vm767, %v5570, %v5554
        %v5590 = vsel %vm767, %v5572, %v5556
        %v5591 = vsel %vm767, %v5574, %v5558
        %v5592 = vsel %vm767, %v5576, %v5560
        %v5593 = vmul.f32 %v5585, %v1512
        %v5594 = vmul.f32 %v5577, %v1516
        %v5595 = vmul.f32 %v5586, %v1512
        %v5596 = vmul.f32 %v5578, %v1516
        %v5597 = vmul.f32 %v5587, %v1512
        %v5598 = vmul.f32 %v5579, %v1516
        %v5599 = vmul.f32 %v5588, %v1512
        %v5600 = vmul.f32 %v5580, %v1516
        %v5601 = vmul.f32 %v5589, %v1512
        %v5602 = vmul.f32 %v5581, %v1516
        %v5603 = vmul.f32 %v5590, %v1512
        %v5604 = vmul.f32 %v5582, %v1516
        %v5605 = vmul.f32 %v5591, %v1512
        %v5606 = vmul.f32 %v5583, %v1516
        %v5607 = vmul.f32 %v5592, %v1512
        %v5608 = vmul.f32 %v5584, %v1516
        %5609 = vrot.lane.b32.xlu0 %v5465, 15
        %v5610 = vpop.permute.xlu0 %5609
        %5611 = vrot.lane.b32.xlu0 %v5467, 15
        %v5612 = vpop.permute.xlu0 %5611
        %5613 = vrot.lane.b32.xlu0 %v5469, 15
        %v5614 = vpop.permute.xlu0 %5613
        %5615 = vrot.lane.b32.xlu0 %v5471, 15
        %v5616 = vpop.permute.xlu0 %5615
        %5617 = vrot.lane.b32.xlu0 %v5473, 15
        %v5618 = vpop.permute.xlu0 %5617
        %5619 = vrot.lane.b32.xlu0 %v5475, 15
        %v5620 = vpop.permute.xlu0 %5619
        %5621 = vrot.lane.b32.xlu0 %v5477, 15
        %v5622 = vpop.permute.xlu0 %5621
        %5623 = vrot.lane.b32.xlu0 %v5479, 15
        %v5624 = vpop.permute.xlu0 %5623
        %5625 = vrot.lane.b32.xlu0 %v5466, 15
        %v5626 = vpop.permute.xlu0 %5625
        %5627 = vrot.lane.b32.xlu0 %v5468, 15
        %v5628 = vpop.permute.xlu0 %5627
        %5629 = vrot.lane.b32.xlu0 %v5470, 15
        %v5630 = vpop.permute.xlu0 %5629
        %5631 = vrot.lane.b32.xlu0 %v5472, 15
        %v5632 = vpop.permute.xlu0 %5631
        %5633 = vrot.lane.b32.xlu0 %v5474, 15
        %v5634 = vpop.permute.xlu0 %5633
        %5635 = vrot.lane.b32.xlu0 %v5476, 15
        %v5636 = vpop.permute.xlu0 %5635
        %5637 = vrot.lane.b32.xlu0 %v5478, 15
        %v5638 = vpop.permute.xlu0 %5637
        %5639 = vrot.lane.b32.xlu0 %v5480, 15
        %v5640 = vpop.permute.xlu0 %5639
        %v5641 = vsel %vm780, %v5610, %v5626
        %v5642 = vsel %vm780, %v5612, %v5628
        %v5643 = vsel %vm780, %v5614, %v5630
        %v5644 = vsel %vm780, %v5616, %v5632
        %v5645 = vsel %vm780, %v5618, %v5634
        %v5646 = vsel %vm780, %v5620, %v5636
        %v5647 = vsel %vm780, %v5622, %v5638
        %v5648 = vsel %vm780, %v5624, %v5640
        %v5649 = vsel %vm780, %v5626, %v5610
        %v5650 = vsel %vm780, %v5628, %v5612
        %v5651 = vsel %vm780, %v5630, %v5614
        %v5652 = vsel %vm780, %v5632, %v5616
        %v5653 = vsel %vm780, %v5634, %v5618
        %v5654 = vsel %vm780, %v5636, %v5620
        %v5655 = vsel %vm780, %v5638, %v5622
        %v5656 = vsel %vm780, %v5640, %v5624
        %v5657 = vmul.f32 %v5649, %v1584
        %v5658 = vmul.f32 %v5641, %v1588
        %v5659 = vmul.f32 %v5650, %v1584
        %v5660 = vmul.f32 %v5642, %v1588
        %v5661 = vmul.f32 %v5651, %v1584
        %v5662 = vmul.f32 %v5643, %v1588
        %v5663 = vmul.f32 %v5652, %v1584
        %v5664 = vmul.f32 %v5644, %v1588
        %v5665 = vmul.f32 %v5653, %v1584
        %v5666 = vmul.f32 %v5645, %v1588
        %v5667 = vmul.f32 %v5654, %v1584
        %v5668 = vmul.f32 %v5646, %v1588
        %v5669 = vmul.f32 %v5655, %v1584
        %v5670 = vmul.f32 %v5647, %v1588
        %v5671 = vmul.f32 %v5656, %v1584
        %v5672 = vmul.f32 %v5648, %v1588
        %5673 = vrot.lane.b32.xlu0 %v5465, 1
        %v5674 = vpop.permute.xlu0 %5673
        %5675 = vrot.lane.b32.xlu0 %v5467, 1
        %v5676 = vpop.permute.xlu0 %5675
        %5677 = vrot.lane.b32.xlu0 %v5469, 1
        %v5678 = vpop.permute.xlu0 %5677
        %5679 = vrot.lane.b32.xlu0 %v5471, 1
        %v5680 = vpop.permute.xlu0 %5679
        %5681 = vrot.lane.b32.xlu0 %v5473, 1
        %v5682 = vpop.permute.xlu0 %5681
        %5683 = vrot.lane.b32.xlu0 %v5475, 1
        %v5684 = vpop.permute.xlu0 %5683
        %5685 = vrot.lane.b32.xlu0 %v5477, 1
        %v5686 = vpop.permute.xlu0 %5685
        %5687 = vrot.lane.b32.xlu0 %v5479, 1
        %v5688 = vpop.permute.xlu0 %5687
        %5689 = vrot.lane.b32.xlu0 %v5466, 1
        %v5690 = vpop.permute.xlu0 %5689
        %5691 = vrot.lane.b32.xlu0 %v5468, 1
        %v5692 = vpop.permute.xlu0 %5691
        %5693 = vrot.lane.b32.xlu0 %v5470, 1
        %v5694 = vpop.permute.xlu0 %5693
        %5695 = vrot.lane.b32.xlu0 %v5472, 1
        %v5696 = vpop.permute.xlu0 %5695
        %5697 = vrot.lane.b32.xlu0 %v5474, 1
        %v5698 = vpop.permute.xlu0 %5697
        %5699 = vrot.lane.b32.xlu0 %v5476, 1
        %v5700 = vpop.permute.xlu0 %5699
        %5701 = vrot.lane.b32.xlu0 %v5478, 1
        %v5702 = vpop.permute.xlu0 %5701
        %5703 = vrot.lane.b32.xlu0 %v5480, 1
        %v5704 = vpop.permute.xlu0 %5703
        %v5705 = vsel %vm817, %v5674, %v5690
        %v5706 = vsel %vm817, %v5676, %v5692
        %v5707 = vsel %vm817, %v5678, %v5694
        %v5708 = vsel %vm817, %v5680, %v5696
        %v5709 = vsel %vm817, %v5682, %v5698
        %v5710 = vsel %vm817, %v5684, %v5700
        %v5711 = vsel %vm817, %v5686, %v5702
        %v5712 = vsel %vm817, %v5688, %v5704
        %v5713 = vsel %vm817, %v5690, %v5674
        %v5714 = vsel %vm817, %v5692, %v5676
        %v5715 = vsel %vm817, %v5694, %v5678
        %v5716 = vsel %vm817, %v5696, %v5680
        %v5717 = vsel %vm817, %v5698, %v5682
        %v5718 = vsel %vm817, %v5700, %v5684
        %v5719 = vsel %vm817, %v5702, %v5686
        %v5720 = vsel %vm817, %v5704, %v5688
        %v5721 = vmul.f32 %v5713, %v1656
        %v5722 = vmul.f32 %v5705, %v1660
        %v5723 = vmul.f32 %v5714, %v1656
        %v5724 = vmul.f32 %v5706, %v1660
        %v5725 = vmul.f32 %v5715, %v1656
        %v5726 = vmul.f32 %v5707, %v1660
        %v5727 = vmul.f32 %v5716, %v1656
        %v5728 = vmul.f32 %v5708, %v1660
        %v5729 = vmul.f32 %v5717, %v1656
        %v5730 = vmul.f32 %v5709, %v1660
        %v5731 = vmul.f32 %v5718, %v1656
        %v5732 = vmul.f32 %v5710, %v1660
        %v5733 = vmul.f32 %v5719, %v1656
        %v5734 = vmul.f32 %v5711, %v1660
        %v5735 = vmul.f32 %v5720, %v1656
        %v5736 = vmul.f32 %v5712, %v1660
        %v5737 = vmul.f32 %v5465, %v1680
        %v5738 = vmul.f32 %v5466, %v1684
        %v5739 = vmul.f32 %v5467, %v1680
        %v5740 = vmul.f32 %v5468, %v1684
        %v5741 = vmul.f32 %v5469, %v1680
        %v5742 = vmul.f32 %v5470, %v1684
        %v5743 = vmul.f32 %v5471, %v1680
        %v5744 = vmul.f32 %v5472, %v1684
        %v5745 = vmul.f32 %v5473, %v1680
        %v5746 = vmul.f32 %v5474, %v1684
        %v5747 = vmul.f32 %v5475, %v1680
        %v5748 = vmul.f32 %v5476, %v1684
        %v5749 = vmul.f32 %v5477, %v1680
        %v5750 = vmul.f32 %v5478, %v1684
        %v5751 = vmul.f32 %v5479, %v1680
        %v5752 = vmul.f32 %v5480, %v1684
        %5753 = vrot.lane.b32.xlu0 %v5465, 127
        %v5754 = vpop.permute.xlu0 %5753
        %5755 = vrot.lane.b32.xlu0 %v5467, 127
        %v5756 = vpop.permute.xlu0 %5755
        %5757 = vrot.lane.b32.xlu0 %v5469, 127
        %v5758 = vpop.permute.xlu0 %5757
        %5759 = vrot.lane.b32.xlu0 %v5471, 127
        %v5760 = vpop.permute.xlu0 %5759
        %5761 = vrot.lane.b32.xlu0 %v5473, 127
        %v5762 = vpop.permute.xlu0 %5761
        %5763 = vrot.lane.b32.xlu0 %v5475, 127
        %v5764 = vpop.permute.xlu0 %5763
        %5765 = vrot.lane.b32.xlu0 %v5477, 127
        %v5766 = vpop.permute.xlu0 %5765
        %5767 = vrot.lane.b32.xlu0 %v5479, 127
        %v5768 = vpop.permute.xlu0 %5767
        %5769 = vrot.lane.b32.xlu0 %v5466, 127
        %v5770 = vpop.permute.xlu0 %5769
        %5771 = vrot.lane.b32.xlu0 %v5468, 127
        %v5772 = vpop.permute.xlu0 %5771
        %5773 = vrot.lane.b32.xlu0 %v5470, 127
        %v5774 = vpop.permute.xlu0 %5773
        %5775 = vrot.lane.b32.xlu0 %v5472, 127
        %v5776 = vpop.permute.xlu0 %5775
        %5777 = vrot.lane.b32.xlu0 %v5474, 127
        %v5778 = vpop.permute.xlu0 %5777
        %5779 = vrot.lane.b32.xlu0 %v5476, 127
        %v5780 = vpop.permute.xlu0 %5779
        %5781 = vrot.lane.b32.xlu0 %v5478, 127
        %v5782 = vpop.permute.xlu0 %5781
        %5783 = vrot.lane.b32.xlu0 %v5480, 127
        %v5784 = vpop.permute.xlu0 %5783
        %v5785 = vsel %vm847, %v5754, %v5770
        %v5786 = vsel %vm847, %v5756, %v5772
        %v5787 = vsel %vm847, %v5758, %v5774
        %v5788 = vsel %vm847, %v5760, %v5776
        %v5789 = vsel %vm847, %v5762, %v5778
        %v5790 = vsel %vm847, %v5764, %v5780
        %v5791 = vsel %vm847, %v5766, %v5782
        %v5792 = vsel %vm847, %v5768, %v5784
        %v5793 = vsel %vm847, %v5770, %v5754
        %v5794 = vsel %vm847, %v5772, %v5756
        %v5795 = vsel %vm847, %v5774, %v5758
        %v5796 = vsel %vm847, %v5776, %v5760
        %v5797 = vsel %vm847, %v5778, %v5762
        %v5798 = vsel %vm847, %v5780, %v5764
        %v5799 = vsel %vm847, %v5782, %v5766
        %v5800 = vsel %vm847, %v5784, %v5768
        %v5801 = vmul.f32 %v5785, %v1752
        %v5802 = vmul.f32 %v5793, %v1756
        %v5803 = vmul.f32 %v5786, %v1752
        %v5804 = vmul.f32 %v5794, %v1756
        %v5805 = vmul.f32 %v5787, %v1752
        %v5806 = vmul.f32 %v5795, %v1756
        %v5807 = vmul.f32 %v5788, %v1752
        %v5808 = vmul.f32 %v5796, %v1756
        %v5809 = vmul.f32 %v5789, %v1752
        %v5810 = vmul.f32 %v5797, %v1756
        %v5811 = vmul.f32 %v5790, %v1752
        %v5812 = vmul.f32 %v5798, %v1756
        %v5813 = vmul.f32 %v5791, %v1752
        %v5814 = vmul.f32 %v5799, %v1756
        %v5815 = vmul.f32 %v5792, %v1752
        %v5816 = vmul.f32 %v5800, %v1756
        %5817 = vrot.lane.b32.xlu0 %v5465, 113
        %v5818 = vpop.permute.xlu0 %5817
        %5819 = vrot.lane.b32.xlu0 %v5467, 113
        %v5820 = vpop.permute.xlu0 %5819
        %5821 = vrot.lane.b32.xlu0 %v5469, 113
        %v5822 = vpop.permute.xlu0 %5821
        %5823 = vrot.lane.b32.xlu0 %v5471, 113
        %v5824 = vpop.permute.xlu0 %5823
        %5825 = vrot.lane.b32.xlu0 %v5473, 113
        %v5826 = vpop.permute.xlu0 %5825
        %5827 = vrot.lane.b32.xlu0 %v5475, 113
        %v5828 = vpop.permute.xlu0 %5827
        %5829 = vrot.lane.b32.xlu0 %v5477, 113
        %v5830 = vpop.permute.xlu0 %5829
        %5831 = vrot.lane.b32.xlu0 %v5479, 113
        %v5832 = vpop.permute.xlu0 %5831
        %5833 = vrot.lane.b32.xlu0 %v5466, 113
        %v5834 = vpop.permute.xlu0 %5833
        %5835 = vrot.lane.b32.xlu0 %v5468, 113
        %v5836 = vpop.permute.xlu0 %5835
        %5837 = vrot.lane.b32.xlu0 %v5470, 113
        %v5838 = vpop.permute.xlu0 %5837
        %5839 = vrot.lane.b32.xlu0 %v5472, 113
        %v5840 = vpop.permute.xlu0 %5839
        %5841 = vrot.lane.b32.xlu0 %v5474, 113
        %v5842 = vpop.permute.xlu0 %5841
        %5843 = vrot.lane.b32.xlu0 %v5476, 113
        %v5844 = vpop.permute.xlu0 %5843
        %5845 = vrot.lane.b32.xlu0 %v5478, 113
        %v5846 = vpop.permute.xlu0 %5845
        %5847 = vrot.lane.b32.xlu0 %v5480, 113
        %v5848 = vpop.permute.xlu0 %5847
        %v5849 = vsel %vm886, %v5818, %v5834
        %v5850 = vsel %vm886, %v5820, %v5836
        %v5851 = vsel %vm886, %v5822, %v5838
        %v5852 = vsel %vm886, %v5824, %v5840
        %v5853 = vsel %vm886, %v5826, %v5842
        %v5854 = vsel %vm886, %v5828, %v5844
        %v5855 = vsel %vm886, %v5830, %v5846
        %v5856 = vsel %vm886, %v5832, %v5848
        %v5857 = vsel %vm886, %v5834, %v5818
        %v5858 = vsel %vm886, %v5836, %v5820
        %v5859 = vsel %vm886, %v5838, %v5822
        %v5860 = vsel %vm886, %v5840, %v5824
        %v5861 = vsel %vm886, %v5842, %v5826
        %v5862 = vsel %vm886, %v5844, %v5828
        %v5863 = vsel %vm886, %v5846, %v5830
        %v5864 = vsel %vm886, %v5848, %v5832
        %v5865 = vmul.f32 %v5849, %v1824
        %v5866 = vmul.f32 %v5857, %v1828
        %v5867 = vmul.f32 %v5850, %v1824
        %v5868 = vmul.f32 %v5858, %v1828
        %v5869 = vmul.f32 %v5851, %v1824
        %v5870 = vmul.f32 %v5859, %v1828
        %v5871 = vmul.f32 %v5852, %v1824
        %v5872 = vmul.f32 %v5860, %v1828
        %v5873 = vmul.f32 %v5853, %v1824
        %v5874 = vmul.f32 %v5861, %v1828
        %v5875 = vmul.f32 %v5854, %v1824
        %v5876 = vmul.f32 %v5862, %v1828
        %v5877 = vmul.f32 %v5855, %v1824
        %v5878 = vmul.f32 %v5863, %v1828
        %v5879 = vmul.f32 %v5856, %v1824
        %v5880 = vmul.f32 %v5864, %v1828
        %5881 = vrot.lane.b32.xlu0 %v5465, 112
        %v5882 = vpop.permute.xlu0 %5881
        %5883 = vrot.lane.b32.xlu0 %v5467, 112
        %v5884 = vpop.permute.xlu0 %5883
        %5885 = vrot.lane.b32.xlu0 %v5469, 112
        %v5886 = vpop.permute.xlu0 %5885
        %5887 = vrot.lane.b32.xlu0 %v5471, 112
        %v5888 = vpop.permute.xlu0 %5887
        %5889 = vrot.lane.b32.xlu0 %v5473, 112
        %v5890 = vpop.permute.xlu0 %5889
        %5891 = vrot.lane.b32.xlu0 %v5475, 112
        %v5892 = vpop.permute.xlu0 %5891
        %5893 = vrot.lane.b32.xlu0 %v5477, 112
        %v5894 = vpop.permute.xlu0 %5893
        %5895 = vrot.lane.b32.xlu0 %v5479, 112
        %v5896 = vpop.permute.xlu0 %5895
        %5897 = vrot.lane.b32.xlu0 %v5466, 112
        %v5898 = vpop.permute.xlu0 %5897
        %5899 = vrot.lane.b32.xlu0 %v5468, 112
        %v5900 = vpop.permute.xlu0 %5899
        %5901 = vrot.lane.b32.xlu0 %v5470, 112
        %v5902 = vpop.permute.xlu0 %5901
        %5903 = vrot.lane.b32.xlu0 %v5472, 112
        %v5904 = vpop.permute.xlu0 %5903
        %5905 = vrot.lane.b32.xlu0 %v5474, 112
        %v5906 = vpop.permute.xlu0 %5905
        %5907 = vrot.lane.b32.xlu0 %v5476, 112
        %v5908 = vpop.permute.xlu0 %5907
        %5909 = vrot.lane.b32.xlu0 %v5478, 112
        %v5910 = vpop.permute.xlu0 %5909
        %5911 = vrot.lane.b32.xlu0 %v5480, 112
        %v5912 = vpop.permute.xlu0 %5911
        %v5913 = vsel %vm895, %v5882, %v5898
        %v5914 = vsel %vm895, %v5884, %v5900
        %v5915 = vsel %vm895, %v5886, %v5902
        %v5916 = vsel %vm895, %v5888, %v5904
        %v5917 = vsel %vm895, %v5890, %v5906
        %v5918 = vsel %vm895, %v5892, %v5908
        %v5919 = vsel %vm895, %v5894, %v5910
        %v5920 = vsel %vm895, %v5896, %v5912
        %v5921 = vsel %vm895, %v5898, %v5882
        %v5922 = vsel %vm895, %v5900, %v5884
        %v5923 = vsel %vm895, %v5902, %v5886
        %v5924 = vsel %vm895, %v5904, %v5888
        %v5925 = vsel %vm895, %v5906, %v5890
        %v5926 = vsel %vm895, %v5908, %v5892
        %v5927 = vsel %vm895, %v5910, %v5894
        %v5928 = vsel %vm895, %v5912, %v5896
        %v5929 = vmul.f32 %v5913, %v1896
        %v5930 = vmul.f32 %v5921, %v1900
        %v5931 = vmul.f32 %v5914, %v1896
        %v5932 = vmul.f32 %v5922, %v1900
        %v5933 = vmul.f32 %v5915, %v1896
        %v5934 = vmul.f32 %v5923, %v1900
        %v5935 = vmul.f32 %v5916, %v1896
        %v5936 = vmul.f32 %v5924, %v1900
        %v5937 = vmul.f32 %v5917, %v1896
        %v5938 = vmul.f32 %v5925, %v1900
        %v5939 = vmul.f32 %v5918, %v1896
        %v5940 = vmul.f32 %v5926, %v1900
        %v5941 = vmul.f32 %v5919, %v1896
        %v5942 = vmul.f32 %v5927, %v1900
        %v5943 = vmul.f32 %v5920, %v1896
        %v5944 = vmul.f32 %v5928, %v1900
        %5945 = vrot.lane.b32.xlu0 %v5465, 111
        %v5946 = vpop.permute.xlu0 %5945
        %5947 = vrot.lane.b32.xlu0 %v5467, 111
        %v5948 = vpop.permute.xlu0 %5947
        %5949 = vrot.lane.b32.xlu0 %v5469, 111
        %v5950 = vpop.permute.xlu0 %5949
        %5951 = vrot.lane.b32.xlu0 %v5471, 111
        %v5952 = vpop.permute.xlu0 %5951
        %5953 = vrot.lane.b32.xlu0 %v5473, 111
        %v5954 = vpop.permute.xlu0 %5953
        %5955 = vrot.lane.b32.xlu0 %v5475, 111
        %v5956 = vpop.permute.xlu0 %5955
        %5957 = vrot.lane.b32.xlu0 %v5477, 111
        %v5958 = vpop.permute.xlu0 %5957
        %5959 = vrot.lane.b32.xlu0 %v5479, 111
        %v5960 = vpop.permute.xlu0 %5959
        %5961 = vrot.lane.b32.xlu0 %v5466, 111
        %v5962 = vpop.permute.xlu0 %5961
        %5963 = vrot.lane.b32.xlu0 %v5468, 111
        %v5964 = vpop.permute.xlu0 %5963
        %5965 = vrot.lane.b32.xlu0 %v5470, 111
        %v5966 = vpop.permute.xlu0 %5965
        %5967 = vrot.lane.b32.xlu0 %v5472, 111
        %v5968 = vpop.permute.xlu0 %5967
        %5969 = vrot.lane.b32.xlu0 %v5474, 111
        %v5970 = vpop.permute.xlu0 %5969
        %5971 = vrot.lane.b32.xlu0 %v5476, 111
        %v5972 = vpop.permute.xlu0 %5971
        %5973 = vrot.lane.b32.xlu0 %v5478, 111
        %v5974 = vpop.permute.xlu0 %5973
        %5975 = vrot.lane.b32.xlu0 %v5480, 111
        %v5976 = vpop.permute.xlu0 %5975
        %v5977 = vsel %vm910, %v5946, %v5962
        %v5978 = vsel %vm910, %v5948, %v5964
        %v5979 = vsel %vm910, %v5950, %v5966
        %v5980 = vsel %vm910, %v5952, %v5968
        %v5981 = vsel %vm910, %v5954, %v5970
        %v5982 = vsel %vm910, %v5956, %v5972
        %v5983 = vsel %vm910, %v5958, %v5974
        %v5984 = vsel %vm910, %v5960, %v5976
        %v5985 = vsel %vm910, %v5962, %v5946
        %v5986 = vsel %vm910, %v5964, %v5948
        %v5987 = vsel %vm910, %v5966, %v5950
        %v5988 = vsel %vm910, %v5968, %v5952
        %v5989 = vsel %vm910, %v5970, %v5954
        %v5990 = vsel %vm910, %v5972, %v5956
        %v5991 = vsel %vm910, %v5974, %v5958
        %v5992 = vsel %vm910, %v5976, %v5960
        %v5993 = vmul.f32 %v5977, %v1968
        %v5994 = vmul.f32 %v5985, %v1972
        %v5995 = vmul.f32 %v5978, %v1968
        %v5996 = vmul.f32 %v5986, %v1972
        %v5997 = vmul.f32 %v5979, %v1968
        %v5998 = vmul.f32 %v5987, %v1972
        %v5999 = vmul.f32 %v5980, %v1968
        %v6000 = vmul.f32 %v5988, %v1972
        %v6001 = vmul.f32 %v5981, %v1968
        %v6002 = vmul.f32 %v5989, %v1972
        %v6003 = vmul.f32 %v5982, %v1968
        %v6004 = vmul.f32 %v5990, %v1972
        %v6005 = vmul.f32 %v5983, %v1968
        %v6006 = vmul.f32 %v5991, %v1972
        %v6007 = vmul.f32 %v5984, %v1968
        %v6008 = vmul.f32 %v5992, %v1972
        %v6009 = vld [vmem:[#allocation9] sm:$0xff]
        %v6010 = vld [vmem:[#allocation9 + $0x8] sm:$0xff]
        %v6011 = vld [vmem:[#allocation9 + $0x10] sm:$0xff]
        %v6012 = vld [vmem:[#allocation9 + $0x18] sm:$0xff]
        %v6013 = vld [vmem:[#allocation9 + $0x20] sm:$0xff]
        %v6014 = vld [vmem:[#allocation9 + $0x28] sm:$0xff]
        %v6015 = vld [vmem:[#allocation9 + $0x30] sm:$0xff]
        %v6016 = vld [vmem:[#allocation9 + $0x38] sm:$0xff]
        %v6017 = vld [vmem:[#allocation9 + $0x40] sm:$0xff]
        %v6018 = vld [vmem:[#allocation9 + $0x48] sm:$0xff]
        %v6019 = vld [vmem:[#allocation9 + $0x50] sm:$0xff]
        %v6020 = vld [vmem:[#allocation9 + $0x58] sm:$0xff]
        %v6021 = vld [vmem:[#allocation9 + $0x60] sm:$0xff]
        %v6022 = vld [vmem:[#allocation9 + $0x68] sm:$0xff]
        %v6023 = vld [vmem:[#allocation9 + $0x70] sm:$0xff]
        %v6024 = vld [vmem:[#allocation9 + $0x78] sm:$0xff]
        %v6025 = vld [vmem:[#allocation9 + $0x80] sm:$0xff]
        %v6026 = vld [vmem:[#allocation9 + $0x88] sm:$0xff]
        %v6027 = vld [vmem:[#allocation9 + $0x90] sm:$0xff]
        %v6028 = vld [vmem:[#allocation9 + $0x98] sm:$0xff]
        %v6029 = vld [vmem:[#allocation9 + $0xa0] sm:$0xff]
        %v6030 = vld [vmem:[#allocation9 + $0xa8] sm:$0xff]
        %v6031 = vld [vmem:[#allocation9 + $0xb0] sm:$0xff]
        %v6032 = vld [vmem:[#allocation9 + $0xb8] sm:$0xff]
        %v6033 = vld [vmem:[#allocation9 + $0xc0] sm:$0xff]
        %v6034 = vld [vmem:[#allocation9 + $0xc8] sm:$0xff]
        %v6035 = vld [vmem:[#allocation9 + $0xd0] sm:$0xff]
        %v6036 = vld [vmem:[#allocation9 + $0xd8] sm:$0xff]
        %v6037 = vld [vmem:[#allocation9 + $0xe0] sm:$0xff]
        %v6038 = vld [vmem:[#allocation9 + $0xe8] sm:$0xff]
        %v6039 = vld [vmem:[#allocation9 + $0xf0] sm:$0xff]
        %v6040 = vld [vmem:[#allocation9 + $0xf8] sm:$0xff]
        %v6041 = vld [vmem:[#allocation9 + $0x100] sm:$0xff]
        %v6042 = vld [vmem:[#allocation9 + $0x108] sm:$0xff]
        %v6043 = vld [vmem:[#allocation9 + $0x110] sm:$0xff]
        %v6044 = vld [vmem:[#allocation9 + $0x118] sm:$0xff]
        %v6045 = vld [vmem:[#allocation9 + $0x120] sm:$0xff]
        %v6046 = vld [vmem:[#allocation9 + $0x128] sm:$0xff]
        %v6047 = vld [vmem:[#allocation9 + $0x130] sm:$0xff]
        %v6048 = vld [vmem:[#allocation9 + $0x138] sm:$0xff]
        %v6049 = vld [vmem:[%s12] sm:$0xff]
        %v6050 = vld [vmem:[%s12 + $0x8] sm:$0xff]
        %v6051 = vld [vmem:[%s12 + $0x10] sm:$0xff]
        %v6052 = vld [vmem:[%s12 + $0x18] sm:$0xff]
        %v6053 = vld [vmem:[%s12 + $0x20] sm:$0xff]
        %v6054 = vld [vmem:[%s12 + $0x28] sm:$0xff]
        %v6055 = vld [vmem:[%s12 + $0x30] sm:$0xff]
        %v6056 = vld [vmem:[%s12 + $0x38] sm:$0xff]
        %6058 = vset.pattern.permute.xlu0 0
        %6059 = vperm.xlu0 %6058, %v6049
        %v6060 = vpop.permute.xlu0 %6059
        %6063 = vset.pattern.permute.xlu0 0
        %6064 = vperm.xlu0 %6063, %v6050
        %v6065 = vpop.permute.xlu0 %6064
        %6068 = vset.pattern.permute.xlu0 0
        %6069 = vperm.xlu0 %6068, %v6051
        %v6070 = vpop.permute.xlu0 %6069
        %6073 = vset.pattern.permute.xlu0 0
        %6074 = vperm.xlu0 %6073, %v6052
        %v6075 = vpop.permute.xlu0 %6074
        %6078 = vset.pattern.permute.xlu0 0
        %6079 = vperm.xlu0 %6078, %v6053
        %v6080 = vpop.permute.xlu0 %6079
        %6083 = vset.pattern.permute.xlu0 0
        %6084 = vperm.xlu0 %6083, %v6054
        %v6085 = vpop.permute.xlu0 %6084
        %6088 = vset.pattern.permute.xlu0 0
        %6089 = vperm.xlu0 %6088, %v6055
        %v6090 = vpop.permute.xlu0 %6089
        %6093 = vset.pattern.permute.xlu0 0
        %6094 = vperm.xlu0 %6093, %v6056
        %v6095 = vpop.permute.xlu0 %6094
        %v6098 = vsel %vm2165, %v6013, 0
        %v6101 = vsel %vm2165, %v6018, 0
        %v6104 = vsel %vm2165, %v6023, 0
        %v6107 = vsel %vm2165, %v6028, 0
        %v6110 = vsel %vm2165, %v6033, 0
        %v6113 = vsel %vm2165, %v6038, 0
        %v6116 = vsel %vm2165, %v6043, 0
        %v6119 = vsel %vm2165, %v6048, 0
        %6121 = vmatprep.subr.mxu0 %v5530
        %6122 = vmatpush1.msra.mxu0 %v5529
        %6123 = vmatprep.subr.mxu0 %v5532
        %6124 = vmatpush1.msra.mxu0 %v5531
        %6125 = vmatprep.subr.mxu0 %v5534
        %6126 = vmatpush1.msra.mxu0 %v5533
        %6127 = vmatprep.subr.mxu0 %v5536
        %6128 = vmatpush1.msra.mxu0 %v5535
        %6129 = vmatprep.subr.mxu0 %v5538
        %6130 = vmatpush1.msra.mxu0 %v5537
        %6131 = vmatprep.subr.mxu0 %v5540
        %6132 = vmatpush1.msra.mxu0 %v5539
        %6133 = vmatprep.subr.mxu0 %v5542
        %6134 = vmatpush1.msra.mxu0 %v5541
        %6135 = vmatprep.subr.mxu0 %v5544
        %6136 = vmatpush1.msra.mxu0 %v5543
        %6137 = vmatprep.subr.mxu0 %v5594
        %6138 = vmatpush1.msra.mxu0 %v5593
        %6139 = vmatprep.subr.mxu0 %v5596
        %6140 = vmatpush1.msra.mxu0 %v5595
        %6141 = vmatprep.subr.mxu0 %v5598
        %6142 = vmatpush1.msra.mxu0 %v5597
        %6143 = vmatprep.subr.mxu0 %v5600
        %6144 = vmatpush1.msra.mxu0 %v5599
        %6145 = vmatprep.subr.mxu0 %v5602
        %6146 = vmatpush1.msra.mxu0 %v5601
        %6147 = vmatprep.subr.mxu0 %v5604
        %6148 = vmatpush1.msra.mxu0 %v5603
        %6149 = vmatprep.subr.mxu0 %v5606
        %6150 = vmatpush1.msra.mxu0 %v5605
        %6151 = vmatprep.subr.mxu0 %v5608
        %6152 = vmatpush1.msra.mxu0 %v5607
        %6153 = vmatprep.subr.mxu0 %v5658
        %6154 = vmatpush1.msra.mxu0 %v5657
        %6155 = vmatprep.subr.mxu0 %v5660
        %6156 = vmatpush1.msra.mxu0 %v5659
        %6157 = vmatprep.subr.mxu0 %v5662
        %6158 = vmatpush1.msra.mxu0 %v5661
        %6159 = vmatprep.subr.mxu0 %v5664
        %6160 = vmatpush1.msra.mxu0 %v5663
        %6161 = vmatprep.subr.mxu0 %v5666
        %6162 = vmatpush1.msra.mxu0 %v5665
        %6163 = vmatprep.subr.mxu0 %v5668
        %6164 = vmatpush1.msra.mxu0 %v5667
        %6165 = vmatprep.subr.mxu0 %v5670
        %6166 = vmatpush1.msra.mxu0 %v5669
        %6167 = vmatprep.subr.mxu0 %v5672
        %6168 = vmatpush1.msra.mxu0 %v5671
        %6169 = vmatprep.subr.mxu0 %v5722
        %6170 = vmatpush1.msra.mxu0 %v5721
        %6171 = vmatprep.subr.mxu0 %v5724
        %6172 = vmatpush1.msra.mxu0 %v5723
        %6173 = vmatprep.subr.mxu0 %v5726
        %6174 = vmatpush1.msra.mxu0 %v5725
        %6175 = vmatprep.subr.mxu0 %v5728
        %6176 = vmatpush1.msra.mxu0 %v5727
        %6177 = vmatprep.subr.mxu0 %v5730
        %6178 = vmatpush1.msra.mxu0 %v5729
        %6179 = vmatprep.subr.mxu0 %v5732
        %6180 = vmatpush1.msra.mxu0 %v5731
        %6181 = vmatprep.subr.mxu0 %v5734
        %6182 = vmatpush1.msra.mxu0 %v5733
        %6183 = vmatprep.subr.mxu0 %v5736
        %6184 = vmatpush1.msra.mxu0 %v5735
        %6185 = vmatprep.mubr.f32.mxu0 %v6010
        %6186 = vmatmul.mubr.f32.gmra.mrb[0].mxu0 %v6009
        %v6187 = vpop.f32.mrb[0].mxu0
        %v6188 = vadd.f32 %v6060, %v6187
        %v6189 = vpop.f32.mrb[0].mxu0
        %v6190 = vadd.f32 %v6060, %v6189
        %6191 = vmatprep.mubr.f32.mxu0 %v6015
        %6192 = vmatmul.mubr.f32.gmra.mrb[0].mxu0 %v6014
        %v6193 = vpop.f32.mrb[0].mxu0
        %v6194 = vadd.f32 %v6065, %v6193
        %v6195 = vpop.f32.mrb[0].mxu0
        %v6196 = vadd.f32 %v6065, %v6195
        %6197 = vmatprep.mubr.f32.mxu0 %v6020
        %6198 = vmatmul.mubr.f32.gmra.mrb[0].mxu0 %v6019
        %v6199 = vpop.f32.mrb[0].mxu0
        %v6200 = vadd.f32 %v6070, %v6199
        %v6201 = vpop.f32.mrb[0].mxu0
        %v6202 = vadd.f32 %v6070, %v6201
        %6203 = vmatprep.mubr.f32.mxu0 %v6025
        %6204 = vmatmul.mubr.f32.gmra.mrb[0].mxu0 %v6024
        %v6205 = vpop.f32.mrb[0].mxu0
        %v6206 = vadd.f32 %v6075, %v6205
        %v6207 = vpop.f32.mrb[0].mxu0
        %v6208 = vadd.f32 %v6075, %v6207
        %6209 = vmatprep.mubr.f32.mxu0 %v6030
        %6210 = vmatmul.mubr.f32.gmra.mrb[0].mxu0 %v6029
        %v6211 = vpop.f32.mrb[0].mxu0
        %v6212 = vadd.f32 %v6080, %v6211
        %v6213 = vpop.f32.mrb[0].mxu0
        %v6214 = vadd.f32 %v6080, %v6213
        %6215 = vmatprep.mubr.f32.mxu0 %v6035
        %6216 = vmatmul.mubr.f32.gmra.mrb[0].mxu0 %v6034
        %v6217 = vpop.f32.mrb[0].mxu0
        %v6218 = vadd.f32 %v6085, %v6217
        %v6219 = vpop.f32.mrb[0].mxu0
        %v6220 = vadd.f32 %v6085, %v6219
        %6221 = vmatprep.mubr.f32.mxu0 %v6040
        %6222 = vmatmul.mubr.f32.gmra.mrb[0].mxu0 %v6039
        %v6223 = vpop.f32.mrb[0].mxu0
        %v6224 = vadd.f32 %v6090, %v6223
        %v6225 = vpop.f32.mrb[0].mxu0
        %v6226 = vadd.f32 %v6090, %v6225
        %6227 = vmatprep.mubr.f32.mxu0 %v6045
        %6228 = vmatmul.mubr.f32.gmra.mrb[0].mxu0 %v6044
        %v6229 = vpop.f32.mrb[0].mxu0
        %v6230 = vadd.f32 %v6095, %v6229
        %v6231 = vpop.f32.mrb[0].mxu0
        %v6232 = vadd.f32 %v6095, %v6231
        %6233 = vdwg.mxu0
        %6234 = vmatprep.subr.mxu0 %v5738
        %6235 = vmatpush1.msra.mxu0 %v5737
        %6236 = vmatprep.subr.mxu0 %v5740
        %6237 = vmatpush1.msra.mxu0 %v5739
        %6238 = vmatprep.subr.mxu0 %v5742
        %6239 = vmatpush1.msra.mxu0 %v5741
        %6240 = vmatprep.subr.mxu0 %v5744
        %6241 = vmatpush1.msra.mxu0 %v5743
        %6242 = vmatprep.subr.mxu0 %v5746
        %6243 = vmatpush1.msra.mxu0 %v5745
        %6244 = vmatprep.subr.mxu0 %v5748
        %6245 = vmatpush1.msra.mxu0 %v5747
        %6246 = vmatprep.subr.mxu0 %v5750
        %6247 = vmatpush1.msra.mxu0 %v5749
        %6248 = vmatprep.subr.mxu0 %v5752
        %6249 = vmatpush1.msra.mxu0 %v5751
        %6250 = vmatprep.subr.mxu0 %v5802
        %6251 = vmatpush1.msra.mxu0 %v5801
        %6252 = vmatprep.subr.mxu0 %v5804
        %6253 = vmatpush1.msra.mxu0 %v5803
        %6254 = vmatprep.subr.mxu0 %v5806
        %6255 = vmatpush1.msra.mxu0 %v5805
        %6256 = vmatprep.subr.mxu0 %v5808
        %6257 = vmatpush1.msra.mxu0 %v5807
        %6258 = vmatprep.subr.mxu0 %v5810
        %6259 = vmatpush1.msra.mxu0 %v5809
        %6260 = vmatprep.subr.mxu0 %v5812
        %6261 = vmatpush1.msra.mxu0 %v5811
        %6262 = vmatprep.subr.mxu0 %v5814
        %6263 = vmatpush1.msra.mxu0 %v5813
        %6264 = vmatprep.subr.mxu0 %v5816
        %6265 = vmatpush1.msra.mxu0 %v5815
        %6266 = vmatprep.subr.mxu0 %v5866
        %6267 = vmatpush1.msra.mxu0 %v5865
        %6268 = vmatprep.subr.mxu0 %v5868
        %6269 = vmatpush1.msra.mxu0 %v5867
        %6270 = vmatprep.subr.mxu0 %v5870
        %6271 = vmatpush1.msra.mxu0 %v5869
        %6272 = vmatprep.subr.mxu0 %v5872
        %6273 = vmatpush1.msra.mxu0 %v5871
        %6274 = vmatprep.subr.mxu0 %v5874
        %6275 = vmatpush1.msra.mxu0 %v5873
        %6276 = vmatprep.subr.mxu0 %v5876
        %6277 = vmatpush1.msra.mxu0 %v5875
        %6278 = vmatprep.subr.mxu0 %v5878
        %6279 = vmatpush1.msra.mxu0 %v5877
        %6280 = vmatprep.subr.mxu0 %v5880
        %6281 = vmatpush1.msra.mxu0 %v5879
        %6282 = vmatprep.subr.mxu0 %v5930
        %6283 = vmatpush1.msra.mxu0 %v5929
        %6284 = vmatprep.subr.mxu0 %v5932
        %6285 = vmatpush1.msra.mxu0 %v5931
        %6286 = vmatprep.subr.mxu0 %v5934
        %6287 = vmatpush1.msra.mxu0 %v5933
        %6288 = vmatprep.subr.mxu0 %v5936
        %6289 = vmatpush1.msra.mxu0 %v5935
        %6290 = vmatprep.subr.mxu0 %v5938
        %6291 = vmatpush1.msra.mxu0 %v5937
        %6292 = vmatprep.subr.mxu0 %v5940
        %6293 = vmatpush1.msra.mxu0 %v5939
        %6294 = vmatprep.subr.mxu0 %v5942
        %6295 = vmatpush1.msra.mxu0 %v5941
        %6296 = vmatprep.subr.mxu0 %v5944
        %6297 = vmatpush1.msra.mxu0 %v5943
        %6298 = vmatprep.mubr.f32.mxu0 %v6012
        %6299 = vmatmul.mubr.f32.gmra.mrb[0].mxu0 %v6011
        %v6300 = vpop.f32.mrb[0].mxu0
        %v6301 = vadd.f32 %v6188, %v6300
        %v6302 = vpop.f32.mrb[0].mxu0
        %v6303 = vadd.f32 %v6190, %v6302
        %6304 = vmatprep.mubr.f32.mxu0 %v6017
        %6305 = vmatmul.mubr.f32.gmra.mrb[0].mxu0 %v6016
        %v6306 = vpop.f32.mrb[0].mxu0
        %v6307 = vadd.f32 %v6194, %v6306
        %v6308 = vpop.f32.mrb[0].mxu0
        %v6309 = vadd.f32 %v6196, %v6308
        %6310 = vmatprep.mubr.f32.mxu0 %v6022
        %6311 = vmatmul.mubr.f32.gmra.mrb[0].mxu0 %v6021
        %v6312 = vpop.f32.mrb[0].mxu0
        %v6313 = vadd.f32 %v6200, %v6312
        %v6314 = vpop.f32.mrb[0].mxu0
        %v6315 = vadd.f32 %v6202, %v6314
        %6316 = vmatprep.mubr.f32.mxu0 %v6027
        %6317 = vmatmul.mubr.f32.gmra.mrb[0].mxu0 %v6026
        %v6318 = vpop.f32.mrb[0].mxu0
        %v6319 = vadd.f32 %v6206, %v6318
        %v6320 = vpop.f32.mrb[0].mxu0
        %v6321 = vadd.f32 %v6208, %v6320
        %6322 = vmatprep.mubr.f32.mxu0 %v6032
        %6323 = vmatmul.mubr.f32.gmra.mrb[0].mxu0 %v6031
        %v6324 = vpop.f32.mrb[0].mxu0
        %v6325 = vadd.f32 %v6212, %v6324
        %v6326 = vpop.f32.mrb[0].mxu0
        %v6327 = vadd.f32 %v6214, %v6326
        %6328 = vmatprep.mubr.f32.mxu0 %v6037
        %6329 = vmatmul.mubr.f32.gmra.mrb[0].mxu0 %v6036
        %v6330 = vpop.f32.mrb[0].mxu0
        %v6331 = vadd.f32 %v6218, %v6330
        %v6332 = vpop.f32.mrb[0].mxu0
        %v6333 = vadd.f32 %v6220, %v6332
        %6334 = vmatprep.mubr.f32.mxu0 %v6042
        %6335 = vmatmul.mubr.f32.gmra.mrb[0].mxu0 %v6041
        %v6336 = vpop.f32.mrb[0].mxu0
        %v6337 = vadd.f32 %v6224, %v6336
        %v6338 = vpop.f32.mrb[0].mxu0
        %v6339 = vadd.f32 %v6226, %v6338
        %6340 = vmatprep.mubr.f32.mxu0 %v6047
        %6341 = vmatmul.mubr.f32.gmra.mrb[0].mxu0 %v6046
        %v6342 = vpop.f32.mrb[0].mxu0
        %v6343 = vadd.f32 %v6230, %v6342
        %v6344 = vpop.f32.mrb[0].mxu0
        %v6345 = vadd.f32 %v6232, %v6344
        %6346 = vdwg.mxu0
        %6347 = vmatprep.subr.mxu0 %v5994
        %6348 = vmatpush1.msra.mxu0 %v5993
        %6349 = vmatprep.subr.mxu0 %v5996
        %6350 = vmatpush1.msra.mxu0 %v5995
        %6351 = vmatprep.subr.mxu0 %v5998
        %6352 = vmatpush1.msra.mxu0 %v5997
        %6353 = vmatprep.subr.mxu0 %v6000
        %6354 = vmatpush1.msra.mxu0 %v5999
        %6355 = vmatprep.subr.mxu0 %v6002
        %6356 = vmatpush1.msra.mxu0 %v6001
        %6357 = vmatprep.subr.mxu0 %v6004
        %6358 = vmatpush1.msra.mxu0 %v6003
        %6359 = vmatprep.subr.mxu0 %v6006
        %6360 = vmatpush1.msra.mxu0 %v6005
        %6361 = vmatprep.subr.mxu0 %v6008
        %6362 = vmatpush1.msra.mxu0 %v6007
        %6363 = vmatprep.subr.mxu0 0.0
        %6364 = vmatpush1.msra.mxu0 0.0
        %6365 = vmatprep.subr.mxu0 0.0
        %6366 = vmatpush1.msra.mxu0 0.0
        %6367 = vmatprep.subr.mxu0 0.0
        %6368 = vmatpush1.msra.mxu0 0.0
        %6369 = vmatprep.subr.mxu0 0.0
        %6370 = vmatpush1.msra.mxu0 0.0
        %6371 = vmatprep.subr.mxu0 0.0
        %6372 = vmatpush1.msra.mxu0 0.0
        %6373 = vmatprep.subr.mxu0 0.0
        %6374 = vmatpush1.msra.mxu0 0.0
        %6375 = vmatprep.subr.mxu0 0.0
        %6376 = vmatpush1.msra.mxu0 0.0
        %6377 = vmatprep.subr.mxu0 0.0
        %6378 = vmatpush1.msra.mxu0 0.0
        %6379 = vmatprep.subr.mxu0 0.0
        %6380 = vmatpush1.msra.mxu0 0.0
        %6381 = vmatprep.subr.mxu0 0.0
        %6382 = vmatpush1.msra.mxu0 0.0
        %6383 = vmatprep.subr.mxu0 0.0
        %6384 = vmatpush1.msra.mxu0 0.0
        %6385 = vmatprep.subr.mxu0 0.0
        %6386 = vmatpush1.msra.mxu0 0.0
        %6387 = vmatprep.subr.mxu0 0.0
        %6388 = vmatpush1.msra.mxu0 0.0
        %6389 = vmatprep.subr.mxu0 0.0
        %6390 = vmatpush1.msra.mxu0 0.0
        %6391 = vmatprep.subr.mxu0 0.0
        %6392 = vmatpush1.msra.mxu0 0.0
        %6393 = vmatprep.subr.mxu0 0.0
        %6394 = vmatpush1.msra.mxu0 0.0
        %6395 = vmatprep.subr.mxu0 0.0
        %6396 = vmatpush1.msra.mxu0 0.0
        %6397 = vmatprep.subr.mxu0 0.0
        %6398 = vmatpush1.msra.mxu0 0.0
        %6399 = vmatprep.subr.mxu0 0.0
        %6400 = vmatpush1.msra.mxu0 0.0
        %6401 = vmatprep.subr.mxu0 0.0
        %6402 = vmatpush1.msra.mxu0 0.0
        %6403 = vmatprep.subr.mxu0 0.0
        %6404 = vmatpush1.msra.mxu0 0.0
        %6405 = vmatprep.subr.mxu0 0.0
        %6406 = vmatpush1.msra.mxu0 0.0
        %6407 = vmatprep.subr.mxu0 0.0
        %6408 = vmatpush1.msra.mxu0 0.0
        %6409 = vmatprep.subr.mxu0 0.0
        %6410 = vmatpush1.msra.mxu0 0.0
        %6411 = vmatprep.mubr.f32.mxu0 0.0
        %6412 = vmatmul.mubr.f32.gmra.mrb[0].mxu0 %v6098
        %v6413 = vpop.f32.mrb[0].mxu0
        %v6414 = vadd.f32 %v6301, %v6413
        %v6415 = vpop.f32.mrb[0].mxu0
        %v6416 = vadd.f32 %v6303, %v6415
        %6417 = vmatprep.mubr.f32.mxu0 0.0
        %6418 = vmatmul.mubr.f32.gmra.mrb[0].mxu0 %v6101
        %v6419 = vpop.f32.mrb[0].mxu0
        %v6420 = vadd.f32 %v6307, %v6419
        %v6421 = vpop.f32.mrb[0].mxu0
        %v6422 = vadd.f32 %v6309, %v6421
        %6423 = vmatprep.mubr.f32.mxu0 0.0
        %6424 = vmatmul.mubr.f32.gmra.mrb[0].mxu0 %v6104
        %v6425 = vpop.f32.mrb[0].mxu0
        %v6426 = vadd.f32 %v6313, %v6425
        %v6427 = vpop.f32.mrb[0].mxu0
        %v6428 = vadd.f32 %v6315, %v6427
        %6429 = vmatprep.mubr.f32.mxu0 0.0
        %6430 = vmatmul.mubr.f32.gmra.mrb[0].mxu0 %v6107
        %v6431 = vpop.f32.mrb[0].mxu0
        %v6432 = vadd.f32 %v6319, %v6431
        %v6433 = vpop.f32.mrb[0].mxu0
        %v6434 = vadd.f32 %v6321, %v6433
        %6435 = vmatprep.mubr.f32.mxu0 0.0
        %6436 = vmatmul.mubr.f32.gmra.mrb[0].mxu0 %v6110
        %v6437 = vpop.f32.mrb[0].mxu0
        %v6438 = vadd.f32 %v6325, %v6437
        %v6439 = vpop.f32.mrb[0].mxu0
        %v6440 = vadd.f32 %v6327, %v6439
        %6441 = vmatprep.mubr.f32.mxu0 0.0
        %6442 = vmatmul.mubr.f32.gmra.mrb[0].mxu0 %v6113
        %v6443 = vpop.f32.mrb[0].mxu0
        %v6444 = vadd.f32 %v6331, %v6443
        %v6445 = vpop.f32.mrb[0].mxu0
        %v6446 = vadd.f32 %v6333, %v6445
        %6447 = vmatprep.mubr.f32.mxu0 0.0
        %6448 = vmatmul.mubr.f32.gmra.mrb[0].mxu0 %v6116
        %v6449 = vpop.f32.mrb[0].mxu0
        %v6450 = vadd.f32 %v6337, %v6449
        %v6451 = vpop.f32.mrb[0].mxu0
        %v6452 = vadd.f32 %v6339, %v6451
        %6453 = vmatprep.mubr.f32.mxu0 0.0
        %6454 = vmatmul.mubr.f32.gmra.mrb[0].mxu0 %v6119
        %v6455 = vpop.f32.mrb[0].mxu0
        %v6456 = vadd.f32 %v6343, %v6455
        %v6457 = vpop.f32.mrb[0].mxu0
        %v6458 = vadd.f32 %v6345, %v6457
        %6459 = vdwg.mxu0
        %v6460 = vmax.f32 %v6414, 0.0
        %v6461 = vmax.f32 %v6416, 0.0
        %v6462 = vmax.f32 %v6420, 0.0
        %v6463 = vmax.f32 %v6422, 0.0
        %v6464 = vmax.f32 %v6426, 0.0
        %v6465 = vmax.f32 %v6428, 0.0
        %v6466 = vmax.f32 %v6432, 0.0
        %v6467 = vmax.f32 %v6434, 0.0
        %v6468 = vmax.f32 %v6438, 0.0
        %v6469 = vmax.f32 %v6440, 0.0
        %v6470 = vmax.f32 %v6444, 0.0
        %v6471 = vmax.f32 %v6446, 0.0
        %v6472 = vmax.f32 %v6450, 0.0
        %v6473 = vmax.f32 %v6452, 0.0
        %v6474 = vmax.f32 %v6456, 0.0
        %v6475 = vmax.f32 %v6458, 0.0
        %6476 = vrot.lane.b32.xlu0 %v6460, 17
        %v6477 = vpop.permute.xlu0 %6476
        %6478 = vrot.lane.b32.xlu0 %v6462, 17
        %v6479 = vpop.permute.xlu0 %6478
        %6480 = vrot.lane.b32.xlu0 %v6464, 17
        %v6481 = vpop.permute.xlu0 %6480
        %6482 = vrot.lane.b32.xlu0 %v6466, 17
        %v6483 = vpop.permute.xlu0 %6482
        %6484 = vrot.lane.b32.xlu0 %v6468, 17
        %v6485 = vpop.permute.xlu0 %6484
        %6486 = vrot.lane.b32.xlu0 %v6470, 17
        %v6487 = vpop.permute.xlu0 %6486
        %6488 = vrot.lane.b32.xlu0 %v6472, 17
        %v6489 = vpop.permute.xlu0 %6488
        %6490 = vrot.lane.b32.xlu0 %v6474, 17
        %v6491 = vpop.permute.xlu0 %6490
        %6492 = vrot.lane.b32.xlu0 %v6461, 17
        %v6493 = vpop.permute.xlu0 %6492
        %6494 = vrot.lane.b32.xlu0 %v6463, 17
        %v6495 = vpop.permute.xlu0 %6494
        %6496 = vrot.lane.b32.xlu0 %v6465, 17
        %v6497 = vpop.permute.xlu0 %6496
        %6498 = vrot.lane.b32.xlu0 %v6467, 17
        %v6499 = vpop.permute.xlu0 %6498
        %6500 = vrot.lane.b32.xlu0 %v6469, 17
        %v6501 = vpop.permute.xlu0 %6500
        %6502 = vrot.lane.b32.xlu0 %v6471, 17
        %v6503 = vpop.permute.xlu0 %6502
        %6504 = vrot.lane.b32.xlu0 %v6473, 17
        %v6505 = vpop.permute.xlu0 %6504
        %6506 = vrot.lane.b32.xlu0 %v6475, 17
        %v6507 = vpop.permute.xlu0 %6506
        %v6508 = vsel %vm754, %v6477, %v6493
        %v6509 = vsel %vm754, %v6479, %v6495
        %v6510 = vsel %vm754, %v6481, %v6497
        %v6511 = vsel %vm754, %v6483, %v6499
        %v6512 = vsel %vm754, %v6485, %v6501
        %v6513 = vsel %vm754, %v6487, %v6503
        %v6514 = vsel %vm754, %v6489, %v6505
        %v6515 = vsel %vm754, %v6491, %v6507
        %v6516 = vsel %vm754, %v6493, %v6477
        %v6517 = vsel %vm754, %v6495, %v6479
        %v6518 = vsel %vm754, %v6497, %v6481
        %v6519 = vsel %vm754, %v6499, %v6483
        %v6520 = vsel %vm754, %v6501, %v6485
        %v6521 = vsel %vm754, %v6503, %v6487
        %v6522 = vsel %vm754, %v6505, %v6489
        %v6523 = vsel %vm754, %v6507, %v6491
        %v6524 = vmul.f32 %v6516, %v1440
        %v6525 = vmul.f32 %v6508, %v1444
        %v6526 = vmul.f32 %v6517, %v1440
        %v6527 = vmul.f32 %v6509, %v1444
        %v6528 = vmul.f32 %v6518, %v1440
        %v6529 = vmul.f32 %v6510, %v1444
        %v6530 = vmul.f32 %v6519, %v1440
        %v6531 = vmul.f32 %v6511, %v1444
        %v6532 = vmul.f32 %v6520, %v1440
        %v6533 = vmul.f32 %v6512, %v1444
        %v6534 = vmul.f32 %v6521, %v1440
        %v6535 = vmul.f32 %v6513, %v1444
        %v6536 = vmul.f32 %v6522, %v1440
        %v6537 = vmul.f32 %v6514, %v1444
        %v6538 = vmul.f32 %v6523, %v1440
        %v6539 = vmul.f32 %v6515, %v1444
        %6540 = vrot.lane.b32.xlu0 %v6460, 16
        %v6541 = vpop.permute.xlu0 %6540
        %6542 = vrot.lane.b32.xlu0 %v6462, 16
        %v6543 = vpop.permute.xlu0 %6542
        %6544 = vrot.lane.b32.xlu0 %v6464, 16
        %v6545 = vpop.permute.xlu0 %6544
        %6546 = vrot.lane.b32.xlu0 %v6466, 16
        %v6547 = vpop.permute.xlu0 %6546
        %6548 = vrot.lane.b32.xlu0 %v6468, 16
        %v6549 = vpop.permute.xlu0 %6548
        %6550 = vrot.lane.b32.xlu0 %v6470, 16
        %v6551 = vpop.permute.xlu0 %6550
        %6552 = vrot.lane.b32.xlu0 %v6472, 16
        %v6553 = vpop.permute.xlu0 %6552
        %6554 = vrot.lane.b32.xlu0 %v6474, 16
        %v6555 = vpop.permute.xlu0 %6554
        %6556 = vrot.lane.b32.xlu0 %v6461, 16
        %v6557 = vpop.permute.xlu0 %6556
        %6558 = vrot.lane.b32.xlu0 %v6463, 16
        %v6559 = vpop.permute.xlu0 %6558
        %6560 = vrot.lane.b32.xlu0 %v6465, 16
        %v6561 = vpop.permute.xlu0 %6560
        %6562 = vrot.lane.b32.xlu0 %v6467, 16
        %v6563 = vpop.permute.xlu0 %6562
        %6564 = vrot.lane.b32.xlu0 %v6469, 16
        %v6565 = vpop.permute.xlu0 %6564
        %6566 = vrot.lane.b32.xlu0 %v6471, 16
        %v6567 = vpop.permute.xlu0 %6566
        %6568 = vrot.lane.b32.xlu0 %v6473, 16
        %v6569 = vpop.permute.xlu0 %6568
        %6570 = vrot.lane.b32.xlu0 %v6475, 16
        %v6571 = vpop.permute.xlu0 %6570
        %v6572 = vsel %vm767, %v6541, %v6557
        %v6573 = vsel %vm767, %v6543, %v6559
        %v6574 = vsel %vm767, %v6545, %v6561
        %v6575 = vsel %vm767, %v6547, %v6563
        %v6576 = vsel %vm767, %v6549, %v6565
        %v6577 = vsel %vm767, %v6551, %v6567
        %v6578 = vsel %vm767, %v6553, %v6569
        %v6579 = vsel %vm767, %v6555, %v6571
        %v6580 = vsel %vm767, %v6557, %v6541
        %v6581 = vsel %vm767, %v6559, %v6543
        %v6582 = vsel %vm767, %v6561, %v6545
        %v6583 = vsel %vm767, %v6563, %v6547
        %v6584 = vsel %vm767, %v6565, %v6549
        %v6585 = vsel %vm767, %v6567, %v6551
        %v6586 = vsel %vm767, %v6569, %v6553
        %v6587 = vsel %vm767, %v6571, %v6555
        %v6588 = vmul.f32 %v6580, %v1512
        %v6589 = vmul.f32 %v6572, %v1516
        %v6590 = vmul.f32 %v6581, %v1512
        %v6591 = vmul.f32 %v6573, %v1516
        %v6592 = vmul.f32 %v6582, %v1512
        %v6593 = vmul.f32 %v6574, %v1516
        %v6594 = vmul.f32 %v6583, %v1512
        %v6595 = vmul.f32 %v6575, %v1516
        %v6596 = vmul.f32 %v6584, %v1512
        %v6597 = vmul.f32 %v6576, %v1516
        %v6598 = vmul.f32 %v6585, %v1512
        %v6599 = vmul.f32 %v6577, %v1516
        %v6600 = vmul.f32 %v6586, %v1512
        %v6601 = vmul.f32 %v6578, %v1516
        %v6602 = vmul.f32 %v6587, %v1512
        %v6603 = vmul.f32 %v6579, %v1516
        %6604 = vrot.lane.b32.xlu0 %v6460, 15
        %v6605 = vpop.permute.xlu0 %6604
        %6606 = vrot.lane.b32.xlu0 %v6462, 15
        %v6607 = vpop.permute.xlu0 %6606
        %6608 = vrot.lane.b32.xlu0 %v6464, 15
        %v6609 = vpop.permute.xlu0 %6608
        %6610 = vrot.lane.b32.xlu0 %v6466, 15
        %v6611 = vpop.permute.xlu0 %6610
        %6612 = vrot.lane.b32.xlu0 %v6468, 15
        %v6613 = vpop.permute.xlu0 %6612
        %6614 = vrot.lane.b32.xlu0 %v6470, 15
        %v6615 = vpop.permute.xlu0 %6614
        %6616 = vrot.lane.b32.xlu0 %v6472, 15
        %v6617 = vpop.permute.xlu0 %6616
        %6618 = vrot.lane.b32.xlu0 %v6474, 15
        %v6619 = vpop.permute.xlu0 %6618
        %6620 = vrot.lane.b32.xlu0 %v6461, 15
        %v6621 = vpop.permute.xlu0 %6620
        %6622 = vrot.lane.b32.xlu0 %v6463, 15
        %v6623 = vpop.permute.xlu0 %6622
        %6624 = vrot.lane.b32.xlu0 %v6465, 15
        %v6625 = vpop.permute.xlu0 %6624
        %6626 = vrot.lane.b32.xlu0 %v6467, 15
        %v6627 = vpop.permute.xlu0 %6626
        %6628 = vrot.lane.b32.xlu0 %v6469, 15
        %v6629 = vpop.permute.xlu0 %6628
        %6630 = vrot.lane.b32.xlu0 %v6471, 15
        %v6631 = vpop.permute.xlu0 %6630
        %6632 = vrot.lane.b32.xlu0 %v6473, 15
        %v6633 = vpop.permute.xlu0 %6632
        %6634 = vrot.lane.b32.xlu0 %v6475, 15
        %v6635 = vpop.permute.xlu0 %6634
        %v6636 = vsel %vm780, %v6605, %v6621
        %v6637 = vsel %vm780, %v6607, %v6623
        %v6638 = vsel %vm780, %v6609, %v6625
        %v6639 = vsel %vm780, %v6611, %v6627
        %v6640 = vsel %vm780, %v6613, %v6629
        %v6641 = vsel %vm780, %v6615, %v6631
        %v6642 = vsel %vm780, %v6617, %v6633
        %v6643 = vsel %vm780, %v6619, %v6635
        %v6644 = vsel %vm780, %v6621, %v6605
        %v6645 = vsel %vm780, %v6623, %v6607
        %v6646 = vsel %vm780, %v6625, %v6609
        %v6647 = vsel %vm780, %v6627, %v6611
        %v6648 = vsel %vm780, %v6629, %v6613
        %v6649 = vsel %vm780, %v6631, %v6615
        %v6650 = vsel %vm780, %v6633, %v6617
        %v6651 = vsel %vm780, %v6635, %v6619
        %v6652 = vmul.f32 %v6644, %v1584
        %v6653 = vmul.f32 %v6636, %v1588
        %v6654 = vmul.f32 %v6645, %v1584
        %v6655 = vmul.f32 %v6637, %v1588
        %v6656 = vmul.f32 %v6646, %v1584
        %v6657 = vmul.f32 %v6638, %v1588
        %v6658 = vmul.f32 %v6647, %v1584
        %v6659 = vmul.f32 %v6639, %v1588
        %v6660 = vmul.f32 %v6648, %v1584
        %v6661 = vmul.f32 %v6640, %v1588
        %v6662 = vmul.f32 %v6649, %v1584
        %v6663 = vmul.f32 %v6641, %v1588
        %v6664 = vmul.f32 %v6650, %v1584
        %v6665 = vmul.f32 %v6642, %v1588
        %v6666 = vmul.f32 %v6651, %v1584
        %v6667 = vmul.f32 %v6643, %v1588
        %6668 = vrot.lane.b32.xlu0 %v6460, 1
        %v6669 = vpop.permute.xlu0 %6668
        %6670 = vrot.lane.b32.xlu0 %v6462, 1
        %v6671 = vpop.permute.xlu0 %6670
        %6672 = vrot.lane.b32.xlu0 %v6464, 1
        %v6673 = vpop.permute.xlu0 %6672
        %6674 = vrot.lane.b32.xlu0 %v6466, 1
        %v6675 = vpop.permute.xlu0 %6674
        %6676 = vrot.lane.b32.xlu0 %v6468, 1
        %v6677 = vpop.permute.xlu0 %6676
        %6678 = vrot.lane.b32.xlu0 %v6470, 1
        %v6679 = vpop.permute.xlu0 %6678
        %6680 = vrot.lane.b32.xlu0 %v6472, 1
        %v6681 = vpop.permute.xlu0 %6680
        %6682 = vrot.lane.b32.xlu0 %v6474, 1
        %v6683 = vpop.permute.xlu0 %6682
        %6684 = vrot.lane.b32.xlu0 %v6461, 1
        %v6685 = vpop.permute.xlu0 %6684
        %6686 = vrot.lane.b32.xlu0 %v6463, 1
        %v6687 = vpop.permute.xlu0 %6686
        %6688 = vrot.lane.b32.xlu0 %v6465, 1
        %v6689 = vpop.permute.xlu0 %6688
        %6690 = vrot.lane.b32.xlu0 %v6467, 1
        %v6691 = vpop.permute.xlu0 %6690
        %6692 = vrot.lane.b32.xlu0 %v6469, 1
        %v6693 = vpop.permute.xlu0 %6692
        %6694 = vrot.lane.b32.xlu0 %v6471, 1
        %v6695 = vpop.permute.xlu0 %6694
        %6696 = vrot.lane.b32.xlu0 %v6473, 1
        %v6697 = vpop.permute.xlu0 %6696
        %6698 = vrot.lane.b32.xlu0 %v6475, 1
        %v6699 = vpop.permute.xlu0 %6698
        %v6700 = vsel %vm817, %v6669, %v6685
        %v6701 = vsel %vm817, %v6671, %v6687
        %v6702 = vsel %vm817, %v6673, %v6689
        %v6703 = vsel %vm817, %v6675, %v6691
        %v6704 = vsel %vm817, %v6677, %v6693
        %v6705 = vsel %vm817, %v6679, %v6695
        %v6706 = vsel %vm817, %v6681, %v6697
        %v6707 = vsel %vm817, %v6683, %v6699
        %v6708 = vsel %vm817, %v6685, %v6669
        %v6709 = vsel %vm817, %v6687, %v6671
        %v6710 = vsel %vm817, %v6689, %v6673
        %v6711 = vsel %vm817, %v6691, %v6675
        %v6712 = vsel %vm817, %v6693, %v6677
        %v6713 = vsel %vm817, %v6695, %v6679
        %v6714 = vsel %vm817, %v6697, %v6681
        %v6715 = vsel %vm817, %v6699, %v6683
        %v6716 = vmul.f32 %v6708, %v1656
        %v6717 = vmul.f32 %v6700, %v1660
        %v6718 = vmul.f32 %v6709, %v1656
        %v6719 = vmul.f32 %v6701, %v1660
        %v6720 = vmul.f32 %v6710, %v1656
        %v6721 = vmul.f32 %v6702, %v1660
        %v6722 = vmul.f32 %v6711, %v1656
        %v6723 = vmul.f32 %v6703, %v1660
        %v6724 = vmul.f32 %v6712, %v1656
        %v6725 = vmul.f32 %v6704, %v1660
        %v6726 = vmul.f32 %v6713, %v1656
        %v6727 = vmul.f32 %v6705, %v1660
        %v6728 = vmul.f32 %v6714, %v1656
        %v6729 = vmul.f32 %v6706, %v1660
        %v6730 = vmul.f32 %v6715, %v1656
        %v6731 = vmul.f32 %v6707, %v1660
        %v6732 = vmul.f32 %v6460, %v1680
        %v6733 = vmul.f32 %v6461, %v1684
        %v6734 = vmul.f32 %v6462, %v1680
        %v6735 = vmul.f32 %v6463, %v1684
        %v6736 = vmul.f32 %v6464, %v1680
        %v6737 = vmul.f32 %v6465, %v1684
        %v6738 = vmul.f32 %v6466, %v1680
        %v6739 = vmul.f32 %v6467, %v1684
        %v6740 = vmul.f32 %v6468, %v1680
        %v6741 = vmul.f32 %v6469, %v1684
        %v6742 = vmul.f32 %v6470, %v1680
        %v6743 = vmul.f32 %v6471, %v1684
        %v6744 = vmul.f32 %v6472, %v1680
        %v6745 = vmul.f32 %v6473, %v1684
        %v6746 = vmul.f32 %v6474, %v1680
        %v6747 = vmul.f32 %v6475, %v1684
        %6748 = vrot.lane.b32.xlu0 %v6460, 127
        %v6749 = vpop.permute.xlu0 %6748
        %6750 = vrot.lane.b32.xlu0 %v6462, 127
        %v6751 = vpop.permute.xlu0 %6750
        %6752 = vrot.lane.b32.xlu0 %v6464, 127
        %v6753 = vpop.permute.xlu0 %6752
        %6754 = vrot.lane.b32.xlu0 %v6466, 127
        %v6755 = vpop.permute.xlu0 %6754
        %6756 = vrot.lane.b32.xlu0 %v6468, 127
        %v6757 = vpop.permute.xlu0 %6756
        %6758 = vrot.lane.b32.xlu0 %v6470, 127
        %v6759 = vpop.permute.xlu0 %6758
        %6760 = vrot.lane.b32.xlu0 %v6472, 127
        %v6761 = vpop.permute.xlu0 %6760
        %6762 = vrot.lane.b32.xlu0 %v6474, 127
        %v6763 = vpop.permute.xlu0 %6762
        %6764 = vrot.lane.b32.xlu0 %v6461, 127
        %v6765 = vpop.permute.xlu0 %6764
        %6766 = vrot.lane.b32.xlu0 %v6463, 127
        %v6767 = vpop.permute.xlu0 %6766
        %6768 = vrot.lane.b32.xlu0 %v6465, 127
        %v6769 = vpop.permute.xlu0 %6768
        %6770 = vrot.lane.b32.xlu0 %v6467, 127
        %v6771 = vpop.permute.xlu0 %6770
        %6772 = vrot.lane.b32.xlu0 %v6469, 127
        %v6773 = vpop.permute.xlu0 %6772
        %6774 = vrot.lane.b32.xlu0 %v6471, 127
        %v6775 = vpop.permute.xlu0 %6774
        %6776 = vrot.lane.b32.xlu0 %v6473, 127
        %v6777 = vpop.permute.xlu0 %6776
        %6778 = vrot.lane.b32.xlu0 %v6475, 127
        %v6779 = vpop.permute.xlu0 %6778
        %v6780 = vsel %vm847, %v6749, %v6765
        %v6781 = vsel %vm847, %v6751, %v6767
        %v6782 = vsel %vm847, %v6753, %v6769
        %v6783 = vsel %vm847, %v6755, %v6771
        %v6784 = vsel %vm847, %v6757, %v6773
        %v6785 = vsel %vm847, %v6759, %v6775
        %v6786 = vsel %vm847, %v6761, %v6777
        %v6787 = vsel %vm847, %v6763, %v6779
        %v6788 = vsel %vm847, %v6765, %v6749
        %v6789 = vsel %vm847, %v6767, %v6751
        %v6790 = vsel %vm847, %v6769, %v6753
        %v6791 = vsel %vm847, %v6771, %v6755
        %v6792 = vsel %vm847, %v6773, %v6757
        %v6793 = vsel %vm847, %v6775, %v6759
        %v6794 = vsel %vm847, %v6777, %v6761
        %v6795 = vsel %vm847, %v6779, %v6763
        %v6796 = vmul.f32 %v6780, %v1752
        %v6797 = vmul.f32 %v6788, %v1756
        %v6798 = vmul.f32 %v6781, %v1752
        %v6799 = vmul.f32 %v6789, %v1756
        %v6800 = vmul.f32 %v6782, %v1752
        %v6801 = vmul.f32 %v6790, %v1756
        %v6802 = vmul.f32 %v6783, %v1752
        %v6803 = vmul.f32 %v6791, %v1756
        %v6804 = vmul.f32 %v6784, %v1752
        %v6805 = vmul.f32 %v6792, %v1756
        %v6806 = vmul.f32 %v6785, %v1752
        %v6807 = vmul.f32 %v6793, %v1756
        %v6808 = vmul.f32 %v6786, %v1752
        %v6809 = vmul.f32 %v6794, %v1756
        %v6810 = vmul.f32 %v6787, %v1752
        %v6811 = vmul.f32 %v6795, %v1756
        %6812 = vrot.lane.b32.xlu0 %v6460, 113
        %v6813 = vpop.permute.xlu0 %6812
        %6814 = vrot.lane.b32.xlu0 %v6462, 113
        %v6815 = vpop.permute.xlu0 %6814
        %6816 = vrot.lane.b32.xlu0 %v6464, 113
        %v6817 = vpop.permute.xlu0 %6816
        %6818 = vrot.lane.b32.xlu0 %v6466, 113
        %v6819 = vpop.permute.xlu0 %6818
        %6820 = vrot.lane.b32.xlu0 %v6468, 113
        %v6821 = vpop.permute.xlu0 %6820
        %6822 = vrot.lane.b32.xlu0 %v6470, 113
        %v6823 = vpop.permute.xlu0 %6822
        %6824 = vrot.lane.b32.xlu0 %v6472, 113
        %v6825 = vpop.permute.xlu0 %6824
        %6826 = vrot.lane.b32.xlu0 %v6474, 113
        %v6827 = vpop.permute.xlu0 %6826
        %6828 = vrot.lane.b32.xlu0 %v6461, 113
        %v6829 = vpop.permute.xlu0 %6828
        %6830 = vrot.lane.b32.xlu0 %v6463, 113
        %v6831 = vpop.permute.xlu0 %6830
        %6832 = vrot.lane.b32.xlu0 %v6465, 113
        %v6833 = vpop.permute.xlu0 %6832
        %6834 = vrot.lane.b32.xlu0 %v6467, 113
        %v6835 = vpop.permute.xlu0 %6834
        %6836 = vrot.lane.b32.xlu0 %v6469, 113
        %v6837 = vpop.permute.xlu0 %6836
        %6838 = vrot.lane.b32.xlu0 %v6471, 113
        %v6839 = vpop.permute.xlu0 %6838
        %6840 = vrot.lane.b32.xlu0 %v6473, 113
        %v6841 = vpop.permute.xlu0 %6840
        %6842 = vrot.lane.b32.xlu0 %v6475, 113
        %v6843 = vpop.permute.xlu0 %6842
        %v6844 = vsel %vm886, %v6813, %v6829
        %v6845 = vsel %vm886, %v6815, %v6831
        %v6846 = vsel %vm886, %v6817, %v6833
        %v6847 = vsel %vm886, %v6819, %v6835
        %v6848 = vsel %vm886, %v6821, %v6837
        %v6849 = vsel %vm886, %v6823, %v6839
        %v6850 = vsel %vm886, %v6825, %v6841
        %v6851 = vsel %vm886, %v6827, %v6843
        %v6852 = vsel %vm886, %v6829, %v6813
        %v6853 = vsel %vm886, %v6831, %v6815
        %v6854 = vsel %vm886, %v6833, %v6817
        %v6855 = vsel %vm886, %v6835, %v6819
        %v6856 = vsel %vm886, %v6837, %v6821
        %v6857 = vsel %vm886, %v6839, %v6823
        %v6858 = vsel %vm886, %v6841, %v6825
        %v6859 = vsel %vm886, %v6843, %v6827
        %v6860 = vmul.f32 %v6844, %v1824
        %v6861 = vmul.f32 %v6852, %v1828
        %v6862 = vmul.f32 %v6845, %v1824
        %v6863 = vmul.f32 %v6853, %v1828
        %v6864 = vmul.f32 %v6846, %v1824
        %v6865 = vmul.f32 %v6854, %v1828
        %v6866 = vmul.f32 %v6847, %v1824
        %v6867 = vmul.f32 %v6855, %v1828
        %v6868 = vmul.f32 %v6848, %v1824
        %v6869 = vmul.f32 %v6856, %v1828
        %v6870 = vmul.f32 %v6849, %v1824
        %v6871 = vmul.f32 %v6857, %v1828
        %v6872 = vmul.f32 %v6850, %v1824
        %v6873 = vmul.f32 %v6858, %v1828
        %v6874 = vmul.f32 %v6851, %v1824
        %v6875 = vmul.f32 %v6859, %v1828
        %6876 = vrot.lane.b32.xlu0 %v6460, 112
        %v6877 = vpop.permute.xlu0 %6876
        %6878 = vrot.lane.b32.xlu0 %v6462, 112
        %v6879 = vpop.permute.xlu0 %6878
        %6880 = vrot.lane.b32.xlu0 %v6464, 112
        %v6881 = vpop.permute.xlu0 %6880
        %6882 = vrot.lane.b32.xlu0 %v6466, 112
        %v6883 = vpop.permute.xlu0 %6882
        %6884 = vrot.lane.b32.xlu0 %v6468, 112
        %v6885 = vpop.permute.xlu0 %6884
        %6886 = vrot.lane.b32.xlu0 %v6470, 112
        %v6887 = vpop.permute.xlu0 %6886
        %6888 = vrot.lane.b32.xlu0 %v6472, 112
        %v6889 = vpop.permute.xlu0 %6888
        %6890 = vrot.lane.b32.xlu0 %v6474, 112
        %v6891 = vpop.permute.xlu0 %6890
        %6892 = vrot.lane.b32.xlu0 %v6461, 112
        %v6893 = vpop.permute.xlu0 %6892
        %6894 = vrot.lane.b32.xlu0 %v6463, 112
        %v6895 = vpop.permute.xlu0 %6894
        %6896 = vrot.lane.b32.xlu0 %v6465, 112
        %v6897 = vpop.permute.xlu0 %6896
        %6898 = vrot.lane.b32.xlu0 %v6467, 112
        %v6899 = vpop.permute.xlu0 %6898
        %6900 = vrot.lane.b32.xlu0 %v6469, 112
        %v6901 = vpop.permute.xlu0 %6900
        %6902 = vrot.lane.b32.xlu0 %v6471, 112
        %v6903 = vpop.permute.xlu0 %6902
        %6904 = vrot.lane.b32.xlu0 %v6473, 112
        %v6905 = vpop.permute.xlu0 %6904
        %6906 = vrot.lane.b32.xlu0 %v6475, 112
        %v6907 = vpop.permute.xlu0 %6906
        %v6908 = vsel %vm895, %v6877, %v6893
        %v6909 = vsel %vm895, %v6879, %v6895
        %v6910 = vsel %vm895, %v6881, %v6897
        %v6911 = vsel %vm895, %v6883, %v6899
        %v6912 = vsel %vm895, %v6885, %v6901
        %v6913 = vsel %vm895, %v6887, %v6903
        %v6914 = vsel %vm895, %v6889, %v6905
        %v6915 = vsel %vm895, %v6891, %v6907
        %v6916 = vsel %vm895, %v6893, %v6877
        %v6917 = vsel %vm895, %v6895, %v6879
        %v6918 = vsel %vm895, %v6897, %v6881
        %v6919 = vsel %vm895, %v6899, %v6883
        %v6920 = vsel %vm895, %v6901, %v6885
        %v6921 = vsel %vm895, %v6903, %v6887
        %v6922 = vsel %vm895, %v6905, %v6889
        %v6923 = vsel %vm895, %v6907, %v6891
        %v6924 = vmul.f32 %v6908, %v1896
        %v6925 = vmul.f32 %v6916, %v1900
        %v6926 = vmul.f32 %v6909, %v1896
        %v6927 = vmul.f32 %v6917, %v1900
        %v6928 = vmul.f32 %v6910, %v1896
        %v6929 = vmul.f32 %v6918, %v1900
        %v6930 = vmul.f32 %v6911, %v1896
        %v6931 = vmul.f32 %v6919, %v1900
        %v6932 = vmul.f32 %v6912, %v1896
        %v6933 = vmul.f32 %v6920, %v1900
        %v6934 = vmul.f32 %v6913, %v1896
        %v6935 = vmul.f32 %v6921, %v1900
        %v6936 = vmul.f32 %v6914, %v1896
        %v6937 = vmul.f32 %v6922, %v1900
        %v6938 = vmul.f32 %v6915, %v1896
        %v6939 = vmul.f32 %v6923, %v1900
        %6940 = vrot.lane.b32.xlu0 %v6460, 111
        %v6941 = vpop.permute.xlu0 %6940
        %6942 = vrot.lane.b32.xlu0 %v6462, 111
        %v6943 = vpop.permute.xlu0 %6942
        %6944 = vrot.lane.b32.xlu0 %v6464, 111
        %v6945 = vpop.permute.xlu0 %6944
        %6946 = vrot.lane.b32.xlu0 %v6466, 111
        %v6947 = vpop.permute.xlu0 %6946
        %6948 = vrot.lane.b32.xlu0 %v6468, 111
        %v6949 = vpop.permute.xlu0 %6948
        %6950 = vrot.lane.b32.xlu0 %v6470, 111
        %v6951 = vpop.permute.xlu0 %6950
        %6952 = vrot.lane.b32.xlu0 %v6472, 111
        %v6953 = vpop.permute.xlu0 %6952
        %6954 = vrot.lane.b32.xlu0 %v6474, 111
        %v6955 = vpop.permute.xlu0 %6954
        %6956 = vrot.lane.b32.xlu0 %v6461, 111
        %v6957 = vpop.permute.xlu0 %6956
        %6958 = vrot.lane.b32.xlu0 %v6463, 111
        %v6959 = vpop.permute.xlu0 %6958
        %6960 = vrot.lane.b32.xlu0 %v6465, 111
        %v6961 = vpop.permute.xlu0 %6960
        %6962 = vrot.lane.b32.xlu0 %v6467, 111
        %v6963 = vpop.permute.xlu0 %6962
        %6964 = vrot.lane.b32.xlu0 %v6469, 111
        %v6965 = vpop.permute.xlu0 %6964
        %6966 = vrot.lane.b32.xlu0 %v6471, 111
        %v6967 = vpop.permute.xlu0 %6966
        %6968 = vrot.lane.b32.xlu0 %v6473, 111
        %v6969 = vpop.permute.xlu0 %6968
        %6970 = vrot.lane.b32.xlu0 %v6475, 111
        %v6971 = vpop.permute.xlu0 %6970
        %v6972 = vsel %vm910, %v6941, %v6957
        %v6973 = vsel %vm910, %v6943, %v6959
        %v6974 = vsel %vm910, %v6945, %v6961
        %v6975 = vsel %vm910, %v6947, %v6963
        %v6976 = vsel %vm910, %v6949, %v6965
        %v6977 = vsel %vm910, %v6951, %v6967
        %v6978 = vsel %vm910, %v6953, %v6969
        %v6979 = vsel %vm910, %v6955, %v6971
        %v6980 = vsel %vm910, %v6957, %v6941
        %v6981 = vsel %vm910, %v6959, %v6943
        %v6982 = vsel %vm910, %v6961, %v6945
        %v6983 = vsel %vm910, %v6963, %v6947
        %v6984 = vsel %vm910, %v6965, %v6949
        %v6985 = vsel %vm910, %v6967, %v6951
        %v6986 = vsel %vm910, %v6969, %v6953
        %v6987 = vsel %vm910, %v6971, %v6955
        %v6988 = vmul.f32 %v6972, %v1968
        %v6989 = vmul.f32 %v6980, %v1972
        %v6990 = vmul.f32 %v6973, %v1968
        %v6991 = vmul.f32 %v6981, %v1972
        %v6992 = vmul.f32 %v6974, %v1968
        %v6993 = vmul.f32 %v6982, %v1972
        %v6994 = vmul.f32 %v6975, %v1968
        %v6995 = vmul.f32 %v6983, %v1972
        %v6996 = vmul.f32 %v6976, %v1968
        %v6997 = vmul.f32 %v6984, %v1972
        %v6998 = vmul.f32 %v6977, %v1968
        %v6999 = vmul.f32 %v6985, %v1972
        %v7000 = vmul.f32 %v6978, %v1968
        %v7001 = vmul.f32 %v6986, %v1972
        %v7002 = vmul.f32 %v6979, %v1968
        %v7003 = vmul.f32 %v6987, %v1972
        %v7004 = vld [vmem:[#allocation10] sm:$0xff]
        %v7005 = vld [vmem:[#allocation10 + $0x8] sm:$0xff]
        %v7006 = vld [vmem:[#allocation10 + $0x10] sm:$0xff]
        %v7007 = vld [vmem:[#allocation10 + $0x18] sm:$0xff]
        %v7008 = vld [vmem:[#allocation10 + $0x20] sm:$0xff]
        %v7009 = vld [vmem:[#allocation10 + $0x28] sm:$0xff]
        %v7010 = vld [vmem:[#allocation10 + $0x30] sm:$0xff]
        %v7011 = vld [vmem:[#allocation10 + $0x38] sm:$0xff]
        %v7012 = vld [vmem:[#allocation10 + $0x40] sm:$0xff]
        %v7013 = vld [vmem:[#allocation10 + $0x48] sm:$0xff]
        %v7014 = vld [vmem:[#allocation10 + $0x50] sm:$0xff]
        %v7015 = vld [vmem:[#allocation10 + $0x58] sm:$0xff]
        %v7016 = vld [vmem:[#allocation10 + $0x60] sm:$0xff]
        %v7017 = vld [vmem:[#allocation10 + $0x68] sm:$0xff]
        %v7018 = vld [vmem:[#allocation10 + $0x70] sm:$0xff]
        %v7019 = vld [vmem:[#allocation10 + $0x78] sm:$0xff]
        %v7020 = vld [vmem:[#allocation10 + $0x80] sm:$0xff]
        %v7021 = vld [vmem:[#allocation10 + $0x88] sm:$0xff]
        %v7022 = vld [vmem:[#allocation10 + $0x90] sm:$0xff]
        %v7023 = vld [vmem:[#allocation10 + $0x98] sm:$0xff]
        %v7024 = vld [vmem:[#allocation10 + $0xa0] sm:$0xff]
        %v7025 = vld [vmem:[#allocation10 + $0xa8] sm:$0xff]
        %v7026 = vld [vmem:[#allocation10 + $0xb0] sm:$0xff]
        %v7027 = vld [vmem:[#allocation10 + $0xb8] sm:$0xff]
        %v7028 = vld [vmem:[#allocation10 + $0xc0] sm:$0xff]
        %v7029 = vld [vmem:[#allocation10 + $0xc8] sm:$0xff]
        %v7030 = vld [vmem:[#allocation10 + $0xd0] sm:$0xff]
        %v7031 = vld [vmem:[#allocation10 + $0xd8] sm:$0xff]
        %v7032 = vld [vmem:[#allocation10 + $0xe0] sm:$0xff]
        %v7033 = vld [vmem:[#allocation10 + $0xe8] sm:$0xff]
        %v7034 = vld [vmem:[#allocation10 + $0xf0] sm:$0xff]
        %v7035 = vld [vmem:[#allocation10 + $0xf8] sm:$0xff]
        %v7036 = vld [vmem:[#allocation10 + $0x100] sm:$0xff]
        %v7037 = vld [vmem:[#allocation10 + $0x108] sm:$0xff]
        %v7038 = vld [vmem:[#allocation10 + $0x110] sm:$0xff]
        %v7039 = vld [vmem:[#allocation10 + $0x118] sm:$0xff]
        %v7040 = vld [vmem:[#allocation10 + $0x120] sm:$0xff]
        %v7041 = vld [vmem:[#allocation10 + $0x128] sm:$0xff]
        %v7042 = vld [vmem:[#allocation10 + $0x130] sm:$0xff]
        %v7043 = vld [vmem:[#allocation10 + $0x138] sm:$0xff]
        %v7044 = vld [vmem:[%s14] sm:$0xff]
        %v7045 = vld [vmem:[%s14 + $0x8] sm:$0xff]
        %v7046 = vld [vmem:[%s14 + $0x10] sm:$0xff]
        %v7047 = vld [vmem:[%s14 + $0x18] sm:$0xff]
        %v7048 = vld [vmem:[%s14 + $0x20] sm:$0xff]
        %v7049 = vld [vmem:[%s14 + $0x28] sm:$0xff]
        %v7050 = vld [vmem:[%s14 + $0x30] sm:$0xff]
        %v7051 = vld [vmem:[%s14 + $0x38] sm:$0xff]
        %7053 = vset.pattern.permute.xlu0 0
        %7054 = vperm.xlu0 %7053, %v7044
        %v7055 = vpop.permute.xlu0 %7054
        %7058 = vset.pattern.permute.xlu0 0
        %7059 = vperm.xlu0 %7058, %v7045
        %v7060 = vpop.permute.xlu0 %7059
        %7063 = vset.pattern.permute.xlu0 0
        %7064 = vperm.xlu0 %7063, %v7046
        %v7065 = vpop.permute.xlu0 %7064
        %7068 = vset.pattern.permute.xlu0 0
        %7069 = vperm.xlu0 %7068, %v7047
        %v7070 = vpop.permute.xlu0 %7069
        %7073 = vset.pattern.permute.xlu0 0
        %7074 = vperm.xlu0 %7073, %v7048
        %v7075 = vpop.permute.xlu0 %7074
        %7078 = vset.pattern.permute.xlu0 0
        %7079 = vperm.xlu0 %7078, %v7049
        %v7080 = vpop.permute.xlu0 %7079
        %7083 = vset.pattern.permute.xlu0 0
        %7084 = vperm.xlu0 %7083, %v7050
        %v7085 = vpop.permute.xlu0 %7084
        %7088 = vset.pattern.permute.xlu0 0
        %7089 = vperm.xlu0 %7088, %v7051
        %v7090 = vpop.permute.xlu0 %7089
        %v7093 = vsel %vm2165, %v7008, 0
        %v7096 = vsel %vm2165, %v7013, 0
        %v7099 = vsel %vm2165, %v7018, 0
        %v7102 = vsel %vm2165, %v7023, 0
        %v7105 = vsel %vm2165, %v7028, 0
        %v7108 = vsel %vm2165, %v7033, 0
        %v7111 = vsel %vm2165, %v7038, 0
        %v7114 = vsel %vm2165, %v7043, 0
        %7116 = vmatprep.subr.mxu0 %v6525
        %7117 = vmatpush1.msra.mxu0 %v6524
        %7118 = vmatprep.subr.mxu0 %v6527
        %7119 = vmatpush1.msra.mxu0 %v6526
        %7120 = vmatprep.subr.mxu0 %v6529
        %7121 = vmatpush1.msra.mxu0 %v6528
        %7122 = vmatprep.subr.mxu0 %v6531
        %7123 = vmatpush1.msra.mxu0 %v6530
        %7124 = vmatprep.subr.mxu0 %v6533
        %7125 = vmatpush1.msra.mxu0 %v6532
        %7126 = vmatprep.subr.mxu0 %v6535
        %7127 = vmatpush1.msra.mxu0 %v6534
        %7128 = vmatprep.subr.mxu0 %v6537
        %7129 = vmatpush1.msra.mxu0 %v6536
        %7130 = vmatprep.subr.mxu0 %v6539
        %7131 = vmatpush1.msra.mxu0 %v6538
        %7132 = vmatprep.subr.mxu0 %v6589
        %7133 = vmatpush1.msra.mxu0 %v6588
        %7134 = vmatprep.subr.mxu0 %v6591
        %7135 = vmatpush1.msra.mxu0 %v6590
        %7136 = vmatprep.subr.mxu0 %v6593
        %7137 = vmatpush1.msra.mxu0 %v6592
        %7138 = vmatprep.subr.mxu0 %v6595
        %7139 = vmatpush1.msra.mxu0 %v6594
        %7140 = vmatprep.subr.mxu0 %v6597
        %7141 = vmatpush1.msra.mxu0 %v6596
        %7142 = vmatprep.subr.mxu0 %v6599
        %7143 = vmatpush1.msra.mxu0 %v6598
        %7144 = vmatprep.subr.mxu0 %v6601
        %7145 = vmatpush1.msra.mxu0 %v6600
        %7146 = vmatprep.subr.mxu0 %v6603
        %7147 = vmatpush1.msra.mxu0 %v6602
        %7148 = vmatprep.subr.mxu0 %v6653
        %7149 = vmatpush1.msra.mxu0 %v6652
        %7150 = vmatprep.subr.mxu0 %v6655
        %7151 = vmatpush1.msra.mxu0 %v6654
        %7152 = vmatprep.subr.mxu0 %v6657
        %7153 = vmatpush1.msra.mxu0 %v6656
        %7154 = vmatprep.subr.mxu0 %v6659
        %7155 = vmatpush1.msra.mxu0 %v6658
        %7156 = vmatprep.subr.mxu0 %v6661
        %7157 = vmatpush1.msra.mxu0 %v6660
        %7158 = vmatprep.subr.mxu0 %v6663
        %7159 = vmatpush1.msra.mxu0 %v6662
        %7160 = vmatprep.subr.mxu0 %v6665
        %7161 = vmatpush1.msra.mxu0 %v6664
        %7162 = vmatprep.subr.mxu0 %v6667
        %7163 = vmatpush1.msra.mxu0 %v6666
        %7164 = vmatprep.subr.mxu0 %v6717
        %7165 = vmatpush1.msra.mxu0 %v6716
        %7166 = vmatprep.subr.mxu0 %v6719
        %7167 = vmatpush1.msra.mxu0 %v6718
        %7168 = vmatprep.subr.mxu0 %v6721
        %7169 = vmatpush1.msra.mxu0 %v6720
        %7170 = vmatprep.subr.mxu0 %v6723
        %7171 = vmatpush1.msra.mxu0 %v6722
        %7172 = vmatprep.subr.mxu0 %v6725
        %7173 = vmatpush1.msra.mxu0 %v6724
        %7174 = vmatprep.subr.mxu0 %v6727
        %7175 = vmatpush1.msra.mxu0 %v6726
        %7176 = vmatprep.subr.mxu0 %v6729
        %7177 = vmatpush1.msra.mxu0 %v6728
        %7178 = vmatprep.subr.mxu0 %v6731
        %7179 = vmatpush1.msra.mxu0 %v6730
        %7180 = vmatprep.mubr.f32.mxu0 %v7005
        %7181 = vmatmul.mubr.f32.gmra.mrb[0].mxu0 %v7004
        %v7182 = vpop.f32.mrb[0].mxu0
        %v7183 = vadd.f32 %v7055, %v7182
        %v7184 = vpop.f32.mrb[0].mxu0
        %v7185 = vadd.f32 %v7055, %v7184
        %7186 = vmatprep.mubr.f32.mxu0 %v7010
        %7187 = vmatmul.mubr.f32.gmra.mrb[0].mxu0 %v7009
        %v7188 = vpop.f32.mrb[0].mxu0
        %v7189 = vadd.f32 %v7060, %v7188
        %v7190 = vpop.f32.mrb[0].mxu0
        %v7191 = vadd.f32 %v7060, %v7190
        %7192 = vmatprep.mubr.f32.mxu0 %v7015
        %7193 = vmatmul.mubr.f32.gmra.mrb[0].mxu0 %v7014
        %v7194 = vpop.f32.mrb[0].mxu0
        %v7195 = vadd.f32 %v7065, %v7194
        %v7196 = vpop.f32.mrb[0].mxu0
        %v7197 = vadd.f32 %v7065, %v7196
        %7198 = vmatprep.mubr.f32.mxu0 %v7020
        %7199 = vmatmul.mubr.f32.gmra.mrb[0].mxu0 %v7019
        %v7200 = vpop.f32.mrb[0].mxu0
        %v7201 = vadd.f32 %v7070, %v7200
        %v7202 = vpop.f32.mrb[0].mxu0
        %v7203 = vadd.f32 %v7070, %v7202
        %7204 = vmatprep.mubr.f32.mxu0 %v7025
        %7205 = vmatmul.mubr.f32.gmra.mrb[0].mxu0 %v7024
        %v7206 = vpop.f32.mrb[0].mxu0
        %v7207 = vadd.f32 %v7075, %v7206
        %v7208 = vpop.f32.mrb[0].mxu0
        %v7209 = vadd.f32 %v7075, %v7208
        %7210 = vmatprep.mubr.f32.mxu0 %v7030
        %7211 = vmatmul.mubr.f32.gmra.mrb[0].mxu0 %v7029
        %v7212 = vpop.f32.mrb[0].mxu0
        %v7213 = vadd.f32 %v7080, %v7212
        %v7214 = vpop.f32.mrb[0].mxu0
        %v7215 = vadd.f32 %v7080, %v7214
        %7216 = vmatprep.mubr.f32.mxu0 %v7035
        %7217 = vmatmul.mubr.f32.gmra.mrb[0].mxu0 %v7034
        %v7218 = vpop.f32.mrb[0].mxu0
        %v7219 = vadd.f32 %v7085, %v7218
        %v7220 = vpop.f32.mrb[0].mxu0
        %v7221 = vadd.f32 %v7085, %v7220
        %7222 = vmatprep.mubr.f32.mxu0 %v7040
        %7223 = vmatmul.mubr.f32.gmra.mrb[0].mxu0 %v7039
        %v7224 = vpop.f32.mrb[0].mxu0
        %v7225 = vadd.f32 %v7090, %v7224
        %v7226 = vpop.f32.mrb[0].mxu0
        %v7227 = vadd.f32 %v7090, %v7226
        %7228 = vdwg.mxu0
        %7229 = vmatprep.subr.mxu0 %v6733
        %7230 = vmatpush1.msra.mxu0 %v6732
        %7231 = vmatprep.subr.mxu0 %v6735
        %7232 = vmatpush1.msra.mxu0 %v6734
        %7233 = vmatprep.subr.mxu0 %v6737
        %7234 = vmatpush1.msra.mxu0 %v6736
        %7235 = vmatprep.subr.mxu0 %v6739
        %7236 = vmatpush1.msra.mxu0 %v6738
        %7237 = vmatprep.subr.mxu0 %v6741
        %7238 = vmatpush1.msra.mxu0 %v6740
        %7239 = vmatprep.subr.mxu0 %v6743
        %7240 = vmatpush1.msra.mxu0 %v6742
        %7241 = vmatprep.subr.mxu0 %v6745
        %7242 = vmatpush1.msra.mxu0 %v6744
        %7243 = vmatprep.subr.mxu0 %v6747
        %7244 = vmatpush1.msra.mxu0 %v6746
        %7245 = vmatprep.subr.mxu0 %v6797
        %7246 = vmatpush1.msra.mxu0 %v6796
        %7247 = vmatprep.subr.mxu0 %v6799
        %7248 = vmatpush1.msra.mxu0 %v6798
        %7249 = vmatprep.subr.mxu0 %v6801
        %7250 = vmatpush1.msra.mxu0 %v6800
        %7251 = vmatprep.subr.mxu0 %v6803
        %7252 = vmatpush1.msra.mxu0 %v6802
        %7253 = vmatprep.subr.mxu0 %v6805
        %7254 = vmatpush1.msra.mxu0 %v6804
        %7255 = vmatprep.subr.mxu0 %v6807
        %7256 = vmatpush1.msra.mxu0 %v6806
        %7257 = vmatprep.subr.mxu0 %v6809
        %7258 = vmatpush1.msra.mxu0 %v6808
        %7259 = vmatprep.subr.mxu0 %v6811
        %7260 = vmatpush1.msra.mxu0 %v6810
        %7261 = vmatprep.subr.mxu0 %v6861
        %7262 = vmatpush1.msra.mxu0 %v6860
        %7263 = vmatprep.subr.mxu0 %v6863
        %7264 = vmatpush1.msra.mxu0 %v6862
        %7265 = vmatprep.subr.mxu0 %v6865
        %7266 = vmatpush1.msra.mxu0 %v6864
        %7267 = vmatprep.subr.mxu0 %v6867
        %7268 = vmatpush1.msra.mxu0 %v6866
        %7269 = vmatprep.subr.mxu0 %v6869
        %7270 = vmatpush1.msra.mxu0 %v6868
        %7271 = vmatprep.subr.mxu0 %v6871
        %7272 = vmatpush1.msra.mxu0 %v6870
        %7273 = vmatprep.subr.mxu0 %v6873
        %7274 = vmatpush1.msra.mxu0 %v6872
        %7275 = vmatprep.subr.mxu0 %v6875
        %7276 = vmatpush1.msra.mxu0 %v6874
        %7277 = vmatprep.subr.mxu0 %v6925
        %7278 = vmatpush1.msra.mxu0 %v6924
        %7279 = vmatprep.subr.mxu0 %v6927
        %7280 = vmatpush1.msra.mxu0 %v6926
        %7281 = vmatprep.subr.mxu0 %v6929
        %7282 = vmatpush1.msra.mxu0 %v6928
        %7283 = vmatprep.subr.mxu0 %v6931
        %7284 = vmatpush1.msra.mxu0 %v6930
        %7285 = vmatprep.subr.mxu0 %v6933
        %7286 = vmatpush1.msra.mxu0 %v6932
        %7287 = vmatprep.subr.mxu0 %v6935
        %7288 = vmatpush1.msra.mxu0 %v6934
        %7289 = vmatprep.subr.mxu0 %v6937
        %7290 = vmatpush1.msra.mxu0 %v6936
        %7291 = vmatprep.subr.mxu0 %v6939
        %7292 = vmatpush1.msra.mxu0 %v6938
        %7293 = vmatprep.mubr.f32.mxu0 %v7007
        %7294 = vmatmul.mubr.f32.gmra.mrb[0].mxu0 %v7006
        %v7295 = vpop.f32.mrb[0].mxu0
        %v7296 = vadd.f32 %v7183, %v7295
        %v7297 = vpop.f32.mrb[0].mxu0
        %v7298 = vadd.f32 %v7185, %v7297
        %7299 = vmatprep.mubr.f32.mxu0 %v7012
        %7300 = vmatmul.mubr.f32.gmra.mrb[0].mxu0 %v7011
        %v7301 = vpop.f32.mrb[0].mxu0
        %v7302 = vadd.f32 %v7189, %v7301
        %v7303 = vpop.f32.mrb[0].mxu0
        %v7304 = vadd.f32 %v7191, %v7303
        %7305 = vmatprep.mubr.f32.mxu0 %v7017
        %7306 = vmatmul.mubr.f32.gmra.mrb[0].mxu0 %v7016
        %v7307 = vpop.f32.mrb[0].mxu0
        %v7308 = vadd.f32 %v7195, %v7307
        %v7309 = vpop.f32.mrb[0].mxu0
        %v7310 = vadd.f32 %v7197, %v7309
        %7311 = vmatprep.mubr.f32.mxu0 %v7022
        %7312 = vmatmul.mubr.f32.gmra.mrb[0].mxu0 %v7021
        %v7313 = vpop.f32.mrb[0].mxu0
        %v7314 = vadd.f32 %v7201, %v7313
        %v7315 = vpop.f32.mrb[0].mxu0
        %v7316 = vadd.f32 %v7203, %v7315
        %7317 = vmatprep.mubr.f32.mxu0 %v7027
        %7318 = vmatmul.mubr.f32.gmra.mrb[0].mxu0 %v7026
        %v7319 = vpop.f32.mrb[0].mxu0
        %v7320 = vadd.f32 %v7207, %v7319
        %v7321 = vpop.f32.mrb[0].mxu0
        %v7322 = vadd.f32 %v7209, %v7321
        %7323 = vmatprep.mubr.f32.mxu0 %v7032
        %7324 = vmatmul.mubr.f32.gmra.mrb[0].mxu0 %v7031
        %v7325 = vpop.f32.mrb[0].mxu0
        %v7326 = vadd.f32 %v7213, %v7325
        %v7327 = vpop.f32.mrb[0].mxu0
        %v7328 = vadd.f32 %v7215, %v7327
        %7329 = vmatprep.mubr.f32.mxu0 %v7037
        %7330 = vmatmul.mubr.f32.gmra.mrb[0].mxu0 %v7036
        %v7331 = vpop.f32.mrb[0].mxu0
        %v7332 = vadd.f32 %v7219, %v7331
        %v7333 = vpop.f32.mrb[0].mxu0
        %v7334 = vadd.f32 %v7221, %v7333
        %7335 = vmatprep.mubr.f32.mxu0 %v7042
        %7336 = vmatmul.mubr.f32.gmra.mrb[0].mxu0 %v7041
        %v7337 = vpop.f32.mrb[0].mxu0
        %v7338 = vadd.f32 %v7225, %v7337
        %v7339 = vpop.f32.mrb[0].mxu0
        %v7340 = vadd.f32 %v7227, %v7339
        %7341 = vdwg.mxu0
        %7342 = vmatprep.subr.mxu0 %v6989
        %7343 = vmatpush1.msra.mxu0 %v6988
        %7344 = vmatprep.subr.mxu0 %v6991
        %7345 = vmatpush1.msra.mxu0 %v6990
        %7346 = vmatprep.subr.mxu0 %v6993
        %7347 = vmatpush1.msra.mxu0 %v6992
        %7348 = vmatprep.subr.mxu0 %v6995
        %7349 = vmatpush1.msra.mxu0 %v6994
        %7350 = vmatprep.subr.mxu0 %v6997
        %7351 = vmatpush1.msra.mxu0 %v6996
        %7352 = vmatprep.subr.mxu0 %v6999
        %7353 = vmatpush1.msra.mxu0 %v6998
        %7354 = vmatprep.subr.mxu0 %v7001
        %7355 = vmatpush1.msra.mxu0 %v7000
        %7356 = vmatprep.subr.mxu0 %v7003
        %7357 = vmatpush1.msra.mxu0 %v7002
        %7358 = vmatprep.subr.mxu0 0.0
        %7359 = vmatpush1.msra.mxu0 0.0
        %7360 = vmatprep.subr.mxu0 0.0
        %7361 = vmatpush1.msra.mxu0 0.0
        %7362 = vmatprep.subr.mxu0 0.0
        %7363 = vmatpush1.msra.mxu0 0.0
        %7364 = vmatprep.subr.mxu0 0.0
        %7365 = vmatpush1.msra.mxu0 0.0
        %7366 = vmatprep.subr.mxu0 0.0
        %7367 = vmatpush1.msra.mxu0 0.0
        %7368 = vmatprep.subr.mxu0 0.0
        %7369 = vmatpush1.msra.mxu0 0.0
        %7370 = vmatprep.subr.mxu0 0.0
        %7371 = vmatpush1.msra.mxu0 0.0
        %7372 = vmatprep.subr.mxu0 0.0
        %7373 = vmatpush1.msra.mxu0 0.0
        %7374 = vmatprep.subr.mxu0 0.0
        %7375 = vmatpush1.msra.mxu0 0.0
        %7376 = vmatprep.subr.mxu0 0.0
        %7377 = vmatpush1.msra.mxu0 0.0
        %7378 = vmatprep.subr.mxu0 0.0
        %7379 = vmatpush1.msra.mxu0 0.0
        %7380 = vmatprep.subr.mxu0 0.0
        %7381 = vmatpush1.msra.mxu0 0.0
        %7382 = vmatprep.subr.mxu0 0.0
        %7383 = vmatpush1.msra.mxu0 0.0
        %7384 = vmatprep.subr.mxu0 0.0
        %7385 = vmatpush1.msra.mxu0 0.0
        %7386 = vmatprep.subr.mxu0 0.0
        %7387 = vmatpush1.msra.mxu0 0.0
        %7388 = vmatprep.subr.mxu0 0.0
        %7389 = vmatpush1.msra.mxu0 0.0
        %7390 = vmatprep.subr.mxu0 0.0
        %7391 = vmatpush1.msra.mxu0 0.0
        %7392 = vmatprep.subr.mxu0 0.0
        %7393 = vmatpush1.msra.mxu0 0.0
        %7394 = vmatprep.subr.mxu0 0.0
        %7395 = vmatpush1.msra.mxu0 0.0
        %7396 = vmatprep.subr.mxu0 0.0
        %7397 = vmatpush1.msra.mxu0 0.0
        %7398 = vmatprep.subr.mxu0 0.0
        %7399 = vmatpush1.msra.mxu0 0.0
        %7400 = vmatprep.subr.mxu0 0.0
        %7401 = vmatpush1.msra.mxu0 0.0
        %7402 = vmatprep.subr.mxu0 0.0
        %7403 = vmatpush1.msra.mxu0 0.0
        %7404 = vmatprep.subr.mxu0 0.0
        %7405 = vmatpush1.msra.mxu0 0.0
        %7406 = vmatprep.mubr.f32.mxu0 0.0
        %7407 = vmatmul.mubr.f32.gmra.mrb[0].mxu0 %v7093
        %v7408 = vpop.f32.mrb[0].mxu0
        %v7409 = vadd.f32 %v7296, %v7408
        %v7410 = vpop.f32.mrb[0].mxu0
        %v7411 = vadd.f32 %v7298, %v7410
        %7412 = vmatprep.mubr.f32.mxu0 0.0
        %7413 = vmatmul.mubr.f32.gmra.mrb[0].mxu0 %v7096
        %v7414 = vpop.f32.mrb[0].mxu0
        %v7415 = vadd.f32 %v7302, %v7414
        %v7416 = vpop.f32.mrb[0].mxu0
        %v7417 = vadd.f32 %v7304, %v7416
        %7418 = vmatprep.mubr.f32.mxu0 0.0
        %7419 = vmatmul.mubr.f32.gmra.mrb[0].mxu0 %v7099
        %v7420 = vpop.f32.mrb[0].mxu0
        %v7421 = vadd.f32 %v7308, %v7420
        %v7422 = vpop.f32.mrb[0].mxu0
        %v7423 = vadd.f32 %v7310, %v7422
        %7424 = vmatprep.mubr.f32.mxu0 0.0
        %7425 = vmatmul.mubr.f32.gmra.mrb[0].mxu0 %v7102
        %v7426 = vpop.f32.mrb[0].mxu0
        %v7427 = vadd.f32 %v7314, %v7426
        %v7428 = vpop.f32.mrb[0].mxu0
        %v7429 = vadd.f32 %v7316, %v7428
        %7430 = vmatprep.mubr.f32.mxu0 0.0
        %7431 = vmatmul.mubr.f32.gmra.mrb[0].mxu0 %v7105
        %v7432 = vpop.f32.mrb[0].mxu0
        %v7433 = vadd.f32 %v7320, %v7432
        %v7434 = vpop.f32.mrb[0].mxu0
        %v7435 = vadd.f32 %v7322, %v7434
        %7436 = vmatprep.mubr.f32.mxu0 0.0
        %7437 = vmatmul.mubr.f32.gmra.mrb[0].mxu0 %v7108
        %v7438 = vpop.f32.mrb[0].mxu0
        %v7439 = vadd.f32 %v7326, %v7438
        %v7440 = vpop.f32.mrb[0].mxu0
        %v7441 = vadd.f32 %v7328, %v7440
        %7442 = vmatprep.mubr.f32.mxu0 0.0
        %7443 = vmatmul.mubr.f32.gmra.mrb[0].mxu0 %v7111
        %v7444 = vpop.f32.mrb[0].mxu0
        %v7445 = vadd.f32 %v7332, %v7444
        %v7446 = vpop.f32.mrb[0].mxu0
        %v7447 = vadd.f32 %v7334, %v7446
        %7448 = vmatprep.mubr.f32.mxu0 0.0
        %7449 = vmatmul.mubr.f32.gmra.mrb[0].mxu0 %v7114
        %v7450 = vpop.f32.mrb[0].mxu0
        %v7451 = vadd.f32 %v7338, %v7450
        %v7452 = vpop.f32.mrb[0].mxu0
        %v7453 = vadd.f32 %v7340, %v7452
        %7454 = vdwg.mxu0
        %v7455 = vadd.f32 %v5465, %v7409
        %v7456 = vadd.f32 %v5466, %v7411
        %v7457 = vadd.f32 %v5467, %v7415
        %v7458 = vadd.f32 %v5468, %v7417
        %v7459 = vadd.f32 %v5469, %v7421
        %v7460 = vadd.f32 %v5470, %v7423
        %v7461 = vadd.f32 %v5471, %v7427
        %v7462 = vadd.f32 %v5472, %v7429
        %v7463 = vadd.f32 %v5473, %v7433
        %v7464 = vadd.f32 %v5474, %v7435
        %v7465 = vadd.f32 %v5475, %v7439
        %v7466 = vadd.f32 %v5476, %v7441
        %v7467 = vadd.f32 %v5477, %v7445
        %v7468 = vadd.f32 %v5478, %v7447
        %v7469 = vadd.f32 %v5479, %v7451
        %v7470 = vadd.f32 %v5480, %v7453
        %7471 = vrot.lane.b32.xlu0 %v7455, 17
        %v7472 = vpop.permute.xlu0 %7471
        %7473 = vrot.lane.b32.xlu0 %v7457, 17
        %v7474 = vpop.permute.xlu0 %7473
        %7475 = vrot.lane.b32.xlu0 %v7459, 17
        %v7476 = vpop.permute.xlu0 %7475
        %7477 = vrot.lane.b32.xlu0 %v7461, 17
        %v7478 = vpop.permute.xlu0 %7477
        %7479 = vrot.lane.b32.xlu0 %v7463, 17
        %v7480 = vpop.permute.xlu0 %7479
        %7481 = vrot.lane.b32.xlu0 %v7465, 17
        %v7482 = vpop.permute.xlu0 %7481
        %7483 = vrot.lane.b32.xlu0 %v7467, 17
        %v7484 = vpop.permute.xlu0 %7483
        %7485 = vrot.lane.b32.xlu0 %v7469, 17
        %v7486 = vpop.permute.xlu0 %7485
        %7487 = vrot.lane.b32.xlu0 %v7456, 17
        %v7488 = vpop.permute.xlu0 %7487
        %7489 = vrot.lane.b32.xlu0 %v7458, 17
        %v7490 = vpop.permute.xlu0 %7489
        %7491 = vrot.lane.b32.xlu0 %v7460, 17
        %v7492 = vpop.permute.xlu0 %7491
        %7493 = vrot.lane.b32.xlu0 %v7462, 17
        %v7494 = vpop.permute.xlu0 %7493
        %7495 = vrot.lane.b32.xlu0 %v7464, 17
        %v7496 = vpop.permute.xlu0 %7495
        %7497 = vrot.lane.b32.xlu0 %v7466, 17
        %v7498 = vpop.permute.xlu0 %7497
        %7499 = vrot.lane.b32.xlu0 %v7468, 17
        %v7500 = vpop.permute.xlu0 %7499
        %7501 = vrot.lane.b32.xlu0 %v7470, 17
        %v7502 = vpop.permute.xlu0 %7501
        %v7503 = vsel %vm754, %v7472, %v7488
        %v7504 = vsel %vm754, %v7474, %v7490
        %v7505 = vsel %vm754, %v7476, %v7492
        %v7506 = vsel %vm754, %v7478, %v7494
        %v7507 = vsel %vm754, %v7480, %v7496
        %v7508 = vsel %vm754, %v7482, %v7498
        %v7509 = vsel %vm754, %v7484, %v7500
        %v7510 = vsel %vm754, %v7486, %v7502
        %v7511 = vsel %vm754, %v7488, %v7472
        %v7512 = vsel %vm754, %v7490, %v7474
        %v7513 = vsel %vm754, %v7492, %v7476
        %v7514 = vsel %vm754, %v7494, %v7478
        %v7515 = vsel %vm754, %v7496, %v7480
        %v7516 = vsel %vm754, %v7498, %v7482
        %v7517 = vsel %vm754, %v7500, %v7484
        %v7518 = vsel %vm754, %v7502, %v7486
        %v7519 = vmul.f32 %v7511, %v1440
        %v7520 = vmul.f32 %v7503, %v1444
        %v7521 = vmul.f32 %v7512, %v1440
        %v7522 = vmul.f32 %v7504, %v1444
        %v7523 = vmul.f32 %v7513, %v1440
        %v7524 = vmul.f32 %v7505, %v1444
        %v7525 = vmul.f32 %v7514, %v1440
        %v7526 = vmul.f32 %v7506, %v1444
        %v7527 = vmul.f32 %v7515, %v1440
        %v7528 = vmul.f32 %v7507, %v1444
        %v7529 = vmul.f32 %v7516, %v1440
        %v7530 = vmul.f32 %v7508, %v1444
        %v7531 = vmul.f32 %v7517, %v1440
        %v7532 = vmul.f32 %v7509, %v1444
        %v7533 = vmul.f32 %v7518, %v1440
        %v7534 = vmul.f32 %v7510, %v1444
        %7535 = vrot.lane.b32.xlu0 %v7455, 16
        %v7536 = vpop.permute.xlu0 %7535
        %7537 = vrot.lane.b32.xlu0 %v7457, 16
        %v7538 = vpop.permute.xlu0 %7537
        %7539 = vrot.lane.b32.xlu0 %v7459, 16
        %v7540 = vpop.permute.xlu0 %7539
        %7541 = vrot.lane.b32.xlu0 %v7461, 16
        %v7542 = vpop.permute.xlu0 %7541
        %7543 = vrot.lane.b32.xlu0 %v7463, 16
        %v7544 = vpop.permute.xlu0 %7543
        %7545 = vrot.lane.b32.xlu0 %v7465, 16
        %v7546 = vpop.permute.xlu0 %7545
        %7547 = vrot.lane.b32.xlu0 %v7467, 16
        %v7548 = vpop.permute.xlu0 %7547
        %7549 = vrot.lane.b32.xlu0 %v7469, 16
        %v7550 = vpop.permute.xlu0 %7549
        %7551 = vrot.lane.b32.xlu0 %v7456, 16
        %v7552 = vpop.permute.xlu0 %7551
        %7553 = vrot.lane.b32.xlu0 %v7458, 16
        %v7554 = vpop.permute.xlu0 %7553
        %7555 = vrot.lane.b32.xlu0 %v7460, 16
        %v7556 = vpop.permute.xlu0 %7555
        %7557 = vrot.lane.b32.xlu0 %v7462, 16
        %v7558 = vpop.permute.xlu0 %7557
        %7559 = vrot.lane.b32.xlu0 %v7464, 16
        %v7560 = vpop.permute.xlu0 %7559
        %7561 = vrot.lane.b32.xlu0 %v7466, 16
        %v7562 = vpop.permute.xlu0 %7561
        %7563 = vrot.lane.b32.xlu0 %v7468, 16
        %v7564 = vpop.permute.xlu0 %7563
        %7565 = vrot.lane.b32.xlu0 %v7470, 16
        %v7566 = vpop.permute.xlu0 %7565
        %v7567 = vsel %vm767, %v7536, %v7552
        %v7568 = vsel %vm767, %v7538, %v7554
        %v7569 = vsel %vm767, %v7540, %v7556
        %v7570 = vsel %vm767, %v7542, %v7558
        %v7571 = vsel %vm767, %v7544, %v7560
        %v7572 = vsel %vm767, %v7546, %v7562
        %v7573 = vsel %vm767, %v7548, %v7564
        %v7574 = vsel %vm767, %v7550, %v7566
        %v7575 = vsel %vm767, %v7552, %v7536
        %v7576 = vsel %vm767, %v7554, %v7538
        %v7577 = vsel %vm767, %v7556, %v7540
        %v7578 = vsel %vm767, %v7558, %v7542
        %v7579 = vsel %vm767, %v7560, %v7544
        %v7580 = vsel %vm767, %v7562, %v7546
        %v7581 = vsel %vm767, %v7564, %v7548
        %v7582 = vsel %vm767, %v7566, %v7550
        %v7583 = vmul.f32 %v7575, %v1512
        %v7584 = vmul.f32 %v7567, %v1516
        %v7585 = vmul.f32 %v7576, %v1512
        %v7586 = vmul.f32 %v7568, %v1516
        %v7587 = vmul.f32 %v7577, %v1512
        %v7588 = vmul.f32 %v7569, %v1516
        %v7589 = vmul.f32 %v7578, %v1512
        %v7590 = vmul.f32 %v7570, %v1516
        %v7591 = vmul.f32 %v7579, %v1512
        %v7592 = vmul.f32 %v7571, %v1516
        %v7593 = vmul.f32 %v7580, %v1512
        %v7594 = vmul.f32 %v7572, %v1516
        %v7595 = vmul.f32 %v7581, %v1512
        %v7596 = vmul.f32 %v7573, %v1516
        %v7597 = vmul.f32 %v7582, %v1512
        %v7598 = vmul.f32 %v7574, %v1516
        %7599 = vrot.lane.b32.xlu0 %v7455, 15
        %v7600 = vpop.permute.xlu0 %7599
        %7601 = vrot.lane.b32.xlu0 %v7457, 15
        %v7602 = vpop.permute.xlu0 %7601
        %7603 = vrot.lane.b32.xlu0 %v7459, 15
        %v7604 = vpop.permute.xlu0 %7603
        %7605 = vrot.lane.b32.xlu0 %v7461, 15
        %v7606 = vpop.permute.xlu0 %7605
        %7607 = vrot.lane.b32.xlu0 %v7463, 15
        %v7608 = vpop.permute.xlu0 %7607
        %7609 = vrot.lane.b32.xlu0 %v7465, 15
        %v7610 = vpop.permute.xlu0 %7609
        %7611 = vrot.lane.b32.xlu0 %v7467, 15
        %v7612 = vpop.permute.xlu0 %7611
        %7613 = vrot.lane.b32.xlu0 %v7469, 15
        %v7614 = vpop.permute.xlu0 %7613
        %7615 = vrot.lane.b32.xlu0 %v7456, 15
        %v7616 = vpop.permute.xlu0 %7615
        %7617 = vrot.lane.b32.xlu0 %v7458, 15
        %v7618 = vpop.permute.xlu0 %7617
        %7619 = vrot.lane.b32.xlu0 %v7460, 15
        %v7620 = vpop.permute.xlu0 %7619
        %7621 = vrot.lane.b32.xlu0 %v7462, 15
        %v7622 = vpop.permute.xlu0 %7621
        %7623 = vrot.lane.b32.xlu0 %v7464, 15
        %v7624 = vpop.permute.xlu0 %7623
        %7625 = vrot.lane.b32.xlu0 %v7466, 15
        %v7626 = vpop.permute.xlu0 %7625
        %7627 = vrot.lane.b32.xlu0 %v7468, 15
        %v7628 = vpop.permute.xlu0 %7627
        %7629 = vrot.lane.b32.xlu0 %v7470, 15
        %v7630 = vpop.permute.xlu0 %7629
        %v7631 = vsel %vm780, %v7600, %v7616
        %v7632 = vsel %vm780, %v7602, %v7618
        %v7633 = vsel %vm780, %v7604, %v7620
        %v7634 = vsel %vm780, %v7606, %v7622
        %v7635 = vsel %vm780, %v7608, %v7624
        %v7636 = vsel %vm780, %v7610, %v7626
        %v7637 = vsel %vm780, %v7612, %v7628
        %v7638 = vsel %vm780, %v7614, %v7630
        %v7639 = vsel %vm780, %v7616, %v7600
        %v7640 = vsel %vm780, %v7618, %v7602
        %v7641 = vsel %vm780, %v7620, %v7604
        %v7642 = vsel %vm780, %v7622, %v7606
        %v7643 = vsel %vm780, %v7624, %v7608
        %v7644 = vsel %vm780, %v7626, %v7610
        %v7645 = vsel %vm780, %v7628, %v7612
        %v7646 = vsel %vm780, %v7630, %v7614
        %v7647 = vmul.f32 %v7639, %v1584
        %v7648 = vmul.f32 %v7631, %v1588
        %v7649 = vmul.f32 %v7640, %v1584
        %v7650 = vmul.f32 %v7632, %v1588
        %v7651 = vmul.f32 %v7641, %v1584
        %v7652 = vmul.f32 %v7633, %v1588
        %v7653 = vmul.f32 %v7642, %v1584
        %v7654 = vmul.f32 %v7634, %v1588
        %v7655 = vmul.f32 %v7643, %v1584
        %v7656 = vmul.f32 %v7635, %v1588
        %v7657 = vmul.f32 %v7644, %v1584
        %v7658 = vmul.f32 %v7636, %v1588
        %v7659 = vmul.f32 %v7645, %v1584
        %v7660 = vmul.f32 %v7637, %v1588
        %v7661 = vmul.f32 %v7646, %v1584
        %v7662 = vmul.f32 %v7638, %v1588
        %7663 = vrot.lane.b32.xlu0 %v7455, 1
        %v7664 = vpop.permute.xlu0 %7663
        %7665 = vrot.lane.b32.xlu0 %v7457, 1
        %v7666 = vpop.permute.xlu0 %7665
        %7667 = vrot.lane.b32.xlu0 %v7459, 1
        %v7668 = vpop.permute.xlu0 %7667
        %7669 = vrot.lane.b32.xlu0 %v7461, 1
        %v7670 = vpop.permute.xlu0 %7669
        %7671 = vrot.lane.b32.xlu0 %v7463, 1
        %v7672 = vpop.permute.xlu0 %7671
        %7673 = vrot.lane.b32.xlu0 %v7465, 1
        %v7674 = vpop.permute.xlu0 %7673
        %7675 = vrot.lane.b32.xlu0 %v7467, 1
        %v7676 = vpop.permute.xlu0 %7675
        %7677 = vrot.lane.b32.xlu0 %v7469, 1
        %v7678 = vpop.permute.xlu0 %7677
        %7679 = vrot.lane.b32.xlu0 %v7456, 1
        %v7680 = vpop.permute.xlu0 %7679
        %7681 = vrot.lane.b32.xlu0 %v7458, 1
        %v7682 = vpop.permute.xlu0 %7681
        %7683 = vrot.lane.b32.xlu0 %v7460, 1
        %v7684 = vpop.permute.xlu0 %7683
        %7685 = vrot.lane.b32.xlu0 %v7462, 1
        %v7686 = vpop.permute.xlu0 %7685
        %7687 = vrot.lane.b32.xlu0 %v7464, 1
        %v7688 = vpop.permute.xlu0 %7687
        %7689 = vrot.lane.b32.xlu0 %v7466, 1
        %v7690 = vpop.permute.xlu0 %7689
        %7691 = vrot.lane.b32.xlu0 %v7468, 1
        %v7692 = vpop.permute.xlu0 %7691
        %7693 = vrot.lane.b32.xlu0 %v7470, 1
        %v7694 = vpop.permute.xlu0 %7693
        %v7695 = vsel %vm817, %v7664, %v7680
        %v7696 = vsel %vm817, %v7666, %v7682
        %v7697 = vsel %vm817, %v7668, %v7684
        %v7698 = vsel %vm817, %v7670, %v7686
        %v7699 = vsel %vm817, %v7672, %v7688
        %v7700 = vsel %vm817, %v7674, %v7690
        %v7701 = vsel %vm817, %v7676, %v7692
        %v7702 = vsel %vm817, %v7678, %v7694
        %v7703 = vsel %vm817, %v7680, %v7664
        %v7704 = vsel %vm817, %v7682, %v7666
        %v7705 = vsel %vm817, %v7684, %v7668
        %v7706 = vsel %vm817, %v7686, %v7670
        %v7707 = vsel %vm817, %v7688, %v7672
        %v7708 = vsel %vm817, %v7690, %v7674
        %v7709 = vsel %vm817, %v7692, %v7676
        %v7710 = vsel %vm817, %v7694, %v7678
        %v7711 = vmul.f32 %v7703, %v1656
        %v7712 = vmul.f32 %v7695, %v1660
        %v7713 = vmul.f32 %v7704, %v1656
        %v7714 = vmul.f32 %v7696, %v1660
        %v7715 = vmul.f32 %v7705, %v1656
        %v7716 = vmul.f32 %v7697, %v1660
        %v7717 = vmul.f32 %v7706, %v1656
        %v7718 = vmul.f32 %v7698, %v1660
        %v7719 = vmul.f32 %v7707, %v1656
        %v7720 = vmul.f32 %v7699, %v1660
        %v7721 = vmul.f32 %v7708, %v1656
        %v7722 = vmul.f32 %v7700, %v1660
        %v7723 = vmul.f32 %v7709, %v1656
        %v7724 = vmul.f32 %v7701, %v1660
        %v7725 = vmul.f32 %v7710, %v1656
        %v7726 = vmul.f32 %v7702, %v1660
        %v7727 = vmul.f32 %v7455, %v1680
        %v7728 = vmul.f32 %v7456, %v1684
        %v7729 = vmul.f32 %v7457, %v1680
        %v7730 = vmul.f32 %v7458, %v1684
        %v7731 = vmul.f32 %v7459, %v1680
        %v7732 = vmul.f32 %v7460, %v1684
        %v7733 = vmul.f32 %v7461, %v1680
        %v7734 = vmul.f32 %v7462, %v1684
        %v7735 = vmul.f32 %v7463, %v1680
        %v7736 = vmul.f32 %v7464, %v1684
        %v7737 = vmul.f32 %v7465, %v1680
        %v7738 = vmul.f32 %v7466, %v1684
        %v7739 = vmul.f32 %v7467, %v1680
        %v7740 = vmul.f32 %v7468, %v1684
        %v7741 = vmul.f32 %v7469, %v1680
        %v7742 = vmul.f32 %v7470, %v1684
        %7743 = vrot.lane.b32.xlu0 %v7455, 127
        %v7744 = vpop.permute.xlu0 %7743
        %7745 = vrot.lane.b32.xlu0 %v7457, 127
        %v7746 = vpop.permute.xlu0 %7745
        %7747 = vrot.lane.b32.xlu0 %v7459, 127
        %v7748 = vpop.permute.xlu0 %7747
        %7749 = vrot.lane.b32.xlu0 %v7461, 127
        %v7750 = vpop.permute.xlu0 %7749
        %7751 = vrot.lane.b32.xlu0 %v7463, 127
        %v7752 = vpop.permute.xlu0 %7751
        %7753 = vrot.lane.b32.xlu0 %v7465, 127
        %v7754 = vpop.permute.xlu0 %7753
        %7755 = vrot.lane.b32.xlu0 %v7467, 127
        %v7756 = vpop.permute.xlu0 %7755
        %7757 = vrot.lane.b32.xlu0 %v7469, 127
        %v7758 = vpop.permute.xlu0 %7757
        %7759 = vrot.lane.b32.xlu0 %v7456, 127
        %v7760 = vpop.permute.xlu0 %7759
        %7761 = vrot.lane.b32.xlu0 %v7458, 127
        %v7762 = vpop.permute.xlu0 %7761
        %7763 = vrot.lane.b32.xlu0 %v7460, 127
        %v7764 = vpop.permute.xlu0 %7763
        %7765 = vrot.lane.b32.xlu0 %v7462, 127
        %v7766 = vpop.permute.xlu0 %7765
        %7767 = vrot.lane.b32.xlu0 %v7464, 127
        %v7768 = vpop.permute.xlu0 %7767
        %7769 = vrot.lane.b32.xlu0 %v7466, 127
        %v7770 = vpop.permute.xlu0 %7769
        %7771 = vrot.lane.b32.xlu0 %v7468, 127
        %v7772 = vpop.permute.xlu0 %7771
        %7773 = vrot.lane.b32.xlu0 %v7470, 127
        %v7774 = vpop.permute.xlu0 %7773
        %v7775 = vsel %vm847, %v7744, %v7760
        %v7776 = vsel %vm847, %v7746, %v7762
        %v7777 = vsel %vm847, %v7748, %v7764
        %v7778 = vsel %vm847, %v7750, %v7766
        %v7779 = vsel %vm847, %v7752, %v7768
        %v7780 = vsel %vm847, %v7754, %v7770
        %v7781 = vsel %vm847, %v7756, %v7772
        %v7782 = vsel %vm847, %v7758, %v7774
        %v7783 = vsel %vm847, %v7760, %v7744
        %v7784 = vsel %vm847, %v7762, %v7746
        %v7785 = vsel %vm847, %v7764, %v7748
        %v7786 = vsel %vm847, %v7766, %v7750
        %v7787 = vsel %vm847, %v7768, %v7752
        %v7788 = vsel %vm847, %v7770, %v7754
        %v7789 = vsel %vm847, %v7772, %v7756
        %v7790 = vsel %vm847, %v7774, %v7758
        %v7791 = vmul.f32 %v7775, %v1752
        %v7792 = vmul.f32 %v7783, %v1756
        %v7793 = vmul.f32 %v7776, %v1752
        %v7794 = vmul.f32 %v7784, %v1756
        %v7795 = vmul.f32 %v7777, %v1752
        %v7796 = vmul.f32 %v7785, %v1756
        %v7797 = vmul.f32 %v7778, %v1752
        %v7798 = vmul.f32 %v7786, %v1756
        %v7799 = vmul.f32 %v7779, %v1752
        %v7800 = vmul.f32 %v7787, %v1756
        %v7801 = vmul.f32 %v7780, %v1752
        %v7802 = vmul.f32 %v7788, %v1756
        %v7803 = vmul.f32 %v7781, %v1752
        %v7804 = vmul.f32 %v7789, %v1756
        %v7805 = vmul.f32 %v7782, %v1752
        %v7806 = vmul.f32 %v7790, %v1756
        %7807 = vrot.lane.b32.xlu0 %v7455, 113
        %v7808 = vpop.permute.xlu0 %7807
        %7809 = vrot.lane.b32.xlu0 %v7457, 113
        %v7810 = vpop.permute.xlu0 %7809
        %7811 = vrot.lane.b32.xlu0 %v7459, 113
        %v7812 = vpop.permute.xlu0 %7811
        %7813 = vrot.lane.b32.xlu0 %v7461, 113
        %v7814 = vpop.permute.xlu0 %7813
        %7815 = vrot.lane.b32.xlu0 %v7463, 113
        %v7816 = vpop.permute.xlu0 %7815
        %7817 = vrot.lane.b32.xlu0 %v7465, 113
        %v7818 = vpop.permute.xlu0 %7817
        %7819 = vrot.lane.b32.xlu0 %v7467, 113
        %v7820 = vpop.permute.xlu0 %7819
        %7821 = vrot.lane.b32.xlu0 %v7469, 113
        %v7822 = vpop.permute.xlu0 %7821
        %7823 = vrot.lane.b32.xlu0 %v7456, 113
        %v7824 = vpop.permute.xlu0 %7823
        %7825 = vrot.lane.b32.xlu0 %v7458, 113
        %v7826 = vpop.permute.xlu0 %7825
        %7827 = vrot.lane.b32.xlu0 %v7460, 113
        %v7828 = vpop.permute.xlu0 %7827
        %7829 = vrot.lane.b32.xlu0 %v7462, 113
        %v7830 = vpop.permute.xlu0 %7829
        %7831 = vrot.lane.b32.xlu0 %v7464, 113
        %v7832 = vpop.permute.xlu0 %7831
        %7833 = vrot.lane.b32.xlu0 %v7466, 113
        %v7834 = vpop.permute.xlu0 %7833
        %7835 = vrot.lane.b32.xlu0 %v7468, 113
        %v7836 = vpop.permute.xlu0 %7835
        %7837 = vrot.lane.b32.xlu0 %v7470, 113
        %v7838 = vpop.permute.xlu0 %7837
        %v7839 = vsel %vm886, %v7808, %v7824
        %v7840 = vsel %vm886, %v7810, %v7826
        %v7841 = vsel %vm886, %v7812, %v7828
        %v7842 = vsel %vm886, %v7814, %v7830
        %v7843 = vsel %vm886, %v7816, %v7832
        %v7844 = vsel %vm886, %v7818, %v7834
        %v7845 = vsel %vm886, %v7820, %v7836
        %v7846 = vsel %vm886, %v7822, %v7838
        %v7847 = vsel %vm886, %v7824, %v7808
        %v7848 = vsel %vm886, %v7826, %v7810
        %v7849 = vsel %vm886, %v7828, %v7812
        %v7850 = vsel %vm886, %v7830, %v7814
        %v7851 = vsel %vm886, %v7832, %v7816
        %v7852 = vsel %vm886, %v7834, %v7818
        %v7853 = vsel %vm886, %v7836, %v7820
        %v7854 = vsel %vm886, %v7838, %v7822
        %v7855 = vmul.f32 %v7839, %v1824
        %v7856 = vmul.f32 %v7847, %v1828
        %v7857 = vmul.f32 %v7840, %v1824
        %v7858 = vmul.f32 %v7848, %v1828
        %v7859 = vmul.f32 %v7841, %v1824
        %v7860 = vmul.f32 %v7849, %v1828
        %v7861 = vmul.f32 %v7842, %v1824
        %v7862 = vmul.f32 %v7850, %v1828
        %v7863 = vmul.f32 %v7843, %v1824
        %v7864 = vmul.f32 %v7851, %v1828
        %v7865 = vmul.f32 %v7844, %v1824
        %v7866 = vmul.f32 %v7852, %v1828
        %v7867 = vmul.f32 %v7845, %v1824
        %v7868 = vmul.f32 %v7853, %v1828
        %v7869 = vmul.f32 %v7846, %v1824
        %v7870 = vmul.f32 %v7854, %v1828
        %7871 = vrot.lane.b32.xlu0 %v7455, 112
        %v7872 = vpop.permute.xlu0 %7871
        %7873 = vrot.lane.b32.xlu0 %v7457, 112
        %v7874 = vpop.permute.xlu0 %7873
        %7875 = vrot.lane.b32.xlu0 %v7459, 112
        %v7876 = vpop.permute.xlu0 %7875
        %7877 = vrot.lane.b32.xlu0 %v7461, 112
        %v7878 = vpop.permute.xlu0 %7877
        %7879 = vrot.lane.b32.xlu0 %v7463, 112
        %v7880 = vpop.permute.xlu0 %7879
        %7881 = vrot.lane.b32.xlu0 %v7465, 112
        %v7882 = vpop.permute.xlu0 %7881
        %7883 = vrot.lane.b32.xlu0 %v7467, 112
        %v7884 = vpop.permute.xlu0 %7883
        %7885 = vrot.lane.b32.xlu0 %v7469, 112
        %v7886 = vpop.permute.xlu0 %7885
        %7887 = vrot.lane.b32.xlu0 %v7456, 112
        %v7888 = vpop.permute.xlu0 %7887
        %7889 = vrot.lane.b32.xlu0 %v7458, 112
        %v7890 = vpop.permute.xlu0 %7889
        %7891 = vrot.lane.b32.xlu0 %v7460, 112
        %v7892 = vpop.permute.xlu0 %7891
        %7893 = vrot.lane.b32.xlu0 %v7462, 112
        %v7894 = vpop.permute.xlu0 %7893
        %7895 = vrot.lane.b32.xlu0 %v7464, 112
        %v7896 = vpop.permute.xlu0 %7895
        %7897 = vrot.lane.b32.xlu0 %v7466, 112
        %v7898 = vpop.permute.xlu0 %7897
        %7899 = vrot.lane.b32.xlu0 %v7468, 112
        %v7900 = vpop.permute.xlu0 %7899
        %7901 = vrot.lane.b32.xlu0 %v7470, 112
        %v7902 = vpop.permute.xlu0 %7901
        %v7903 = vsel %vm895, %v7872, %v7888
        %v7904 = vsel %vm895, %v7874, %v7890
        %v7905 = vsel %vm895, %v7876, %v7892
        %v7906 = vsel %vm895, %v7878, %v7894
        %v7907 = vsel %vm895, %v7880, %v7896
        %v7908 = vsel %vm895, %v7882, %v7898
        %v7909 = vsel %vm895, %v7884, %v7900
        %v7910 = vsel %vm895, %v7886, %v7902
        %v7911 = vsel %vm895, %v7888, %v7872
        %v7912 = vsel %vm895, %v7890, %v7874
        %v7913 = vsel %vm895, %v7892, %v7876
        %v7914 = vsel %vm895, %v7894, %v7878
        %v7915 = vsel %vm895, %v7896, %v7880
        %v7916 = vsel %vm895, %v7898, %v7882
        %v7917 = vsel %vm895, %v7900, %v7884
        %v7918 = vsel %vm895, %v7902, %v7886
        %v7919 = vmul.f32 %v7903, %v1896
        %v7920 = vmul.f32 %v7911, %v1900
        %v7921 = vmul.f32 %v7904, %v1896
        %v7922 = vmul.f32 %v7912, %v1900
        %v7923 = vmul.f32 %v7905, %v1896
        %v7924 = vmul.f32 %v7913, %v1900
        %v7925 = vmul.f32 %v7906, %v1896
        %v7926 = vmul.f32 %v7914, %v1900
        %v7927 = vmul.f32 %v7907, %v1896
        %v7928 = vmul.f32 %v7915, %v1900
        %v7929 = vmul.f32 %v7908, %v1896
        %v7930 = vmul.f32 %v7916, %v1900
        %v7931 = vmul.f32 %v7909, %v1896
        %v7932 = vmul.f32 %v7917, %v1900
        %v7933 = vmul.f32 %v7910, %v1896
        %v7934 = vmul.f32 %v7918, %v1900
        %7935 = vrot.lane.b32.xlu0 %v7455, 111
        %v7936 = vpop.permute.xlu0 %7935
        %7937 = vrot.lane.b32.xlu0 %v7457, 111
        %v7938 = vpop.permute.xlu0 %7937
        %7939 = vrot.lane.b32.xlu0 %v7459, 111
        %v7940 = vpop.permute.xlu0 %7939
        %7941 = vrot.lane.b32.xlu0 %v7461, 111
        %v7942 = vpop.permute.xlu0 %7941
        %7943 = vrot.lane.b32.xlu0 %v7463, 111
        %v7944 = vpop.permute.xlu0 %7943
        %7945 = vrot.lane.b32.xlu0 %v7465, 111
        %v7946 = vpop.permute.xlu0 %7945
        %7947 = vrot.lane.b32.xlu0 %v7467, 111
        %v7948 = vpop.permute.xlu0 %7947
        %7949 = vrot.lane.b32.xlu0 %v7469, 111
        %v7950 = vpop.permute.xlu0 %7949
        %7951 = vrot.lane.b32.xlu0 %v7456, 111
        %v7952 = vpop.permute.xlu0 %7951
        %7953 = vrot.lane.b32.xlu0 %v7458, 111
        %v7954 = vpop.permute.xlu0 %7953
        %7955 = vrot.lane.b32.xlu0 %v7460, 111
        %v7956 = vpop.permute.xlu0 %7955
        %7957 = vrot.lane.b32.xlu0 %v7462, 111
        %v7958 = vpop.permute.xlu0 %7957
        %7959 = vrot.lane.b32.xlu0 %v7464, 111
        %v7960 = vpop.permute.xlu0 %7959
        %7961 = vrot.lane.b32.xlu0 %v7466, 111
        %v7962 = vpop.permute.xlu0 %7961
        %7963 = vrot.lane.b32.xlu0 %v7468, 111
        %v7964 = vpop.permute.xlu0 %7963
        %7965 = vrot.lane.b32.xlu0 %v7470, 111
        %v7966 = vpop.permute.xlu0 %7965
        %v7967 = vsel %vm910, %v7936, %v7952
        %v7968 = vsel %vm910, %v7938, %v7954
        %v7969 = vsel %vm910, %v7940, %v7956
        %v7970 = vsel %vm910, %v7942, %v7958
        %v7971 = vsel %vm910, %v7944, %v7960
        %v7972 = vsel %vm910, %v7946, %v7962
        %v7973 = vsel %vm910, %v7948, %v7964
        %v7974 = vsel %vm910, %v7950, %v7966
        %v7975 = vsel %vm910, %v7952, %v7936
        %v7976 = vsel %vm910, %v7954, %v7938
        %v7977 = vsel %vm910, %v7956, %v7940
        %v7978 = vsel %vm910, %v7958, %v7942
        %v7979 = vsel %vm910, %v7960, %v7944
        %v7980 = vsel %vm910, %v7962, %v7946
        %v7981 = vsel %vm910, %v7964, %v7948
        %v7982 = vsel %vm910, %v7966, %v7950
        %v7983 = vmul.f32 %v7967, %v1968
        %v7984 = vmul.f32 %v7975, %v1972
        %v7985 = vmul.f32 %v7968, %v1968
        %v7986 = vmul.f32 %v7976, %v1972
        %v7987 = vmul.f32 %v7969, %v1968
        %v7988 = vmul.f32 %v7977, %v1972
        %v7989 = vmul.f32 %v7970, %v1968
        %v7990 = vmul.f32 %v7978, %v1972
        %v7991 = vmul.f32 %v7971, %v1968
        %v7992 = vmul.f32 %v7979, %v1972
        %v7993 = vmul.f32 %v7972, %v1968
        %v7994 = vmul.f32 %v7980, %v1972
        %v7995 = vmul.f32 %v7973, %v1968
        %v7996 = vmul.f32 %v7981, %v1972
        %v7997 = vmul.f32 %v7974, %v1968
        %v7998 = vmul.f32 %v7982, %v1972
        %v7999 = vld [vmem:[#allocation12] sm:$0xff]
        %v8000 = vld [vmem:[#allocation12 + $0x8] sm:$0xff]
        %v8001 = vld [vmem:[#allocation12 + $0x10] sm:$0xff]
        %v8002 = vld [vmem:[#allocation12 + $0x18] sm:$0xff]
        %v8003 = vld [vmem:[#allocation12 + $0x20] sm:$0xff]
        %v8004 = vld [vmem:[#allocation12 + $0x28] sm:$0xff]
        %v8005 = vld [vmem:[#allocation12 + $0x30] sm:$0xff]
        %v8006 = vld [vmem:[#allocation12 + $0x38] sm:$0xff]
        %v8007 = vld [vmem:[#allocation12 + $0x40] sm:$0xff]
        %v8008 = vld [vmem:[#allocation12 + $0x48] sm:$0xff]
        %v8009 = vld [vmem:[%s16] sm:$0xff]
        %v8010 = vld [vmem:[%s16 + $0x8] sm:$0xff]
        %8012 = vset.pattern.permute.xlu0 0
        %8013 = vperm.xlu0 %8012, %v8009
        %v8014 = vpop.permute.xlu0 %8013
        %8017 = vset.pattern.permute.xlu0 0
        %8018 = vperm.xlu0 %8017, %v8010
        %v8019 = vpop.permute.xlu0 %8018
        %v8022 = vsel %vm2165, %v8003, 0
        %v8025 = vsel %vm2165, %v8008, 0
        %8027 = vmatprep.subr.mxu0 %v7520
        %8028 = vmatpush1.msra.mxu0 %v7519
        %8029 = vmatprep.subr.mxu0 %v7522
        %8030 = vmatpush1.msra.mxu0 %v7521
        %8031 = vmatprep.subr.mxu0 %v7524
        %8032 = vmatpush1.msra.mxu0 %v7523
        %8033 = vmatprep.subr.mxu0 %v7526
        %8034 = vmatpush1.msra.mxu0 %v7525
        %8035 = vmatprep.subr.mxu0 %v7528
        %8036 = vmatpush1.msra.mxu0 %v7527
        %8037 = vmatprep.subr.mxu0 %v7530
        %8038 = vmatpush1.msra.mxu0 %v7529
        %8039 = vmatprep.subr.mxu0 %v7532
        %8040 = vmatpush1.msra.mxu0 %v7531
        %8041 = vmatprep.subr.mxu0 %v7534
        %8042 = vmatpush1.msra.mxu0 %v7533
        %8043 = vmatprep.subr.mxu0 %v7584
        %8044 = vmatpush1.msra.mxu0 %v7583
        %8045 = vmatprep.subr.mxu0 %v7586
        %8046 = vmatpush1.msra.mxu0 %v7585
        %8047 = vmatprep.subr.mxu0 %v7588
        %8048 = vmatpush1.msra.mxu0 %v7587
        %8049 = vmatprep.subr.mxu0 %v7590
        %8050 = vmatpush1.msra.mxu0 %v7589
        %8051 = vmatprep.subr.mxu0 %v7592
        %8052 = vmatpush1.msra.mxu0 %v7591
        %8053 = vmatprep.subr.mxu0 %v7594
        %8054 = vmatpush1.msra.mxu0 %v7593
        %8055 = vmatprep.subr.mxu0 %v7596
        %8056 = vmatpush1.msra.mxu0 %v7595
        %8057 = vmatprep.subr.mxu0 %v7598
        %8058 = vmatpush1.msra.mxu0 %v7597
        %8059 = vmatprep.subr.mxu0 %v7648
        %8060 = vmatpush1.msra.mxu0 %v7647
        %8061 = vmatprep.subr.mxu0 %v7650
        %8062 = vmatpush1.msra.mxu0 %v7649
        %8063 = vmatprep.subr.mxu0 %v7652
        %8064 = vmatpush1.msra.mxu0 %v7651
        %8065 = vmatprep.subr.mxu0 %v7654
        %8066 = vmatpush1.msra.mxu0 %v7653
        %8067 = vmatprep.subr.mxu0 %v7656
        %8068 = vmatpush1.msra.mxu0 %v7655
        %8069 = vmatprep.subr.mxu0 %v7658
        %8070 = vmatpush1.msra.mxu0 %v7657
        %8071 = vmatprep.subr.mxu0 %v7660
        %8072 = vmatpush1.msra.mxu0 %v7659
        %8073 = vmatprep.subr.mxu0 %v7662
        %8074 = vmatpush1.msra.mxu0 %v7661
        %8075 = vmatprep.subr.mxu0 %v7712
        %8076 = vmatpush1.msra.mxu0 %v7711
        %8077 = vmatprep.subr.mxu0 %v7714
        %8078 = vmatpush1.msra.mxu0 %v7713
        %8079 = vmatprep.subr.mxu0 %v7716
        %8080 = vmatpush1.msra.mxu0 %v7715
        %8081 = vmatprep.subr.mxu0 %v7718
        %8082 = vmatpush1.msra.mxu0 %v7717
        %8083 = vmatprep.subr.mxu0 %v7720
        %8084 = vmatpush1.msra.mxu0 %v7719
        %8085 = vmatprep.subr.mxu0 %v7722
        %8086 = vmatpush1.msra.mxu0 %v7721
        %8087 = vmatprep.subr.mxu0 %v7724
        %8088 = vmatpush1.msra.mxu0 %v7723
        %8089 = vmatprep.subr.mxu0 %v7726
        %8090 = vmatpush1.msra.mxu0 %v7725
        %8091 = vmatprep.mubr.f32.mxu0 %v8000
        %8092 = vmatmul.mubr.f32.gmra.mrb[0].mxu0 %v7999
        %v8093 = vpop.f32.mrb[0].mxu0
        %v8094 = vadd.f32 %v8014, %v8093
        %v8095 = vpop.f32.mrb[0].mxu0
        %v8096 = vadd.f32 %v8014, %v8095
        %8097 = vmatprep.mubr.f32.mxu0 %v8005
        %8098 = vmatmul.mubr.f32.gmra.mrb[0].mxu0 %v8004
        %v8099 = vpop.f32.mrb[0].mxu0
        %v8100 = vadd.f32 %v8019, %v8099
        %v8101 = vpop.f32.mrb[0].mxu0
        %v8102 = vadd.f32 %v8019, %v8101
        %8103 = vdwg.mxu0
        %8104 = vmatprep.subr.mxu0 %v7728
        %8105 = vmatpush1.msra.mxu0 %v7727
        %8106 = vmatprep.subr.mxu0 %v7730
        %8107 = vmatpush1.msra.mxu0 %v7729
        %8108 = vmatprep.subr.mxu0 %v7732
        %8109 = vmatpush1.msra.mxu0 %v7731
        %8110 = vmatprep.subr.mxu0 %v7734
        %8111 = vmatpush1.msra.mxu0 %v7733
        %8112 = vmatprep.subr.mxu0 %v7736
        %8113 = vmatpush1.msra.mxu0 %v7735
        %8114 = vmatprep.subr.mxu0 %v7738
        %8115 = vmatpush1.msra.mxu0 %v7737
        %8116 = vmatprep.subr.mxu0 %v7740
        %8117 = vmatpush1.msra.mxu0 %v7739
        %8118 = vmatprep.subr.mxu0 %v7742
        %8119 = vmatpush1.msra.mxu0 %v7741
        %8120 = vmatprep.subr.mxu0 %v7792
        %8121 = vmatpush1.msra.mxu0 %v7791
        %8122 = vmatprep.subr.mxu0 %v7794
        %8123 = vmatpush1.msra.mxu0 %v7793
        %8124 = vmatprep.subr.mxu0 %v7796
        %8125 = vmatpush1.msra.mxu0 %v7795
        %8126 = vmatprep.subr.mxu0 %v7798
        %8127 = vmatpush1.msra.mxu0 %v7797
        %8128 = vmatprep.subr.mxu0 %v7800
        %8129 = vmatpush1.msra.mxu0 %v7799
        %8130 = vmatprep.subr.mxu0 %v7802
        %8131 = vmatpush1.msra.mxu0 %v7801
        %8132 = vmatprep.subr.mxu0 %v7804
        %8133 = vmatpush1.msra.mxu0 %v7803
        %8134 = vmatprep.subr.mxu0 %v7806
        %8135 = vmatpush1.msra.mxu0 %v7805
        %8136 = vmatprep.subr.mxu0 %v7856
        %8137 = vmatpush1.msra.mxu0 %v7855
        %8138 = vmatprep.subr.mxu0 %v7858
        %8139 = vmatpush1.msra.mxu0 %v7857
        %8140 = vmatprep.subr.mxu0 %v7860
        %8141 = vmatpush1.msra.mxu0 %v7859
        %8142 = vmatprep.subr.mxu0 %v7862
        %8143 = vmatpush1.msra.mxu0 %v7861
        %8144 = vmatprep.subr.mxu0 %v7864
        %8145 = vmatpush1.msra.mxu0 %v7863
        %8146 = vmatprep.subr.mxu0 %v7866
        %8147 = vmatpush1.msra.mxu0 %v7865
        %8148 = vmatprep.subr.mxu0 %v7868
        %8149 = vmatpush1.msra.mxu0 %v7867
        %8150 = vmatprep.subr.mxu0 %v7870
        %8151 = vmatpush1.msra.mxu0 %v7869
        %8152 = vmatprep.subr.mxu0 %v7920
        %8153 = vmatpush1.msra.mxu0 %v7919
        %8154 = vmatprep.subr.mxu0 %v7922
        %8155 = vmatpush1.msra.mxu0 %v7921
        %8156 = vmatprep.subr.mxu0 %v7924
        %8157 = vmatpush1.msra.mxu0 %v7923
        %8158 = vmatprep.subr.mxu0 %v7926
        %8159 = vmatpush1.msra.mxu0 %v7925
        %8160 = vmatprep.subr.mxu0 %v7928
        %8161 = vmatpush1.msra.mxu0 %v7927
        %8162 = vmatprep.subr.mxu0 %v7930
        %8163 = vmatpush1.msra.mxu0 %v7929
        %8164 = vmatprep.subr.mxu0 %v7932
        %8165 = vmatpush1.msra.mxu0 %v7931
        %8166 = vmatprep.subr.mxu0 %v7934
        %8167 = vmatpush1.msra.mxu0 %v7933
        %8168 = vmatprep.mubr.f32.mxu0 %v8002
        %8169 = vmatmul.mubr.f32.gmra.mrb[0].mxu0 %v8001
        %v8170 = vpop.f32.mrb[0].mxu0
        %v8171 = vadd.f32 %v8094, %v8170
        %v8172 = vpop.f32.mrb[0].mxu0
        %v8173 = vadd.f32 %v8096, %v8172
        %8174 = vmatprep.mubr.f32.mxu0 %v8007
        %8175 = vmatmul.mubr.f32.gmra.mrb[0].mxu0 %v8006
        %v8176 = vpop.f32.mrb[0].mxu0
        %v8177 = vadd.f32 %v8100, %v8176
        %v8178 = vpop.f32.mrb[0].mxu0
        %v8179 = vadd.f32 %v8102, %v8178
        %8180 = vdwg.mxu0
        %8181 = vmatprep.subr.mxu0 %v7984
        %8182 = vmatpush1.msra.mxu0 %v7983
        %8183 = vmatprep.subr.mxu0 %v7986
        %8184 = vmatpush1.msra.mxu0 %v7985
        %8185 = vmatprep.subr.mxu0 %v7988
        %8186 = vmatpush1.msra.mxu0 %v7987
        %8187 = vmatprep.subr.mxu0 %v7990
        %8188 = vmatpush1.msra.mxu0 %v7989
        %8189 = vmatprep.subr.mxu0 %v7992
        %8190 = vmatpush1.msra.mxu0 %v7991
        %8191 = vmatprep.subr.mxu0 %v7994
        %8192 = vmatpush1.msra.mxu0 %v7993
        %8193 = vmatprep.subr.mxu0 %v7996
        %8194 = vmatpush1.msra.mxu0 %v7995
        %8195 = vmatprep.subr.mxu0 %v7998
        %8196 = vmatpush1.msra.mxu0 %v7997
        %8197 = vmatprep.subr.mxu0 0.0
        %8198 = vmatpush1.msra.mxu0 0.0
        %8199 = vmatprep.subr.mxu0 0.0
        %8200 = vmatpush1.msra.mxu0 0.0
        %8201 = vmatprep.subr.mxu0 0.0
        %8202 = vmatpush1.msra.mxu0 0.0
        %8203 = vmatprep.subr.mxu0 0.0
        %8204 = vmatpush1.msra.mxu0 0.0
        %8205 = vmatprep.subr.mxu0 0.0
        %8206 = vmatpush1.msra.mxu0 0.0
        %8207 = vmatprep.subr.mxu0 0.0
        %8208 = vmatpush1.msra.mxu0 0.0
        %8209 = vmatprep.subr.mxu0 0.0
        %8210 = vmatpush1.msra.mxu0 0.0
        %8211 = vmatprep.subr.mxu0 0.0
        %8212 = vmatpush1.msra.mxu0 0.0
        %8213 = vmatprep.subr.mxu0 0.0
        %8214 = vmatpush1.msra.mxu0 0.0
        %8215 = vmatprep.subr.mxu0 0.0
        %8216 = vmatpush1.msra.mxu0 0.0
        %8217 = vmatprep.subr.mxu0 0.0
        %8218 = vmatpush1.msra.mxu0 0.0
        %8219 = vmatprep.subr.mxu0 0.0
        %8220 = vmatpush1.msra.mxu0 0.0
        %8221 = vmatprep.subr.mxu0 0.0
        %8222 = vmatpush1.msra.mxu0 0.0
        %8223 = vmatprep.subr.mxu0 0.0
        %8224 = vmatpush1.msra.mxu0 0.0
        %8225 = vmatprep.subr.mxu0 0.0
        %8226 = vmatpush1.msra.mxu0 0.0
        %8227 = vmatprep.subr.mxu0 0.0
        %8228 = vmatpush1.msra.mxu0 0.0
        %8229 = vmatprep.subr.mxu0 0.0
        %8230 = vmatpush1.msra.mxu0 0.0
        %8231 = vmatprep.subr.mxu0 0.0
        %8232 = vmatpush1.msra.mxu0 0.0
        %8233 = vmatprep.subr.mxu0 0.0
        %8234 = vmatpush1.msra.mxu0 0.0
        %8235 = vmatprep.subr.mxu0 0.0
        %8236 = vmatpush1.msra.mxu0 0.0
        %8237 = vmatprep.subr.mxu0 0.0
        %8238 = vmatpush1.msra.mxu0 0.0
        %8239 = vmatprep.subr.mxu0 0.0
        %8240 = vmatpush1.msra.mxu0 0.0
        %8241 = vmatprep.subr.mxu0 0.0
        %8242 = vmatpush1.msra.mxu0 0.0
        %8243 = vmatprep.subr.mxu0 0.0
        %8244 = vmatpush1.msra.mxu0 0.0
        %8245 = vmatprep.mubr.f32.mxu0 0.0
        %8246 = vmatmul.mubr.f32.gmra.mrb[0].mxu0 %v8022
        %v8247 = vpop.f32.mrb[0].mxu0
        %v8248 = vadd.f32 %v8171, %v8247
        %v8249 = vpop.f32.mrb[0].mxu0
        %v8250 = vadd.f32 %v8173, %v8249
        %8251 = vmatprep.mubr.f32.mxu0 0.0
        %8252 = vmatmul.mubr.f32.gmra.mrb[0].mxu0 %v8025
        %v8253 = vpop.f32.mrb[0].mxu0
        %v8254 = vadd.f32 %v8177, %v8253
        %v8255 = vpop.f32.mrb[0].mxu0
        %v8256 = vadd.f32 %v8179, %v8255
        %8257 = vdwg.mxu0
        %v8258 = vmax.f32 %v8248, 0.0
        %v8259 = vmax.f32 %v8250, 0.0
        %v8260 = vmax.f32 %v8254, 0.0
        %v8261 = vmax.f32 %v8256, 0.0
        %v8262 = vmin.f32 %v8258, 1.0
        %v8263 = vmin.f32 %v8259, 1.0
        %v8264 = vmin.f32 %v8260, 1.0
        %v8265 = vmin.f32 %v8261, 1.0
        %8266 = vst [vmem:[%s647] sm:$0xff] %v8262
        %8267 = vst [vmem:[%s647 + $0x8] sm:$0xff] %v8263
        %8268 = vst [vmem:[%s647 + $0x10] sm:$0xff] %v8264
        %8269 = vst [vmem:[%s647 + $0x18] sm:$0xff] %v8265
        %p8270 = scmp.lt.s32.totalorder %s32, 5
        %s8271 = scalar_select %p8270, %s32, 5
        %s8272 = smul.addr %s8271, 4
        %s8273 = smul.addr %s8272, 8
        %s8274 = scalar_lea.vmem %s17, %s8273
        // Predicated region
        $region117: #{_lambda_.1} parent=87 // pred_check
          %p8275 = pneg %p412
        $region118: #{_lambda_.1} parent=87 // pred_check_branch
          %8277 = sbr.rel (%p8275) target = $region120
        $region119: #{_lambda_.1} parent=87 // pred_region
          _
        $region120: #{_lambda_.1} parent=87 // pred_fallthru
          _
      $region88: #{_lambda_.1} parent=5 // pred_fallthru
        _
      %p8278 = scmp.le.s32.totalorder 2, %s27
      // Predicated region
      $region121: #{_lambda_.1} parent=5 // pred_check
        %p8279 = pneg %p8278
      $region122: #{_lambda_.1} parent=5 // pred_check_branch
        %8281 = sbr.rel (%p8279) target = $region124
      $region123: #{_lambda_.1} parent=5 // pred_region
        %s8282 = ssub.s32 %s27, 2
        // Predicated region
        $region125: #{_lambda_.1} parent=123 // pred_check
          %p8283 = pneg %p418
        $region126: #{_lambda_.1} parent=123 // pred_check_branch
          %8285 = sbr.rel (%p8283) target = $region128
        $region127: #{_lambda_.1} parent=123 // pred_region
          %p8286 = scmp.lt.s32.totalorder %s33, 5
          %s8287 = scalar_select %p8286, %s33, 5
          %s8288 = smul.addr %s8287, 4
          %s8289 = smul.addr %s8288, 8
          %s8290 = scalar_lea.vmem %s17, %s8289
        $region128: #{_lambda_.1} parent=123 // pred_fallthru
          _
      $region124: #{_lambda_.1} parent=5 // pred_fallthru
        _
    $region6: #{_lambda_.1} parent=1 // loop_footer
      %s31 = sadd.s32 1, %s27
    $region7: #{_lambda_.1} parent=1 // loop_footer_branch
      %26 = sbr.rel target = $region3
    $region8: #{_lambda_.1} parent=1 // loop_exit
      _
    %8291 = vsyncpa [#allocation3], 1
    %s8292 = scalar_lea.sflag [#allocation3], 1
    %8293 = vsyncpa %s8292, 1
    %8294 = vsyncpa [#allocation5], 1
    %8295 = vsyncpa [#allocation8], 1
    %8296 = vsyncpa [#allocation11], 1

</llo_original>
